<compile_context>
chip_gen: v5e
topology: v5e:2x2
jax: 0.10.0
libtpu: 0.0.40
codegen_flags: <defaults>
</compile_context>

<pallas_src>
import math

import jax
import jax.numpy as jnp
from jax.experimental import pallas as pl
from jax.experimental.pallas import tpu as pltpu


def _nmt_kernel(src_tok_ref, hist_tok_ref, tgt_tok_ref,
                src_len_ref, hist_len_ref,
                enc_tbl_ref, b_enc_ref, q_tbl_ref, b_q_ref,
                w_c_ref, w_o_ref, b_d_ref,
                dec_out_ref, attn_ref, enc_state_ref):
    Bb, S = src_tok_ref.shape
    Sh = hist_tok_ref.shape[1]
    T = tgt_tok_ref.shape[1]
    Vs, H = enc_tbl_ref.shape
    Vt = q_tbl_ref.shape[0]

    def embed_tanh(tok, table, bias, vocab):
        # token ids -> one-hot (bf16) -> MXU matmul against the fused (V, H)
        # table; mathematically identical to tanh(embedding[tok] @ W + b).
        b, s = tok.shape
        iota_v = jax.lax.broadcasted_iota(jnp.int32, (b, s, vocab), 2)
        onehot = (tok[:, :, None] == iota_v).astype(jnp.bfloat16)
        proj = jnp.dot(onehot.reshape(b * s, vocab), table,
                       preferred_element_type=jnp.float32)
        return jnp.tanh(proj + bias)                              # (b*s, H) f32

    # validity masks built in-kernel from the length vectors (1.0 / 0.0)
    src_valid = (jax.lax.broadcasted_iota(jnp.int32, (Bb, S), 1)
                 < src_len_ref[...]).astype(jnp.float32)
    hist_valid = (jax.lax.broadcasted_iota(jnp.int32, (Bb, Sh), 1)
                  < hist_len_ref[...]).astype(jnp.float32)

    enc_tbl = enc_tbl_ref[...]
    b_enc = b_enc_ref[...]

    # ---------------- encoder (history branch first: its f32 block dies
    # before the attention phase, keeping VMEM pressure low) ----------------
    hist_mem = embed_tanh(hist_tok_ref[...], enc_tbl, b_enc, Vs).reshape(Bb, Sh, H)
    hist_den = jnp.maximum(jnp.sum(hist_valid, axis=-1, keepdims=True), 1.0)
    hist_mean = jnp.sum(hist_mem * hist_valid[:, :, None], axis=1) / hist_den

    mem = embed_tanh(src_tok_ref[...], enc_tbl, b_enc, Vs).reshape(Bb, S, H)
    src_den = jnp.maximum(jnp.sum(src_valid, axis=-1, keepdims=True), 1.0)
    src_mean = jnp.sum(mem * src_valid[:, :, None], axis=1) / src_den
    enc_state_ref[...] = 0.5 * (src_mean + hist_mean)               # (Bb, H)

    # ---------------- decoder query ------------------------------------------
    q2d = embed_tanh(tgt_tok_ref[...], q_tbl_ref[...], b_q_ref[...], Vt)  # (Bb*T,H)
    q = q2d.reshape(Bb, T, H)

    # ---------------- Luong dot attention (bf16 MXU, exact f32 softmax) ------
    mem_bf = mem.astype(jnp.bfloat16)
    scores = jnp.einsum('bth,bsh->bts', q.astype(jnp.bfloat16), mem_bf,
                        preferred_element_type=jnp.float32)         # (Bb,T,S)
    scores = scores + (src_valid[:, None, :] - 1.0) * 1e9           # mask pads
    m = jnp.max(scores, axis=-1, keepdims=True)
    p = jnp.exp(scores - m)
    l = jnp.sum(p, axis=-1, keepdims=True)
    attn = p / l                                 # exact normalization (f32)
    attn_ref[...] = jnp.transpose(attn, (1, 0, 2))       # store (T, Bb, S)

    ctx = jnp.einsum('bts,bsh->bth', attn.astype(jnp.bfloat16), mem_bf,
                     preferred_element_type=jnp.float32)            # (Bb,T,H)

    # ---------------- output projection: ctx @ W_c + q @ W_o (no concat) -----
    dec2d = jnp.tanh(
        jnp.dot(ctx.reshape(Bb * T, H).astype(jnp.bfloat16), w_c_ref[...],
                preferred_element_type=jnp.float32)
        + jnp.dot(q2d.astype(jnp.bfloat16), w_o_ref[...],
                  preferred_element_type=jnp.float32)
        + b_d_ref[...])
    dec_out_ref[...] = jnp.transpose(dec2d.reshape(Bb, T, H), (1, 0, 2))


def _run_nmt_kernel(src_tok, hist_tok, tgt_tok, src_len, hist_len, params,
                    batch_block=8, vmem_limit_mb=32):
    B, S = src_tok.shape
    Sh = hist_tok.shape[1]
    T = tgt_tok.shape[1]
    Vs, H = params['enc_tbl'].shape
    Vt = params['q_tbl'].shape[0]

    # For realistic batches raise batch_block (~64 on v5e/v6e with a larger
    # scoped-VMEM cap, ~32-48 on v7x's 64 MiB VMEM); keep the grid length even
    # so the "parallel" axis splits across both TensorCores.
    Bb = min(batch_block, B)
    assert B % Bb == 0, "batch must be divisible by the batch tile"

    def batched(shape):
        n = len(shape)
        return pl.BlockSpec(shape, lambda b: (b,) + (0,) * (n - 1))

    def resident(shape):
        n = len(shape)
        return pl.BlockSpec(shape, lambda b: (0,) * n)

    def time_major(shape):
        return pl.BlockSpec(shape, lambda b: (0, b, 0))

    in_specs = [
        batched((Bb, S)),        # src token ids (int32)
        batched((Bb, Sh)),       # history token ids
        batched((Bb, T)),        # tgt token ids
        batched((Bb, 1)),        # src lengths
        batched((Bb, 1)),        # history lengths
        resident((Vs, H)),       # fused src_embed @ w_enc table (bf16)
        resident((1, H)),        # b_enc
        resident((Vt, H)),       # fused tgt_embed @ w_q table (bf16)
        resident((1, H)),        # b_q
        resident((H, H)),        # w_c
        resident((H, H)),        # w_o
        resident((1, H)),        # b_d
    ]
    out_specs = (
        time_major((T, Bb, H)),  # dec_out, already (tgt_len, batch, hidden)
        time_major((T, Bb, S)),  # attention dists, (tgt_len, batch, src_len)
        batched((Bb, H)),        # enc_state
    )
    out_shapes = (
        jax.ShapeDtypeStruct((T, B, H), jnp.float32),
        jax.ShapeDtypeStruct((T, B, S), jnp.float32),
        jax.ShapeDtypeStruct((B, H), jnp.float32),
    )

    inputs = (src_tok, hist_tok, tgt_tok, src_len, hist_len,
              params['enc_tbl'], params['b_enc'], params['q_tbl'],
              params['b_q'], params['w_c'], params['w_o'], params['b_d'])

    flops = (2 * B * (S + Sh) * Vs * H        # encoder one-hot matmuls
             + 2 * B * T * Vt * H             # decoder query
             + 2 * 2 * B * T * S * H          # scores + context
             + 2 * 2 * B * T * H * H)         # output projection (two HxH)
    transcendentals = B * (S + Sh) * H + 2 * B * T * H + B * T * S
    bytes_accessed = (sum(int(x.size) * x.dtype.itemsize for x in inputs)
                      + sum(4 * math.prod(s.shape) for s in out_shapes))

    return pl.pallas_call(
        _nmt_kernel,
        out_shape=out_shapes,
        grid=(B // Bb,),
        in_specs=in_specs,
        out_specs=out_specs,
        compiler_params=pltpu.CompilerParams(
            dimension_semantics=("parallel",),           # megacore / 2-TC split
            vmem_limit_bytes=vmem_limit_mb * 1024 * 1024),
        cost_estimate=pl.CostEstimate(
            flops=flops, transcendentals=transcendentals,
            bytes_accessed=bytes_accessed),
    )(*inputs)


class PallasNMTModel:
    """JAX/Pallas stand-in for onmt.models.NMTModel (encoder + decoder)."""

    def __init__(self, key, src_vocab, tgt_vocab, emb_dim, hidden,
                 batch_block=8):
        ks = jax.random.split(key, 9)
        s = 0.1
        self.emb_dim = emb_dim
        self.hidden = hidden
        self.batch_block = batch_block

        src_embed = s * jax.random.normal(ks[0], (src_vocab, emb_dim))
        tgt_embed = s * jax.random.normal(ks[1], (tgt_vocab, emb_dim))
        w_enc = s * jax.random.normal(ks[2], (emb_dim, hidden))
        b_enc = s * jax.random.normal(ks[3], (1, hidden))
        w_q = s * jax.random.normal(ks[4], (emb_dim, hidden))
        b_q = s * jax.random.normal(ks[5], (1, hidden))
        w_c = s * jax.random.normal(ks[6], (hidden, hidden))
        w_o = s * jax.random.normal(ks[7], (hidden, hidden))
        b_d = s * jax.random.normal(ks[8], (1, hidden))

        # Algebraic fusion: tanh(emb[tok] @ W + b) == tanh((emb @ W)[tok] + b),
        # so fold the embedding tables into the projections once, offline.
        self.params = {
            'enc_tbl': (src_embed @ w_enc).astype(jnp.bfloat16),   # (Vs, H)
            'b_enc': b_enc.astype(jnp.float32),
            'q_tbl': (tgt_embed @ w_q).astype(jnp.bfloat16),       # (Vt, H)
            'b_q': b_q.astype(jnp.float32),
            'w_c': w_c.astype(jnp.bfloat16),
            'w_o': w_o.astype(jnp.bfloat16),
            'b_d': b_d.astype(jnp.float32),
        }
        self.translator = None
        self.decoder_state = None

    def forward(self, batch, src, history, tgt, src_lengths, history_lengths,
                bptt=False):
        # tgt = tgt[:-1]  (drop the last target token, as in the PyTorch model)
        tgt = tgt[:-1]

        # Only the tiny int32 tensors are transposed/reshaped outside the
        # kernel; all heavy lifting (gather, masks, attention, projections,
        # time-major layout) happens inside the single Pallas call.
        src_tok = src.T.astype(jnp.int32)                # (B, S)
        hist_tok = history.T.astype(jnp.int32)           # (B, Sh)
        tgt_tok = tgt.T.astype(jnp.int32)                # (B, T)
        src_len = src_lengths.reshape(-1, 1).astype(jnp.int32)      # (B, 1)
        hist_len = history_lengths.reshape(-1, 1).astype(jnp.int32)

        dec_out, attn, enc_state = _run_nmt_kernel(
            src_tok, hist_tok, tgt_tok, src_len, hist_len, self.params,
            batch_block=self.batch_block)

        if bptt is False:
            # decoder.init_state(src, memory_bank, enc_state)
            self.decoder_state = enc_state

        attns = {'std': attn}                      # (tgt_len, batch, src_len)

        # TODO(synk): translator.translate_batch / drqa_predict / reverse are
        # external beam-search / QA components with no Pallas equivalent.
        results = None
        return dec_out, attns, results


if __name__ == "__main__":
    key = jax.random.PRNGKey(0)
    k_model, k_src, k_hist, k_tgt, k_len, k_hlen = jax.random.split(key, 6)

    SRC_VOCAB, TGT_VOCAB = 32, 32
    EMB, HID = 128, 128                 # lane-dense / MXU-friendly feature dims
    S, Sh, T_IN, B = 128, 128, 9, 16    # 9 tgt tokens -> 8 decoding steps
    BATCH_BLOCK = 8                     # grid=(2,), one batch tile per TC

    model = PallasNMTModel(k_model, SRC_VOCAB, TGT_VOCAB, EMB, HID,
                           batch_block=BATCH_BLOCK)

    src = jax.random.randint(k_src, (S, B), 0, SRC_VOCAB, dtype=jnp.int32)
    history = jax.random.randint(k_hist, (Sh, B), 0, SRC_VOCAB, dtype=jnp.int32)
    tgt = jax.random.randint(k_tgt, (T_IN, B), 0, TGT_VOCAB, dtype=jnp.int32)
    src_lengths = jax.random.randint(k_len, (B,), S // 2, S + 1, dtype=jnp.int32)
    history_lengths = jax.random.randint(k_hlen, (B,), Sh // 2, Sh + 1,
                                         dtype=jnp.int32)

    dec_out, attns, results = model.forward(
        batch=None, src=src, history=history, tgt=tgt,
        src_lengths=src_lengths, history_lengths=history_lengths, bptt=False)

    dec_out = jax.block_until_ready(dec_out)
    attn_std = jax.block_until_ready(attns['std'])

    assert dec_out.shape == (T_IN - 1, B, HID)
    assert attn_std.shape == (T_IN - 1, B, S)
    # attention rows are proper distributions over (masked) source positions
    assert bool(jnp.allclose(attn_std.sum(-1), 1.0, atol=1e-3))
    # padded source positions get (near) zero attention mass
    pad_mass = (attn_std * (jnp.arange(S)[None, None, :]
                            >= src_lengths[None, :, None])).sum()
    assert bool(pad_mass < 1e-3)

    print("KERNEL_OK")
</pallas_src>

<mosaic_0001>
module attributes {stable_mosaic.version = 11 : i64} {
  func.func @_nmt_kernel(%arg0: i32, %arg1: memref<8x128xi32, #tpu.memory_space<vmem>>, %arg2: memref<8x128xi32, #tpu.memory_space<vmem>>, %arg3: memref<8x8xi32, #tpu.memory_space<vmem>>, %arg4: memref<8x1xi32, #tpu.memory_space<vmem>>, %arg5: memref<8x1xi32, #tpu.memory_space<vmem>>, %arg6: memref<32x128xbf16, #tpu.memory_space<vmem>>, %arg7: memref<1x128xf32, #tpu.memory_space<vmem>>, %arg8: memref<32x128xbf16, #tpu.memory_space<vmem>>, %arg9: memref<1x128xf32, #tpu.memory_space<vmem>>, %arg10: memref<128x128xbf16, #tpu.memory_space<vmem>>, %arg11: memref<128x128xbf16, #tpu.memory_space<vmem>>, %arg12: memref<1x128xf32, #tpu.memory_space<vmem>>, %arg13: memref<8x8x128xf32, #tpu.memory_space<vmem>>, %arg14: memref<8x8x128xf32, #tpu.memory_space<vmem>>, %arg15: memref<8x128xf32, #tpu.memory_space<vmem>>) attributes {dimension_semantics = [#tpu.dimension_semantics<parallel>], iteration_bounds = array<i64: 2>, scalar_prefetch = 0 : i64, scratch_operands = 0 : i64, tpu.core_type = #tpu.core_type<tc>, window_params = [{transform_indices = @transform_0, window_bounds = array<i64: 8, 128>}, {transform_indices = @transform_1, window_bounds = array<i64: 8, 128>}, {transform_indices = @transform_2, window_bounds = array<i64: 8, 8>}, {transform_indices = @transform_3, window_bounds = array<i64: 8, 1>}, {transform_indices = @transform_4, window_bounds = array<i64: 8, 1>}, {pipeline_mode = #tpu.pipeline_mode<synchronous>, transform_indices = @transform_5, window_bounds = array<i64: 32, 128>}, {pipeline_mode = #tpu.pipeline_mode<synchronous>, transform_indices = @transform_6, window_bounds = array<i64: 1, 128>}, {pipeline_mode = #tpu.pipeline_mode<synchronous>, transform_indices = @transform_7, window_bounds = array<i64: 32, 128>}, {pipeline_mode = #tpu.pipeline_mode<synchronous>, transform_indices = @transform_8, window_bounds = array<i64: 1, 128>}, {pipeline_mode = #tpu.pipeline_mode<synchronous>, transform_indices = @transform_9, window_bounds = array<i64: 128, 128>}, {pipeline_mode = #tpu.pipeline_mode<synchronous>, transform_indices = @transform_10, window_bounds = array<i64: 128, 128>}, {pipeline_mode = #tpu.pipeline_mode<synchronous>, transform_indices = @transform_11, window_bounds = array<i64: 1, 128>}, {transform_indices = @transform_12, window_bounds = array<i64: 8, 8, 128>}, {transform_indices = @transform_13, window_bounds = array<i64: 8, 8, 128>}, {transform_indices = @transform_14, window_bounds = array<i64: 8, 128>}]} {
    %0 = tpu.iota {dimensions = array<i32: 1>} : vector<8x128xi32>
    %c0 = arith.constant 0 : index
    %c0_0 = arith.constant 0 : index
    %1 = vector.load %arg4[%c0, %c0_0] : memref<8x1xi32, #tpu.memory_space<vmem>>, vector<8x1xi32>
    %2 = vector.broadcast %1 : vector<8x1xi32> to vector<8x128xi32>
    %3 = arith.cmpi slt, %0, %2 : vector<8x128xi32>
    %4 = arith.extui %3 : vector<8x128xi1> to vector<8x128xi32>
    %5 = arith.sitofp %4 : vector<8x128xi32> to vector<8x128xf32>
    %6 = tpu.iota {dimensions = array<i32: 1>} : vector<8x128xi32>
    %c0_1 = arith.constant 0 : index
    %c0_2 = arith.constant 0 : index
    %7 = vector.load %arg5[%c0_1, %c0_2] : memref<8x1xi32, #tpu.memory_space<vmem>>, vector<8x1xi32>
    %8 = vector.broadcast %7 : vector<8x1xi32> to vector<8x128xi32>
    %9 = arith.cmpi slt, %6, %8 : vector<8x128xi32>
    %10 = arith.extui %9 : vector<8x128xi1> to vector<8x128xi32>
    %11 = arith.sitofp %10 : vector<8x128xi32> to vector<8x128xf32>
    %c0_3 = arith.constant 0 : index
    %c0_4 = arith.constant 0 : index
    %12 = vector.load %arg6[%c0_3, %c0_4] : memref<32x128xbf16, #tpu.memory_space<vmem>>, vector<32x128xbf16>
    %c0_5 = arith.constant 0 : index
    %c0_6 = arith.constant 0 : index
    %13 = vector.load %arg7[%c0_5, %c0_6] : memref<1x128xf32, #tpu.memory_space<vmem>>, vector<1x128xf32>
    %c0_7 = arith.constant 0 : index
    %c0_8 = arith.constant 0 : index
    %14 = vector.load %arg2[%c0_7, %c0_8] : memref<8x128xi32, #tpu.memory_space<vmem>>, vector<8x128xi32>
    %15 = tpu.iota {dimensions = array<i32: 2>} : vector<8x128x32xi32>
    %16 = vector.shape_cast %14 : vector<8x128xi32> to vector<8x128x1xi32>
    %17 = vector.broadcast %16 : vector<8x128x1xi32> to vector<8x128x32xi32>
    %18 = arith.cmpi eq, %17, %15 : vector<8x128x32xi32>
    %19 = arith.extui %18 : vector<8x128x32xi1> to vector<8x128x32xi32>
    %20 = arith.sitofp %19 : vector<8x128x32xi32> to vector<8x128x32xf32>
    %21 = arith.truncf %20 : vector<8x128x32xf32> to vector<8x128x32xbf16>
    %22 = vector.shape_cast %21 : vector<8x128x32xbf16> to vector<1024x32xbf16>
    %cst = arith.constant dense<0.000000e+00> : vector<1024x128xf32>
    %23 = tpu.matmul %22, %12, %cst {dimension_numbers = #tpu.dot_dimension_numbers<[1], [0], [0], [1], [0, 0, 1, 1], [], []>} : vector<1024x32xbf16>, vector<32x128xbf16>, vector<1024x128xf32> -> vector<1024x128xf32>
    %24 = vector.broadcast %13 : vector<1x128xf32> to vector<1024x128xf32>
    %25 = arith.addf %23, %24 : vector<1024x128xf32>
    %26 = math.tanh %25 : vector<1024x128xf32>
    %27 = vector.shape_cast %26 : vector<1024x128xf32> to vector<8x128x128xf32>
    %cst_9 = arith.constant dense<0.000000e+00> : vector<8xf32>
    %28 = vector.multi_reduction <add>, %11, %cst_9 [1] : vector<8x128xf32> to vector<8xf32>
    %29 = vector.shape_cast %28 : vector<8xf32> to vector<8x1xf32>
    %cst_10 = arith.constant 1.000000e+00 : f32
    %30 = vector.broadcast %cst_10 : f32 to vector<8x1xf32>
    %31 = arith.maximumf %29, %30 : vector<8x1xf32>
    %32 = vector.shape_cast %11 : vector<8x128xf32> to vector<8x128x1xf32>
    %33 = vector.broadcast %32 : vector<8x128x1xf32> to vector<8x128x128xf32>
    %34 = arith.mulf %27, %33 : vector<8x128x128xf32>
    %cst_11 = arith.constant dense<0.000000e+00> : vector<8x128xf32>
    %35 = vector.multi_reduction <add>, %34, %cst_11 [1] : vector<8x128x128xf32> to vector<8x128xf32>
    %36 = vector.broadcast %31 : vector<8x1xf32> to vector<8x128xf32>
    %37 = arith.divf %35, %36 : vector<8x128xf32>
    %c0_12 = arith.constant 0 : index
    %c0_13 = arith.constant 0 : index
    %38 = vector.load %arg1[%c0_12, %c0_13] : memref<8x128xi32, #tpu.memory_space<vmem>>, vector<8x128xi32>
    %39 = tpu.iota {dimensions = array<i32: 2>} : vector<8x128x32xi32>
    %40 = vector.shape_cast %38 : vector<8x128xi32> to vector<8x128x1xi32>
    %41 = vector.broadcast %40 : vector<8x128x1xi32> to vector<8x128x32xi32>
    %42 = arith.cmpi eq, %41, %39 : vector<8x128x32xi32>
    %43 = arith.extui %42 : vector<8x128x32xi1> to vector<8x128x32xi32>
    %44 = arith.sitofp %43 : vector<8x128x32xi32> to vector<8x128x32xf32>
    %45 = arith.truncf %44 : vector<8x128x32xf32> to vector<8x128x32xbf16>
    %46 = vector.shape_cast %45 : vector<8x128x32xbf16> to vector<1024x32xbf16>
    %cst_14 = arith.constant dense<0.000000e+00> : vector<1024x128xf32>
    %47 = tpu.matmul %46, %12, %cst_14 {dimension_numbers = #tpu.dot_dimension_numbers<[1], [0], [0], [1], [0, 0, 1, 1], [], []>} : vector<1024x32xbf16>, vector<32x128xbf16>, vector<1024x128xf32> -> vector<1024x128xf32>
    %48 = vector.broadcast %13 : vector<1x128xf32> to vector<1024x128xf32>
    %49 = arith.addf %47, %48 : vector<1024x128xf32>
    %50 = math.tanh %49 : vector<1024x128xf32>
    %51 = vector.shape_cast %50 : vector<1024x128xf32> to vector<8x128x128xf32>
    %cst_15 = arith.constant dense<0.000000e+00> : vector<8xf32>
    %52 = vector.multi_reduction <add>, %5, %cst_15 [1] : vector<8x128xf32> to vector<8xf32>
    %53 = vector.shape_cast %52 : vector<8xf32> to vector<8x1xf32>
    %cst_16 = arith.constant 1.000000e+00 : f32
    %54 = vector.broadcast %cst_16 : f32 to vector<8x1xf32>
    %55 = arith.maximumf %53, %54 : vector<8x1xf32>
    %56 = vector.shape_cast %5 : vector<8x128xf32> to vector<8x128x1xf32>
    %57 = vector.broadcast %56 : vector<8x128x1xf32> to vector<8x128x128xf32>
    %58 = arith.mulf %51, %57 : vector<8x128x128xf32>
    %cst_17 = arith.constant dense<0.000000e+00> : vector<8x128xf32>
    %59 = vector.multi_reduction <add>, %58, %cst_17 [1] : vector<8x128x128xf32> to vector<8x128xf32>
    %60 = vector.broadcast %55 : vector<8x1xf32> to vector<8x128xf32>
    %61 = arith.divf %59, %60 : vector<8x128xf32>
    %62 = arith.addf %61, %37 : vector<8x128xf32>
    %cst_18 = arith.constant 5.000000e-01 : f32
    %63 = vector.broadcast %cst_18 : f32 to vector<8x128xf32>
    %64 = arith.mulf %63, %62 : vector<8x128xf32>
    %c0_19 = arith.constant 0 : index
    %c0_20 = arith.constant 0 : index
    %65 = vector.load %arg15[%c0_19, %c0_20] : memref<8x128xf32, #tpu.memory_space<vmem>>, vector<8x128xf32>
    tpu.vector_store %arg15[%c0_19, %c0_20], %64 {strides = array<i32>} : memref<8x128xf32, #tpu.memory_space<vmem>>, vector<8x128xf32>,
    %c0_21 = arith.constant 0 : index
    %c0_22 = arith.constant 0 : index
    %66 = vector.load %arg3[%c0_21, %c0_22] : memref<8x8xi32, #tpu.memory_space<vmem>>, vector<8x8xi32>
    %c0_23 = arith.constant 0 : index
    %c0_24 = arith.constant 0 : index
    %67 = vector.load %arg8[%c0_23, %c0_24] : memref<32x128xbf16, #tpu.memory_space<vmem>>, vector<32x128xbf16>
    %c0_25 = arith.constant 0 : index
    %c0_26 = arith.constant 0 : index
    %68 = vector.load %arg9[%c0_25, %c0_26] : memref<1x128xf32, #tpu.memory_space<vmem>>, vector<1x128xf32>
    %69 = tpu.iota {dimensions = array<i32: 2>} : vector<8x8x32xi32>
    %70 = vector.shape_cast %66 : vector<8x8xi32> to vector<8x8x1xi32>
    %71 = vector.broadcast %70 : vector<8x8x1xi32> to vector<8x8x32xi32>
    %72 = arith.cmpi eq, %71, %69 : vector<8x8x32xi32>
    %73 = arith.extui %72 : vector<8x8x32xi1> to vector<8x8x32xi32>
    %74 = arith.sitofp %73 : vector<8x8x32xi32> to vector<8x8x32xf32>
    %75 = arith.truncf %74 : vector<8x8x32xf32> to vector<8x8x32xbf16>
    %76 = vector.shape_cast %75 : vector<8x8x32xbf16> to vector<64x32xbf16>
    %cst_27 = arith.constant dense<0.000000e+00> : vector<64x128xf32>
    %77 = tpu.matmul %76, %67, %cst_27 {dimension_numbers = #tpu.dot_dimension_numbers<[1], [0], [0], [1], [0, 0, 1, 1], [], []>} : vector<64x32xbf16>, vector<32x128xbf16>, vector<64x128xf32> -> vector<64x128xf32>
    %78 = vector.broadcast %68 : vector<1x128xf32> to vector<64x128xf32>
    %79 = arith.addf %77, %78 : vector<64x128xf32>
    %80 = math.tanh %79 : vector<64x128xf32>
    %81 = vector.shape_cast %80 : vector<64x128xf32> to vector<8x8x128xf32>
    %82 = arith.truncf %51 : vector<8x128x128xf32> to vector<8x128x128xbf16>
    %83 = arith.truncf %81 : vector<8x8x128xf32> to vector<8x8x128xbf16>
    "tpu.trace_start"() <{level = 10 : i32, message = "bth,bsh->bts"}> : () -> ()
    %cst_28 = arith.constant dense<0.000000e+00> : vector<8x8x128xf32>
    %84 = tpu.matmul %83, %82, %cst_28 {dimension_numbers = #tpu.dot_dimension_numbers<[2], [2], [1], [1], [0, 0, 0, 1, 1, 1], [0], [0]>} : vector<8x8x128xbf16>, vector<8x128x128xbf16>, vector<8x8x128xf32> -> vector<8x8x128xf32>
    "tpu.trace_stop"() : () -> ()
    %85 = vector.shape_cast %5 : vector<8x128xf32> to vector<8x1x128xf32>
    %cst_29 = arith.constant 1.000000e+00 : f32
    %86 = vector.broadcast %cst_29 : f32 to vector<8x1x128xf32>
    %87 = arith.subf %85, %86 : vector<8x1x128xf32>
    %cst_30 = arith.constant 1.000000e+09 : f32
    %88 = vector.broadcast %cst_30 : f32 to vector<8x1x128xf32>
    %89 = arith.mulf %87, %88 : vector<8x1x128xf32>
    %90 = vector.broadcast %89 : vector<8x1x128xf32> to vector<8x8x128xf32>
    %91 = arith.addf %84, %90 : vector<8x8x128xf32>
    %cst_31 = arith.constant dense<0xFF800000> : vector<8x8xf32>
    %92 = vector.multi_reduction <maximumf>, %91, %cst_31 [2] : vector<8x8x128xf32> to vector<8x8xf32>
    %93 = vector.shape_cast %92 : vector<8x8xf32> to vector<8x8x1xf32>
    %94 = vector.broadcast %93 : vector<8x8x1xf32> to vector<8x8x128xf32>
    %95 = arith.subf %91, %94 : vector<8x8x128xf32>
    %96 = math.exp %95 : vector<8x8x128xf32>
    %cst_32 = arith.constant dense<0.000000e+00> : vector<8x8xf32>
    %97 = vector.multi_reduction <add>, %96, %cst_32 [2] : vector<8x8x128xf32> to vector<8x8xf32>
    %98 = vector.shape_cast %97 : vector<8x8xf32> to vector<8x8x1xf32>
    %99 = vector.broadcast %98 : vector<8x8x1xf32> to vector<8x8x128xf32>
    %100 = arith.divf %96, %99 : vector<8x8x128xf32>
    %101 = tpu.transpose %100, [1, 0, 2] : vector<8x8x128xf32> -> vector<8x8x128xf32>
    %c0_33 = arith.constant 0 : index
    %c0_34 = arith.constant 0 : index
    %c0_35 = arith.constant 0 : index
    %102 = vector.load %arg14[%c0_33, %c0_34, %c0_35] : memref<8x8x128xf32, #tpu.memory_space<vmem>>, vector<8x8x128xf32>
    tpu.vector_store %arg14[%c0_33, %c0_34, %c0_35], %101 {strides = array<i32>} : memref<8x8x128xf32, #tpu.memory_space<vmem>>, vector<8x8x128xf32>,
    %103 = arith.truncf %100 : vector<8x8x128xf32> to vector<8x8x128xbf16>
    "tpu.trace_start"() <{level = 10 : i32, message = "bts,bsh->bth"}> : () -> ()
    %cst_36 = arith.constant dense<0.000000e+00> : vector<8x8x128xf32>
    %104 = tpu.matmul %103, %82, %cst_36 {dimension_numbers = #tpu.dot_dimension_numbers<[2], [1], [1], [2], [0, 0, 0, 1, 1, 2], [0], [0]>} : vector<8x8x128xbf16>, vector<8x128x128xbf16>, vector<8x8x128xf32> -> vector<8x8x128xf32>
    "tpu.trace_stop"() : () -> ()
    %105 = vector.shape_cast %104 : vector<8x8x128xf32> to vector<64x128xf32>
    %106 = arith.truncf %105 : vector<64x128xf32> to vector<64x128xbf16>
    %c0_37 = arith.constant 0 : index
    %c0_38 = arith.constant 0 : index
    %107 = vector.load %arg10[%c0_37, %c0_38] : memref<128x128xbf16, #tpu.memory_space<vmem>>, vector<128x128xbf16>
    %cst_39 = arith.constant dense<0.000000e+00> : vector<64x128xf32>
    %108 = tpu.matmul %106, %107, %cst_39 {dimension_numbers = #tpu.dot_dimension_numbers<[1], [0], [0], [1], [0, 0, 1, 1], [], []>} : vector<64x128xbf16>, vector<128x128xbf16>, vector<64x128xf32> -> vector<64x128xf32>
    %109 = arith.truncf %80 : vector<64x128xf32> to vector<64x128xbf16>
    %c0_40 = arith.constant 0 : index
    %c0_41 = arith.constant 0 : index
    %110 = vector.load %arg11[%c0_40, %c0_41] : memref<128x128xbf16, #tpu.memory_space<vmem>>, vector<128x128xbf16>
    %cst_42 = arith.constant dense<0.000000e+00> : vector<64x128xf32>
    %111 = tpu.matmul %109, %110, %cst_42 {dimension_numbers = #tpu.dot_dimension_numbers<[1], [0], [0], [1], [0, 0, 1, 1], [], []>} : vector<64x128xbf16>, vector<128x128xbf16>, vector<64x128xf32> -> vector<64x128xf32>
    %112 = arith.addf %108, %111 : vector<64x128xf32>
    %c0_43 = arith.constant 0 : index
    %c0_44 = arith.constant 0 : index
    %113 = vector.load %arg12[%c0_43, %c0_44] : memref<1x128xf32, #tpu.memory_space<vmem>>, vector<1x128xf32>
    %114 = vector.broadcast %113 : vector<1x128xf32> to vector<64x128xf32>
    %115 = arith.addf %112, %114 : vector<64x128xf32>
    %116 = math.tanh %115 : vector<64x128xf32>
    %117 = vector.shape_cast %116 : vector<64x128xf32> to vector<8x8x128xf32>
    %118 = tpu.transpose %117, [1, 0, 2] : vector<8x8x128xf32> -> vector<8x8x128xf32>
    %c0_45 = arith.constant 0 : index
    %c0_46 = arith.constant 0 : index
    %c0_47 = arith.constant 0 : index
    %119 = vector.load %arg13[%c0_45, %c0_46, %c0_47] : memref<8x8x128xf32, #tpu.memory_space<vmem>>, vector<8x8x128xf32>
    tpu.vector_store %arg13[%c0_45, %c0_46, %c0_47], %118 {strides = array<i32>} : memref<8x8x128xf32, #tpu.memory_space<vmem>>, vector<8x8x128xf32>,
    return
  }
  func.func @transform_0(%arg0: i32) -> (i32, i32) {
    %c0_i32 = arith.constant 0 : i32
    %c0_i32_0 = arith.constant 0 : i32
    return %arg0, %c0_i32 : i32, i32
  }
  func.func @transform_1(%arg0: i32) -> (i32, i32) {
    %c0_i32 = arith.constant 0 : i32
    %c0_i32_0 = arith.constant 0 : i32
    return %arg0, %c0_i32 : i32, i32
  }
  func.func @transform_2(%arg0: i32) -> (i32, i32) {
    %c0_i32 = arith.constant 0 : i32
    %c0_i32_0 = arith.constant 0 : i32
    return %arg0, %c0_i32 : i32, i32
  }
  func.func @transform_3(%arg0: i32) -> (i32, i32) {
    %c0_i32 = arith.constant 0 : i32
    %c0_i32_0 = arith.constant 0 : i32
    return %arg0, %c0_i32 : i32, i32
  }
  func.func @transform_4(%arg0: i32) -> (i32, i32) {
    %c0_i32 = arith.constant 0 : i32
    %c0_i32_0 = arith.constant 0 : i32
    return %arg0, %c0_i32 : i32, i32
  }
  func.func @transform_5(%arg0: i32) -> (i32, i32) {
    %c0_i32 = arith.constant 0 : i32
    %c0_i32_0 = arith.constant 0 : i32
    %c0_i32_1 = arith.constant 0 : i32
    return %c0_i32, %c0_i32_0 : i32, i32
  }
  func.func @transform_6(%arg0: i32) -> (i32, i32) {
    %c0_i32 = arith.constant 0 : i32
    %c0_i32_0 = arith.constant 0 : i32
    %c0_i32_1 = arith.constant 0 : i32
    return %c0_i32, %c0_i32_0 : i32, i32
  }
  func.func @transform_7(%arg0: i32) -> (i32, i32) {
    %c0_i32 = arith.constant 0 : i32
    %c0_i32_0 = arith.constant 0 : i32
    %c0_i32_1 = arith.constant 0 : i32
    return %c0_i32, %c0_i32_0 : i32, i32
  }
  func.func @transform_8(%arg0: i32) -> (i32, i32) {
    %c0_i32 = arith.constant 0 : i32
    %c0_i32_0 = arith.constant 0 : i32
    %c0_i32_1 = arith.constant 0 : i32
    return %c0_i32, %c0_i32_0 : i32, i32
  }
  func.func @transform_9(%arg0: i32) -> (i32, i32) {
    %c0_i32 = arith.constant 0 : i32
    %c0_i32_0 = arith.constant 0 : i32
    %c0_i32_1 = arith.constant 0 : i32
    return %c0_i32, %c0_i32_0 : i32, i32
  }
  func.func @transform_10(%arg0: i32) -> (i32, i32) {
    %c0_i32 = arith.constant 0 : i32
    %c0_i32_0 = arith.constant 0 : i32
    %c0_i32_1 = arith.constant 0 : i32
    return %c0_i32, %c0_i32_0 : i32, i32
  }
  func.func @transform_11(%arg0: i32) -> (i32, i32) {
    %c0_i32 = arith.constant 0 : i32
    %c0_i32_0 = arith.constant 0 : i32
    %c0_i32_1 = arith.constant 0 : i32
    return %c0_i32, %c0_i32_0 : i32, i32
  }
  func.func @transform_12(%arg0: i32) -> (i32, i32, i32) {
    %c0_i32 = arith.constant 0 : i32
    %c0_i32_0 = arith.constant 0 : i32
    %c0_i32_1 = arith.constant 0 : i32
    return %c0_i32, %arg0, %c0_i32_0 : i32, i32, i32
  }
  func.func @transform_13(%arg0: i32) -> (i32, i32, i32) {
    %c0_i32 = arith.constant 0 : i32
    %c0_i32_0 = arith.constant 0 : i32
    %c0_i32_1 = arith.constant 0 : i32
    return %c0_i32, %arg0, %c0_i32_0 : i32, i32, i32
  }
  func.func @transform_14(%arg0: i32) -> (i32, i32) {
    %c0_i32 = arith.constant 0 : i32
    %c0_i32_0 = arith.constant 0 : i32
    return %arg0, %c0_i32 : i32, i32
  }
}

</mosaic_0001>

<llo_original>
// kernel: tpu_custom_call.1
$region0: #{tpu_custom_call.1}
  #allocation0 [shape = 'u32[]', space=smem, size = 0x4, offset = 0x4, fixed_abs, tag = 'smem constant byte address 0x4 - core index']
  #allocation1 [shape = 'u32[72,128]{1,0:T(1,128)}', space=vmem, size = 0x9000, scoped, tag = 'internal scratch']
  %s0 = inlined_call_operand.vmem [shape: s32[16,128], index: 0, kind: input, shape index: {}]
  %s1 = inlined_call_operand.vmem [shape: s32[16,128], index: 1, kind: input, shape index: {}]
  %s2 = inlined_call_operand.vmem [shape: s32[16,8], index: 2, kind: input, shape index: {}]
  %s3 = inlined_call_operand.vmem [shape: s32[16,1], index: 3, kind: input, shape index: {}]
  %s4 = inlined_call_operand.vmem [shape: s32[16,1], index: 4, kind: input, shape index: {}]
  %s5 = inlined_call_operand.vmem [shape: bf16[32,128], index: 5, kind: input, shape index: {}]
  %s6 = inlined_call_operand.vmem [shape: f32[1,128], index: 6, kind: input, shape index: {}]
  %s7 = inlined_call_operand.hbm [shape: bf16[32,128], index: 7, kind: input, shape index: {}]
  %s8 = inlined_call_operand.vmem [shape: f32[1,128], index: 8, kind: input, shape index: {}]
  %s9 = inlined_call_operand.hbm [shape: bf16[128,128], index: 9, kind: input, shape index: {}]
  %s10 = inlined_call_operand.hbm [shape: bf16[128,128], index: 10, kind: input, shape index: {}]
  %s11 = inlined_call_operand.vmem [shape: f32[1,128], index: 11, kind: input, shape index: {}]
  %s12 = inlined_call_operand.hbm [shape: f32[8,16,128], index: 12, kind: output, shape index: {0}]
  %s13 = inlined_call_operand.hbm [shape: f32[8,16,128], index: 13, kind: output, shape index: {1}]
  %s14 = inlined_call_operand.hbm [shape: f32[16,128], index: 14, kind: output, shape index: {2}]
  %15 = xla_tuple %s12, %s13, %s14
  %s16 = sld [smem:[#allocation0]]
  $region109: #{tpu_custom_call.1} parent=0
    _
  %s18 = ssub.s32 1, %s16
  %s19 = scalar_select 0, %s18, %s16
  $region1: #{tpu_custom_call.1} parent=0
    #allocation2 [shape = 'u8[8192]{0}', space=vmem, size = 0x2000, scoped, tag = 'input window, operand 7, single buffered']
    #allocation3 [shape = 's32[2]{0}', space=sflag, size = 0x8, scoped, tag = 'scoped memory for tpu_custom_call.1']
    #allocation4 [shape = 's32[2]{0}', space=sflag, size = 0x8, scoped, tag = 'scoped memory for tpu_custom_call.1']
    #allocation5 [shape = 'u8[32768]{0}', space=vmem, size = 0x8000, scoped, tag = 'input window, operand 9, single buffered']
    #allocation6 [shape = 's32[1]{0}', space=sflag, size = 0x4, scoped, tag = 'scoped memory for tpu_custom_call.1']
    #allocation7 [shape = 'u8[32768]{0}', space=vmem, size = 0x8000, scoped, tag = 'input window, operand 10, single buffered']
    #allocation8 [shape = 'u8[65536]{0}', space=vmem, size = 0x10000, scoped, tag = 'output window, operand 0']
    #allocation9 [shape = 'u8[65536]{0}', space=vmem, size = 0x10000, scoped, tag = 'output window, operand 1']
    #allocation10 [shape = 's32[2]{0}', space=sflag, size = 0x8, scoped, tag = 'scoped memory for tpu_custom_call.1']
    #allocation11 [shape = 'u8[8192]{0}', space=vmem, size = 0x2000, scoped, tag = 'output window, operand 2']
    %20 = vsyncpa [#allocation3], 0
    %21 = vsyncpa [#allocation6], 0
    %22 = vsyncpa [#allocation4], 0
    %s23 = scalar_lea.sflag [#allocation4], 1
    %24 = vsyncpa %s23, 0
    %25 = vsyncpa [#allocation10], 0
    %s26 = scalar_lea.sflag [#allocation10], 1
    %27 = vsyncpa %s26, 0
    loop: start=0, step=1, limit=4
    $region2: #{tpu_custom_call.1} parent=1 // loop_pre_header
      _
    $region3: #{tpu_custom_call.1} parent=1 // loop_header
      %s29 = sphi 0, %s33
      %p30 = scmp.ge.s32.totalorder %s29, 4
      %s39 = sphi 0, %s41
      %s42 = sphi 0, %s39
      %s43 = sphi 0, %s42
      %s59 = sphi 0, %s43
      %s65 = sphi 0, %s67
      %s68 = sphi 0, %s65
      %s69 = sphi 0, %s68
      %s85 = sphi 0, %s69
      %s91 = sphi 0, %s93
      %s94 = sphi 0, %s91
      %s95 = sphi 0, %s94
      %s111 = sphi 0, %s95
      %s117 = sphi 0, %s119
      %s120 = sphi 0, %s117
      %s121 = sphi 0, %s120
      %s137 = sphi 0, %s121
      %s143 = sphi 0, %s145
      %s146 = sphi 0, %s143
      %s147 = sphi 0, %s146
      %s163 = sphi 0, %s147
      %s167 = sphi 0, %s167
      %s169 = sphi 0, %s167
      %s170 = sphi 0, %s169
      %s184 = sphi 0, %s170
      %s188 = sphi 0, %s188
      %s190 = sphi 0, %s188
      %s191 = sphi 0, %s190
      %s205 = sphi 0, %s191
      %s209 = sphi 0, %s209
      %s211 = sphi 0, %s209
      %s212 = sphi 0, %s211
      %s226 = sphi 0, %s212
      %s230 = sphi 0, %s230
      %s232 = sphi 0, %s230
      %s233 = sphi 0, %s232
      %s247 = sphi 0, %s233
      %s251 = sphi 0, %s251
      %s253 = sphi 0, %s251
      %s254 = sphi 0, %s253
      %s268 = sphi 0, %s254
      %s272 = sphi 0, %s272
      %s274 = sphi 0, %s272
      %s275 = sphi 0, %s274
      %s289 = sphi 0, %s275
      %s293 = sphi 0, %s293
      %s295 = sphi 0, %s293
      %s296 = sphi 0, %s295
      %s310 = sphi 0, %s296
      %s316 = sphi 0, %s318
      %s319 = sphi 0, %s316
      %s320 = sphi 0, %s319
      %s336 = sphi 0, %s320
      %s342 = sphi 0, %s344
      %s345 = sphi 0, %s342
      %s346 = sphi 0, %s345
      %s362 = sphi 0, %s346
      %s368 = sphi 0, %s370
      %s371 = sphi 0, %s368
      %s372 = sphi 0, %s371
      %s388 = sphi 0, %s372
    $region4: #{tpu_custom_call.1} parent=1 // loop_header_branch
      %32 = sbr.rel (%p30) target = $region8
    $region5: #{tpu_custom_call.1} parent=1 // loop_body
      %s34 = ssub.s32 %s29, 1
      %s35 = ssub.s32 %s29, 2
      %s36 = sadd.s32 %s29, 1
      %s37 = ssub.s32 %s29, %s36
      %p38 = scmp.eq.s32.totalorder %s37, 0
      %s40 = sadd.s32 %s39, 1
      %s41 = scalar_select %p38, %s39, %s40
      %p44 = pneg %p38
      %p45 = scmp.eq.s32.totalorder %s29, 1
      %p46 = por %p44, %p45
      %p47 = scmp.ne.s32.totalorder %s39, %s42
      %p48 = scmp.eq.s32.totalorder %s29, 0
      %p49 = por %p47, %p48
      %p50 = scmp.ne.s32.totalorder %s39, %s42
      %p51 = scmp.eq.s32.totalorder %s34, 1
      %p52 = por %p50, %p51
      %p53 = scmp.ne.s32.totalorder %s42, %s43
      %p54 = scmp.eq.s32.totalorder %s34, 0
      %p55 = por %p53, %p54
      %p56 = scmp.ne.s32.totalorder %s42, %s43
      %p57 = scmp.eq.s32.totalorder %s35, 1
      %p58 = por %p56, %p57
      %p60 = scmp.ne.s32.totalorder %s43, %s59
      %p61 = scmp.eq.s32.totalorder %s35, 0
      %p62 = por %p60, %p61
      %s63 = ssub.s32 %s29, %s36
      %p64 = scmp.eq.s32.totalorder %s63, 0
      %s66 = sadd.s32 %s65, 1
      %s67 = scalar_select %p64, %s65, %s66
      %p70 = pneg %p64
      %p71 = scmp.eq.s32.totalorder %s29, 1
      %p72 = por %p70, %p71
      %p73 = scmp.ne.s32.totalorder %s65, %s68
      %p74 = scmp.eq.s32.totalorder %s29, 0
      %p75 = por %p73, %p74
      %p76 = scmp.ne.s32.totalorder %s65, %s68
      %p77 = scmp.eq.s32.totalorder %s34, 1
      %p78 = por %p76, %p77
      %p79 = scmp.ne.s32.totalorder %s68, %s69
      %p80 = scmp.eq.s32.totalorder %s34, 0
      %p81 = por %p79, %p80
      %p82 = scmp.ne.s32.totalorder %s68, %s69
      %p83 = scmp.eq.s32.totalorder %s35, 1
      %p84 = por %p82, %p83
      %p86 = scmp.ne.s32.totalorder %s69, %s85
      %p87 = scmp.eq.s32.totalorder %s35, 0
      %p88 = por %p86, %p87
      %s89 = ssub.s32 %s29, %s36
      %p90 = scmp.eq.s32.totalorder %s89, 0
      %s92 = sadd.s32 %s91, 1
      %s93 = scalar_select %p90, %s91, %s92
      %p96 = pneg %p90
      %p97 = scmp.eq.s32.totalorder %s29, 1
      %p98 = por %p96, %p97
      %p99 = scmp.ne.s32.totalorder %s91, %s94
      %p100 = scmp.eq.s32.totalorder %s29, 0
      %p101 = por %p99, %p100
      %p102 = scmp.ne.s32.totalorder %s91, %s94
      %p103 = scmp.eq.s32.totalorder %s34, 1
      %p104 = por %p102, %p103
      %p105 = scmp.ne.s32.totalorder %s94, %s95
      %p106 = scmp.eq.s32.totalorder %s34, 0
      %p107 = por %p105, %p106
      %p108 = scmp.ne.s32.totalorder %s94, %s95
      %p109 = scmp.eq.s32.totalorder %s35, 1
      %p110 = por %p108, %p109
      %p112 = scmp.ne.s32.totalorder %s95, %s111
      %p113 = scmp.eq.s32.totalorder %s35, 0
      %p114 = por %p112, %p113
      %s115 = ssub.s32 %s29, %s36
      %p116 = scmp.eq.s32.totalorder %s115, 0
      %s118 = sadd.s32 %s117, 1
      %s119 = scalar_select %p116, %s117, %s118
      %p122 = pneg %p116
      %p123 = scmp.eq.s32.totalorder %s29, 1
      %p124 = por %p122, %p123
      %p125 = scmp.ne.s32.totalorder %s117, %s120
      %p126 = scmp.eq.s32.totalorder %s29, 0
      %p127 = por %p125, %p126
      %p128 = scmp.ne.s32.totalorder %s117, %s120
      %p129 = scmp.eq.s32.totalorder %s34, 1
      %p130 = por %p128, %p129
      %p131 = scmp.ne.s32.totalorder %s120, %s121
      %p132 = scmp.eq.s32.totalorder %s34, 0
      %p133 = por %p131, %p132
      %p134 = scmp.ne.s32.totalorder %s120, %s121
      %p135 = scmp.eq.s32.totalorder %s35, 1
      %p136 = por %p134, %p135
      %p138 = scmp.ne.s32.totalorder %s121, %s137
      %p139 = scmp.eq.s32.totalorder %s35, 0
      %p140 = por %p138, %p139
      %s141 = ssub.s32 %s29, %s36
      %p142 = scmp.eq.s32.totalorder %s141, 0
      %s144 = sadd.s32 %s143, 1
      %s145 = scalar_select %p142, %s143, %s144
      %p148 = pneg %p142
      %p149 = scmp.eq.s32.totalorder %s29, 1
      %p150 = por %p148, %p149
      %p151 = scmp.ne.s32.totalorder %s143, %s146
      %p152 = scmp.eq.s32.totalorder %s29, 0
      %p153 = por %p151, %p152
      %p154 = scmp.ne.s32.totalorder %s143, %s146
      %p155 = scmp.eq.s32.totalorder %s34, 1
      %p156 = por %p154, %p155
      %p157 = scmp.ne.s32.totalorder %s146, %s147
      %p158 = scmp.eq.s32.totalorder %s34, 0
      %p159 = por %p157, %p158
      %p160 = scmp.ne.s32.totalorder %s146, %s147
      %p161 = scmp.eq.s32.totalorder %s35, 1
      %p162 = por %p160, %p161
      %p164 = scmp.ne.s32.totalorder %s147, %s163
      %p165 = scmp.eq.s32.totalorder %s35, 0
      %p166 = por %p164, %p165
      %s168 = sadd.s32 %s167, 1
      %p171 = scmp.eq.s32.totalorder %s29, 1
      %p172 = scmp.ne.s32.totalorder %s167, %s169
      %p173 = scmp.eq.s32.totalorder %s29, 0
      %p174 = por %p172, %p173
      %p175 = scmp.ne.s32.totalorder %s167, %s169
      %p176 = scmp.eq.s32.totalorder %s34, 1
      %p177 = por %p175, %p176
      %p178 = scmp.ne.s32.totalorder %s169, %s170
      %p179 = scmp.eq.s32.totalorder %s34, 0
      %p180 = por %p178, %p179
      %p181 = scmp.ne.s32.totalorder %s169, %s170
      %p182 = scmp.eq.s32.totalorder %s35, 1
      %p183 = por %p181, %p182
      %p185 = scmp.ne.s32.totalorder %s170, %s184
      %p186 = scmp.eq.s32.totalorder %s35, 0
      %p187 = por %p185, %p186
      %s189 = sadd.s32 %s188, 1
      %p192 = scmp.eq.s32.totalorder %s29, 1
      %p193 = scmp.ne.s32.totalorder %s188, %s190
      %p194 = scmp.eq.s32.totalorder %s29, 0
      %p195 = por %p193, %p194
      %p196 = scmp.ne.s32.totalorder %s188, %s190
      %p197 = scmp.eq.s32.totalorder %s34, 1
      %p198 = por %p196, %p197
      %p199 = scmp.ne.s32.totalorder %s190, %s191
      %p200 = scmp.eq.s32.totalorder %s34, 0
      %p201 = por %p199, %p200
      %p202 = scmp.ne.s32.totalorder %s190, %s191
      %p203 = scmp.eq.s32.totalorder %s35, 1
      %p204 = por %p202, %p203
      %p206 = scmp.ne.s32.totalorder %s191, %s205
      %p207 = scmp.eq.s32.totalorder %s35, 0
      %p208 = por %p206, %p207
      %s210 = sadd.s32 %s209, 1
      %p213 = scmp.eq.s32.totalorder %s29, 1
      %p214 = scmp.ne.s32.totalorder %s209, %s211
      %p215 = scmp.eq.s32.totalorder %s29, 0
      %p216 = por %p214, %p215
      %p217 = scmp.ne.s32.totalorder %s209, %s211
      %p218 = scmp.eq.s32.totalorder %s34, 1
      %p219 = por %p217, %p218
      %p220 = scmp.ne.s32.totalorder %s211, %s212
      %p221 = scmp.eq.s32.totalorder %s34, 0
      %p222 = por %p220, %p221
      %p223 = scmp.ne.s32.totalorder %s211, %s212
      %p224 = scmp.eq.s32.totalorder %s35, 1
      %p225 = por %p223, %p224
      %p227 = scmp.ne.s32.totalorder %s212, %s226
      %p228 = scmp.eq.s32.totalorder %s35, 0
      %p229 = por %p227, %p228
      %s231 = sadd.s32 %s230, 1
      %p234 = scmp.eq.s32.totalorder %s29, 1
      %p235 = scmp.ne.s32.totalorder %s230, %s232
      %p236 = scmp.eq.s32.totalorder %s29, 0
      %p237 = por %p235, %p236
      %p238 = scmp.ne.s32.totalorder %s230, %s232
      %p239 = scmp.eq.s32.totalorder %s34, 1
      %p240 = por %p238, %p239
      %p241 = scmp.ne.s32.totalorder %s232, %s233
      %p242 = scmp.eq.s32.totalorder %s34, 0
      %p243 = por %p241, %p242
      %p244 = scmp.ne.s32.totalorder %s232, %s233
      %p245 = scmp.eq.s32.totalorder %s35, 1
      %p246 = por %p244, %p245
      %p248 = scmp.ne.s32.totalorder %s233, %s247
      %p249 = scmp.eq.s32.totalorder %s35, 0
      %p250 = por %p248, %p249
      %s252 = sadd.s32 %s251, 1
      %p255 = scmp.eq.s32.totalorder %s29, 1
      %p256 = scmp.ne.s32.totalorder %s251, %s253
      %p257 = scmp.eq.s32.totalorder %s29, 0
      %p258 = por %p256, %p257
      %p259 = scmp.ne.s32.totalorder %s251, %s253
      %p260 = scmp.eq.s32.totalorder %s34, 1
      %p261 = por %p259, %p260
      %p262 = scmp.ne.s32.totalorder %s253, %s254
      %p263 = scmp.eq.s32.totalorder %s34, 0
      %p264 = por %p262, %p263
      %p265 = scmp.ne.s32.totalorder %s253, %s254
      %p266 = scmp.eq.s32.totalorder %s35, 1
      %p267 = por %p265, %p266
      %p269 = scmp.ne.s32.totalorder %s254, %s268
      %p270 = scmp.eq.s32.totalorder %s35, 0
      %p271 = por %p269, %p270
      %s273 = sadd.s32 %s272, 1
      %p276 = scmp.eq.s32.totalorder %s29, 1
      %p277 = scmp.ne.s32.totalorder %s272, %s274
      %p278 = scmp.eq.s32.totalorder %s29, 0
      %p279 = por %p277, %p278
      %p280 = scmp.ne.s32.totalorder %s272, %s274
      %p281 = scmp.eq.s32.totalorder %s34, 1
      %p282 = por %p280, %p281
      %p283 = scmp.ne.s32.totalorder %s274, %s275
      %p284 = scmp.eq.s32.totalorder %s34, 0
      %p285 = por %p283, %p284
      %p286 = scmp.ne.s32.totalorder %s274, %s275
      %p287 = scmp.eq.s32.totalorder %s35, 1
      %p288 = por %p286, %p287
      %p290 = scmp.ne.s32.totalorder %s275, %s289
      %p291 = scmp.eq.s32.totalorder %s35, 0
      %p292 = por %p290, %p291
      %s294 = sadd.s32 %s293, 1
      %p297 = scmp.eq.s32.totalorder %s29, 1
      %p298 = scmp.ne.s32.totalorder %s293, %s295
      %p299 = scmp.eq.s32.totalorder %s29, 0
      %p300 = por %p298, %p299
      %p301 = scmp.ne.s32.totalorder %s293, %s295
      %p302 = scmp.eq.s32.totalorder %s34, 1
      %p303 = por %p301, %p302
      %p304 = scmp.ne.s32.totalorder %s295, %s296
      %p305 = scmp.eq.s32.totalorder %s34, 0
      %p306 = por %p304, %p305
      %p307 = scmp.ne.s32.totalorder %s295, %s296
      %p308 = scmp.eq.s32.totalorder %s35, 1
      %p309 = por %p307, %p308
      %p311 = scmp.ne.s32.totalorder %s296, %s310
      %p312 = scmp.eq.s32.totalorder %s35, 0
      %p313 = por %p311, %p312
      %s314 = ssub.s32 %s29, %s36
      %p315 = scmp.eq.s32.totalorder %s314, 0
      %s317 = sadd.s32 %s316, 1
      %s318 = scalar_select %p315, %s316, %s317
      %p321 = pneg %p315
      %p322 = scmp.eq.s32.totalorder %s29, 1
      %p323 = por %p321, %p322
      %p324 = scmp.ne.s32.totalorder %s316, %s319
      %p325 = scmp.eq.s32.totalorder %s29, 0
      %p326 = por %p324, %p325
      %p327 = scmp.ne.s32.totalorder %s316, %s319
      %p328 = scmp.eq.s32.totalorder %s34, 1
      %p329 = por %p327, %p328
      %p330 = scmp.ne.s32.totalorder %s319, %s320
      %p331 = scmp.eq.s32.totalorder %s34, 0
      %p332 = por %p330, %p331
      %p333 = scmp.ne.s32.totalorder %s319, %s320
      %p334 = scmp.eq.s32.totalorder %s35, 1
      %p335 = por %p333, %p334
      %p337 = scmp.ne.s32.totalorder %s320, %s336
      %p338 = scmp.eq.s32.totalorder %s35, 0
      %p339 = por %p337, %p338
      %s340 = ssub.s32 %s29, %s36
      %p341 = scmp.eq.s32.totalorder %s340, 0
      %s343 = sadd.s32 %s342, 1
      %s344 = scalar_select %p341, %s342, %s343
      %p347 = pneg %p341
      %p348 = scmp.eq.s32.totalorder %s29, 1
      %p349 = por %p347, %p348
      %p350 = scmp.ne.s32.totalorder %s342, %s345
      %p351 = scmp.eq.s32.totalorder %s29, 0
      %p352 = por %p350, %p351
      %p353 = scmp.ne.s32.totalorder %s342, %s345
      %p354 = scmp.eq.s32.totalorder %s34, 1
      %p355 = por %p353, %p354
      %p356 = scmp.ne.s32.totalorder %s345, %s346
      %p357 = scmp.eq.s32.totalorder %s34, 0
      %p358 = por %p356, %p357
      %p359 = scmp.ne.s32.totalorder %s345, %s346
      %p360 = scmp.eq.s32.totalorder %s35, 1
      %p361 = por %p359, %p360
      %p363 = scmp.ne.s32.totalorder %s346, %s362
      %p364 = scmp.eq.s32.totalorder %s35, 0
      %p365 = por %p363, %p364
      %s366 = ssub.s32 %s29, %s36
      %p367 = scmp.eq.s32.totalorder %s366, 0
      %s369 = sadd.s32 %s368, 1
      %s370 = scalar_select %p367, %s368, %s369
      %p373 = pneg %p367
      %p374 = scmp.eq.s32.totalorder %s29, 1
      %p375 = por %p373, %p374
      %p376 = scmp.ne.s32.totalorder %s368, %s371
      %p377 = scmp.eq.s32.totalorder %s29, 0
      %p378 = por %p376, %p377
      %p379 = scmp.ne.s32.totalorder %s368, %s371
      %p380 = scmp.eq.s32.totalorder %s34, 1
      %p381 = por %p379, %p380
      %p382 = scmp.ne.s32.totalorder %s371, %s372
      %p383 = scmp.eq.s32.totalorder %s34, 0
      %p384 = por %p382, %p383
      %p385 = scmp.ne.s32.totalorder %s371, %s372
      %p386 = scmp.eq.s32.totalorder %s35, 1
      %p387 = por %p385, %p386
      %p389 = scmp.ne.s32.totalorder %s372, %s388
      %p390 = scmp.eq.s32.totalorder %s35, 0
      %p391 = por %p389, %p390
      %p392 = scmp.le.s32.totalorder 1, %s29
      %p393 = scmp.lt.s32.totalorder %s29, 3
      %p394 = pnand %p392, %p393
      %p395 = pneg %p394
      // Predicated region
      $region9: #{tpu_custom_call.1} parent=5 // pred_check
        _
      $region10: #{tpu_custom_call.1} parent=5 // pred_check_branch
        %397 = sbr.rel (%p394) target = $region12
      $region11: #{tpu_custom_call.1} parent=5 // pred_region
        %s398 = ssub.s32 %s29, 1
        // Predicated region
        $region13: #{tpu_custom_call.1} parent=11 // pred_check
          %p399 = pneg %p180
        $region14: #{tpu_custom_call.1} parent=11 // pred_check_branch
          %401 = sbr.rel (%p399) target = $region16
        $region15: #{tpu_custom_call.1} parent=11 // pred_region
          _
        $region16: #{tpu_custom_call.1} parent=11 // pred_fallthru
          _
        // Predicated region
        $region17: #{tpu_custom_call.1} parent=11 // pred_check
          %p402 = pneg %p201
        $region18: #{tpu_custom_call.1} parent=11 // pred_check_branch
          %404 = sbr.rel (%p402) target = $region20
        $region19: #{tpu_custom_call.1} parent=11 // pred_region
          _
        $region20: #{tpu_custom_call.1} parent=11 // pred_fallthru
          _
        // Predicated region
        $region21: #{tpu_custom_call.1} parent=11 // pred_check
          %p405 = pneg %p222
        $region22: #{tpu_custom_call.1} parent=11 // pred_check_branch
          %407 = sbr.rel (%p405) target = $region24
        $region23: #{tpu_custom_call.1} parent=11 // pred_region
          %409 = vsyncadd [#allocation3], 0
          %s410 = sshll.u32 %s7, 4
          %s411 = int_to_ptr.hbm [resolvable:$true] %s410
          %s412 = sshll.u32 [#allocation2], 4
          %s413 = int_to_ptr.vmem [resolvable:$true] %s412
          %418 = dma.hbm_to_vmem [thread:$0]  %s411, 256, %s413, [#allocation3], 64, 64, 4
        $region24: #{tpu_custom_call.1} parent=11 // pred_fallthru
          _
        // Predicated region
        $region25: #{tpu_custom_call.1} parent=11 // pred_check
          %p419 = pneg %p243
        $region26: #{tpu_custom_call.1} parent=11 // pred_check_branch
          %421 = sbr.rel (%p419) target = $region28
        $region27: #{tpu_custom_call.1} parent=11 // pred_region
          _
        $region28: #{tpu_custom_call.1} parent=11 // pred_fallthru
          _
        // Predicated region
        $region29: #{tpu_custom_call.1} parent=11 // pred_check
          %p422 = pneg %p264
        $region30: #{tpu_custom_call.1} parent=11 // pred_check_branch
          %424 = sbr.rel (%p422) target = $region32
        $region31: #{tpu_custom_call.1} parent=11 // pred_region
          %426 = vsyncadd [#allocation6], 0
          %s427 = sshll.u32 %s9, 4
          %s428 = int_to_ptr.hbm [resolvable:$true] %s427
          %s429 = sshll.u32 [#allocation5], 4
          %s430 = int_to_ptr.vmem [resolvable:$true] %s429
          %435 = dma.hbm_to_vmem [thread:$0]  %s428, 1024, %s430, [#allocation6], 64, 64, 4
        $region32: #{tpu_custom_call.1} parent=11 // pred_fallthru
          _
        // Predicated region
        $region33: #{tpu_custom_call.1} parent=11 // pred_check
          %p436 = pneg %p285
        $region34: #{tpu_custom_call.1} parent=11 // pred_check_branch
          %438 = sbr.rel (%p436) target = $region36
        $region35: #{tpu_custom_call.1} parent=11 // pred_region
          %440 = vsyncadd [#allocation6], 0
          %s441 = sshll.u32 %s10, 4
          %s442 = int_to_ptr.hbm [resolvable:$true] %s441
          %s443 = sshll.u32 [#allocation7], 4
          %s444 = int_to_ptr.vmem [resolvable:$true] %s443
          %449 = dma.hbm_to_vmem [thread:$0]  %s442, 1024, %s444, [#allocation6], 64, 64, 4
        $region36: #{tpu_custom_call.1} parent=11 // pred_fallthru
          _
        // Predicated region
        $region37: #{tpu_custom_call.1} parent=11 // pred_check
          %p450 = pneg %p306
        $region38: #{tpu_custom_call.1} parent=11 // pred_check_branch
          %452 = sbr.rel (%p450) target = $region40
        $region39: #{tpu_custom_call.1} parent=11 // pred_region
          _
        $region40: #{tpu_custom_call.1} parent=11 // pred_fallthru
          _
      $region12: #{tpu_custom_call.1} parent=5 // pred_fallthru
        _
      %p453 = scmp.lt.s32.totalorder %s29, 2
      // Predicated region
      $region41: #{tpu_custom_call.1} parent=5 // pred_check
        %p454 = pneg %p453
      $region42: #{tpu_custom_call.1} parent=5 // pred_check_branch
        %456 = sbr.rel (%p454) target = $region44
      $region43: #{tpu_custom_call.1} parent=5 // pred_region
        // Predicated region
        $region45: #{tpu_custom_call.1} parent=43 // pred_check
          %p457 = pneg %p49
        $region46: #{tpu_custom_call.1} parent=43 // pred_check_branch
          %459 = sbr.rel (%p457) target = $region48
        $region47: #{tpu_custom_call.1} parent=43 // pred_region
          %p460 = scmp.lt.s32.totalorder %s29, 1
          %s461 = scalar_select %p460, %s29, 1
          %s462 = smul.addr %s461, 8
          %s463 = scalar_lea.vmem %s0, %s462
        $region48: #{tpu_custom_call.1} parent=43 // pred_fallthru
          _
        // Predicated region
        $region49: #{tpu_custom_call.1} parent=43 // pred_check
          %p464 = pneg %p75
        $region50: #{tpu_custom_call.1} parent=43 // pred_check_branch
          %466 = sbr.rel (%p464) target = $region52
        $region51: #{tpu_custom_call.1} parent=43 // pred_region
          %p467 = scmp.lt.s32.totalorder %s29, 1
          %s468 = scalar_select %p467, %s29, 1
          %s469 = smul.addr %s468, 8
          %s470 = scalar_lea.vmem %s1, %s469
        $region52: #{tpu_custom_call.1} parent=43 // pred_fallthru
          _
        // Predicated region
        $region53: #{tpu_custom_call.1} parent=43 // pred_check
          %p471 = pneg %p101
        $region54: #{tpu_custom_call.1} parent=43 // pred_check_branch
          %473 = sbr.rel (%p471) target = $region56
        $region55: #{tpu_custom_call.1} parent=43 // pred_region
          %p474 = scmp.lt.s32.totalorder %s29, 1
          %s475 = scalar_select %p474, %s29, 1
          %s476 = smul.addr %s475, 8
          %s477 = scalar_lea.vmem %s2, %s476
        $region56: #{tpu_custom_call.1} parent=43 // pred_fallthru
          _
        // Predicated region
        $region57: #{tpu_custom_call.1} parent=43 // pred_check
          %p478 = pneg %p127
        $region58: #{tpu_custom_call.1} parent=43 // pred_check_branch
          %480 = sbr.rel (%p478) target = $region60
        $region59: #{tpu_custom_call.1} parent=43 // pred_region
          %p481 = scmp.lt.s32.totalorder %s29, 1
          %s482 = scalar_select %p481, %s29, 1
          %s483 = smul.addr %s482, 8
          %s484 = scalar_lea.vmem %s3, %s483
        $region60: #{tpu_custom_call.1} parent=43 // pred_fallthru
          _
        // Predicated region
        $region61: #{tpu_custom_call.1} parent=43 // pred_check
          %p485 = pneg %p153
        $region62: #{tpu_custom_call.1} parent=43 // pred_check_branch
          %487 = sbr.rel (%p485) target = $region64
        $region63: #{tpu_custom_call.1} parent=43 // pred_region
          %p488 = scmp.lt.s32.totalorder %s29, 1
          %s489 = scalar_select %p488, %s29, 1
          %s490 = smul.addr %s489, 8
          %s491 = scalar_lea.vmem %s4, %s490
        $region64: #{tpu_custom_call.1} parent=43 // pred_fallthru
          _
      $region44: #{tpu_custom_call.1} parent=5 // pred_fallthru
        _
      %p492 = scmp.le.s32.totalorder 1, %s29
      %p493 = scmp.lt.s32.totalorder %s29, 3
      %p494 = pnand %p492, %p493
      %p495 = pneg %p494
      // Predicated region
      $region65: #{tpu_custom_call.1} parent=5 // pred_check
        _
      $region66: #{tpu_custom_call.1} parent=5 // pred_check_branch
        %497 = sbr.rel (%p494) target = $region68
      $region67: #{tpu_custom_call.1} parent=5 // pred_region
        %s498 = ssub.s32 %s29, 1
        // Predicated region
        $region69: #{tpu_custom_call.1} parent=67 // pred_check
          %p499 = pneg %p222
        $region70: #{tpu_custom_call.1} parent=67 // pred_check_branch
          %501 = sbr.rel (%p499) target = $region72
        $region71: #{tpu_custom_call.1} parent=67 // pred_region
          %503 = dma.done [#allocation3], 256
        $region72: #{tpu_custom_call.1} parent=67 // pred_fallthru
          _
        // Predicated region
        $region73: #{tpu_custom_call.1} parent=67 // pred_check
          %p504 = pneg %p264
        $region74: #{tpu_custom_call.1} parent=67 // pred_check_branch
          %506 = sbr.rel (%p504) target = $region76
        $region75: #{tpu_custom_call.1} parent=67 // pred_region
          %508 = dma.done [#allocation6], 1024
        $region76: #{tpu_custom_call.1} parent=67 // pred_fallthru
          _
        // Predicated region
        $region77: #{tpu_custom_call.1} parent=67 // pred_check
          %p509 = pneg %p285
        $region78: #{tpu_custom_call.1} parent=67 // pred_check_branch
          %511 = sbr.rel (%p509) target = $region80
        $region79: #{tpu_custom_call.1} parent=67 // pred_region
          %513 = dma.done [#allocation6], 1024
        $region80: #{tpu_custom_call.1} parent=67 // pred_fallthru
          _
        %p514 = scmp.lt.s32.totalorder %s34, 1
        %s515 = scalar_select %p514, %s34, 1
        %s516 = smul.addr %s515, 8
        %s517 = scalar_lea.vmem %s0, %s516
        %p518 = pneg %p55
        %p519 = pneg %p52
        %p520 = scmp.lt.s32.totalorder %s34, 1
        %s521 = scalar_select %p520, %s34, 1
        %s522 = smul.addr %s521, 8
        %s523 = scalar_lea.vmem %s1, %s522
        %p524 = pneg %p81
        %p525 = pneg %p78
        %p526 = scmp.lt.s32.totalorder %s34, 1
        %s527 = scalar_select %p526, %s34, 1
        %s528 = smul.addr %s527, 8
        %s529 = scalar_lea.vmem %s2, %s528
        %p530 = pneg %p107
        %p531 = pneg %p104
        %p532 = scmp.lt.s32.totalorder %s34, 1
        %s533 = scalar_select %p532, %s34, 1
        %s534 = smul.addr %s533, 8
        %s535 = scalar_lea.vmem %s3, %s534
        %p536 = pneg %p133
        %p537 = pneg %p130
        %p538 = scmp.lt.s32.totalorder %s34, 1
        %s539 = scalar_select %p538, %s34, 1
        %s540 = smul.addr %s539, 8
        %s541 = scalar_lea.vmem %s4, %s540
        %p542 = pneg %p159
        %p543 = pneg %p156
        %p544 = pneg %p180
        %p545 = pneg %p177
        %p546 = pneg %p201
        %p547 = pneg %p198
        %p548 = pneg %p222
        %p549 = pneg %p219
        %p550 = pneg %p243
        %p551 = pneg %p240
        %p552 = pneg %p264
        %p553 = pneg %p261
        %p554 = pneg %p285
        %p555 = pneg %p282
        %p556 = pneg %p306
        %p557 = pneg %p303
        %p558 = pneg %p332
        %p559 = pneg %p329
        %s560 = sand.u32 %s319, 1
        %s561 = scalar_lea.sflag [#allocation4], %s560
        %s562 = sand.u32 %s319, 1
        %s563 = smul.addr %s562, 64
        %s564 = scalar_lea.vmem [#allocation8], %s563
        %p565 = pneg %p358
        %p566 = pneg %p355
        %s567 = sand.u32 %s34, 1
        %s568 = scalar_lea.sflag [#allocation10], %s567
        %s569 = sand.u32 %s345, 1
        %s570 = smul.addr %s569, 64
        %s571 = scalar_lea.vmem [#allocation9], %s570
        %p572 = pneg %p384
        %p573 = pneg %p381
        %s574 = sand.u32 %s34, 1
        %s575 = scalar_lea.sflag [#allocation10], %s574
        %s576 = sand.u32 %s371, 1
        %s577 = smul.addr %s576, 8
        %s578 = scalar_lea.vmem [#allocation11], %s577
        %p579 = scmp.lt.s32.totalorder %s34, 1
        %s580 = scalar_select %p579, %s34, 1
        %s581 = smul.addr %s580, 8
        %s582 = scalar_lea.vmem %s0, %s581
        %p583 = scmp.lt.s32.totalorder %s34, 1
        %s584 = scalar_select %p583, %s34, 1
        %s585 = smul.addr %s584, 8
        %s586 = scalar_lea.vmem %s1, %s585
        %p587 = scmp.lt.s32.totalorder %s34, 1
        %s588 = scalar_select %p587, %s34, 1
        %s589 = smul.addr %s588, 8
        %s590 = scalar_lea.vmem %s2, %s589
        %p591 = scmp.lt.s32.totalorder %s34, 1
        %s592 = scalar_select %p591, %s34, 1
        %s593 = smul.addr %s592, 8
        %s594 = scalar_lea.vmem %s3, %s593
        %p595 = scmp.lt.s32.totalorder %s34, 1
        %s596 = scalar_select %p595, %s34, 1
        %s597 = smul.addr %s596, 8
        %s598 = scalar_lea.vmem %s4, %s597
        %v600 = vlaneseq
        %v601 = vand.u32 %v600, 127
        %v602 = vld [vmem:[%s594] sm:$0xff]
        %603 = vset.pattern.permute.xlu0 0
        %604 = vperm.xlu0 %603, %v602
        %v605 = vpop.permute.xlu0 %604
        %vm606 = vcmp.lt.s32.totalorder %v601, %v605
        %v607 = vsel %vm606, 1, 0
        %v608 = vcvt.s32.f32 %v607
        %v609 = vld [vmem:[%s598] sm:$0xff]
        %610 = vset.pattern.permute.xlu0 0
        %611 = vperm.xlu0 %610, %v609
        %v612 = vpop.permute.xlu0 %611
        %vm613 = vcmp.lt.s32.totalorder %v601, %v612
        %v614 = vsel %vm613, 1, 0
        %v615 = vcvt.s32.f32 %v614
        %v616 = vld [vmem:[%s5] sm:$0xf]
        %v617 = vld [vmem:[%s5 + $0x4] sm:$0xf]
        %v618 = vld [vmem:[%s5 + $0x8] sm:$0xf]
        %v619 = vld [vmem:[%s5 + $0xc] sm:$0xf]
        %v620 = vld [vmem:[%s6] sm:$0x1]
        %v621 = vld [vmem:[%s586] sm:$0xff]
        %v622 = vperm.slane %v621, 0
        %v623 = vlaneseq
        %v624 = vshrl.u32 %v623, 7
        %626 = vset.pattern.permute.xlu0 %v624
        %627 = vperm.xlu0 %626, %v622
        %v628 = vpop.permute.xlu0 %627
        %v629 = vlaneseq
        %v630 = vshrl.u32 %v629, 7
        %v631 = vadd.s32 %v630, 8
        %632 = vset.pattern.permute.xlu0 %v631
        %633 = vperm.xlu0 %632, %v622
        %v634 = vpop.permute.xlu0 %633
        %v635 = vlaneseq
        %v636 = vshrl.u32 %v635, 7
        %v637 = vadd.s32 %v636, 16
        %638 = vset.pattern.permute.xlu0 %v637
        %639 = vperm.xlu0 %638, %v622
        %v640 = vpop.permute.xlu0 %639
        %v641 = vlaneseq
        %v642 = vshrl.u32 %v641, 7
        %v643 = vadd.s32 %v642, 24
        %644 = vset.pattern.permute.xlu0 %v643
        %645 = vperm.xlu0 %644, %v622
        %v646 = vpop.permute.xlu0 %645
        %v647 = vlaneseq
        %v648 = vshrl.u32 %v647, 7
        %v649 = vadd.s32 %v648, 32
        %650 = vset.pattern.permute.xlu0 %v649
        %651 = vperm.xlu0 %650, %v622
        %v652 = vpop.permute.xlu0 %651
        %v653 = vlaneseq
        %v654 = vshrl.u32 %v653, 7
        %v655 = vadd.s32 %v654, 40
        %656 = vset.pattern.permute.xlu0 %v655
        %657 = vperm.xlu0 %656, %v622
        %v658 = vpop.permute.xlu0 %657
        %v659 = vlaneseq
        %v660 = vshrl.u32 %v659, 7
        %v661 = vadd.s32 %v660, 48
        %662 = vset.pattern.permute.xlu0 %v661
        %663 = vperm.xlu0 %662, %v622
        %v664 = vpop.permute.xlu0 %663
        %v665 = vlaneseq
        %v666 = vshrl.u32 %v665, 7
        %v667 = vadd.s32 %v666, 56
        %668 = vset.pattern.permute.xlu0 %v667
        %669 = vperm.xlu0 %668, %v622
        %v670 = vpop.permute.xlu0 %669
        %v671 = vlaneseq
        %v672 = vshrl.u32 %v671, 7
        %v673 = vadd.s32 %v672, 64
        %674 = vset.pattern.permute.xlu0 %v673
        %675 = vperm.xlu0 %674, %v622
        %v676 = vpop.permute.xlu0 %675
        %v677 = vlaneseq
        %v678 = vshrl.u32 %v677, 7
        %v679 = vadd.s32 %v678, 72
        %680 = vset.pattern.permute.xlu0 %v679
        %681 = vperm.xlu0 %680, %v622
        %v682 = vpop.permute.xlu0 %681
        %v683 = vlaneseq
        %v684 = vshrl.u32 %v683, 7
        %v685 = vadd.s32 %v684, 80
        %686 = vset.pattern.permute.xlu0 %v685
        %687 = vperm.xlu0 %686, %v622
        %v688 = vpop.permute.xlu0 %687
        %v689 = vlaneseq
        %v690 = vshrl.u32 %v689, 7
        %v691 = vadd.s32 %v690, 88
        %692 = vset.pattern.permute.xlu0 %v691
        %693 = vperm.xlu0 %692, %v622
        %v694 = vpop.permute.xlu0 %693
        %v695 = vlaneseq
        %v696 = vshrl.u32 %v695, 7
        %v697 = vadd.s32 %v696, 96
        %698 = vset.pattern.permute.xlu0 %v697
        %699 = vperm.xlu0 %698, %v622
        %v700 = vpop.permute.xlu0 %699
        %v701 = vlaneseq
        %v702 = vshrl.u32 %v701, 7
        %v703 = vadd.s32 %v702, 104
        %704 = vset.pattern.permute.xlu0 %v703
        %705 = vperm.xlu0 %704, %v622
        %v706 = vpop.permute.xlu0 %705
        %v707 = vlaneseq
        %v708 = vshrl.u32 %v707, 7
        %v709 = vadd.s32 %v708, 112
        %710 = vset.pattern.permute.xlu0 %v709
        %711 = vperm.xlu0 %710, %v622
        %v712 = vpop.permute.xlu0 %711
        %v713 = vlaneseq
        %v714 = vshrl.u32 %v713, 7
        %v715 = vadd.s32 %v714, 120
        %716 = vset.pattern.permute.xlu0 %v715
        %717 = vperm.xlu0 %716, %v622
        %v718 = vpop.permute.xlu0 %717
        %v719 = vperm.slane %v621, 1
        %v720 = vlaneseq
        %v721 = vshrl.u32 %v720, 7
        %723 = vset.pattern.permute.xlu0 %v721
        %724 = vperm.xlu0 %723, %v719
        %v725 = vpop.permute.xlu0 %724
        %v726 = vlaneseq
        %v727 = vshrl.u32 %v726, 7
        %v728 = vadd.s32 %v727, 8
        %729 = vset.pattern.permute.xlu0 %v728
        %730 = vperm.xlu0 %729, %v719
        %v731 = vpop.permute.xlu0 %730
        %v732 = vlaneseq
        %v733 = vshrl.u32 %v732, 7
        %v734 = vadd.s32 %v733, 16
        %735 = vset.pattern.permute.xlu0 %v734
        %736 = vperm.xlu0 %735, %v719
        %v737 = vpop.permute.xlu0 %736
        %v738 = vlaneseq
        %v739 = vshrl.u32 %v738, 7
        %v740 = vadd.s32 %v739, 24
        %741 = vset.pattern.permute.xlu0 %v740
        %742 = vperm.xlu0 %741, %v719
        %v743 = vpop.permute.xlu0 %742
        %v744 = vlaneseq
        %v745 = vshrl.u32 %v744, 7
        %v746 = vadd.s32 %v745, 32
        %747 = vset.pattern.permute.xlu0 %v746
        %748 = vperm.xlu0 %747, %v719
        %v749 = vpop.permute.xlu0 %748
        %v750 = vlaneseq
        %v751 = vshrl.u32 %v750, 7
        %v752 = vadd.s32 %v751, 40
        %753 = vset.pattern.permute.xlu0 %v752
        %754 = vperm.xlu0 %753, %v719
        %v755 = vpop.permute.xlu0 %754
        %v756 = vlaneseq
        %v757 = vshrl.u32 %v756, 7
        %v758 = vadd.s32 %v757, 48
        %759 = vset.pattern.permute.xlu0 %v758
        %760 = vperm.xlu0 %759, %v719
        %v761 = vpop.permute.xlu0 %760
        %v762 = vlaneseq
        %v763 = vshrl.u32 %v762, 7
        %v764 = vadd.s32 %v763, 56
        %765 = vset.pattern.permute.xlu0 %v764
        %766 = vperm.xlu0 %765, %v719
        %v767 = vpop.permute.xlu0 %766
        %v768 = vlaneseq
        %v769 = vshrl.u32 %v768, 7
        %v770 = vadd.s32 %v769, 64
        %771 = vset.pattern.permute.xlu0 %v770
        %772 = vperm.xlu0 %771, %v719
        %v773 = vpop.permute.xlu0 %772
        %v774 = vlaneseq
        %v775 = vshrl.u32 %v774, 7
        %v776 = vadd.s32 %v775, 72
        %777 = vset.pattern.permute.xlu0 %v776
        %778 = vperm.xlu0 %777, %v719
        %v779 = vpop.permute.xlu0 %778
        %v780 = vlaneseq
        %v781 = vshrl.u32 %v780, 7
        %v782 = vadd.s32 %v781, 80
        %783 = vset.pattern.permute.xlu0 %v782
        %784 = vperm.xlu0 %783, %v719
        %v785 = vpop.permute.xlu0 %784
        %v786 = vlaneseq
        %v787 = vshrl.u32 %v786, 7
        %v788 = vadd.s32 %v787, 88
        %789 = vset.pattern.permute.xlu0 %v788
        %790 = vperm.xlu0 %789, %v719
        %v791 = vpop.permute.xlu0 %790
        %v792 = vlaneseq
        %v793 = vshrl.u32 %v792, 7
        %v794 = vadd.s32 %v793, 96
        %795 = vset.pattern.permute.xlu0 %v794
        %796 = vperm.xlu0 %795, %v719
        %v797 = vpop.permute.xlu0 %796
        %v798 = vlaneseq
        %v799 = vshrl.u32 %v798, 7
        %v800 = vadd.s32 %v799, 104
        %801 = vset.pattern.permute.xlu0 %v800
        %802 = vperm.xlu0 %801, %v719
        %v803 = vpop.permute.xlu0 %802
        %v804 = vlaneseq
        %v805 = vshrl.u32 %v804, 7
        %v806 = vadd.s32 %v805, 112
        %807 = vset.pattern.permute.xlu0 %v806
        %808 = vperm.xlu0 %807, %v719
        %v809 = vpop.permute.xlu0 %808
        %v810 = vlaneseq
        %v811 = vshrl.u32 %v810, 7
        %v812 = vadd.s32 %v811, 120
        %813 = vset.pattern.permute.xlu0 %v812
        %814 = vperm.xlu0 %813, %v719
        %v815 = vpop.permute.xlu0 %814
        %v816 = vperm.slane %v621, 2
        %v817 = vlaneseq
        %v818 = vshrl.u32 %v817, 7
        %820 = vset.pattern.permute.xlu0 %v818
        %821 = vperm.xlu0 %820, %v816
        %v822 = vpop.permute.xlu0 %821
        %v823 = vlaneseq
        %v824 = vshrl.u32 %v823, 7
        %v825 = vadd.s32 %v824, 8
        %826 = vset.pattern.permute.xlu0 %v825
        %827 = vperm.xlu0 %826, %v816
        %v828 = vpop.permute.xlu0 %827
        %v829 = vlaneseq
        %v830 = vshrl.u32 %v829, 7
        %v831 = vadd.s32 %v830, 16
        %832 = vset.pattern.permute.xlu0 %v831
        %833 = vperm.xlu0 %832, %v816
        %v834 = vpop.permute.xlu0 %833
        %v835 = vlaneseq
        %v836 = vshrl.u32 %v835, 7
        %v837 = vadd.s32 %v836, 24
        %838 = vset.pattern.permute.xlu0 %v837
        %839 = vperm.xlu0 %838, %v816
        %v840 = vpop.permute.xlu0 %839
        %v841 = vlaneseq
        %v842 = vshrl.u32 %v841, 7
        %v843 = vadd.s32 %v842, 32
        %844 = vset.pattern.permute.xlu0 %v843
        %845 = vperm.xlu0 %844, %v816
        %v846 = vpop.permute.xlu0 %845
        %v847 = vlaneseq
        %v848 = vshrl.u32 %v847, 7
        %v849 = vadd.s32 %v848, 40
        %850 = vset.pattern.permute.xlu0 %v849
        %851 = vperm.xlu0 %850, %v816
        %v852 = vpop.permute.xlu0 %851
        %v853 = vlaneseq
        %v854 = vshrl.u32 %v853, 7
        %v855 = vadd.s32 %v854, 48
        %856 = vset.pattern.permute.xlu0 %v855
        %857 = vperm.xlu0 %856, %v816
        %v858 = vpop.permute.xlu0 %857
        %v859 = vlaneseq
        %v860 = vshrl.u32 %v859, 7
        %v861 = vadd.s32 %v860, 56
        %862 = vset.pattern.permute.xlu0 %v861
        %863 = vperm.xlu0 %862, %v816
        %v864 = vpop.permute.xlu0 %863
        %v865 = vlaneseq
        %v866 = vshrl.u32 %v865, 7
        %v867 = vadd.s32 %v866, 64
        %868 = vset.pattern.permute.xlu0 %v867
        %869 = vperm.xlu0 %868, %v816
        %v870 = vpop.permute.xlu0 %869
        %v871 = vlaneseq
        %v872 = vshrl.u32 %v871, 7
        %v873 = vadd.s32 %v872, 72
        %874 = vset.pattern.permute.xlu0 %v873
        %875 = vperm.xlu0 %874, %v816
        %v876 = vpop.permute.xlu0 %875
        %v877 = vlaneseq
        %v878 = vshrl.u32 %v877, 7
        %v879 = vadd.s32 %v878, 80
        %880 = vset.pattern.permute.xlu0 %v879
        %881 = vperm.xlu0 %880, %v816
        %v882 = vpop.permute.xlu0 %881
        %v883 = vlaneseq
        %v884 = vshrl.u32 %v883, 7
        %v885 = vadd.s32 %v884, 88
        %886 = vset.pattern.permute.xlu0 %v885
        %887 = vperm.xlu0 %886, %v816
        %v888 = vpop.permute.xlu0 %887
        %v889 = vlaneseq
        %v890 = vshrl.u32 %v889, 7
        %v891 = vadd.s32 %v890, 96
        %892 = vset.pattern.permute.xlu0 %v891
        %893 = vperm.xlu0 %892, %v816
        %v894 = vpop.permute.xlu0 %893
        %v895 = vlaneseq
        %v896 = vshrl.u32 %v895, 7
        %v897 = vadd.s32 %v896, 104
        %898 = vset.pattern.permute.xlu0 %v897
        %899 = vperm.xlu0 %898, %v816
        %v900 = vpop.permute.xlu0 %899
        %v901 = vlaneseq
        %v902 = vshrl.u32 %v901, 7
        %v903 = vadd.s32 %v902, 112
        %904 = vset.pattern.permute.xlu0 %v903
        %905 = vperm.xlu0 %904, %v816
        %v906 = vpop.permute.xlu0 %905
        %v907 = vlaneseq
        %v908 = vshrl.u32 %v907, 7
        %v909 = vadd.s32 %v908, 120
        %910 = vset.pattern.permute.xlu0 %v909
        %911 = vperm.xlu0 %910, %v816
        %v912 = vpop.permute.xlu0 %911
        %v913 = vperm.slane %v621, 3
        %v914 = vlaneseq
        %v915 = vshrl.u32 %v914, 7
        %917 = vset.pattern.permute.xlu0 %v915
        %918 = vperm.xlu0 %917, %v913
        %v919 = vpop.permute.xlu0 %918
        %v920 = vlaneseq
        %v921 = vshrl.u32 %v920, 7
        %v922 = vadd.s32 %v921, 8
        %923 = vset.pattern.permute.xlu0 %v922
        %924 = vperm.xlu0 %923, %v913
        %v925 = vpop.permute.xlu0 %924
        %v926 = vlaneseq
        %v927 = vshrl.u32 %v926, 7
        %v928 = vadd.s32 %v927, 16
        %929 = vset.pattern.permute.xlu0 %v928
        %930 = vperm.xlu0 %929, %v913
        %v931 = vpop.permute.xlu0 %930
        %v932 = vlaneseq
        %v933 = vshrl.u32 %v932, 7
        %v934 = vadd.s32 %v933, 24
        %935 = vset.pattern.permute.xlu0 %v934
        %936 = vperm.xlu0 %935, %v913
        %v937 = vpop.permute.xlu0 %936
        %v938 = vlaneseq
        %v939 = vshrl.u32 %v938, 7
        %v940 = vadd.s32 %v939, 32
        %941 = vset.pattern.permute.xlu0 %v940
        %942 = vperm.xlu0 %941, %v913
        %v943 = vpop.permute.xlu0 %942
        %v944 = vlaneseq
        %v945 = vshrl.u32 %v944, 7
        %v946 = vadd.s32 %v945, 40
        %947 = vset.pattern.permute.xlu0 %v946
        %948 = vperm.xlu0 %947, %v913
        %v949 = vpop.permute.xlu0 %948
        %v950 = vlaneseq
        %v951 = vshrl.u32 %v950, 7
        %v952 = vadd.s32 %v951, 48
        %953 = vset.pattern.permute.xlu0 %v952
        %954 = vperm.xlu0 %953, %v913
        %v955 = vpop.permute.xlu0 %954
        %v956 = vlaneseq
        %v957 = vshrl.u32 %v956, 7
        %v958 = vadd.s32 %v957, 56
        %959 = vset.pattern.permute.xlu0 %v958
        %960 = vperm.xlu0 %959, %v913
        %v961 = vpop.permute.xlu0 %960
        %v962 = vlaneseq
        %v963 = vshrl.u32 %v962, 7
        %v964 = vadd.s32 %v963, 64
        %965 = vset.pattern.permute.xlu0 %v964
        %966 = vperm.xlu0 %965, %v913
        %v967 = vpop.permute.xlu0 %966
        %v968 = vlaneseq
        %v969 = vshrl.u32 %v968, 7
        %v970 = vadd.s32 %v969, 72
        %971 = vset.pattern.permute.xlu0 %v970
        %972 = vperm.xlu0 %971, %v913
        %v973 = vpop.permute.xlu0 %972
        %v974 = vlaneseq
        %v975 = vshrl.u32 %v974, 7
        %v976 = vadd.s32 %v975, 80
        %977 = vset.pattern.permute.xlu0 %v976
        %978 = vperm.xlu0 %977, %v913
        %v979 = vpop.permute.xlu0 %978
        %v980 = vlaneseq
        %v981 = vshrl.u32 %v980, 7
        %v982 = vadd.s32 %v981, 88
        %983 = vset.pattern.permute.xlu0 %v982
        %984 = vperm.xlu0 %983, %v913
        %v985 = vpop.permute.xlu0 %984
        %v986 = vlaneseq
        %v987 = vshrl.u32 %v986, 7
        %v988 = vadd.s32 %v987, 96
        %989 = vset.pattern.permute.xlu0 %v988
        %990 = vperm.xlu0 %989, %v913
        %v991 = vpop.permute.xlu0 %990
        %v992 = vlaneseq
        %v993 = vshrl.u32 %v992, 7
        %v994 = vadd.s32 %v993, 104
        %995 = vset.pattern.permute.xlu0 %v994
        %996 = vperm.xlu0 %995, %v913
        %v997 = vpop.permute.xlu0 %996
        %v998 = vlaneseq
        %v999 = vshrl.u32 %v998, 7
        %v1000 = vadd.s32 %v999, 112
        %1001 = vset.pattern.permute.xlu0 %v1000
        %1002 = vperm.xlu0 %1001, %v913
        %v1003 = vpop.permute.xlu0 %1002
        %v1004 = vlaneseq
        %v1005 = vshrl.u32 %v1004, 7
        %v1006 = vadd.s32 %v1005, 120
        %1007 = vset.pattern.permute.xlu0 %v1006
        %1008 = vperm.xlu0 %1007, %v913
        %v1009 = vpop.permute.xlu0 %1008
        %v1010 = vperm.slane %v621, 4
        %v1011 = vlaneseq
        %v1012 = vshrl.u32 %v1011, 7
        %1014 = vset.pattern.permute.xlu0 %v1012
        %1015 = vperm.xlu0 %1014, %v1010
        %v1016 = vpop.permute.xlu0 %1015
        %v1017 = vlaneseq
        %v1018 = vshrl.u32 %v1017, 7
        %v1019 = vadd.s32 %v1018, 8
        %1020 = vset.pattern.permute.xlu0 %v1019
        %1021 = vperm.xlu0 %1020, %v1010
        %v1022 = vpop.permute.xlu0 %1021
        %v1023 = vlaneseq
        %v1024 = vshrl.u32 %v1023, 7
        %v1025 = vadd.s32 %v1024, 16
        %1026 = vset.pattern.permute.xlu0 %v1025
        %1027 = vperm.xlu0 %1026, %v1010
        %v1028 = vpop.permute.xlu0 %1027
        %v1029 = vlaneseq
        %v1030 = vshrl.u32 %v1029, 7
        %v1031 = vadd.s32 %v1030, 24
        %1032 = vset.pattern.permute.xlu0 %v1031
        %1033 = vperm.xlu0 %1032, %v1010
        %v1034 = vpop.permute.xlu0 %1033
        %v1035 = vlaneseq
        %v1036 = vshrl.u32 %v1035, 7
        %v1037 = vadd.s32 %v1036, 32
        %1038 = vset.pattern.permute.xlu0 %v1037
        %1039 = vperm.xlu0 %1038, %v1010
        %v1040 = vpop.permute.xlu0 %1039
        %v1041 = vlaneseq
        %v1042 = vshrl.u32 %v1041, 7
        %v1043 = vadd.s32 %v1042, 40
        %1044 = vset.pattern.permute.xlu0 %v1043
        %1045 = vperm.xlu0 %1044, %v1010
        %v1046 = vpop.permute.xlu0 %1045
        %v1047 = vlaneseq
        %v1048 = vshrl.u32 %v1047, 7
        %v1049 = vadd.s32 %v1048, 48
        %1050 = vset.pattern.permute.xlu0 %v1049
        %1051 = vperm.xlu0 %1050, %v1010
        %v1052 = vpop.permute.xlu0 %1051
        %v1053 = vlaneseq
        %v1054 = vshrl.u32 %v1053, 7
        %v1055 = vadd.s32 %v1054, 56
        %1056 = vset.pattern.permute.xlu0 %v1055
        %1057 = vperm.xlu0 %1056, %v1010
        %v1058 = vpop.permute.xlu0 %1057
        %v1059 = vlaneseq
        %v1060 = vshrl.u32 %v1059, 7
        %v1061 = vadd.s32 %v1060, 64
        %1062 = vset.pattern.permute.xlu0 %v1061
        %1063 = vperm.xlu0 %1062, %v1010
        %v1064 = vpop.permute.xlu0 %1063
        %v1065 = vlaneseq
        %v1066 = vshrl.u32 %v1065, 7
        %v1067 = vadd.s32 %v1066, 72
        %1068 = vset.pattern.permute.xlu0 %v1067
        %1069 = vperm.xlu0 %1068, %v1010
        %v1070 = vpop.permute.xlu0 %1069
        %v1071 = vlaneseq
        %v1072 = vshrl.u32 %v1071, 7
        %v1073 = vadd.s32 %v1072, 80
        %1074 = vset.pattern.permute.xlu0 %v1073
        %1075 = vperm.xlu0 %1074, %v1010
        %v1076 = vpop.permute.xlu0 %1075
        %v1077 = vlaneseq
        %v1078 = vshrl.u32 %v1077, 7
        %v1079 = vadd.s32 %v1078, 88
        %1080 = vset.pattern.permute.xlu0 %v1079
        %1081 = vperm.xlu0 %1080, %v1010
        %v1082 = vpop.permute.xlu0 %1081
        %v1083 = vlaneseq
        %v1084 = vshrl.u32 %v1083, 7
        %v1085 = vadd.s32 %v1084, 96
        %1086 = vset.pattern.permute.xlu0 %v1085
        %1087 = vperm.xlu0 %1086, %v1010
        %v1088 = vpop.permute.xlu0 %1087
        %v1089 = vlaneseq
        %v1090 = vshrl.u32 %v1089, 7
        %v1091 = vadd.s32 %v1090, 104
        %1092 = vset.pattern.permute.xlu0 %v1091
        %1093 = vperm.xlu0 %1092, %v1010
        %v1094 = vpop.permute.xlu0 %1093
        %v1095 = vlaneseq
        %v1096 = vshrl.u32 %v1095, 7
        %v1097 = vadd.s32 %v1096, 112
        %1098 = vset.pattern.permute.xlu0 %v1097
        %1099 = vperm.xlu0 %1098, %v1010
        %v1100 = vpop.permute.xlu0 %1099
        %v1101 = vlaneseq
        %v1102 = vshrl.u32 %v1101, 7
        %v1103 = vadd.s32 %v1102, 120
        %1104 = vset.pattern.permute.xlu0 %v1103
        %1105 = vperm.xlu0 %1104, %v1010
        %v1106 = vpop.permute.xlu0 %1105
        %v1107 = vperm.slane %v621, 5
        %v1108 = vlaneseq
        %v1109 = vshrl.u32 %v1108, 7
        %1111 = vset.pattern.permute.xlu0 %v1109
        %1112 = vperm.xlu0 %1111, %v1107
        %v1113 = vpop.permute.xlu0 %1112
        %v1114 = vlaneseq
        %v1115 = vshrl.u32 %v1114, 7
        %v1116 = vadd.s32 %v1115, 8
        %1117 = vset.pattern.permute.xlu0 %v1116
        %1118 = vperm.xlu0 %1117, %v1107
        %v1119 = vpop.permute.xlu0 %1118
        %v1120 = vlaneseq
        %v1121 = vshrl.u32 %v1120, 7
        %v1122 = vadd.s32 %v1121, 16
        %1123 = vset.pattern.permute.xlu0 %v1122
        %1124 = vperm.xlu0 %1123, %v1107
        %v1125 = vpop.permute.xlu0 %1124
        %v1126 = vlaneseq
        %v1127 = vshrl.u32 %v1126, 7
        %v1128 = vadd.s32 %v1127, 24
        %1129 = vset.pattern.permute.xlu0 %v1128
        %1130 = vperm.xlu0 %1129, %v1107
        %v1131 = vpop.permute.xlu0 %1130
        %v1132 = vlaneseq
        %v1133 = vshrl.u32 %v1132, 7
        %v1134 = vadd.s32 %v1133, 32
        %1135 = vset.pattern.permute.xlu0 %v1134
        %1136 = vperm.xlu0 %1135, %v1107
        %v1137 = vpop.permute.xlu0 %1136
        %v1138 = vlaneseq
        %v1139 = vshrl.u32 %v1138, 7
        %v1140 = vadd.s32 %v1139, 40
        %1141 = vset.pattern.permute.xlu0 %v1140
        %1142 = vperm.xlu0 %1141, %v1107
        %v1143 = vpop.permute.xlu0 %1142
        %v1144 = vlaneseq
        %v1145 = vshrl.u32 %v1144, 7
        %v1146 = vadd.s32 %v1145, 48
        %1147 = vset.pattern.permute.xlu0 %v1146
        %1148 = vperm.xlu0 %1147, %v1107
        %v1149 = vpop.permute.xlu0 %1148
        %v1150 = vlaneseq
        %v1151 = vshrl.u32 %v1150, 7
        %v1152 = vadd.s32 %v1151, 56
        %1153 = vset.pattern.permute.xlu0 %v1152
        %1154 = vperm.xlu0 %1153, %v1107
        %v1155 = vpop.permute.xlu0 %1154
        %v1156 = vlaneseq
        %v1157 = vshrl.u32 %v1156, 7
        %v1158 = vadd.s32 %v1157, 64
        %1159 = vset.pattern.permute.xlu0 %v1158
        %1160 = vperm.xlu0 %1159, %v1107
        %v1161 = vpop.permute.xlu0 %1160
        %v1162 = vlaneseq
        %v1163 = vshrl.u32 %v1162, 7
        %v1164 = vadd.s32 %v1163, 72
        %1165 = vset.pattern.permute.xlu0 %v1164
        %1166 = vperm.xlu0 %1165, %v1107
        %v1167 = vpop.permute.xlu0 %1166
        %v1168 = vlaneseq
        %v1169 = vshrl.u32 %v1168, 7
        %v1170 = vadd.s32 %v1169, 80
        %1171 = vset.pattern.permute.xlu0 %v1170
        %1172 = vperm.xlu0 %1171, %v1107
        %v1173 = vpop.permute.xlu0 %1172
        %v1174 = vlaneseq
        %v1175 = vshrl.u32 %v1174, 7
        %v1176 = vadd.s32 %v1175, 88
        %1177 = vset.pattern.permute.xlu0 %v1176
        %1178 = vperm.xlu0 %1177, %v1107
        %v1179 = vpop.permute.xlu0 %1178
        %v1180 = vlaneseq
        %v1181 = vshrl.u32 %v1180, 7
        %v1182 = vadd.s32 %v1181, 96
        %1183 = vset.pattern.permute.xlu0 %v1182
        %1184 = vperm.xlu0 %1183, %v1107
        %v1185 = vpop.permute.xlu0 %1184
        %v1186 = vlaneseq
        %v1187 = vshrl.u32 %v1186, 7
        %v1188 = vadd.s32 %v1187, 104
        %1189 = vset.pattern.permute.xlu0 %v1188
        %1190 = vperm.xlu0 %1189, %v1107
        %v1191 = vpop.permute.xlu0 %1190
        %v1192 = vlaneseq
        %v1193 = vshrl.u32 %v1192, 7
        %v1194 = vadd.s32 %v1193, 112
        %1195 = vset.pattern.permute.xlu0 %v1194
        %1196 = vperm.xlu0 %1195, %v1107
        %v1197 = vpop.permute.xlu0 %1196
        %v1198 = vlaneseq
        %v1199 = vshrl.u32 %v1198, 7
        %v1200 = vadd.s32 %v1199, 120
        %1201 = vset.pattern.permute.xlu0 %v1200
        %1202 = vperm.xlu0 %1201, %v1107
        %v1203 = vpop.permute.xlu0 %1202
        %v1204 = vperm.slane %v621, 6
        %v1205 = vlaneseq
        %v1206 = vshrl.u32 %v1205, 7
        %1208 = vset.pattern.permute.xlu0 %v1206
        %1209 = vperm.xlu0 %1208, %v1204
        %v1210 = vpop.permute.xlu0 %1209
        %v1211 = vlaneseq
        %v1212 = vshrl.u32 %v1211, 7
        %v1213 = vadd.s32 %v1212, 8
        %1214 = vset.pattern.permute.xlu0 %v1213
        %1215 = vperm.xlu0 %1214, %v1204
        %v1216 = vpop.permute.xlu0 %1215
        %v1217 = vlaneseq
        %v1218 = vshrl.u32 %v1217, 7
        %v1219 = vadd.s32 %v1218, 16
        %1220 = vset.pattern.permute.xlu0 %v1219
        %1221 = vperm.xlu0 %1220, %v1204
        %v1222 = vpop.permute.xlu0 %1221
        %v1223 = vlaneseq
        %v1224 = vshrl.u32 %v1223, 7
        %v1225 = vadd.s32 %v1224, 24
        %1226 = vset.pattern.permute.xlu0 %v1225
        %1227 = vperm.xlu0 %1226, %v1204
        %v1228 = vpop.permute.xlu0 %1227
        %v1229 = vlaneseq
        %v1230 = vshrl.u32 %v1229, 7
        %v1231 = vadd.s32 %v1230, 32
        %1232 = vset.pattern.permute.xlu0 %v1231
        %1233 = vperm.xlu0 %1232, %v1204
        %v1234 = vpop.permute.xlu0 %1233
        %v1235 = vlaneseq
        %v1236 = vshrl.u32 %v1235, 7
        %v1237 = vadd.s32 %v1236, 40
        %1238 = vset.pattern.permute.xlu0 %v1237
        %1239 = vperm.xlu0 %1238, %v1204
        %v1240 = vpop.permute.xlu0 %1239
        %v1241 = vlaneseq
        %v1242 = vshrl.u32 %v1241, 7
        %v1243 = vadd.s32 %v1242, 48
        %1244 = vset.pattern.permute.xlu0 %v1243
        %1245 = vperm.xlu0 %1244, %v1204
        %v1246 = vpop.permute.xlu0 %1245
        %v1247 = vlaneseq
        %v1248 = vshrl.u32 %v1247, 7
        %v1249 = vadd.s32 %v1248, 56
        %1250 = vset.pattern.permute.xlu0 %v1249
        %1251 = vperm.xlu0 %1250, %v1204
        %v1252 = vpop.permute.xlu0 %1251
        %v1253 = vlaneseq
        %v1254 = vshrl.u32 %v1253, 7
        %v1255 = vadd.s32 %v1254, 64
        %1256 = vset.pattern.permute.xlu0 %v1255
        %1257 = vperm.xlu0 %1256, %v1204
        %v1258 = vpop.permute.xlu0 %1257
        %v1259 = vlaneseq
        %v1260 = vshrl.u32 %v1259, 7
        %v1261 = vadd.s32 %v1260, 72
        %1262 = vset.pattern.permute.xlu0 %v1261
        %1263 = vperm.xlu0 %1262, %v1204
        %v1264 = vpop.permute.xlu0 %1263
        %v1265 = vlaneseq
        %v1266 = vshrl.u32 %v1265, 7
        %v1267 = vadd.s32 %v1266, 80
        %1268 = vset.pattern.permute.xlu0 %v1267
        %1269 = vperm.xlu0 %1268, %v1204
        %v1270 = vpop.permute.xlu0 %1269
        %v1271 = vlaneseq
        %v1272 = vshrl.u32 %v1271, 7
        %v1273 = vadd.s32 %v1272, 88
        %1274 = vset.pattern.permute.xlu0 %v1273
        %1275 = vperm.xlu0 %1274, %v1204
        %v1276 = vpop.permute.xlu0 %1275
        %v1277 = vlaneseq
        %v1278 = vshrl.u32 %v1277, 7
        %v1279 = vadd.s32 %v1278, 96
        %1280 = vset.pattern.permute.xlu0 %v1279
        %1281 = vperm.xlu0 %1280, %v1204
        %v1282 = vpop.permute.xlu0 %1281
        %v1283 = vlaneseq
        %v1284 = vshrl.u32 %v1283, 7
        %v1285 = vadd.s32 %v1284, 104
        %1286 = vset.pattern.permute.xlu0 %v1285
        %1287 = vperm.xlu0 %1286, %v1204
        %v1288 = vpop.permute.xlu0 %1287
        %v1289 = vlaneseq
        %v1290 = vshrl.u32 %v1289, 7
        %v1291 = vadd.s32 %v1290, 112
        %1292 = vset.pattern.permute.xlu0 %v1291
        %1293 = vperm.xlu0 %1292, %v1204
        %v1294 = vpop.permute.xlu0 %1293
        %v1295 = vlaneseq
        %v1296 = vshrl.u32 %v1295, 7
        %v1297 = vadd.s32 %v1296, 120
        %1298 = vset.pattern.permute.xlu0 %v1297
        %1299 = vperm.xlu0 %1298, %v1204
        %v1300 = vpop.permute.xlu0 %1299
        %v1301 = vperm.slane %v621, 7
        %v1302 = vlaneseq
        %v1303 = vshrl.u32 %v1302, 7
        %1305 = vset.pattern.permute.xlu0 %v1303
        %1306 = vperm.xlu0 %1305, %v1301
        %v1307 = vpop.permute.xlu0 %1306
        %v1308 = vlaneseq
        %v1309 = vshrl.u32 %v1308, 7
        %v1310 = vadd.s32 %v1309, 8
        %1311 = vset.pattern.permute.xlu0 %v1310
        %1312 = vperm.xlu0 %1311, %v1301
        %v1313 = vpop.permute.xlu0 %1312
        %v1314 = vlaneseq
        %v1315 = vshrl.u32 %v1314, 7
        %v1316 = vadd.s32 %v1315, 16
        %1317 = vset.pattern.permute.xlu0 %v1316
        %1318 = vperm.xlu0 %1317, %v1301
        %v1319 = vpop.permute.xlu0 %1318
        %v1320 = vlaneseq
        %v1321 = vshrl.u32 %v1320, 7
        %v1322 = vadd.s32 %v1321, 24
        %1323 = vset.pattern.permute.xlu0 %v1322
        %1324 = vperm.xlu0 %1323, %v1301
        %v1325 = vpop.permute.xlu0 %1324
        %v1326 = vlaneseq
        %v1327 = vshrl.u32 %v1326, 7
        %v1328 = vadd.s32 %v1327, 32
        %1329 = vset.pattern.permute.xlu0 %v1328
        %1330 = vperm.xlu0 %1329, %v1301
        %v1331 = vpop.permute.xlu0 %1330
        %v1332 = vlaneseq
        %v1333 = vshrl.u32 %v1332, 7
        %v1334 = vadd.s32 %v1333, 40
        %1335 = vset.pattern.permute.xlu0 %v1334
        %1336 = vperm.xlu0 %1335, %v1301
        %v1337 = vpop.permute.xlu0 %1336
        %v1338 = vlaneseq
        %v1339 = vshrl.u32 %v1338, 7
        %v1340 = vadd.s32 %v1339, 48
        %1341 = vset.pattern.permute.xlu0 %v1340
        %1342 = vperm.xlu0 %1341, %v1301
        %v1343 = vpop.permute.xlu0 %1342
        %v1344 = vlaneseq
        %v1345 = vshrl.u32 %v1344, 7
        %v1346 = vadd.s32 %v1345, 56
        %1347 = vset.pattern.permute.xlu0 %v1346
        %1348 = vperm.xlu0 %1347, %v1301
        %v1349 = vpop.permute.xlu0 %1348
        %v1350 = vlaneseq
        %v1351 = vshrl.u32 %v1350, 7
        %v1352 = vadd.s32 %v1351, 64
        %1353 = vset.pattern.permute.xlu0 %v1352
        %1354 = vperm.xlu0 %1353, %v1301
        %v1355 = vpop.permute.xlu0 %1354
        %v1356 = vlaneseq
        %v1357 = vshrl.u32 %v1356, 7
        %v1358 = vadd.s32 %v1357, 72
        %1359 = vset.pattern.permute.xlu0 %v1358
        %1360 = vperm.xlu0 %1359, %v1301
        %v1361 = vpop.permute.xlu0 %1360
        %v1362 = vlaneseq
        %v1363 = vshrl.u32 %v1362, 7
        %v1364 = vadd.s32 %v1363, 80
        %1365 = vset.pattern.permute.xlu0 %v1364
        %1366 = vperm.xlu0 %1365, %v1301
        %v1367 = vpop.permute.xlu0 %1366
        %v1368 = vlaneseq
        %v1369 = vshrl.u32 %v1368, 7
        %v1370 = vadd.s32 %v1369, 88
        %1371 = vset.pattern.permute.xlu0 %v1370
        %1372 = vperm.xlu0 %1371, %v1301
        %v1373 = vpop.permute.xlu0 %1372
        %v1374 = vlaneseq
        %v1375 = vshrl.u32 %v1374, 7
        %v1376 = vadd.s32 %v1375, 96
        %1377 = vset.pattern.permute.xlu0 %v1376
        %1378 = vperm.xlu0 %1377, %v1301
        %v1379 = vpop.permute.xlu0 %1378
        %v1380 = vlaneseq
        %v1381 = vshrl.u32 %v1380, 7
        %v1382 = vadd.s32 %v1381, 104
        %1383 = vset.pattern.permute.xlu0 %v1382
        %1384 = vperm.xlu0 %1383, %v1301
        %v1385 = vpop.permute.xlu0 %1384
        %v1386 = vlaneseq
        %v1387 = vshrl.u32 %v1386, 7
        %v1388 = vadd.s32 %v1387, 112
        %1389 = vset.pattern.permute.xlu0 %v1388
        %1390 = vperm.xlu0 %1389, %v1301
        %v1391 = vpop.permute.xlu0 %1390
        %v1392 = vlaneseq
        %v1393 = vshrl.u32 %v1392, 7
        %v1394 = vadd.s32 %v1393, 120
        %1395 = vset.pattern.permute.xlu0 %v1394
        %1396 = vperm.xlu0 %1395, %v1301
        %v1397 = vpop.permute.xlu0 %1396
        %vm1398 = vcmp.eq.s32.totalorder %v628, %v601
        %vm1399 = vcmp.eq.s32.totalorder %v634, %v601
        %vm1400 = vcmp.eq.s32.totalorder %v640, %v601
        %vm1401 = vcmp.eq.s32.totalorder %v646, %v601
        %vm1402 = vcmp.eq.s32.totalorder %v652, %v601
        %vm1403 = vcmp.eq.s32.totalorder %v658, %v601
        %vm1404 = vcmp.eq.s32.totalorder %v664, %v601
        %vm1405 = vcmp.eq.s32.totalorder %v670, %v601
        %vm1406 = vcmp.eq.s32.totalorder %v676, %v601
        %vm1407 = vcmp.eq.s32.totalorder %v682, %v601
        %vm1408 = vcmp.eq.s32.totalorder %v688, %v601
        %vm1409 = vcmp.eq.s32.totalorder %v694, %v601
        %vm1410 = vcmp.eq.s32.totalorder %v700, %v601
        %vm1411 = vcmp.eq.s32.totalorder %v706, %v601
        %vm1412 = vcmp.eq.s32.totalorder %v712, %v601
        %vm1413 = vcmp.eq.s32.totalorder %v718, %v601
        %vm1414 = vcmp.eq.s32.totalorder %v725, %v601
        %vm1415 = vcmp.eq.s32.totalorder %v731, %v601
        %vm1416 = vcmp.eq.s32.totalorder %v737, %v601
        %vm1417 = vcmp.eq.s32.totalorder %v743, %v601
        %vm1418 = vcmp.eq.s32.totalorder %v749, %v601
        %vm1419 = vcmp.eq.s32.totalorder %v755, %v601
        %vm1420 = vcmp.eq.s32.totalorder %v761, %v601
        %vm1421 = vcmp.eq.s32.totalorder %v767, %v601
        %vm1422 = vcmp.eq.s32.totalorder %v773, %v601
        %vm1423 = vcmp.eq.s32.totalorder %v779, %v601
        %vm1424 = vcmp.eq.s32.totalorder %v785, %v601
        %vm1425 = vcmp.eq.s32.totalorder %v791, %v601
        %vm1426 = vcmp.eq.s32.totalorder %v797, %v601
        %vm1427 = vcmp.eq.s32.totalorder %v803, %v601
        %vm1428 = vcmp.eq.s32.totalorder %v809, %v601
        %vm1429 = vcmp.eq.s32.totalorder %v815, %v601
        %vm1430 = vcmp.eq.s32.totalorder %v822, %v601
        %vm1431 = vcmp.eq.s32.totalorder %v828, %v601
        %vm1432 = vcmp.eq.s32.totalorder %v834, %v601
        %vm1433 = vcmp.eq.s32.totalorder %v840, %v601
        %vm1434 = vcmp.eq.s32.totalorder %v846, %v601
        %vm1435 = vcmp.eq.s32.totalorder %v852, %v601
        %vm1436 = vcmp.eq.s32.totalorder %v858, %v601
        %vm1437 = vcmp.eq.s32.totalorder %v864, %v601
        %vm1438 = vcmp.eq.s32.totalorder %v870, %v601
        %vm1439 = vcmp.eq.s32.totalorder %v876, %v601
        %vm1440 = vcmp.eq.s32.totalorder %v882, %v601
        %vm1441 = vcmp.eq.s32.totalorder %v888, %v601
        %vm1442 = vcmp.eq.s32.totalorder %v894, %v601
        %vm1443 = vcmp.eq.s32.totalorder %v900, %v601
        %vm1444 = vcmp.eq.s32.totalorder %v906, %v601
        %vm1445 = vcmp.eq.s32.totalorder %v912, %v601
        %vm1446 = vcmp.eq.s32.totalorder %v919, %v601
        %vm1447 = vcmp.eq.s32.totalorder %v925, %v601
        %vm1448 = vcmp.eq.s32.totalorder %v931, %v601
        %vm1449 = vcmp.eq.s32.totalorder %v937, %v601
        %vm1450 = vcmp.eq.s32.totalorder %v943, %v601
        %vm1451 = vcmp.eq.s32.totalorder %v949, %v601
        %vm1452 = vcmp.eq.s32.totalorder %v955, %v601
        %vm1453 = vcmp.eq.s32.totalorder %v961, %v601
        %vm1454 = vcmp.eq.s32.totalorder %v967, %v601
        %vm1455 = vcmp.eq.s32.totalorder %v973, %v601
        %vm1456 = vcmp.eq.s32.totalorder %v979, %v601
        %vm1457 = vcmp.eq.s32.totalorder %v985, %v601
        %vm1458 = vcmp.eq.s32.totalorder %v991, %v601
        %vm1459 = vcmp.eq.s32.totalorder %v997, %v601
        %vm1460 = vcmp.eq.s32.totalorder %v1003, %v601
        %vm1461 = vcmp.eq.s32.totalorder %v1009, %v601
        %vm1462 = vcmp.eq.s32.totalorder %v1016, %v601
        %vm1463 = vcmp.eq.s32.totalorder %v1022, %v601
        %vm1464 = vcmp.eq.s32.totalorder %v1028, %v601
        %vm1465 = vcmp.eq.s32.totalorder %v1034, %v601
        %vm1466 = vcmp.eq.s32.totalorder %v1040, %v601
        %vm1467 = vcmp.eq.s32.totalorder %v1046, %v601
        %vm1468 = vcmp.eq.s32.totalorder %v1052, %v601
        %vm1469 = vcmp.eq.s32.totalorder %v1058, %v601
        %vm1470 = vcmp.eq.s32.totalorder %v1064, %v601
        %vm1471 = vcmp.eq.s32.totalorder %v1070, %v601
        %vm1472 = vcmp.eq.s32.totalorder %v1076, %v601
        %vm1473 = vcmp.eq.s32.totalorder %v1082, %v601
        %vm1474 = vcmp.eq.s32.totalorder %v1088, %v601
        %vm1475 = vcmp.eq.s32.totalorder %v1094, %v601
        %vm1476 = vcmp.eq.s32.totalorder %v1100, %v601
        %vm1477 = vcmp.eq.s32.totalorder %v1106, %v601
        %vm1478 = vcmp.eq.s32.totalorder %v1113, %v601
        %vm1479 = vcmp.eq.s32.totalorder %v1119, %v601
        %vm1480 = vcmp.eq.s32.totalorder %v1125, %v601
        %vm1481 = vcmp.eq.s32.totalorder %v1131, %v601
        %vm1482 = vcmp.eq.s32.totalorder %v1137, %v601
        %vm1483 = vcmp.eq.s32.totalorder %v1143, %v601
        %vm1484 = vcmp.eq.s32.totalorder %v1149, %v601
        %vm1485 = vcmp.eq.s32.totalorder %v1155, %v601
        %vm1486 = vcmp.eq.s32.totalorder %v1161, %v601
        %vm1487 = vcmp.eq.s32.totalorder %v1167, %v601
        %vm1488 = vcmp.eq.s32.totalorder %v1173, %v601
        %vm1489 = vcmp.eq.s32.totalorder %v1179, %v601
        %vm1490 = vcmp.eq.s32.totalorder %v1185, %v601
        %vm1491 = vcmp.eq.s32.totalorder %v1191, %v601
        %vm1492 = vcmp.eq.s32.totalorder %v1197, %v601
        %vm1493 = vcmp.eq.s32.totalorder %v1203, %v601
        %vm1494 = vcmp.eq.s32.totalorder %v1210, %v601
        %vm1495 = vcmp.eq.s32.totalorder %v1216, %v601
        %vm1496 = vcmp.eq.s32.totalorder %v1222, %v601
        %vm1497 = vcmp.eq.s32.totalorder %v1228, %v601
        %vm1498 = vcmp.eq.s32.totalorder %v1234, %v601
        %vm1499 = vcmp.eq.s32.totalorder %v1240, %v601
        %vm1500 = vcmp.eq.s32.totalorder %v1246, %v601
        %vm1501 = vcmp.eq.s32.totalorder %v1252, %v601
        %vm1502 = vcmp.eq.s32.totalorder %v1258, %v601
        %vm1503 = vcmp.eq.s32.totalorder %v1264, %v601
        %vm1504 = vcmp.eq.s32.totalorder %v1270, %v601
        %vm1505 = vcmp.eq.s32.totalorder %v1276, %v601
        %vm1506 = vcmp.eq.s32.totalorder %v1282, %v601
        %vm1507 = vcmp.eq.s32.totalorder %v1288, %v601
        %vm1508 = vcmp.eq.s32.totalorder %v1294, %v601
        %vm1509 = vcmp.eq.s32.totalorder %v1300, %v601
        %vm1510 = vcmp.eq.s32.totalorder %v1307, %v601
        %vm1511 = vcmp.eq.s32.totalorder %v1313, %v601
        %vm1512 = vcmp.eq.s32.totalorder %v1319, %v601
        %vm1513 = vcmp.eq.s32.totalorder %v1325, %v601
        %vm1514 = vcmp.eq.s32.totalorder %v1331, %v601
        %vm1515 = vcmp.eq.s32.totalorder %v1337, %v601
        %vm1516 = vcmp.eq.s32.totalorder %v1343, %v601
        %vm1517 = vcmp.eq.s32.totalorder %v1349, %v601
        %vm1518 = vcmp.eq.s32.totalorder %v1355, %v601
        %vm1519 = vcmp.eq.s32.totalorder %v1361, %v601
        %vm1520 = vcmp.eq.s32.totalorder %v1367, %v601
        %vm1521 = vcmp.eq.s32.totalorder %v1373, %v601
        %vm1522 = vcmp.eq.s32.totalorder %v1379, %v601
        %vm1523 = vcmp.eq.s32.totalorder %v1385, %v601
        %vm1524 = vcmp.eq.s32.totalorder %v1391, %v601
        %vm1525 = vcmp.eq.s32.totalorder %v1397, %v601
        %v1526 = vsel %vm1398, 1, 0
        %v1527 = vsel %vm1399, 1, 0
        %v1528 = vsel %vm1400, 1, 0
        %v1529 = vsel %vm1401, 1, 0
        %v1530 = vsel %vm1402, 1, 0
        %v1531 = vsel %vm1403, 1, 0
        %v1532 = vsel %vm1404, 1, 0
        %v1533 = vsel %vm1405, 1, 0
        %v1534 = vsel %vm1406, 1, 0
        %v1535 = vsel %vm1407, 1, 0
        %v1536 = vsel %vm1408, 1, 0
        %v1537 = vsel %vm1409, 1, 0
        %v1538 = vsel %vm1410, 1, 0
        %v1539 = vsel %vm1411, 1, 0
        %v1540 = vsel %vm1412, 1, 0
        %v1541 = vsel %vm1413, 1, 0
        %v1542 = vsel %vm1414, 1, 0
        %v1543 = vsel %vm1415, 1, 0
        %v1544 = vsel %vm1416, 1, 0
        %v1545 = vsel %vm1417, 1, 0
        %v1546 = vsel %vm1418, 1, 0
        %v1547 = vsel %vm1419, 1, 0
        %v1548 = vsel %vm1420, 1, 0
        %v1549 = vsel %vm1421, 1, 0
        %v1550 = vsel %vm1422, 1, 0
        %v1551 = vsel %vm1423, 1, 0
        %v1552 = vsel %vm1424, 1, 0
        %v1553 = vsel %vm1425, 1, 0
        %v1554 = vsel %vm1426, 1, 0
        %v1555 = vsel %vm1427, 1, 0
        %v1556 = vsel %vm1428, 1, 0
        %v1557 = vsel %vm1429, 1, 0
        %v1558 = vsel %vm1430, 1, 0
        %v1559 = vsel %vm1431, 1, 0
        %v1560 = vsel %vm1432, 1, 0
        %v1561 = vsel %vm1433, 1, 0
        %v1562 = vsel %vm1434, 1, 0
        %v1563 = vsel %vm1435, 1, 0
        %v1564 = vsel %vm1436, 1, 0
        %v1565 = vsel %vm1437, 1, 0
        %v1566 = vsel %vm1438, 1, 0
        %v1567 = vsel %vm1439, 1, 0
        %v1568 = vsel %vm1440, 1, 0
        %v1569 = vsel %vm1441, 1, 0
        %v1570 = vsel %vm1442, 1, 0
        %v1571 = vsel %vm1443, 1, 0
        %v1572 = vsel %vm1444, 1, 0
        %v1573 = vsel %vm1445, 1, 0
        %v1574 = vsel %vm1446, 1, 0
        %v1575 = vsel %vm1447, 1, 0
        %v1576 = vsel %vm1448, 1, 0
        %v1577 = vsel %vm1449, 1, 0
        %v1578 = vsel %vm1450, 1, 0
        %v1579 = vsel %vm1451, 1, 0
        %v1580 = vsel %vm1452, 1, 0
        %v1581 = vsel %vm1453, 1, 0
        %v1582 = vsel %vm1454, 1, 0
        %v1583 = vsel %vm1455, 1, 0
        %v1584 = vsel %vm1456, 1, 0
        %v1585 = vsel %vm1457, 1, 0
        %v1586 = vsel %vm1458, 1, 0
        %v1587 = vsel %vm1459, 1, 0
        %v1588 = vsel %vm1460, 1, 0
        %v1589 = vsel %vm1461, 1, 0
        %v1590 = vsel %vm1462, 1, 0
        %v1591 = vsel %vm1463, 1, 0
        %v1592 = vsel %vm1464, 1, 0
        %v1593 = vsel %vm1465, 1, 0
        %v1594 = vsel %vm1466, 1, 0
        %v1595 = vsel %vm1467, 1, 0
        %v1596 = vsel %vm1468, 1, 0
        %v1597 = vsel %vm1469, 1, 0
        %v1598 = vsel %vm1470, 1, 0
        %v1599 = vsel %vm1471, 1, 0
        %v1600 = vsel %vm1472, 1, 0
        %v1601 = vsel %vm1473, 1, 0
        %v1602 = vsel %vm1474, 1, 0
        %v1603 = vsel %vm1475, 1, 0
        %v1604 = vsel %vm1476, 1, 0
        %v1605 = vsel %vm1477, 1, 0
        %v1606 = vsel %vm1478, 1, 0
        %v1607 = vsel %vm1479, 1, 0
        %v1608 = vsel %vm1480, 1, 0
        %v1609 = vsel %vm1481, 1, 0
        %v1610 = vsel %vm1482, 1, 0
        %v1611 = vsel %vm1483, 1, 0
        %v1612 = vsel %vm1484, 1, 0
        %v1613 = vsel %vm1485, 1, 0
        %v1614 = vsel %vm1486, 1, 0
        %v1615 = vsel %vm1487, 1, 0
        %v1616 = vsel %vm1488, 1, 0
        %v1617 = vsel %vm1489, 1, 0
        %v1618 = vsel %vm1490, 1, 0
        %v1619 = vsel %vm1491, 1, 0
        %v1620 = vsel %vm1492, 1, 0
        %v1621 = vsel %vm1493, 1, 0
        %v1622 = vsel %vm1494, 1, 0
        %v1623 = vsel %vm1495, 1, 0
        %v1624 = vsel %vm1496, 1, 0
        %v1625 = vsel %vm1497, 1, 0
        %v1626 = vsel %vm1498, 1, 0
        %v1627 = vsel %vm1499, 1, 0
        %v1628 = vsel %vm1500, 1, 0
        %v1629 = vsel %vm1501, 1, 0
        %v1630 = vsel %vm1502, 1, 0
        %v1631 = vsel %vm1503, 1, 0
        %v1632 = vsel %vm1504, 1, 0
        %v1633 = vsel %vm1505, 1, 0
        %v1634 = vsel %vm1506, 1, 0
        %v1635 = vsel %vm1507, 1, 0
        %v1636 = vsel %vm1508, 1, 0
        %v1637 = vsel %vm1509, 1, 0
        %v1638 = vsel %vm1510, 1, 0
        %v1639 = vsel %vm1511, 1, 0
        %v1640 = vsel %vm1512, 1, 0
        %v1641 = vsel %vm1513, 1, 0
        %v1642 = vsel %vm1514, 1, 0
        %v1643 = vsel %vm1515, 1, 0
        %v1644 = vsel %vm1516, 1, 0
        %v1645 = vsel %vm1517, 1, 0
        %v1646 = vsel %vm1518, 1, 0
        %v1647 = vsel %vm1519, 1, 0
        %v1648 = vsel %vm1520, 1, 0
        %v1649 = vsel %vm1521, 1, 0
        %v1650 = vsel %vm1522, 1, 0
        %v1651 = vsel %vm1523, 1, 0
        %v1652 = vsel %vm1524, 1, 0
        %v1653 = vsel %vm1525, 1, 0
        %v1654 = vcvt.s32.f32 %v1526
        %v1655 = vcvt.s32.f32 %v1527
        %v1656 = vcvt.s32.f32 %v1528
        %v1657 = vcvt.s32.f32 %v1529
        %v1658 = vcvt.s32.f32 %v1530
        %v1659 = vcvt.s32.f32 %v1531
        %v1660 = vcvt.s32.f32 %v1532
        %v1661 = vcvt.s32.f32 %v1533
        %v1662 = vcvt.s32.f32 %v1534
        %v1663 = vcvt.s32.f32 %v1535
        %v1664 = vcvt.s32.f32 %v1536
        %v1665 = vcvt.s32.f32 %v1537
        %v1666 = vcvt.s32.f32 %v1538
        %v1667 = vcvt.s32.f32 %v1539
        %v1668 = vcvt.s32.f32 %v1540
        %v1669 = vcvt.s32.f32 %v1541
        %v1670 = vcvt.s32.f32 %v1542
        %v1671 = vcvt.s32.f32 %v1543
        %v1672 = vcvt.s32.f32 %v1544
        %v1673 = vcvt.s32.f32 %v1545
        %v1674 = vcvt.s32.f32 %v1546
        %v1675 = vcvt.s32.f32 %v1547
        %v1676 = vcvt.s32.f32 %v1548
        %v1677 = vcvt.s32.f32 %v1549
        %v1678 = vcvt.s32.f32 %v1550
        %v1679 = vcvt.s32.f32 %v1551
        %v1680 = vcvt.s32.f32 %v1552
        %v1681 = vcvt.s32.f32 %v1553
        %v1682 = vcvt.s32.f32 %v1554
        %v1683 = vcvt.s32.f32 %v1555
        %v1684 = vcvt.s32.f32 %v1556
        %v1685 = vcvt.s32.f32 %v1557
        %v1686 = vcvt.s32.f32 %v1558
        %v1687 = vcvt.s32.f32 %v1559
        %v1688 = vcvt.s32.f32 %v1560
        %v1689 = vcvt.s32.f32 %v1561
        %v1690 = vcvt.s32.f32 %v1562
        %v1691 = vcvt.s32.f32 %v1563
        %v1692 = vcvt.s32.f32 %v1564
        %v1693 = vcvt.s32.f32 %v1565
        %v1694 = vcvt.s32.f32 %v1566
        %v1695 = vcvt.s32.f32 %v1567
        %v1696 = vcvt.s32.f32 %v1568
        %v1697 = vcvt.s32.f32 %v1569
        %v1698 = vcvt.s32.f32 %v1570
        %v1699 = vcvt.s32.f32 %v1571
        %v1700 = vcvt.s32.f32 %v1572
        %v1701 = vcvt.s32.f32 %v1573
        %v1702 = vcvt.s32.f32 %v1574
        %v1703 = vcvt.s32.f32 %v1575
        %v1704 = vcvt.s32.f32 %v1576
        %v1705 = vcvt.s32.f32 %v1577
        %v1706 = vcvt.s32.f32 %v1578
        %v1707 = vcvt.s32.f32 %v1579
        %v1708 = vcvt.s32.f32 %v1580
        %v1709 = vcvt.s32.f32 %v1581
        %v1710 = vcvt.s32.f32 %v1582
        %v1711 = vcvt.s32.f32 %v1583
        %v1712 = vcvt.s32.f32 %v1584
        %v1713 = vcvt.s32.f32 %v1585
        %v1714 = vcvt.s32.f32 %v1586
        %v1715 = vcvt.s32.f32 %v1587
        %v1716 = vcvt.s32.f32 %v1588
        %v1717 = vcvt.s32.f32 %v1589
        %v1718 = vcvt.s32.f32 %v1590
        %v1719 = vcvt.s32.f32 %v1591
        %v1720 = vcvt.s32.f32 %v1592
        %v1721 = vcvt.s32.f32 %v1593
        %v1722 = vcvt.s32.f32 %v1594
        %v1723 = vcvt.s32.f32 %v1595
        %v1724 = vcvt.s32.f32 %v1596
        %v1725 = vcvt.s32.f32 %v1597
        %v1726 = vcvt.s32.f32 %v1598
        %v1727 = vcvt.s32.f32 %v1599
        %v1728 = vcvt.s32.f32 %v1600
        %v1729 = vcvt.s32.f32 %v1601
        %v1730 = vcvt.s32.f32 %v1602
        %v1731 = vcvt.s32.f32 %v1603
        %v1732 = vcvt.s32.f32 %v1604
        %v1733 = vcvt.s32.f32 %v1605
        %v1734 = vcvt.s32.f32 %v1606
        %v1735 = vcvt.s32.f32 %v1607
        %v1736 = vcvt.s32.f32 %v1608
        %v1737 = vcvt.s32.f32 %v1609
        %v1738 = vcvt.s32.f32 %v1610
        %v1739 = vcvt.s32.f32 %v1611
        %v1740 = vcvt.s32.f32 %v1612
        %v1741 = vcvt.s32.f32 %v1613
        %v1742 = vcvt.s32.f32 %v1614
        %v1743 = vcvt.s32.f32 %v1615
        %v1744 = vcvt.s32.f32 %v1616
        %v1745 = vcvt.s32.f32 %v1617
        %v1746 = vcvt.s32.f32 %v1618
        %v1747 = vcvt.s32.f32 %v1619
        %v1748 = vcvt.s32.f32 %v1620
        %v1749 = vcvt.s32.f32 %v1621
        %v1750 = vcvt.s32.f32 %v1622
        %v1751 = vcvt.s32.f32 %v1623
        %v1752 = vcvt.s32.f32 %v1624
        %v1753 = vcvt.s32.f32 %v1625
        %v1754 = vcvt.s32.f32 %v1626
        %v1755 = vcvt.s32.f32 %v1627
        %v1756 = vcvt.s32.f32 %v1628
        %v1757 = vcvt.s32.f32 %v1629
        %v1758 = vcvt.s32.f32 %v1630
        %v1759 = vcvt.s32.f32 %v1631
        %v1760 = vcvt.s32.f32 %v1632
        %v1761 = vcvt.s32.f32 %v1633
        %v1762 = vcvt.s32.f32 %v1634
        %v1763 = vcvt.s32.f32 %v1635
        %v1764 = vcvt.s32.f32 %v1636
        %v1765 = vcvt.s32.f32 %v1637
        %v1766 = vcvt.s32.f32 %v1638
        %v1767 = vcvt.s32.f32 %v1639
        %v1768 = vcvt.s32.f32 %v1640
        %v1769 = vcvt.s32.f32 %v1641
        %v1770 = vcvt.s32.f32 %v1642
        %v1771 = vcvt.s32.f32 %v1643
        %v1772 = vcvt.s32.f32 %v1644
        %v1773 = vcvt.s32.f32 %v1645
        %v1774 = vcvt.s32.f32 %v1646
        %v1775 = vcvt.s32.f32 %v1647
        %v1776 = vcvt.s32.f32 %v1648
        %v1777 = vcvt.s32.f32 %v1649
        %v1778 = vcvt.s32.f32 %v1650
        %v1779 = vcvt.s32.f32 %v1651
        %v1780 = vcvt.s32.f32 %v1652
        %v1781 = vcvt.s32.f32 %v1653
        %v1782 = vpack.c.bf16 %v1654, %v1654
        %v1783 = vpack.c.bf16 %v1655, %v1655
        %v1784 = vpack.c.bf16 %v1656, %v1656
        %v1785 = vpack.c.bf16 %v1657, %v1657
        %v1786 = vpack.c.bf16 %v1658, %v1658
        %v1787 = vpack.c.bf16 %v1659, %v1659
        %v1788 = vpack.c.bf16 %v1660, %v1660
        %v1789 = vpack.c.bf16 %v1661, %v1661
        %v1790 = vpack.c.bf16 %v1662, %v1662
        %v1791 = vpack.c.bf16 %v1663, %v1663
        %v1792 = vpack.c.bf16 %v1664, %v1664
        %v1793 = vpack.c.bf16 %v1665, %v1665
        %v1794 = vpack.c.bf16 %v1666, %v1666
        %v1795 = vpack.c.bf16 %v1667, %v1667
        %v1796 = vpack.c.bf16 %v1668, %v1668
        %v1797 = vpack.c.bf16 %v1669, %v1669
        %v1798 = vpack.c.bf16 %v1670, %v1670
        %v1799 = vpack.c.bf16 %v1671, %v1671
        %v1800 = vpack.c.bf16 %v1672, %v1672
        %v1801 = vpack.c.bf16 %v1673, %v1673
        %v1802 = vpack.c.bf16 %v1674, %v1674
        %v1803 = vpack.c.bf16 %v1675, %v1675
        %v1804 = vpack.c.bf16 %v1676, %v1676
        %v1805 = vpack.c.bf16 %v1677, %v1677
        %v1806 = vpack.c.bf16 %v1678, %v1678
        %v1807 = vpack.c.bf16 %v1679, %v1679
        %v1808 = vpack.c.bf16 %v1680, %v1680
        %v1809 = vpack.c.bf16 %v1681, %v1681
        %v1810 = vpack.c.bf16 %v1682, %v1682
        %v1811 = vpack.c.bf16 %v1683, %v1683
        %v1812 = vpack.c.bf16 %v1684, %v1684
        %v1813 = vpack.c.bf16 %v1685, %v1685
        %v1814 = vpack.c.bf16 %v1686, %v1686
        %v1815 = vpack.c.bf16 %v1687, %v1687
        %v1816 = vpack.c.bf16 %v1688, %v1688
        %v1817 = vpack.c.bf16 %v1689, %v1689
        %v1818 = vpack.c.bf16 %v1690, %v1690
        %v1819 = vpack.c.bf16 %v1691, %v1691
        %v1820 = vpack.c.bf16 %v1692, %v1692
        %v1821 = vpack.c.bf16 %v1693, %v1693
        %v1822 = vpack.c.bf16 %v1694, %v1694
        %v1823 = vpack.c.bf16 %v1695, %v1695
        %v1824 = vpack.c.bf16 %v1696, %v1696
        %v1825 = vpack.c.bf16 %v1697, %v1697
        %v1826 = vpack.c.bf16 %v1698, %v1698
        %v1827 = vpack.c.bf16 %v1699, %v1699
        %v1828 = vpack.c.bf16 %v1700, %v1700
        %v1829 = vpack.c.bf16 %v1701, %v1701
        %v1830 = vpack.c.bf16 %v1702, %v1702
        %v1831 = vpack.c.bf16 %v1703, %v1703
        %v1832 = vpack.c.bf16 %v1704, %v1704
        %v1833 = vpack.c.bf16 %v1705, %v1705
        %v1834 = vpack.c.bf16 %v1706, %v1706
        %v1835 = vpack.c.bf16 %v1707, %v1707
        %v1836 = vpack.c.bf16 %v1708, %v1708
        %v1837 = vpack.c.bf16 %v1709, %v1709
        %v1838 = vpack.c.bf16 %v1710, %v1710
        %v1839 = vpack.c.bf16 %v1711, %v1711
        %v1840 = vpack.c.bf16 %v1712, %v1712
        %v1841 = vpack.c.bf16 %v1713, %v1713
        %v1842 = vpack.c.bf16 %v1714, %v1714
        %v1843 = vpack.c.bf16 %v1715, %v1715
        %v1844 = vpack.c.bf16 %v1716, %v1716
        %v1845 = vpack.c.bf16 %v1717, %v1717
        %v1846 = vpack.c.bf16 %v1718, %v1718
        %v1847 = vpack.c.bf16 %v1719, %v1719
        %v1848 = vpack.c.bf16 %v1720, %v1720
        %v1849 = vpack.c.bf16 %v1721, %v1721
        %v1850 = vpack.c.bf16 %v1722, %v1722
        %v1851 = vpack.c.bf16 %v1723, %v1723
        %v1852 = vpack.c.bf16 %v1724, %v1724
        %v1853 = vpack.c.bf16 %v1725, %v1725
        %v1854 = vpack.c.bf16 %v1726, %v1726
        %v1855 = vpack.c.bf16 %v1727, %v1727
        %v1856 = vpack.c.bf16 %v1728, %v1728
        %v1857 = vpack.c.bf16 %v1729, %v1729
        %v1858 = vpack.c.bf16 %v1730, %v1730
        %v1859 = vpack.c.bf16 %v1731, %v1731
        %v1860 = vpack.c.bf16 %v1732, %v1732
        %v1861 = vpack.c.bf16 %v1733, %v1733
        %v1862 = vpack.c.bf16 %v1734, %v1734
        %v1863 = vpack.c.bf16 %v1735, %v1735
        %v1864 = vpack.c.bf16 %v1736, %v1736
        %v1865 = vpack.c.bf16 %v1737, %v1737
        %v1866 = vpack.c.bf16 %v1738, %v1738
        %v1867 = vpack.c.bf16 %v1739, %v1739
        %v1868 = vpack.c.bf16 %v1740, %v1740
        %v1869 = vpack.c.bf16 %v1741, %v1741
        %v1870 = vpack.c.bf16 %v1742, %v1742
        %v1871 = vpack.c.bf16 %v1743, %v1743
        %v1872 = vpack.c.bf16 %v1744, %v1744
        %v1873 = vpack.c.bf16 %v1745, %v1745
        %v1874 = vpack.c.bf16 %v1746, %v1746
        %v1875 = vpack.c.bf16 %v1747, %v1747
        %v1876 = vpack.c.bf16 %v1748, %v1748
        %v1877 = vpack.c.bf16 %v1749, %v1749
        %v1878 = vpack.c.bf16 %v1750, %v1750
        %v1879 = vpack.c.bf16 %v1751, %v1751
        %v1880 = vpack.c.bf16 %v1752, %v1752
        %v1881 = vpack.c.bf16 %v1753, %v1753
        %v1882 = vpack.c.bf16 %v1754, %v1754
        %v1883 = vpack.c.bf16 %v1755, %v1755
        %v1884 = vpack.c.bf16 %v1756, %v1756
        %v1885 = vpack.c.bf16 %v1757, %v1757
        %v1886 = vpack.c.bf16 %v1758, %v1758
        %v1887 = vpack.c.bf16 %v1759, %v1759
        %v1888 = vpack.c.bf16 %v1760, %v1760
        %v1889 = vpack.c.bf16 %v1761, %v1761
        %v1890 = vpack.c.bf16 %v1762, %v1762
        %v1891 = vpack.c.bf16 %v1763, %v1763
        %v1892 = vpack.c.bf16 %v1764, %v1764
        %v1893 = vpack.c.bf16 %v1765, %v1765
        %v1894 = vpack.c.bf16 %v1766, %v1766
        %v1895 = vpack.c.bf16 %v1767, %v1767
        %v1896 = vpack.c.bf16 %v1768, %v1768
        %v1897 = vpack.c.bf16 %v1769, %v1769
        %v1898 = vpack.c.bf16 %v1770, %v1770
        %v1899 = vpack.c.bf16 %v1771, %v1771
        %v1900 = vpack.c.bf16 %v1772, %v1772
        %v1901 = vpack.c.bf16 %v1773, %v1773
        %v1902 = vpack.c.bf16 %v1774, %v1774
        %v1903 = vpack.c.bf16 %v1775, %v1775
        %v1904 = vpack.c.bf16 %v1776, %v1776
        %v1905 = vpack.c.bf16 %v1777, %v1777
        %v1906 = vpack.c.bf16 %v1778, %v1778
        %v1907 = vpack.c.bf16 %v1779, %v1779
        %v1908 = vpack.c.bf16 %v1780, %v1780
        %v1909 = vpack.c.bf16 %v1781, %v1781
        %v1911 = vperm.slane %v620, 0
        %v2041 = vunpack.c.l.b16 %v1782
        %v2042 = vunpack.c.l.b16 %v1783
        %v2043 = vunpack.c.l.b16 %v1784
        %v2044 = vunpack.c.l.b16 %v1785
        %v2045 = vunpack.c.l.b16 %v1786
        %v2046 = vunpack.c.l.b16 %v1787
        %v2047 = vunpack.c.l.b16 %v1788
        %v2048 = vunpack.c.l.b16 %v1789
        %v2049 = vunpack.c.l.b16 %v1790
        %v2050 = vunpack.c.l.b16 %v1791
        %v2051 = vunpack.c.l.b16 %v1792
        %v2052 = vunpack.c.l.b16 %v1793
        %v2053 = vunpack.c.l.b16 %v1794
        %v2054 = vunpack.c.l.b16 %v1795
        %v2055 = vunpack.c.l.b16 %v1796
        %v2056 = vunpack.c.l.b16 %v1797
        %v2057 = vunpack.c.l.b16 %v1798
        %v2058 = vunpack.c.l.b16 %v1799
        %v2059 = vunpack.c.l.b16 %v1800
        %v2060 = vunpack.c.l.b16 %v1801
        %v2061 = vunpack.c.l.b16 %v1802
        %v2062 = vunpack.c.l.b16 %v1803
        %v2063 = vunpack.c.l.b16 %v1804
        %v2064 = vunpack.c.l.b16 %v1805
        %v2065 = vunpack.c.l.b16 %v1806
        %v2066 = vunpack.c.l.b16 %v1807
        %v2067 = vunpack.c.l.b16 %v1808
        %v2068 = vunpack.c.l.b16 %v1809
        %v2069 = vunpack.c.l.b16 %v1810
        %v2070 = vunpack.c.l.b16 %v1811
        %v2071 = vunpack.c.l.b16 %v1812
        %v2072 = vunpack.c.l.b16 %v1813
        %v2073 = vunpack.c.l.b16 %v1814
        %v2074 = vunpack.c.l.b16 %v1815
        %v2075 = vunpack.c.l.b16 %v1816
        %v2076 = vunpack.c.l.b16 %v1817
        %v2077 = vunpack.c.l.b16 %v1818
        %v2078 = vunpack.c.l.b16 %v1819
        %v2079 = vunpack.c.l.b16 %v1820
        %v2080 = vunpack.c.l.b16 %v1821
        %v2081 = vunpack.c.l.b16 %v1822
        %v2082 = vunpack.c.l.b16 %v1823
        %v2083 = vunpack.c.l.b16 %v1824
        %v2084 = vunpack.c.l.b16 %v1825
        %v2085 = vunpack.c.l.b16 %v1826
        %v2086 = vunpack.c.l.b16 %v1827
        %v2087 = vunpack.c.l.b16 %v1828
        %v2088 = vunpack.c.l.b16 %v1829
        %v2089 = vunpack.c.l.b16 %v1830
        %v2090 = vunpack.c.l.b16 %v1831
        %v2091 = vunpack.c.l.b16 %v1832
        %v2092 = vunpack.c.l.b16 %v1833
        %v2093 = vunpack.c.l.b16 %v1834
        %v2094 = vunpack.c.l.b16 %v1835
        %v2095 = vunpack.c.l.b16 %v1836
        %v2096 = vunpack.c.l.b16 %v1837
        %v2097 = vunpack.c.l.b16 %v1838
        %v2098 = vunpack.c.l.b16 %v1839
        %v2099 = vunpack.c.l.b16 %v1840
        %v2100 = vunpack.c.l.b16 %v1841
        %v2101 = vunpack.c.l.b16 %v1842
        %v2102 = vunpack.c.l.b16 %v1843
        %v2103 = vunpack.c.l.b16 %v1844
        %v2104 = vunpack.c.l.b16 %v1845
        %v2105 = vunpack.c.l.b16 %v1846
        %v2106 = vunpack.c.l.b16 %v1847
        %v2107 = vunpack.c.l.b16 %v1848
        %v2108 = vunpack.c.l.b16 %v1849
        %v2109 = vunpack.c.l.b16 %v1850
        %v2110 = vunpack.c.l.b16 %v1851
        %v2111 = vunpack.c.l.b16 %v1852
        %v2112 = vunpack.c.l.b16 %v1853
        %v2113 = vunpack.c.l.b16 %v1854
        %v2114 = vunpack.c.l.b16 %v1855
        %v2115 = vunpack.c.l.b16 %v1856
        %v2116 = vunpack.c.l.b16 %v1857
        %v2117 = vunpack.c.l.b16 %v1858
        %v2118 = vunpack.c.l.b16 %v1859
        %v2119 = vunpack.c.l.b16 %v1860
        %v2120 = vunpack.c.l.b16 %v1861
        %v2121 = vunpack.c.l.b16 %v1862
        %v2122 = vunpack.c.l.b16 %v1863
        %v2123 = vunpack.c.l.b16 %v1864
        %v2124 = vunpack.c.l.b16 %v1865
        %v2125 = vunpack.c.l.b16 %v1866
        %v2126 = vunpack.c.l.b16 %v1867
        %v2127 = vunpack.c.l.b16 %v1868
        %v2128 = vunpack.c.l.b16 %v1869
        %v2129 = vunpack.c.l.b16 %v1870
        %v2130 = vunpack.c.l.b16 %v1871
        %v2131 = vunpack.c.l.b16 %v1872
        %v2132 = vunpack.c.l.b16 %v1873
        %v2133 = vunpack.c.l.b16 %v1874
        %v2134 = vunpack.c.l.b16 %v1875
        %v2135 = vunpack.c.l.b16 %v1876
        %v2136 = vunpack.c.l.b16 %v1877
        %v2137 = vunpack.c.l.b16 %v1878
        %v2138 = vunpack.c.l.b16 %v1879
        %v2139 = vunpack.c.l.b16 %v1880
        %v2140 = vunpack.c.l.b16 %v1881
        %v2141 = vunpack.c.l.b16 %v1882
        %v2142 = vunpack.c.l.b16 %v1883
        %v2143 = vunpack.c.l.b16 %v1884
        %v2144 = vunpack.c.l.b16 %v1885
        %v2145 = vunpack.c.l.b16 %v1886
        %v2146 = vunpack.c.l.b16 %v1887
        %v2147 = vunpack.c.l.b16 %v1888
        %v2148 = vunpack.c.l.b16 %v1889
        %v2149 = vunpack.c.l.b16 %v1890
        %v2150 = vunpack.c.l.b16 %v1891
        %v2151 = vunpack.c.l.b16 %v1892
        %v2152 = vunpack.c.l.b16 %v1893
        %v2153 = vunpack.c.l.b16 %v1894
        %v2154 = vunpack.c.l.b16 %v1895
        %v2155 = vunpack.c.l.b16 %v1896
        %v2156 = vunpack.c.l.b16 %v1897
        %v2157 = vunpack.c.l.b16 %v1898
        %v2158 = vunpack.c.l.b16 %v1899
        %v2159 = vunpack.c.l.b16 %v1900
        %v2160 = vunpack.c.l.b16 %v1901
        %v2161 = vunpack.c.l.b16 %v1902
        %v2162 = vunpack.c.l.b16 %v1903
        %v2163 = vunpack.c.l.b16 %v1904
        %v2164 = vunpack.c.l.b16 %v1905
        %v2165 = vunpack.c.l.b16 %v1906
        %v2166 = vunpack.c.l.b16 %v1907
        %v2167 = vunpack.c.l.b16 %v1908
        %v2168 = vunpack.c.l.b16 %v1909
        %v2169 = vpack.c.b16 %v2042, %v2041
        %v2170 = vpack.c.b16 %v2044, %v2043
        %v2171 = vpack.c.b16 %v2046, %v2045
        %v2172 = vpack.c.b16 %v2048, %v2047
        %v2173 = vpack.c.b16 %v2050, %v2049
        %v2174 = vpack.c.b16 %v2052, %v2051
        %v2175 = vpack.c.b16 %v2054, %v2053
        %v2176 = vpack.c.b16 %v2056, %v2055
        %v2177 = vpack.c.b16 %v2058, %v2057
        %v2178 = vpack.c.b16 %v2060, %v2059
        %v2179 = vpack.c.b16 %v2062, %v2061
        %v2180 = vpack.c.b16 %v2064, %v2063
        %v2181 = vpack.c.b16 %v2066, %v2065
        %v2182 = vpack.c.b16 %v2068, %v2067
        %v2183 = vpack.c.b16 %v2070, %v2069
        %v2184 = vpack.c.b16 %v2072, %v2071
        %v2185 = vpack.c.b16 %v2074, %v2073
        %v2186 = vpack.c.b16 %v2076, %v2075
        %v2187 = vpack.c.b16 %v2078, %v2077
        %v2188 = vpack.c.b16 %v2080, %v2079
        %v2189 = vpack.c.b16 %v2082, %v2081
        %v2190 = vpack.c.b16 %v2084, %v2083
        %v2191 = vpack.c.b16 %v2086, %v2085
        %v2192 = vpack.c.b16 %v2088, %v2087
        %v2193 = vpack.c.b16 %v2090, %v2089
        %v2194 = vpack.c.b16 %v2092, %v2091
        %v2195 = vpack.c.b16 %v2094, %v2093
        %v2196 = vpack.c.b16 %v2096, %v2095
        %v2197 = vpack.c.b16 %v2098, %v2097
        %v2198 = vpack.c.b16 %v2100, %v2099
        %v2199 = vpack.c.b16 %v2102, %v2101
        %v2200 = vpack.c.b16 %v2104, %v2103
        %v2201 = vpack.c.b16 %v2106, %v2105
        %v2202 = vpack.c.b16 %v2108, %v2107
        %v2203 = vpack.c.b16 %v2110, %v2109
        %v2204 = vpack.c.b16 %v2112, %v2111
        %v2205 = vpack.c.b16 %v2114, %v2113
        %v2206 = vpack.c.b16 %v2116, %v2115
        %v2207 = vpack.c.b16 %v2118, %v2117
        %v2208 = vpack.c.b16 %v2120, %v2119
        %v2209 = vpack.c.b16 %v2122, %v2121
        %v2210 = vpack.c.b16 %v2124, %v2123
        %v2211 = vpack.c.b16 %v2126, %v2125
        %v2212 = vpack.c.b16 %v2128, %v2127
        %v2213 = vpack.c.b16 %v2130, %v2129
        %v2214 = vpack.c.b16 %v2132, %v2131
        %v2215 = vpack.c.b16 %v2134, %v2133
        %v2216 = vpack.c.b16 %v2136, %v2135
        %v2217 = vpack.c.b16 %v2138, %v2137
        %v2218 = vpack.c.b16 %v2140, %v2139
        %v2219 = vpack.c.b16 %v2142, %v2141
        %v2220 = vpack.c.b16 %v2144, %v2143
        %v2221 = vpack.c.b16 %v2146, %v2145
        %v2222 = vpack.c.b16 %v2148, %v2147
        %v2223 = vpack.c.b16 %v2150, %v2149
        %v2224 = vpack.c.b16 %v2152, %v2151
        %v2225 = vpack.c.b16 %v2154, %v2153
        %v2226 = vpack.c.b16 %v2156, %v2155
        %v2227 = vpack.c.b16 %v2158, %v2157
        %v2228 = vpack.c.b16 %v2160, %v2159
        %v2229 = vpack.c.b16 %v2162, %v2161
        %v2230 = vpack.c.b16 %v2164, %v2163
        %v2231 = vpack.c.b16 %v2166, %v2165
        %v2232 = vpack.c.b16 %v2168, %v2167
        %v2237 = vunpack.c.l.b16 %v616
        %v2238 = vunpack.c.l.b16 %v617
        %v2239 = vunpack.c.l.b16 %v618
        %v2240 = vunpack.c.l.b16 %v619
        %v2241 = vpack.c.b16 %v2238, %v2237
        %v2242 = vpack.c.b16 %v2240, %v2239
        %vm2245 = vcmask 261120
        %v2247 = vsel %vm2245, %v2169, 0
        %v2250 = vsel %vm2245, %v2170, 0
        %v2253 = vsel %vm2245, %v2171, 0
        %v2256 = vsel %vm2245, %v2172, 0
        %v2259 = vsel %vm2245, %v2173, 0
        %v2262 = vsel %vm2245, %v2174, 0
        %v2265 = vsel %vm2245, %v2175, 0
        %v2268 = vsel %vm2245, %v2176, 0
        %v2271 = vsel %vm2245, %v2177, 0
        %v2274 = vsel %vm2245, %v2178, 0
        %v2277 = vsel %vm2245, %v2179, 0
        %v2280 = vsel %vm2245, %v2180, 0
        %v2283 = vsel %vm2245, %v2181, 0
        %v2286 = vsel %vm2245, %v2182, 0
        %v2289 = vsel %vm2245, %v2183, 0
        %v2292 = vsel %vm2245, %v2184, 0
        %v2295 = vsel %vm2245, %v2185, 0
        %v2298 = vsel %vm2245, %v2186, 0
        %v2301 = vsel %vm2245, %v2187, 0
        %v2304 = vsel %vm2245, %v2188, 0
        %v2307 = vsel %vm2245, %v2189, 0
        %v2310 = vsel %vm2245, %v2190, 0
        %v2313 = vsel %vm2245, %v2191, 0
        %v2316 = vsel %vm2245, %v2192, 0
        %v2319 = vsel %vm2245, %v2193, 0
        %v2322 = vsel %vm2245, %v2194, 0
        %v2325 = vsel %vm2245, %v2195, 0
        %v2328 = vsel %vm2245, %v2196, 0
        %v2331 = vsel %vm2245, %v2197, 0
        %v2334 = vsel %vm2245, %v2198, 0
        %v2337 = vsel %vm2245, %v2199, 0
        %v2340 = vsel %vm2245, %v2200, 0
        %v2343 = vsel %vm2245, %v2201, 0
        %v2346 = vsel %vm2245, %v2202, 0
        %v2349 = vsel %vm2245, %v2203, 0
        %v2352 = vsel %vm2245, %v2204, 0
        %v2355 = vsel %vm2245, %v2205, 0
        %v2358 = vsel %vm2245, %v2206, 0
        %v2361 = vsel %vm2245, %v2207, 0
        %v2364 = vsel %vm2245, %v2208, 0
        %v2367 = vsel %vm2245, %v2209, 0
        %v2370 = vsel %vm2245, %v2210, 0
        %v2373 = vsel %vm2245, %v2211, 0
        %v2376 = vsel %vm2245, %v2212, 0
        %v2379 = vsel %vm2245, %v2213, 0
        %v2382 = vsel %vm2245, %v2214, 0
        %v2385 = vsel %vm2245, %v2215, 0
        %v2388 = vsel %vm2245, %v2216, 0
        %v2391 = vsel %vm2245, %v2217, 0
        %v2394 = vsel %vm2245, %v2218, 0
        %v2397 = vsel %vm2245, %v2219, 0
        %v2400 = vsel %vm2245, %v2220, 0
        %v2403 = vsel %vm2245, %v2221, 0
        %v2406 = vsel %vm2245, %v2222, 0
        %v2409 = vsel %vm2245, %v2223, 0
        %v2412 = vsel %vm2245, %v2224, 0
        %v2415 = vsel %vm2245, %v2225, 0
        %v2418 = vsel %vm2245, %v2226, 0
        %v2421 = vsel %vm2245, %v2227, 0
        %v2424 = vsel %vm2245, %v2228, 0
        %v2427 = vsel %vm2245, %v2229, 0
        %v2430 = vsel %vm2245, %v2230, 0
        %v2433 = vsel %vm2245, %v2231, 0
        %v2436 = vsel %vm2245, %v2232, 0
        %2438 = vmatpush.bf16.msra.mxu0 0
        %2439 = vmatpush.bf16.msra.mxu0 0
        %2440 = vmatpush.bf16.msra.mxu0 0
        %2441 = vmatpush.bf16.msra.mxu0 0
        %2442 = vmatpush.bf16.msra.mxu0 0
        %2443 = vmatpush.bf16.msra.mxu0 0
        %2444 = vmatpush.bf16.msra.mxu0 %v2242
        %2445 = vmatpush.bf16.msra.mxu0 %v2241
        %2446 = vmatmul.bf16.gmra.mxu0 %v2247
        %v2447 = vpop.f32.mrf.mxu0
        %v2448 = vadd.f32 %v1911, %v2447
        %v2449 = vpop.f32.mrf.mxu0
        %v2450 = vadd.f32 %v1911, %v2449
        %2451 = vmatmul.bf16.gmra.mxu0 %v2250
        %v2452 = vpop.f32.mrf.mxu0
        %v2453 = vadd.f32 %v1911, %v2452
        %v2454 = vpop.f32.mrf.mxu0
        %v2455 = vadd.f32 %v1911, %v2454
        %2456 = vmatmul.bf16.gmra.mxu0 %v2253
        %v2457 = vpop.f32.mrf.mxu0
        %v2458 = vadd.f32 %v1911, %v2457
        %v2459 = vpop.f32.mrf.mxu0
        %v2460 = vadd.f32 %v1911, %v2459
        %2461 = vmatmul.bf16.gmra.mxu0 %v2256
        %v2462 = vpop.f32.mrf.mxu0
        %v2463 = vadd.f32 %v1911, %v2462
        %v2464 = vpop.f32.mrf.mxu0
        %v2465 = vadd.f32 %v1911, %v2464
        %2466 = vmatmul.bf16.gmra.mxu0 %v2259
        %v2467 = vpop.f32.mrf.mxu0
        %v2468 = vadd.f32 %v1911, %v2467
        %v2469 = vpop.f32.mrf.mxu0
        %v2470 = vadd.f32 %v1911, %v2469
        %2471 = vmatmul.bf16.gmra.mxu0 %v2262
        %v2472 = vpop.f32.mrf.mxu0
        %v2473 = vadd.f32 %v1911, %v2472
        %v2474 = vpop.f32.mrf.mxu0
        %v2475 = vadd.f32 %v1911, %v2474
        %2476 = vmatmul.bf16.gmra.mxu0 %v2265
        %v2477 = vpop.f32.mrf.mxu0
        %v2478 = vadd.f32 %v1911, %v2477
        %v2479 = vpop.f32.mrf.mxu0
        %v2480 = vadd.f32 %v1911, %v2479
        %2481 = vmatmul.bf16.gmra.mxu0 %v2268
        %v2482 = vpop.f32.mrf.mxu0
        %v2483 = vadd.f32 %v1911, %v2482
        %v2484 = vpop.f32.mrf.mxu0
        %v2485 = vadd.f32 %v1911, %v2484
        %2486 = vmatmul.bf16.gmra.mxu0 %v2271
        %v2487 = vpop.f32.mrf.mxu0
        %v2488 = vadd.f32 %v1911, %v2487
        %v2489 = vpop.f32.mrf.mxu0
        %v2490 = vadd.f32 %v1911, %v2489
        %2491 = vmatmul.bf16.gmra.mxu0 %v2274
        %v2492 = vpop.f32.mrf.mxu0
        %v2493 = vadd.f32 %v1911, %v2492
        %v2494 = vpop.f32.mrf.mxu0
        %v2495 = vadd.f32 %v1911, %v2494
        %2496 = vmatmul.bf16.gmra.mxu0 %v2277
        %v2497 = vpop.f32.mrf.mxu0
        %v2498 = vadd.f32 %v1911, %v2497
        %v2499 = vpop.f32.mrf.mxu0
        %v2500 = vadd.f32 %v1911, %v2499
        %2501 = vmatmul.bf16.gmra.mxu0 %v2280
        %v2502 = vpop.f32.mrf.mxu0
        %v2503 = vadd.f32 %v1911, %v2502
        %v2504 = vpop.f32.mrf.mxu0
        %v2505 = vadd.f32 %v1911, %v2504
        %2506 = vmatmul.bf16.gmra.mxu0 %v2283
        %v2507 = vpop.f32.mrf.mxu0
        %v2508 = vadd.f32 %v1911, %v2507
        %v2509 = vpop.f32.mrf.mxu0
        %v2510 = vadd.f32 %v1911, %v2509
        %2511 = vmatmul.bf16.gmra.mxu0 %v2286
        %v2512 = vpop.f32.mrf.mxu0
        %v2513 = vadd.f32 %v1911, %v2512
        %v2514 = vpop.f32.mrf.mxu0
        %v2515 = vadd.f32 %v1911, %v2514
        %2516 = vmatmul.bf16.gmra.mxu0 %v2289
        %v2517 = vpop.f32.mrf.mxu0
        %v2518 = vadd.f32 %v1911, %v2517
        %v2519 = vpop.f32.mrf.mxu0
        %v2520 = vadd.f32 %v1911, %v2519
        %2521 = vmatmul.bf16.gmra.mxu0 %v2292
        %v2522 = vpop.f32.mrf.mxu0
        %v2523 = vadd.f32 %v1911, %v2522
        %v2524 = vpop.f32.mrf.mxu0
        %v2525 = vadd.f32 %v1911, %v2524
        %2526 = vmatmul.bf16.gmra.mxu0 %v2295
        %v2527 = vpop.f32.mrf.mxu0
        %v2528 = vadd.f32 %v1911, %v2527
        %v2529 = vpop.f32.mrf.mxu0
        %v2530 = vadd.f32 %v1911, %v2529
        %2531 = vmatmul.bf16.gmra.mxu0 %v2298
        %v2532 = vpop.f32.mrf.mxu0
        %v2533 = vadd.f32 %v1911, %v2532
        %v2534 = vpop.f32.mrf.mxu0
        %v2535 = vadd.f32 %v1911, %v2534
        %2536 = vmatmul.bf16.gmra.mxu0 %v2301
        %v2537 = vpop.f32.mrf.mxu0
        %v2538 = vadd.f32 %v1911, %v2537
        %v2539 = vpop.f32.mrf.mxu0
        %v2540 = vadd.f32 %v1911, %v2539
        %2541 = vmatmul.bf16.gmra.mxu0 %v2304
        %v2542 = vpop.f32.mrf.mxu0
        %v2543 = vadd.f32 %v1911, %v2542
        %v2544 = vpop.f32.mrf.mxu0
        %v2545 = vadd.f32 %v1911, %v2544
        %2546 = vmatmul.bf16.gmra.mxu0 %v2307
        %v2547 = vpop.f32.mrf.mxu0
        %v2548 = vadd.f32 %v1911, %v2547
        %v2549 = vpop.f32.mrf.mxu0
        %v2550 = vadd.f32 %v1911, %v2549
        %2551 = vmatmul.bf16.gmra.mxu0 %v2310
        %v2552 = vpop.f32.mrf.mxu0
        %v2553 = vadd.f32 %v1911, %v2552
        %v2554 = vpop.f32.mrf.mxu0
        %v2555 = vadd.f32 %v1911, %v2554
        %2556 = vmatmul.bf16.gmra.mxu0 %v2313
        %v2557 = vpop.f32.mrf.mxu0
        %v2558 = vadd.f32 %v1911, %v2557
        %v2559 = vpop.f32.mrf.mxu0
        %v2560 = vadd.f32 %v1911, %v2559
        %2561 = vmatmul.bf16.gmra.mxu0 %v2316
        %v2562 = vpop.f32.mrf.mxu0
        %v2563 = vadd.f32 %v1911, %v2562
        %v2564 = vpop.f32.mrf.mxu0
        %v2565 = vadd.f32 %v1911, %v2564
        %2566 = vmatmul.bf16.gmra.mxu0 %v2319
        %v2567 = vpop.f32.mrf.mxu0
        %v2568 = vadd.f32 %v1911, %v2567
        %v2569 = vpop.f32.mrf.mxu0
        %v2570 = vadd.f32 %v1911, %v2569
        %2571 = vmatmul.bf16.gmra.mxu0 %v2322
        %v2572 = vpop.f32.mrf.mxu0
        %v2573 = vadd.f32 %v1911, %v2572
        %v2574 = vpop.f32.mrf.mxu0
        %v2575 = vadd.f32 %v1911, %v2574
        %2576 = vmatmul.bf16.gmra.mxu0 %v2325
        %v2577 = vpop.f32.mrf.mxu0
        %v2578 = vadd.f32 %v1911, %v2577
        %v2579 = vpop.f32.mrf.mxu0
        %v2580 = vadd.f32 %v1911, %v2579
        %2581 = vmatmul.bf16.gmra.mxu0 %v2328
        %v2582 = vpop.f32.mrf.mxu0
        %v2583 = vadd.f32 %v1911, %v2582
        %v2584 = vpop.f32.mrf.mxu0
        %v2585 = vadd.f32 %v1911, %v2584
        %2586 = vmatmul.bf16.gmra.mxu0 %v2331
        %v2587 = vpop.f32.mrf.mxu0
        %v2588 = vadd.f32 %v1911, %v2587
        %v2589 = vpop.f32.mrf.mxu0
        %v2590 = vadd.f32 %v1911, %v2589
        %2591 = vmatmul.bf16.gmra.mxu0 %v2334
        %v2592 = vpop.f32.mrf.mxu0
        %v2593 = vadd.f32 %v1911, %v2592
        %v2594 = vpop.f32.mrf.mxu0
        %v2595 = vadd.f32 %v1911, %v2594
        %2596 = vmatmul.bf16.gmra.mxu0 %v2337
        %v2597 = vpop.f32.mrf.mxu0
        %v2598 = vadd.f32 %v1911, %v2597
        %v2599 = vpop.f32.mrf.mxu0
        %v2600 = vadd.f32 %v1911, %v2599
        %2601 = vmatmul.bf16.gmra.mxu0 %v2340
        %v2602 = vpop.f32.mrf.mxu0
        %v2603 = vadd.f32 %v1911, %v2602
        %v2604 = vpop.f32.mrf.mxu0
        %v2605 = vadd.f32 %v1911, %v2604
        %2606 = vmatmul.bf16.gmra.mxu0 %v2343
        %v2607 = vpop.f32.mrf.mxu0
        %v2608 = vadd.f32 %v1911, %v2607
        %v2609 = vpop.f32.mrf.mxu0
        %v2610 = vadd.f32 %v1911, %v2609
        %2611 = vmatmul.bf16.gmra.mxu0 %v2346
        %v2612 = vpop.f32.mrf.mxu0
        %v2613 = vadd.f32 %v1911, %v2612
        %v2614 = vpop.f32.mrf.mxu0
        %v2615 = vadd.f32 %v1911, %v2614
        %2616 = vmatmul.bf16.gmra.mxu0 %v2349
        %v2617 = vpop.f32.mrf.mxu0
        %v2618 = vadd.f32 %v1911, %v2617
        %v2619 = vpop.f32.mrf.mxu0
        %v2620 = vadd.f32 %v1911, %v2619
        %2621 = vmatmul.bf16.gmra.mxu0 %v2352
        %v2622 = vpop.f32.mrf.mxu0
        %v2623 = vadd.f32 %v1911, %v2622
        %v2624 = vpop.f32.mrf.mxu0
        %v2625 = vadd.f32 %v1911, %v2624
        %2626 = vmatmul.bf16.gmra.mxu0 %v2355
        %v2627 = vpop.f32.mrf.mxu0
        %v2628 = vadd.f32 %v1911, %v2627
        %v2629 = vpop.f32.mrf.mxu0
        %v2630 = vadd.f32 %v1911, %v2629
        %2631 = vmatmul.bf16.gmra.mxu0 %v2358
        %v2632 = vpop.f32.mrf.mxu0
        %v2633 = vadd.f32 %v1911, %v2632
        %v2634 = vpop.f32.mrf.mxu0
        %v2635 = vadd.f32 %v1911, %v2634
        %2636 = vmatmul.bf16.gmra.mxu0 %v2361
        %v2637 = vpop.f32.mrf.mxu0
        %v2638 = vadd.f32 %v1911, %v2637
        %v2639 = vpop.f32.mrf.mxu0
        %v2640 = vadd.f32 %v1911, %v2639
        %2641 = vmatmul.bf16.gmra.mxu0 %v2364
        %v2642 = vpop.f32.mrf.mxu0
        %v2643 = vadd.f32 %v1911, %v2642
        %v2644 = vpop.f32.mrf.mxu0
        %v2645 = vadd.f32 %v1911, %v2644
        %2646 = vmatmul.bf16.gmra.mxu0 %v2367
        %v2647 = vpop.f32.mrf.mxu0
        %v2648 = vadd.f32 %v1911, %v2647
        %v2649 = vpop.f32.mrf.mxu0
        %v2650 = vadd.f32 %v1911, %v2649
        %2651 = vmatmul.bf16.gmra.mxu0 %v2370
        %v2652 = vpop.f32.mrf.mxu0
        %v2653 = vadd.f32 %v1911, %v2652
        %v2654 = vpop.f32.mrf.mxu0
        %v2655 = vadd.f32 %v1911, %v2654
        %2656 = vmatmul.bf16.gmra.mxu0 %v2373
        %v2657 = vpop.f32.mrf.mxu0
        %v2658 = vadd.f32 %v1911, %v2657
        %v2659 = vpop.f32.mrf.mxu0
        %v2660 = vadd.f32 %v1911, %v2659
        %2661 = vmatmul.bf16.gmra.mxu0 %v2376
        %v2662 = vpop.f32.mrf.mxu0
        %v2663 = vadd.f32 %v1911, %v2662
        %v2664 = vpop.f32.mrf.mxu0
        %v2665 = vadd.f32 %v1911, %v2664
        %2666 = vmatmul.bf16.gmra.mxu0 %v2379
        %v2667 = vpop.f32.mrf.mxu0
        %v2668 = vadd.f32 %v1911, %v2667
        %v2669 = vpop.f32.mrf.mxu0
        %v2670 = vadd.f32 %v1911, %v2669
        %2671 = vmatmul.bf16.gmra.mxu0 %v2382
        %v2672 = vpop.f32.mrf.mxu0
        %v2673 = vadd.f32 %v1911, %v2672
        %v2674 = vpop.f32.mrf.mxu0
        %v2675 = vadd.f32 %v1911, %v2674
        %2676 = vmatmul.bf16.gmra.mxu0 %v2385
        %v2677 = vpop.f32.mrf.mxu0
        %v2678 = vadd.f32 %v1911, %v2677
        %v2679 = vpop.f32.mrf.mxu0
        %v2680 = vadd.f32 %v1911, %v2679
        %2681 = vmatmul.bf16.gmra.mxu0 %v2388
        %v2682 = vpop.f32.mrf.mxu0
        %v2683 = vadd.f32 %v1911, %v2682
        %v2684 = vpop.f32.mrf.mxu0
        %v2685 = vadd.f32 %v1911, %v2684
        %2686 = vmatmul.bf16.gmra.mxu0 %v2391
        %v2687 = vpop.f32.mrf.mxu0
        %v2688 = vadd.f32 %v1911, %v2687
        %v2689 = vpop.f32.mrf.mxu0
        %v2690 = vadd.f32 %v1911, %v2689
        %2691 = vmatmul.bf16.gmra.mxu0 %v2394
        %v2692 = vpop.f32.mrf.mxu0
        %v2693 = vadd.f32 %v1911, %v2692
        %v2694 = vpop.f32.mrf.mxu0
        %v2695 = vadd.f32 %v1911, %v2694
        %2696 = vmatmul.bf16.gmra.mxu0 %v2397
        %v2697 = vpop.f32.mrf.mxu0
        %v2698 = vadd.f32 %v1911, %v2697
        %v2699 = vpop.f32.mrf.mxu0
        %v2700 = vadd.f32 %v1911, %v2699
        %2701 = vmatmul.bf16.gmra.mxu0 %v2400
        %v2702 = vpop.f32.mrf.mxu0
        %v2703 = vadd.f32 %v1911, %v2702
        %v2704 = vpop.f32.mrf.mxu0
        %v2705 = vadd.f32 %v1911, %v2704
        %2706 = vmatmul.bf16.gmra.mxu0 %v2403
        %v2707 = vpop.f32.mrf.mxu0
        %v2708 = vadd.f32 %v1911, %v2707
        %v2709 = vpop.f32.mrf.mxu0
        %v2710 = vadd.f32 %v1911, %v2709
        %2711 = vmatmul.bf16.gmra.mxu0 %v2406
        %v2712 = vpop.f32.mrf.mxu0
        %v2713 = vadd.f32 %v1911, %v2712
        %v2714 = vpop.f32.mrf.mxu0
        %v2715 = vadd.f32 %v1911, %v2714
        %2716 = vmatmul.bf16.gmra.mxu0 %v2409
        %v2717 = vpop.f32.mrf.mxu0
        %v2718 = vadd.f32 %v1911, %v2717
        %v2719 = vpop.f32.mrf.mxu0
        %v2720 = vadd.f32 %v1911, %v2719
        %2721 = vmatmul.bf16.gmra.mxu0 %v2412
        %v2722 = vpop.f32.mrf.mxu0
        %v2723 = vadd.f32 %v1911, %v2722
        %v2724 = vpop.f32.mrf.mxu0
        %v2725 = vadd.f32 %v1911, %v2724
        %2726 = vmatmul.bf16.gmra.mxu0 %v2415
        %v2727 = vpop.f32.mrf.mxu0
        %v2728 = vadd.f32 %v1911, %v2727
        %v2729 = vpop.f32.mrf.mxu0
        %v2730 = vadd.f32 %v1911, %v2729
        %2731 = vmatmul.bf16.gmra.mxu0 %v2418
        %v2732 = vpop.f32.mrf.mxu0
        %v2733 = vadd.f32 %v1911, %v2732
        %v2734 = vpop.f32.mrf.mxu0
        %v2735 = vadd.f32 %v1911, %v2734
        %2736 = vmatmul.bf16.gmra.mxu0 %v2421
        %v2737 = vpop.f32.mrf.mxu0
        %v2738 = vadd.f32 %v1911, %v2737
        %v2739 = vpop.f32.mrf.mxu0
        %v2740 = vadd.f32 %v1911, %v2739
        %2741 = vmatmul.bf16.gmra.mxu0 %v2424
        %v2742 = vpop.f32.mrf.mxu0
        %v2743 = vadd.f32 %v1911, %v2742
        %v2744 = vpop.f32.mrf.mxu0
        %v2745 = vadd.f32 %v1911, %v2744
        %2746 = vmatmul.bf16.gmra.mxu0 %v2427
        %v2747 = vpop.f32.mrf.mxu0
        %v2748 = vadd.f32 %v1911, %v2747
        %v2749 = vpop.f32.mrf.mxu0
        %v2750 = vadd.f32 %v1911, %v2749
        %2751 = vmatmul.bf16.gmra.mxu0 %v2430
        %v2752 = vpop.f32.mrf.mxu0
        %v2753 = vadd.f32 %v1911, %v2752
        %v2754 = vpop.f32.mrf.mxu0
        %v2755 = vadd.f32 %v1911, %v2754
        %2756 = vmatmul.bf16.gmra.mxu0 %v2433
        %v2757 = vpop.f32.mrf.mxu0
        %v2758 = vadd.f32 %v1911, %v2757
        %v2759 = vpop.f32.mrf.mxu0
        %v2760 = vadd.f32 %v1911, %v2759
        %2761 = vmatmul.bf16.gmra.mxu0 %v2436
        %v2762 = vpop.f32.mrf.mxu0
        %v2763 = vadd.f32 %v1911, %v2762
        %v2764 = vpop.f32.mrf.mxu0
        %v2765 = vadd.f32 %v1911, %v2764
        %2766 = vdwg.mxu0
        %v2767 = vtanh.pop %v2448
        %v2768 = vtanh.pop %v2450
        %v2769 = vtanh.pop %v2453
        %v2770 = vtanh.pop %v2455
        %v2771 = vtanh.pop %v2458
        %v2772 = vtanh.pop %v2460
        %v2773 = vtanh.pop %v2463
        %v2774 = vtanh.pop %v2465
        %v2775 = vtanh.pop %v2468
        %v2776 = vtanh.pop %v2470
        %v2777 = vtanh.pop %v2473
        %v2778 = vtanh.pop %v2475
        %v2779 = vtanh.pop %v2478
        %v2780 = vtanh.pop %v2480
        %v2781 = vtanh.pop %v2483
        %v2782 = vtanh.pop %v2485
        %v2783 = vtanh.pop %v2488
        %v2784 = vtanh.pop %v2490
        %v2785 = vtanh.pop %v2493
        %v2786 = vtanh.pop %v2495
        %v2787 = vtanh.pop %v2498
        %v2788 = vtanh.pop %v2500
        %v2789 = vtanh.pop %v2503
        %v2790 = vtanh.pop %v2505
        %v2791 = vtanh.pop %v2508
        %v2792 = vtanh.pop %v2510
        %v2793 = vtanh.pop %v2513
        %v2794 = vtanh.pop %v2515
        %v2795 = vtanh.pop %v2518
        %v2796 = vtanh.pop %v2520
        %v2797 = vtanh.pop %v2523
        %v2798 = vtanh.pop %v2525
        %v2799 = vtanh.pop %v2528
        %v2800 = vtanh.pop %v2530
        %v2801 = vtanh.pop %v2533
        %v2802 = vtanh.pop %v2535
        %v2803 = vtanh.pop %v2538
        %v2804 = vtanh.pop %v2540
        %v2805 = vtanh.pop %v2543
        %v2806 = vtanh.pop %v2545
        %v2807 = vtanh.pop %v2548
        %v2808 = vtanh.pop %v2550
        %v2809 = vtanh.pop %v2553
        %v2810 = vtanh.pop %v2555
        %v2811 = vtanh.pop %v2558
        %v2812 = vtanh.pop %v2560
        %v2813 = vtanh.pop %v2563
        %v2814 = vtanh.pop %v2565
        %v2815 = vtanh.pop %v2568
        %v2816 = vtanh.pop %v2570
        %v2817 = vtanh.pop %v2573
        %v2818 = vtanh.pop %v2575
        %v2819 = vtanh.pop %v2578
        %v2820 = vtanh.pop %v2580
        %v2821 = vtanh.pop %v2583
        %v2822 = vtanh.pop %v2585
        %v2823 = vtanh.pop %v2588
        %v2824 = vtanh.pop %v2590
        %v2825 = vtanh.pop %v2593
        %v2826 = vtanh.pop %v2595
        %v2827 = vtanh.pop %v2598
        %v2828 = vtanh.pop %v2600
        %v2829 = vtanh.pop %v2603
        %v2830 = vtanh.pop %v2605
        %v2831 = vtanh.pop %v2608
        %v2832 = vtanh.pop %v2610
        %v2833 = vtanh.pop %v2613
        %v2834 = vtanh.pop %v2615
        %v2835 = vtanh.pop %v2618
        %v2836 = vtanh.pop %v2620
        %v2837 = vtanh.pop %v2623
        %v2838 = vtanh.pop %v2625
        %v2839 = vtanh.pop %v2628
        %v2840 = vtanh.pop %v2630
        %v2841 = vtanh.pop %v2633
        %v2842 = vtanh.pop %v2635
        %v2843 = vtanh.pop %v2638
        %v2844 = vtanh.pop %v2640
        %v2845 = vtanh.pop %v2643
        %v2846 = vtanh.pop %v2645
        %v2847 = vtanh.pop %v2648
        %v2848 = vtanh.pop %v2650
        %v2849 = vtanh.pop %v2653
        %v2850 = vtanh.pop %v2655
        %v2851 = vtanh.pop %v2658
        %v2852 = vtanh.pop %v2660
        %v2853 = vtanh.pop %v2663
        %v2854 = vtanh.pop %v2665
        %v2855 = vtanh.pop %v2668
        %v2856 = vtanh.pop %v2670
        %v2857 = vtanh.pop %v2673
        %v2858 = vtanh.pop %v2675
        %v2859 = vtanh.pop %v2678
        %v2860 = vtanh.pop %v2680
        %v2861 = vtanh.pop %v2683
        %v2862 = vtanh.pop %v2685
        %v2863 = vtanh.pop %v2688
        %v2864 = vtanh.pop %v2690
        %v2865 = vtanh.pop %v2693
        %v2866 = vtanh.pop %v2695
        %v2867 = vtanh.pop %v2698
        %v2868 = vtanh.pop %v2700
        %v2869 = vtanh.pop %v2703
        %v2870 = vtanh.pop %v2705
        %v2871 = vtanh.pop %v2708
        %v2872 = vtanh.pop %v2710
        %v2873 = vtanh.pop %v2713
        %v2874 = vtanh.pop %v2715
        %v2875 = vtanh.pop %v2718
        %v2876 = vtanh.pop %v2720
        %v2877 = vtanh.pop %v2723
        %v2878 = vtanh.pop %v2725
        %v2879 = vtanh.pop %v2728
        %v2880 = vtanh.pop %v2730
        %v2881 = vtanh.pop %v2733
        %v2882 = vtanh.pop %v2735
        %v2883 = vtanh.pop %v2738
        %v2884 = vtanh.pop %v2740
        %v2885 = vtanh.pop %v2743
        %v2886 = vtanh.pop %v2745
        %v2887 = vtanh.pop %v2748
        %v2888 = vtanh.pop %v2750
        %v2889 = vtanh.pop %v2753
        %v2890 = vtanh.pop %v2755
        %v2891 = vtanh.pop %v2758
        %v2892 = vtanh.pop %v2760
        %v2893 = vtanh.pop %v2763
        %v2894 = vtanh.pop %v2765
        %2895 = vadd.xlane.f32.xlu0 %v615
        %v2896 = vpop.xlane.xlu0 %2895
        %v2897 = vmax.f32 %v2896, 1.0
        %v2898 = vperm.slane %v615, 0
        %v2899 = vlaneseq
        %v2900 = vshrl.u32 %v2899, 7
        %2902 = vset.pattern.permute.xlu0 %v2900
        %2903 = vperm.xlu0 %2902, %v2898
        %v2904 = vpop.permute.xlu0 %2903
        %v2905 = vlaneseq
        %v2906 = vshrl.u32 %v2905, 7
        %v2907 = vadd.s32 %v2906, 8
        %2908 = vset.pattern.permute.xlu0 %v2907
        %2909 = vperm.xlu0 %2908, %v2898
        %v2910 = vpop.permute.xlu0 %2909
        %v2911 = vlaneseq
        %v2912 = vshrl.u32 %v2911, 7
        %v2913 = vadd.s32 %v2912, 16
        %2914 = vset.pattern.permute.xlu0 %v2913
        %2915 = vperm.xlu0 %2914, %v2898
        %v2916 = vpop.permute.xlu0 %2915
        %v2917 = vlaneseq
        %v2918 = vshrl.u32 %v2917, 7
        %v2919 = vadd.s32 %v2918, 24
        %2920 = vset.pattern.permute.xlu0 %v2919
        %2921 = vperm.xlu0 %2920, %v2898
        %v2922 = vpop.permute.xlu0 %2921
        %v2923 = vlaneseq
        %v2924 = vshrl.u32 %v2923, 7
        %v2925 = vadd.s32 %v2924, 32
        %2926 = vset.pattern.permute.xlu0 %v2925
        %2927 = vperm.xlu0 %2926, %v2898
        %v2928 = vpop.permute.xlu0 %2927
        %v2929 = vlaneseq
        %v2930 = vshrl.u32 %v2929, 7
        %v2931 = vadd.s32 %v2930, 40
        %2932 = vset.pattern.permute.xlu0 %v2931
        %2933 = vperm.xlu0 %2932, %v2898
        %v2934 = vpop.permute.xlu0 %2933
        %v2935 = vlaneseq
        %v2936 = vshrl.u32 %v2935, 7
        %v2937 = vadd.s32 %v2936, 48
        %2938 = vset.pattern.permute.xlu0 %v2937
        %2939 = vperm.xlu0 %2938, %v2898
        %v2940 = vpop.permute.xlu0 %2939
        %v2941 = vlaneseq
        %v2942 = vshrl.u32 %v2941, 7
        %v2943 = vadd.s32 %v2942, 56
        %2944 = vset.pattern.permute.xlu0 %v2943
        %2945 = vperm.xlu0 %2944, %v2898
        %v2946 = vpop.permute.xlu0 %2945
        %v2947 = vlaneseq
        %v2948 = vshrl.u32 %v2947, 7
        %v2949 = vadd.s32 %v2948, 64
        %2950 = vset.pattern.permute.xlu0 %v2949
        %2951 = vperm.xlu0 %2950, %v2898
        %v2952 = vpop.permute.xlu0 %2951
        %v2953 = vlaneseq
        %v2954 = vshrl.u32 %v2953, 7
        %v2955 = vadd.s32 %v2954, 72
        %2956 = vset.pattern.permute.xlu0 %v2955
        %2957 = vperm.xlu0 %2956, %v2898
        %v2958 = vpop.permute.xlu0 %2957
        %v2959 = vlaneseq
        %v2960 = vshrl.u32 %v2959, 7
        %v2961 = vadd.s32 %v2960, 80
        %2962 = vset.pattern.permute.xlu0 %v2961
        %2963 = vperm.xlu0 %2962, %v2898
        %v2964 = vpop.permute.xlu0 %2963
        %v2965 = vlaneseq
        %v2966 = vshrl.u32 %v2965, 7
        %v2967 = vadd.s32 %v2966, 88
        %2968 = vset.pattern.permute.xlu0 %v2967
        %2969 = vperm.xlu0 %2968, %v2898
        %v2970 = vpop.permute.xlu0 %2969
        %v2971 = vlaneseq
        %v2972 = vshrl.u32 %v2971, 7
        %v2973 = vadd.s32 %v2972, 96
        %2974 = vset.pattern.permute.xlu0 %v2973
        %2975 = vperm.xlu0 %2974, %v2898
        %v2976 = vpop.permute.xlu0 %2975
        %v2977 = vlaneseq
        %v2978 = vshrl.u32 %v2977, 7
        %v2979 = vadd.s32 %v2978, 104
        %2980 = vset.pattern.permute.xlu0 %v2979
        %2981 = vperm.xlu0 %2980, %v2898
        %v2982 = vpop.permute.xlu0 %2981
        %v2983 = vlaneseq
        %v2984 = vshrl.u32 %v2983, 7
        %v2985 = vadd.s32 %v2984, 112
        %2986 = vset.pattern.permute.xlu0 %v2985
        %2987 = vperm.xlu0 %2986, %v2898
        %v2988 = vpop.permute.xlu0 %2987
        %v2989 = vlaneseq
        %v2990 = vshrl.u32 %v2989, 7
        %v2991 = vadd.s32 %v2990, 120
        %2992 = vset.pattern.permute.xlu0 %v2991
        %2993 = vperm.xlu0 %2992, %v2898
        %v2994 = vpop.permute.xlu0 %2993
        %v2995 = vperm.slane %v615, 1
        %v2996 = vlaneseq
        %v2997 = vshrl.u32 %v2996, 7
        %2999 = vset.pattern.permute.xlu0 %v2997
        %3000 = vperm.xlu0 %2999, %v2995
        %v3001 = vpop.permute.xlu0 %3000
        %v3002 = vlaneseq
        %v3003 = vshrl.u32 %v3002, 7
        %v3004 = vadd.s32 %v3003, 8
        %3005 = vset.pattern.permute.xlu0 %v3004
        %3006 = vperm.xlu0 %3005, %v2995
        %v3007 = vpop.permute.xlu0 %3006
        %v3008 = vlaneseq
        %v3009 = vshrl.u32 %v3008, 7
        %v3010 = vadd.s32 %v3009, 16
        %3011 = vset.pattern.permute.xlu0 %v3010
        %3012 = vperm.xlu0 %3011, %v2995
        %v3013 = vpop.permute.xlu0 %3012
        %v3014 = vlaneseq
        %v3015 = vshrl.u32 %v3014, 7
        %v3016 = vadd.s32 %v3015, 24
        %3017 = vset.pattern.permute.xlu0 %v3016
        %3018 = vperm.xlu0 %3017, %v2995
        %v3019 = vpop.permute.xlu0 %3018
        %v3020 = vlaneseq
        %v3021 = vshrl.u32 %v3020, 7
        %v3022 = vadd.s32 %v3021, 32
        %3023 = vset.pattern.permute.xlu0 %v3022
        %3024 = vperm.xlu0 %3023, %v2995
        %v3025 = vpop.permute.xlu0 %3024
        %v3026 = vlaneseq
        %v3027 = vshrl.u32 %v3026, 7
        %v3028 = vadd.s32 %v3027, 40
        %3029 = vset.pattern.permute.xlu0 %v3028
        %3030 = vperm.xlu0 %3029, %v2995
        %v3031 = vpop.permute.xlu0 %3030
        %v3032 = vlaneseq
        %v3033 = vshrl.u32 %v3032, 7
        %v3034 = vadd.s32 %v3033, 48
        %3035 = vset.pattern.permute.xlu0 %v3034
        %3036 = vperm.xlu0 %3035, %v2995
        %v3037 = vpop.permute.xlu0 %3036
        %v3038 = vlaneseq
        %v3039 = vshrl.u32 %v3038, 7
        %v3040 = vadd.s32 %v3039, 56
        %3041 = vset.pattern.permute.xlu0 %v3040
        %3042 = vperm.xlu0 %3041, %v2995
        %v3043 = vpop.permute.xlu0 %3042
        %v3044 = vlaneseq
        %v3045 = vshrl.u32 %v3044, 7
        %v3046 = vadd.s32 %v3045, 64
        %3047 = vset.pattern.permute.xlu0 %v3046
        %3048 = vperm.xlu0 %3047, %v2995
        %v3049 = vpop.permute.xlu0 %3048
        %v3050 = vlaneseq
        %v3051 = vshrl.u32 %v3050, 7
        %v3052 = vadd.s32 %v3051, 72
        %3053 = vset.pattern.permute.xlu0 %v3052
        %3054 = vperm.xlu0 %3053, %v2995
        %v3055 = vpop.permute.xlu0 %3054
        %v3056 = vlaneseq
        %v3057 = vshrl.u32 %v3056, 7
        %v3058 = vadd.s32 %v3057, 80
        %3059 = vset.pattern.permute.xlu0 %v3058
        %3060 = vperm.xlu0 %3059, %v2995
        %v3061 = vpop.permute.xlu0 %3060
        %v3062 = vlaneseq
        %v3063 = vshrl.u32 %v3062, 7
        %v3064 = vadd.s32 %v3063, 88
        %3065 = vset.pattern.permute.xlu0 %v3064
        %3066 = vperm.xlu0 %3065, %v2995
        %v3067 = vpop.permute.xlu0 %3066
        %v3068 = vlaneseq
        %v3069 = vshrl.u32 %v3068, 7
        %v3070 = vadd.s32 %v3069, 96
        %3071 = vset.pattern.permute.xlu0 %v3070
        %3072 = vperm.xlu0 %3071, %v2995
        %v3073 = vpop.permute.xlu0 %3072
        %v3074 = vlaneseq
        %v3075 = vshrl.u32 %v3074, 7
        %v3076 = vadd.s32 %v3075, 104
        %3077 = vset.pattern.permute.xlu0 %v3076
        %3078 = vperm.xlu0 %3077, %v2995
        %v3079 = vpop.permute.xlu0 %3078
        %v3080 = vlaneseq
        %v3081 = vshrl.u32 %v3080, 7
        %v3082 = vadd.s32 %v3081, 112
        %3083 = vset.pattern.permute.xlu0 %v3082
        %3084 = vperm.xlu0 %3083, %v2995
        %v3085 = vpop.permute.xlu0 %3084
        %v3086 = vlaneseq
        %v3087 = vshrl.u32 %v3086, 7
        %v3088 = vadd.s32 %v3087, 120
        %3089 = vset.pattern.permute.xlu0 %v3088
        %3090 = vperm.xlu0 %3089, %v2995
        %v3091 = vpop.permute.xlu0 %3090
        %v3092 = vperm.slane %v615, 2
        %v3093 = vlaneseq
        %v3094 = vshrl.u32 %v3093, 7
        %3096 = vset.pattern.permute.xlu0 %v3094
        %3097 = vperm.xlu0 %3096, %v3092
        %v3098 = vpop.permute.xlu0 %3097
        %v3099 = vlaneseq
        %v3100 = vshrl.u32 %v3099, 7
        %v3101 = vadd.s32 %v3100, 8
        %3102 = vset.pattern.permute.xlu0 %v3101
        %3103 = vperm.xlu0 %3102, %v3092
        %v3104 = vpop.permute.xlu0 %3103
        %v3105 = vlaneseq
        %v3106 = vshrl.u32 %v3105, 7
        %v3107 = vadd.s32 %v3106, 16
        %3108 = vset.pattern.permute.xlu0 %v3107
        %3109 = vperm.xlu0 %3108, %v3092
        %v3110 = vpop.permute.xlu0 %3109
        %v3111 = vlaneseq
        %v3112 = vshrl.u32 %v3111, 7
        %v3113 = vadd.s32 %v3112, 24
        %3114 = vset.pattern.permute.xlu0 %v3113
        %3115 = vperm.xlu0 %3114, %v3092
        %v3116 = vpop.permute.xlu0 %3115
        %v3117 = vlaneseq
        %v3118 = vshrl.u32 %v3117, 7
        %v3119 = vadd.s32 %v3118, 32
        %3120 = vset.pattern.permute.xlu0 %v3119
        %3121 = vperm.xlu0 %3120, %v3092
        %v3122 = vpop.permute.xlu0 %3121
        %v3123 = vlaneseq
        %v3124 = vshrl.u32 %v3123, 7
        %v3125 = vadd.s32 %v3124, 40
        %3126 = vset.pattern.permute.xlu0 %v3125
        %3127 = vperm.xlu0 %3126, %v3092
        %v3128 = vpop.permute.xlu0 %3127
        %v3129 = vlaneseq
        %v3130 = vshrl.u32 %v3129, 7
        %v3131 = vadd.s32 %v3130, 48
        %3132 = vset.pattern.permute.xlu0 %v3131
        %3133 = vperm.xlu0 %3132, %v3092
        %v3134 = vpop.permute.xlu0 %3133
        %v3135 = vlaneseq
        %v3136 = vshrl.u32 %v3135, 7
        %v3137 = vadd.s32 %v3136, 56
        %3138 = vset.pattern.permute.xlu0 %v3137
        %3139 = vperm.xlu0 %3138, %v3092
        %v3140 = vpop.permute.xlu0 %3139
        %v3141 = vlaneseq
        %v3142 = vshrl.u32 %v3141, 7
        %v3143 = vadd.s32 %v3142, 64
        %3144 = vset.pattern.permute.xlu0 %v3143
        %3145 = vperm.xlu0 %3144, %v3092
        %v3146 = vpop.permute.xlu0 %3145
        %v3147 = vlaneseq
        %v3148 = vshrl.u32 %v3147, 7
        %v3149 = vadd.s32 %v3148, 72
        %3150 = vset.pattern.permute.xlu0 %v3149
        %3151 = vperm.xlu0 %3150, %v3092
        %v3152 = vpop.permute.xlu0 %3151
        %v3153 = vlaneseq
        %v3154 = vshrl.u32 %v3153, 7
        %v3155 = vadd.s32 %v3154, 80
        %3156 = vset.pattern.permute.xlu0 %v3155
        %3157 = vperm.xlu0 %3156, %v3092
        %v3158 = vpop.permute.xlu0 %3157
        %v3159 = vlaneseq
        %v3160 = vshrl.u32 %v3159, 7
        %v3161 = vadd.s32 %v3160, 88
        %3162 = vset.pattern.permute.xlu0 %v3161
        %3163 = vperm.xlu0 %3162, %v3092
        %v3164 = vpop.permute.xlu0 %3163
        %v3165 = vlaneseq
        %v3166 = vshrl.u32 %v3165, 7
        %v3167 = vadd.s32 %v3166, 96
        %3168 = vset.pattern.permute.xlu0 %v3167
        %3169 = vperm.xlu0 %3168, %v3092
        %v3170 = vpop.permute.xlu0 %3169
        %v3171 = vlaneseq
        %v3172 = vshrl.u32 %v3171, 7
        %v3173 = vadd.s32 %v3172, 104
        %3174 = vset.pattern.permute.xlu0 %v3173
        %3175 = vperm.xlu0 %3174, %v3092
        %v3176 = vpop.permute.xlu0 %3175
        %v3177 = vlaneseq
        %v3178 = vshrl.u32 %v3177, 7
        %v3179 = vadd.s32 %v3178, 112
        %3180 = vset.pattern.permute.xlu0 %v3179
        %3181 = vperm.xlu0 %3180, %v3092
        %v3182 = vpop.permute.xlu0 %3181
        %v3183 = vlaneseq
        %v3184 = vshrl.u32 %v3183, 7
        %v3185 = vadd.s32 %v3184, 120
        %3186 = vset.pattern.permute.xlu0 %v3185
        %3187 = vperm.xlu0 %3186, %v3092
        %v3188 = vpop.permute.xlu0 %3187
        %v3189 = vperm.slane %v615, 3
        %v3190 = vlaneseq
        %v3191 = vshrl.u32 %v3190, 7
        %3193 = vset.pattern.permute.xlu0 %v3191
        %3194 = vperm.xlu0 %3193, %v3189
        %v3195 = vpop.permute.xlu0 %3194
        %v3196 = vlaneseq
        %v3197 = vshrl.u32 %v3196, 7
        %v3198 = vadd.s32 %v3197, 8
        %3199 = vset.pattern.permute.xlu0 %v3198
        %3200 = vperm.xlu0 %3199, %v3189
        %v3201 = vpop.permute.xlu0 %3200
        %v3202 = vlaneseq
        %v3203 = vshrl.u32 %v3202, 7
        %v3204 = vadd.s32 %v3203, 16
        %3205 = vset.pattern.permute.xlu0 %v3204
        %3206 = vperm.xlu0 %3205, %v3189
        %v3207 = vpop.permute.xlu0 %3206
        %v3208 = vlaneseq
        %v3209 = vshrl.u32 %v3208, 7
        %v3210 = vadd.s32 %v3209, 24
        %3211 = vset.pattern.permute.xlu0 %v3210
        %3212 = vperm.xlu0 %3211, %v3189
        %v3213 = vpop.permute.xlu0 %3212
        %v3214 = vlaneseq
        %v3215 = vshrl.u32 %v3214, 7
        %v3216 = vadd.s32 %v3215, 32
        %3217 = vset.pattern.permute.xlu0 %v3216
        %3218 = vperm.xlu0 %3217, %v3189
        %v3219 = vpop.permute.xlu0 %3218
        %v3220 = vlaneseq
        %v3221 = vshrl.u32 %v3220, 7
        %v3222 = vadd.s32 %v3221, 40
        %3223 = vset.pattern.permute.xlu0 %v3222
        %3224 = vperm.xlu0 %3223, %v3189
        %v3225 = vpop.permute.xlu0 %3224
        %v3226 = vlaneseq
        %v3227 = vshrl.u32 %v3226, 7
        %v3228 = vadd.s32 %v3227, 48
        %3229 = vset.pattern.permute.xlu0 %v3228
        %3230 = vperm.xlu0 %3229, %v3189
        %v3231 = vpop.permute.xlu0 %3230
        %v3232 = vlaneseq
        %v3233 = vshrl.u32 %v3232, 7
        %v3234 = vadd.s32 %v3233, 56
        %3235 = vset.pattern.permute.xlu0 %v3234
        %3236 = vperm.xlu0 %3235, %v3189
        %v3237 = vpop.permute.xlu0 %3236
        %v3238 = vlaneseq
        %v3239 = vshrl.u32 %v3238, 7
        %v3240 = vadd.s32 %v3239, 64
        %3241 = vset.pattern.permute.xlu0 %v3240
        %3242 = vperm.xlu0 %3241, %v3189
        %v3243 = vpop.permute.xlu0 %3242
        %v3244 = vlaneseq
        %v3245 = vshrl.u32 %v3244, 7
        %v3246 = vadd.s32 %v3245, 72
        %3247 = vset.pattern.permute.xlu0 %v3246
        %3248 = vperm.xlu0 %3247, %v3189
        %v3249 = vpop.permute.xlu0 %3248
        %v3250 = vlaneseq
        %v3251 = vshrl.u32 %v3250, 7
        %v3252 = vadd.s32 %v3251, 80
        %3253 = vset.pattern.permute.xlu0 %v3252
        %3254 = vperm.xlu0 %3253, %v3189
        %v3255 = vpop.permute.xlu0 %3254
        %v3256 = vlaneseq
        %v3257 = vshrl.u32 %v3256, 7
        %v3258 = vadd.s32 %v3257, 88
        %3259 = vset.pattern.permute.xlu0 %v3258
        %3260 = vperm.xlu0 %3259, %v3189
        %v3261 = vpop.permute.xlu0 %3260
        %v3262 = vlaneseq
        %v3263 = vshrl.u32 %v3262, 7
        %v3264 = vadd.s32 %v3263, 96
        %3265 = vset.pattern.permute.xlu0 %v3264
        %3266 = vperm.xlu0 %3265, %v3189
        %v3267 = vpop.permute.xlu0 %3266
        %v3268 = vlaneseq
        %v3269 = vshrl.u32 %v3268, 7
        %v3270 = vadd.s32 %v3269, 104
        %3271 = vset.pattern.permute.xlu0 %v3270
        %3272 = vperm.xlu0 %3271, %v3189
        %v3273 = vpop.permute.xlu0 %3272
        %v3274 = vlaneseq
        %v3275 = vshrl.u32 %v3274, 7
        %v3276 = vadd.s32 %v3275, 112
        %3277 = vset.pattern.permute.xlu0 %v3276
        %3278 = vperm.xlu0 %3277, %v3189
        %v3279 = vpop.permute.xlu0 %3278
        %v3280 = vlaneseq
        %v3281 = vshrl.u32 %v3280, 7
        %v3282 = vadd.s32 %v3281, 120
        %3283 = vset.pattern.permute.xlu0 %v3282
        %3284 = vperm.xlu0 %3283, %v3189
        %v3285 = vpop.permute.xlu0 %3284
        %v3286 = vperm.slane %v615, 4
        %v3287 = vlaneseq
        %v3288 = vshrl.u32 %v3287, 7
        %3290 = vset.pattern.permute.xlu0 %v3288
        %3291 = vperm.xlu0 %3290, %v3286
        %v3292 = vpop.permute.xlu0 %3291
        %v3293 = vlaneseq
        %v3294 = vshrl.u32 %v3293, 7
        %v3295 = vadd.s32 %v3294, 8
        %3296 = vset.pattern.permute.xlu0 %v3295
        %3297 = vperm.xlu0 %3296, %v3286
        %v3298 = vpop.permute.xlu0 %3297
        %v3299 = vlaneseq
        %v3300 = vshrl.u32 %v3299, 7
        %v3301 = vadd.s32 %v3300, 16
        %3302 = vset.pattern.permute.xlu0 %v3301
        %3303 = vperm.xlu0 %3302, %v3286
        %v3304 = vpop.permute.xlu0 %3303
        %v3305 = vlaneseq
        %v3306 = vshrl.u32 %v3305, 7
        %v3307 = vadd.s32 %v3306, 24
        %3308 = vset.pattern.permute.xlu0 %v3307
        %3309 = vperm.xlu0 %3308, %v3286
        %v3310 = vpop.permute.xlu0 %3309
        %v3311 = vlaneseq
        %v3312 = vshrl.u32 %v3311, 7
        %v3313 = vadd.s32 %v3312, 32
        %3314 = vset.pattern.permute.xlu0 %v3313
        %3315 = vperm.xlu0 %3314, %v3286
        %v3316 = vpop.permute.xlu0 %3315
        %v3317 = vlaneseq
        %v3318 = vshrl.u32 %v3317, 7
        %v3319 = vadd.s32 %v3318, 40
        %3320 = vset.pattern.permute.xlu0 %v3319
        %3321 = vperm.xlu0 %3320, %v3286
        %v3322 = vpop.permute.xlu0 %3321
        %v3323 = vlaneseq
        %v3324 = vshrl.u32 %v3323, 7
        %v3325 = vadd.s32 %v3324, 48
        %3326 = vset.pattern.permute.xlu0 %v3325
        %3327 = vperm.xlu0 %3326, %v3286
        %v3328 = vpop.permute.xlu0 %3327
        %v3329 = vlaneseq
        %v3330 = vshrl.u32 %v3329, 7
        %v3331 = vadd.s32 %v3330, 56
        %3332 = vset.pattern.permute.xlu0 %v3331
        %3333 = vperm.xlu0 %3332, %v3286
        %v3334 = vpop.permute.xlu0 %3333
        %v3335 = vlaneseq
        %v3336 = vshrl.u32 %v3335, 7
        %v3337 = vadd.s32 %v3336, 64
        %3338 = vset.pattern.permute.xlu0 %v3337
        %3339 = vperm.xlu0 %3338, %v3286
        %v3340 = vpop.permute.xlu0 %3339
        %v3341 = vlaneseq
        %v3342 = vshrl.u32 %v3341, 7
        %v3343 = vadd.s32 %v3342, 72
        %3344 = vset.pattern.permute.xlu0 %v3343
        %3345 = vperm.xlu0 %3344, %v3286
        %v3346 = vpop.permute.xlu0 %3345
        %v3347 = vlaneseq
        %v3348 = vshrl.u32 %v3347, 7
        %v3349 = vadd.s32 %v3348, 80
        %3350 = vset.pattern.permute.xlu0 %v3349
        %3351 = vperm.xlu0 %3350, %v3286
        %v3352 = vpop.permute.xlu0 %3351
        %v3353 = vlaneseq
        %v3354 = vshrl.u32 %v3353, 7
        %v3355 = vadd.s32 %v3354, 88
        %3356 = vset.pattern.permute.xlu0 %v3355
        %3357 = vperm.xlu0 %3356, %v3286
        %v3358 = vpop.permute.xlu0 %3357
        %v3359 = vlaneseq
        %v3360 = vshrl.u32 %v3359, 7
        %v3361 = vadd.s32 %v3360, 96
        %3362 = vset.pattern.permute.xlu0 %v3361
        %3363 = vperm.xlu0 %3362, %v3286
        %v3364 = vpop.permute.xlu0 %3363
        %v3365 = vlaneseq
        %v3366 = vshrl.u32 %v3365, 7
        %v3367 = vadd.s32 %v3366, 104
        %3368 = vset.pattern.permute.xlu0 %v3367
        %3369 = vperm.xlu0 %3368, %v3286
        %v3370 = vpop.permute.xlu0 %3369
        %v3371 = vlaneseq
        %v3372 = vshrl.u32 %v3371, 7
        %v3373 = vadd.s32 %v3372, 112
        %3374 = vset.pattern.permute.xlu0 %v3373
        %3375 = vperm.xlu0 %3374, %v3286
        %v3376 = vpop.permute.xlu0 %3375
        %v3377 = vlaneseq
        %v3378 = vshrl.u32 %v3377, 7
        %v3379 = vadd.s32 %v3378, 120
        %3380 = vset.pattern.permute.xlu0 %v3379
        %3381 = vperm.xlu0 %3380, %v3286
        %v3382 = vpop.permute.xlu0 %3381
        %v3383 = vperm.slane %v615, 5
        %v3384 = vlaneseq
        %v3385 = vshrl.u32 %v3384, 7
        %3387 = vset.pattern.permute.xlu0 %v3385
        %3388 = vperm.xlu0 %3387, %v3383
        %v3389 = vpop.permute.xlu0 %3388
        %v3390 = vlaneseq
        %v3391 = vshrl.u32 %v3390, 7
        %v3392 = vadd.s32 %v3391, 8
        %3393 = vset.pattern.permute.xlu0 %v3392
        %3394 = vperm.xlu0 %3393, %v3383
        %v3395 = vpop.permute.xlu0 %3394
        %v3396 = vlaneseq
        %v3397 = vshrl.u32 %v3396, 7
        %v3398 = vadd.s32 %v3397, 16
        %3399 = vset.pattern.permute.xlu0 %v3398
        %3400 = vperm.xlu0 %3399, %v3383
        %v3401 = vpop.permute.xlu0 %3400
        %v3402 = vlaneseq
        %v3403 = vshrl.u32 %v3402, 7
        %v3404 = vadd.s32 %v3403, 24
        %3405 = vset.pattern.permute.xlu0 %v3404
        %3406 = vperm.xlu0 %3405, %v3383
        %v3407 = vpop.permute.xlu0 %3406
        %v3408 = vlaneseq
        %v3409 = vshrl.u32 %v3408, 7
        %v3410 = vadd.s32 %v3409, 32
        %3411 = vset.pattern.permute.xlu0 %v3410
        %3412 = vperm.xlu0 %3411, %v3383
        %v3413 = vpop.permute.xlu0 %3412
        %v3414 = vlaneseq
        %v3415 = vshrl.u32 %v3414, 7
        %v3416 = vadd.s32 %v3415, 40
        %3417 = vset.pattern.permute.xlu0 %v3416
        %3418 = vperm.xlu0 %3417, %v3383
        %v3419 = vpop.permute.xlu0 %3418
        %v3420 = vlaneseq
        %v3421 = vshrl.u32 %v3420, 7
        %v3422 = vadd.s32 %v3421, 48
        %3423 = vset.pattern.permute.xlu0 %v3422
        %3424 = vperm.xlu0 %3423, %v3383
        %v3425 = vpop.permute.xlu0 %3424
        %v3426 = vlaneseq
        %v3427 = vshrl.u32 %v3426, 7
        %v3428 = vadd.s32 %v3427, 56
        %3429 = vset.pattern.permute.xlu0 %v3428
        %3430 = vperm.xlu0 %3429, %v3383
        %v3431 = vpop.permute.xlu0 %3430
        %v3432 = vlaneseq
        %v3433 = vshrl.u32 %v3432, 7
        %v3434 = vadd.s32 %v3433, 64
        %3435 = vset.pattern.permute.xlu0 %v3434
        %3436 = vperm.xlu0 %3435, %v3383
        %v3437 = vpop.permute.xlu0 %3436
        %v3438 = vlaneseq
        %v3439 = vshrl.u32 %v3438, 7
        %v3440 = vadd.s32 %v3439, 72
        %3441 = vset.pattern.permute.xlu0 %v3440
        %3442 = vperm.xlu0 %3441, %v3383
        %v3443 = vpop.permute.xlu0 %3442
        %v3444 = vlaneseq
        %v3445 = vshrl.u32 %v3444, 7
        %v3446 = vadd.s32 %v3445, 80
        %3447 = vset.pattern.permute.xlu0 %v3446
        %3448 = vperm.xlu0 %3447, %v3383
        %v3449 = vpop.permute.xlu0 %3448
        %v3450 = vlaneseq
        %v3451 = vshrl.u32 %v3450, 7
        %v3452 = vadd.s32 %v3451, 88
        %3453 = vset.pattern.permute.xlu0 %v3452
        %3454 = vperm.xlu0 %3453, %v3383
        %v3455 = vpop.permute.xlu0 %3454
        %v3456 = vlaneseq
        %v3457 = vshrl.u32 %v3456, 7
        %v3458 = vadd.s32 %v3457, 96
        %3459 = vset.pattern.permute.xlu0 %v3458
        %3460 = vperm.xlu0 %3459, %v3383
        %v3461 = vpop.permute.xlu0 %3460
        %v3462 = vlaneseq
        %v3463 = vshrl.u32 %v3462, 7
        %v3464 = vadd.s32 %v3463, 104
        %3465 = vset.pattern.permute.xlu0 %v3464
        %3466 = vperm.xlu0 %3465, %v3383
        %v3467 = vpop.permute.xlu0 %3466
        %v3468 = vlaneseq
        %v3469 = vshrl.u32 %v3468, 7
        %v3470 = vadd.s32 %v3469, 112
        %3471 = vset.pattern.permute.xlu0 %v3470
        %3472 = vperm.xlu0 %3471, %v3383
        %v3473 = vpop.permute.xlu0 %3472
        %v3474 = vlaneseq
        %v3475 = vshrl.u32 %v3474, 7
        %v3476 = vadd.s32 %v3475, 120
        %3477 = vset.pattern.permute.xlu0 %v3476
        %3478 = vperm.xlu0 %3477, %v3383
        %v3479 = vpop.permute.xlu0 %3478
        %v3480 = vperm.slane %v615, 6
        %v3481 = vlaneseq
        %v3482 = vshrl.u32 %v3481, 7
        %3484 = vset.pattern.permute.xlu0 %v3482
        %3485 = vperm.xlu0 %3484, %v3480
        %v3486 = vpop.permute.xlu0 %3485
        %v3487 = vlaneseq
        %v3488 = vshrl.u32 %v3487, 7
        %v3489 = vadd.s32 %v3488, 8
        %3490 = vset.pattern.permute.xlu0 %v3489
        %3491 = vperm.xlu0 %3490, %v3480
        %v3492 = vpop.permute.xlu0 %3491
        %v3493 = vlaneseq
        %v3494 = vshrl.u32 %v3493, 7
        %v3495 = vadd.s32 %v3494, 16
        %3496 = vset.pattern.permute.xlu0 %v3495
        %3497 = vperm.xlu0 %3496, %v3480
        %v3498 = vpop.permute.xlu0 %3497
        %v3499 = vlaneseq
        %v3500 = vshrl.u32 %v3499, 7
        %v3501 = vadd.s32 %v3500, 24
        %3502 = vset.pattern.permute.xlu0 %v3501
        %3503 = vperm.xlu0 %3502, %v3480
        %v3504 = vpop.permute.xlu0 %3503
        %v3505 = vlaneseq
        %v3506 = vshrl.u32 %v3505, 7
        %v3507 = vadd.s32 %v3506, 32
        %3508 = vset.pattern.permute.xlu0 %v3507
        %3509 = vperm.xlu0 %3508, %v3480
        %v3510 = vpop.permute.xlu0 %3509
        %v3511 = vlaneseq
        %v3512 = vshrl.u32 %v3511, 7
        %v3513 = vadd.s32 %v3512, 40
        %3514 = vset.pattern.permute.xlu0 %v3513
        %3515 = vperm.xlu0 %3514, %v3480
        %v3516 = vpop.permute.xlu0 %3515
        %v3517 = vlaneseq
        %v3518 = vshrl.u32 %v3517, 7
        %v3519 = vadd.s32 %v3518, 48
        %3520 = vset.pattern.permute.xlu0 %v3519
        %3521 = vperm.xlu0 %3520, %v3480
        %v3522 = vpop.permute.xlu0 %3521
        %v3523 = vlaneseq
        %v3524 = vshrl.u32 %v3523, 7
        %v3525 = vadd.s32 %v3524, 56
        %3526 = vset.pattern.permute.xlu0 %v3525
        %3527 = vperm.xlu0 %3526, %v3480
        %v3528 = vpop.permute.xlu0 %3527
        %v3529 = vlaneseq
        %v3530 = vshrl.u32 %v3529, 7
        %v3531 = vadd.s32 %v3530, 64
        %3532 = vset.pattern.permute.xlu0 %v3531
        %3533 = vperm.xlu0 %3532, %v3480
        %v3534 = vpop.permute.xlu0 %3533
        %v3535 = vlaneseq
        %v3536 = vshrl.u32 %v3535, 7
        %v3537 = vadd.s32 %v3536, 72
        %3538 = vset.pattern.permute.xlu0 %v3537
        %3539 = vperm.xlu0 %3538, %v3480
        %v3540 = vpop.permute.xlu0 %3539
        %v3541 = vlaneseq
        %v3542 = vshrl.u32 %v3541, 7
        %v3543 = vadd.s32 %v3542, 80
        %3544 = vset.pattern.permute.xlu0 %v3543
        %3545 = vperm.xlu0 %3544, %v3480
        %v3546 = vpop.permute.xlu0 %3545
        %v3547 = vlaneseq
        %v3548 = vshrl.u32 %v3547, 7
        %v3549 = vadd.s32 %v3548, 88
        %3550 = vset.pattern.permute.xlu0 %v3549
        %3551 = vperm.xlu0 %3550, %v3480
        %v3552 = vpop.permute.xlu0 %3551
        %v3553 = vlaneseq
        %v3554 = vshrl.u32 %v3553, 7
        %v3555 = vadd.s32 %v3554, 96
        %3556 = vset.pattern.permute.xlu0 %v3555
        %3557 = vperm.xlu0 %3556, %v3480
        %v3558 = vpop.permute.xlu0 %3557
        %v3559 = vlaneseq
        %v3560 = vshrl.u32 %v3559, 7
        %v3561 = vadd.s32 %v3560, 104
        %3562 = vset.pattern.permute.xlu0 %v3561
        %3563 = vperm.xlu0 %3562, %v3480
        %v3564 = vpop.permute.xlu0 %3563
        %v3565 = vlaneseq
        %v3566 = vshrl.u32 %v3565, 7
        %v3567 = vadd.s32 %v3566, 112
        %3568 = vset.pattern.permute.xlu0 %v3567
        %3569 = vperm.xlu0 %3568, %v3480
        %v3570 = vpop.permute.xlu0 %3569
        %v3571 = vlaneseq
        %v3572 = vshrl.u32 %v3571, 7
        %v3573 = vadd.s32 %v3572, 120
        %3574 = vset.pattern.permute.xlu0 %v3573
        %3575 = vperm.xlu0 %3574, %v3480
        %v3576 = vpop.permute.xlu0 %3575
        %v3577 = vperm.slane %v615, 7
        %v3578 = vlaneseq
        %v3579 = vshrl.u32 %v3578, 7
        %3581 = vset.pattern.permute.xlu0 %v3579
        %3582 = vperm.xlu0 %3581, %v3577
        %v3583 = vpop.permute.xlu0 %3582
        %v3584 = vlaneseq
        %v3585 = vshrl.u32 %v3584, 7
        %v3586 = vadd.s32 %v3585, 8
        %3587 = vset.pattern.permute.xlu0 %v3586
        %3588 = vperm.xlu0 %3587, %v3577
        %v3589 = vpop.permute.xlu0 %3588
        %v3590 = vlaneseq
        %v3591 = vshrl.u32 %v3590, 7
        %v3592 = vadd.s32 %v3591, 16
        %3593 = vset.pattern.permute.xlu0 %v3592
        %3594 = vperm.xlu0 %3593, %v3577
        %v3595 = vpop.permute.xlu0 %3594
        %v3596 = vlaneseq
        %v3597 = vshrl.u32 %v3596, 7
        %v3598 = vadd.s32 %v3597, 24
        %3599 = vset.pattern.permute.xlu0 %v3598
        %3600 = vperm.xlu0 %3599, %v3577
        %v3601 = vpop.permute.xlu0 %3600
        %v3602 = vlaneseq
        %v3603 = vshrl.u32 %v3602, 7
        %v3604 = vadd.s32 %v3603, 32
        %3605 = vset.pattern.permute.xlu0 %v3604
        %3606 = vperm.xlu0 %3605, %v3577
        %v3607 = vpop.permute.xlu0 %3606
        %v3608 = vlaneseq
        %v3609 = vshrl.u32 %v3608, 7
        %v3610 = vadd.s32 %v3609, 40
        %3611 = vset.pattern.permute.xlu0 %v3610
        %3612 = vperm.xlu0 %3611, %v3577
        %v3613 = vpop.permute.xlu0 %3612
        %v3614 = vlaneseq
        %v3615 = vshrl.u32 %v3614, 7
        %v3616 = vadd.s32 %v3615, 48
        %3617 = vset.pattern.permute.xlu0 %v3616
        %3618 = vperm.xlu0 %3617, %v3577
        %v3619 = vpop.permute.xlu0 %3618
        %v3620 = vlaneseq
        %v3621 = vshrl.u32 %v3620, 7
        %v3622 = vadd.s32 %v3621, 56
        %3623 = vset.pattern.permute.xlu0 %v3622
        %3624 = vperm.xlu0 %3623, %v3577
        %v3625 = vpop.permute.xlu0 %3624
        %v3626 = vlaneseq
        %v3627 = vshrl.u32 %v3626, 7
        %v3628 = vadd.s32 %v3627, 64
        %3629 = vset.pattern.permute.xlu0 %v3628
        %3630 = vperm.xlu0 %3629, %v3577
        %v3631 = vpop.permute.xlu0 %3630
        %v3632 = vlaneseq
        %v3633 = vshrl.u32 %v3632, 7
        %v3634 = vadd.s32 %v3633, 72
        %3635 = vset.pattern.permute.xlu0 %v3634
        %3636 = vperm.xlu0 %3635, %v3577
        %v3637 = vpop.permute.xlu0 %3636
        %v3638 = vlaneseq
        %v3639 = vshrl.u32 %v3638, 7
        %v3640 = vadd.s32 %v3639, 80
        %3641 = vset.pattern.permute.xlu0 %v3640
        %3642 = vperm.xlu0 %3641, %v3577
        %v3643 = vpop.permute.xlu0 %3642
        %v3644 = vlaneseq
        %v3645 = vshrl.u32 %v3644, 7
        %v3646 = vadd.s32 %v3645, 88
        %3647 = vset.pattern.permute.xlu0 %v3646
        %3648 = vperm.xlu0 %3647, %v3577
        %v3649 = vpop.permute.xlu0 %3648
        %v3650 = vlaneseq
        %v3651 = vshrl.u32 %v3650, 7
        %v3652 = vadd.s32 %v3651, 96
        %3653 = vset.pattern.permute.xlu0 %v3652
        %3654 = vperm.xlu0 %3653, %v3577
        %v3655 = vpop.permute.xlu0 %3654
        %v3656 = vlaneseq
        %v3657 = vshrl.u32 %v3656, 7
        %v3658 = vadd.s32 %v3657, 104
        %3659 = vset.pattern.permute.xlu0 %v3658
        %3660 = vperm.xlu0 %3659, %v3577
        %v3661 = vpop.permute.xlu0 %3660
        %v3662 = vlaneseq
        %v3663 = vshrl.u32 %v3662, 7
        %v3664 = vadd.s32 %v3663, 112
        %3665 = vset.pattern.permute.xlu0 %v3664
        %3666 = vperm.xlu0 %3665, %v3577
        %v3667 = vpop.permute.xlu0 %3666
        %v3668 = vlaneseq
        %v3669 = vshrl.u32 %v3668, 7
        %v3670 = vadd.s32 %v3669, 120
        %3671 = vset.pattern.permute.xlu0 %v3670
        %3672 = vperm.xlu0 %3671, %v3577
        %v3673 = vpop.permute.xlu0 %3672
        %v3674 = vmul.f32 %v2767, %v2904
        %v3675 = vmul.f32 %v2768, %v2910
        %v3676 = vmul.f32 %v2769, %v2916
        %v3677 = vmul.f32 %v2770, %v2922
        %v3678 = vmul.f32 %v2771, %v2928
        %v3679 = vmul.f32 %v2772, %v2934
        %v3680 = vmul.f32 %v2773, %v2940
        %v3681 = vmul.f32 %v2774, %v2946
        %v3682 = vmul.f32 %v2775, %v2952
        %v3683 = vmul.f32 %v2776, %v2958
        %v3684 = vmul.f32 %v2777, %v2964
        %v3685 = vmul.f32 %v2778, %v2970
        %v3686 = vmul.f32 %v2779, %v2976
        %v3687 = vmul.f32 %v2780, %v2982
        %v3688 = vmul.f32 %v2781, %v2988
        %v3689 = vmul.f32 %v2782, %v2994
        %v3690 = vmul.f32 %v2783, %v3001
        %v3691 = vmul.f32 %v2784, %v3007
        %v3692 = vmul.f32 %v2785, %v3013
        %v3693 = vmul.f32 %v2786, %v3019
        %v3694 = vmul.f32 %v2787, %v3025
        %v3695 = vmul.f32 %v2788, %v3031
        %v3696 = vmul.f32 %v2789, %v3037
        %v3697 = vmul.f32 %v2790, %v3043
        %v3698 = vmul.f32 %v2791, %v3049
        %v3699 = vmul.f32 %v2792, %v3055
        %v3700 = vmul.f32 %v2793, %v3061
        %v3701 = vmul.f32 %v2794, %v3067
        %v3702 = vmul.f32 %v2795, %v3073
        %v3703 = vmul.f32 %v2796, %v3079
        %v3704 = vmul.f32 %v2797, %v3085
        %v3705 = vmul.f32 %v2798, %v3091
        %v3706 = vmul.f32 %v2799, %v3098
        %v3707 = vmul.f32 %v2800, %v3104
        %v3708 = vmul.f32 %v2801, %v3110
        %v3709 = vmul.f32 %v2802, %v3116
        %v3710 = vmul.f32 %v2803, %v3122
        %v3711 = vmul.f32 %v2804, %v3128
        %v3712 = vmul.f32 %v2805, %v3134
        %v3713 = vmul.f32 %v2806, %v3140
        %v3714 = vmul.f32 %v2807, %v3146
        %v3715 = vmul.f32 %v2808, %v3152
        %v3716 = vmul.f32 %v2809, %v3158
        %v3717 = vmul.f32 %v2810, %v3164
        %v3718 = vmul.f32 %v2811, %v3170
        %v3719 = vmul.f32 %v2812, %v3176
        %v3720 = vmul.f32 %v2813, %v3182
        %v3721 = vmul.f32 %v2814, %v3188
        %v3722 = vmul.f32 %v2815, %v3195
        %v3723 = vmul.f32 %v2816, %v3201
        %v3724 = vmul.f32 %v2817, %v3207
        %v3725 = vmul.f32 %v2818, %v3213
        %v3726 = vmul.f32 %v2819, %v3219
        %v3727 = vmul.f32 %v2820, %v3225
        %v3728 = vmul.f32 %v2821, %v3231
        %v3729 = vmul.f32 %v2822, %v3237
        %v3730 = vmul.f32 %v2823, %v3243
        %v3731 = vmul.f32 %v2824, %v3249
        %v3732 = vmul.f32 %v2825, %v3255
        %v3733 = vmul.f32 %v2826, %v3261
        %v3734 = vmul.f32 %v2827, %v3267
        %v3735 = vmul.f32 %v2828, %v3273
        %v3736 = vmul.f32 %v2829, %v3279
        %v3737 = vmul.f32 %v2830, %v3285
        %v3738 = vmul.f32 %v2831, %v3292
        %v3739 = vmul.f32 %v2832, %v3298
        %v3740 = vmul.f32 %v2833, %v3304
        %v3741 = vmul.f32 %v2834, %v3310
        %v3742 = vmul.f32 %v2835, %v3316
        %v3743 = vmul.f32 %v2836, %v3322
        %v3744 = vmul.f32 %v2837, %v3328
        %v3745 = vmul.f32 %v2838, %v3334
        %v3746 = vmul.f32 %v2839, %v3340
        %v3747 = vmul.f32 %v2840, %v3346
        %v3748 = vmul.f32 %v2841, %v3352
        %v3749 = vmul.f32 %v2842, %v3358
        %v3750 = vmul.f32 %v2843, %v3364
        %v3751 = vmul.f32 %v2844, %v3370
        %v3752 = vmul.f32 %v2845, %v3376
        %v3753 = vmul.f32 %v2846, %v3382
        %v3754 = vmul.f32 %v2847, %v3389
        %v3755 = vmul.f32 %v2848, %v3395
        %v3756 = vmul.f32 %v2849, %v3401
        %v3757 = vmul.f32 %v2850, %v3407
        %v3758 = vmul.f32 %v2851, %v3413
        %v3759 = vmul.f32 %v2852, %v3419
        %v3760 = vmul.f32 %v2853, %v3425
        %v3761 = vmul.f32 %v2854, %v3431
        %v3762 = vmul.f32 %v2855, %v3437
        %v3763 = vmul.f32 %v2856, %v3443
        %v3764 = vmul.f32 %v2857, %v3449
        %v3765 = vmul.f32 %v2858, %v3455
        %v3766 = vmul.f32 %v2859, %v3461
        %v3767 = vmul.f32 %v2860, %v3467
        %v3768 = vmul.f32 %v2861, %v3473
        %v3769 = vmul.f32 %v2862, %v3479
        %v3770 = vmul.f32 %v2863, %v3486
        %v3771 = vmul.f32 %v2864, %v3492
        %v3772 = vmul.f32 %v2865, %v3498
        %v3773 = vmul.f32 %v2866, %v3504
        %v3774 = vmul.f32 %v2867, %v3510
        %v3775 = vmul.f32 %v2868, %v3516
        %v3776 = vmul.f32 %v2869, %v3522
        %v3777 = vmul.f32 %v2870, %v3528
        %v3778 = vmul.f32 %v2871, %v3534
        %v3779 = vmul.f32 %v2872, %v3540
        %v3780 = vmul.f32 %v2873, %v3546
        %v3781 = vmul.f32 %v2874, %v3552
        %v3782 = vmul.f32 %v2875, %v3558
        %v3783 = vmul.f32 %v2876, %v3564
        %v3784 = vmul.f32 %v2877, %v3570
        %v3785 = vmul.f32 %v2878, %v3576
        %v3786 = vmul.f32 %v2879, %v3583
        %v3787 = vmul.f32 %v2880, %v3589
        %v3788 = vmul.f32 %v2881, %v3595
        %v3789 = vmul.f32 %v2882, %v3601
        %v3790 = vmul.f32 %v2883, %v3607
        %v3791 = vmul.f32 %v2884, %v3613
        %v3792 = vmul.f32 %v2885, %v3619
        %v3793 = vmul.f32 %v2886, %v3625
        %v3794 = vmul.f32 %v2887, %v3631
        %v3795 = vmul.f32 %v2888, %v3637
        %v3796 = vmul.f32 %v2889, %v3643
        %v3797 = vmul.f32 %v2890, %v3649
        %v3798 = vmul.f32 %v2891, %v3655
        %v3799 = vmul.f32 %v2892, %v3661
        %v3800 = vmul.f32 %v2893, %v3667
        %v3801 = vmul.f32 %v2894, %v3673
        %v3802 = vadd.f32 %v3674, %v3675
        %v3803 = vadd.f32 %v3802, %v3676
        %v3804 = vadd.f32 %v3803, %v3677
        %v3805 = vadd.f32 %v3804, %v3678
        %v3806 = vadd.f32 %v3805, %v3679
        %v3807 = vadd.f32 %v3806, %v3680
        %v3808 = vadd.f32 %v3807, %v3681
        %v3809 = vadd.f32 %v3808, %v3682
        %v3810 = vadd.f32 %v3809, %v3683
        %v3811 = vadd.f32 %v3810, %v3684
        %v3812 = vadd.f32 %v3811, %v3685
        %v3813 = vadd.f32 %v3812, %v3686
        %v3814 = vadd.f32 %v3813, %v3687
        %v3815 = vadd.f32 %v3814, %v3688
        %v3816 = vadd.f32 %v3815, %v3689
        %v3817 = vrot.slane %v3816, 4
        %v3818 = vadd.f32 %v3816, %v3817
        %v3819 = vrot.slane %v3818, 2
        %v3820 = vadd.f32 %v3818, %v3819
        %v3821 = vrot.slane %v3820, 1
        %v3822 = vadd.f32 %v3820, %v3821
        %v3823 = vadd.f32 %v3690, %v3691
        %v3824 = vadd.f32 %v3823, %v3692
        %v3825 = vadd.f32 %v3824, %v3693
        %v3826 = vadd.f32 %v3825, %v3694
        %v3827 = vadd.f32 %v3826, %v3695
        %v3828 = vadd.f32 %v3827, %v3696
        %v3829 = vadd.f32 %v3828, %v3697
        %v3830 = vadd.f32 %v3829, %v3698
        %v3831 = vadd.f32 %v3830, %v3699
        %v3832 = vadd.f32 %v3831, %v3700
        %v3833 = vadd.f32 %v3832, %v3701
        %v3834 = vadd.f32 %v3833, %v3702
        %v3835 = vadd.f32 %v3834, %v3703
        %v3836 = vadd.f32 %v3835, %v3704
        %v3837 = vadd.f32 %v3836, %v3705
        %v3838 = vrot.slane %v3837, 4
        %v3839 = vadd.f32 %v3837, %v3838
        %v3840 = vrot.slane %v3839, 2
        %v3841 = vadd.f32 %v3839, %v3840
        %v3842 = vrot.slane %v3841, 1
        %v3843 = vadd.f32 %v3841, %v3842
        %v3844 = vadd.f32 %v3706, %v3707
        %v3845 = vadd.f32 %v3844, %v3708
        %v3846 = vadd.f32 %v3845, %v3709
        %v3847 = vadd.f32 %v3846, %v3710
        %v3848 = vadd.f32 %v3847, %v3711
        %v3849 = vadd.f32 %v3848, %v3712
        %v3850 = vadd.f32 %v3849, %v3713
        %v3851 = vadd.f32 %v3850, %v3714
        %v3852 = vadd.f32 %v3851, %v3715
        %v3853 = vadd.f32 %v3852, %v3716
        %v3854 = vadd.f32 %v3853, %v3717
        %v3855 = vadd.f32 %v3854, %v3718
        %v3856 = vadd.f32 %v3855, %v3719
        %v3857 = vadd.f32 %v3856, %v3720
        %v3858 = vadd.f32 %v3857, %v3721
        %v3859 = vrot.slane %v3858, 4
        %v3860 = vadd.f32 %v3858, %v3859
        %v3861 = vrot.slane %v3860, 2
        %v3862 = vadd.f32 %v3860, %v3861
        %v3863 = vrot.slane %v3862, 1
        %v3864 = vadd.f32 %v3862, %v3863
        %v3865 = vadd.f32 %v3722, %v3723
        %v3866 = vadd.f32 %v3865, %v3724
        %v3867 = vadd.f32 %v3866, %v3725
        %v3868 = vadd.f32 %v3867, %v3726
        %v3869 = vadd.f32 %v3868, %v3727
        %v3870 = vadd.f32 %v3869, %v3728
        %v3871 = vadd.f32 %v3870, %v3729
        %v3872 = vadd.f32 %v3871, %v3730
        %v3873 = vadd.f32 %v3872, %v3731
        %v3874 = vadd.f32 %v3873, %v3732
        %v3875 = vadd.f32 %v3874, %v3733
        %v3876 = vadd.f32 %v3875, %v3734
        %v3877 = vadd.f32 %v3876, %v3735
        %v3878 = vadd.f32 %v3877, %v3736
        %v3879 = vadd.f32 %v3878, %v3737
        %v3880 = vrot.slane %v3879, 4
        %v3881 = vadd.f32 %v3879, %v3880
        %v3882 = vrot.slane %v3881, 2
        %v3883 = vadd.f32 %v3881, %v3882
        %v3884 = vrot.slane %v3883, 1
        %v3885 = vadd.f32 %v3883, %v3884
        %v3886 = vadd.f32 %v3738, %v3739
        %v3887 = vadd.f32 %v3886, %v3740
        %v3888 = vadd.f32 %v3887, %v3741
        %v3889 = vadd.f32 %v3888, %v3742
        %v3890 = vadd.f32 %v3889, %v3743
        %v3891 = vadd.f32 %v3890, %v3744
        %v3892 = vadd.f32 %v3891, %v3745
        %v3893 = vadd.f32 %v3892, %v3746
        %v3894 = vadd.f32 %v3893, %v3747
        %v3895 = vadd.f32 %v3894, %v3748
        %v3896 = vadd.f32 %v3895, %v3749
        %v3897 = vadd.f32 %v3896, %v3750
        %v3898 = vadd.f32 %v3897, %v3751
        %v3899 = vadd.f32 %v3898, %v3752
        %v3900 = vadd.f32 %v3899, %v3753
        %v3901 = vrot.slane %v3900, 4
        %v3902 = vadd.f32 %v3900, %v3901
        %v3903 = vrot.slane %v3902, 2
        %v3904 = vadd.f32 %v3902, %v3903
        %v3905 = vrot.slane %v3904, 1
        %v3906 = vadd.f32 %v3904, %v3905
        %v3907 = vadd.f32 %v3754, %v3755
        %v3908 = vadd.f32 %v3907, %v3756
        %v3909 = vadd.f32 %v3908, %v3757
        %v3910 = vadd.f32 %v3909, %v3758
        %v3911 = vadd.f32 %v3910, %v3759
        %v3912 = vadd.f32 %v3911, %v3760
        %v3913 = vadd.f32 %v3912, %v3761
        %v3914 = vadd.f32 %v3913, %v3762
        %v3915 = vadd.f32 %v3914, %v3763
        %v3916 = vadd.f32 %v3915, %v3764
        %v3917 = vadd.f32 %v3916, %v3765
        %v3918 = vadd.f32 %v3917, %v3766
        %v3919 = vadd.f32 %v3918, %v3767
        %v3920 = vadd.f32 %v3919, %v3768
        %v3921 = vadd.f32 %v3920, %v3769
        %v3922 = vrot.slane %v3921, 4
        %v3923 = vadd.f32 %v3921, %v3922
        %v3924 = vrot.slane %v3923, 2
        %v3925 = vadd.f32 %v3923, %v3924
        %v3926 = vrot.slane %v3925, 1
        %v3927 = vadd.f32 %v3925, %v3926
        %v3928 = vadd.f32 %v3770, %v3771
        %v3929 = vadd.f32 %v3928, %v3772
        %v3930 = vadd.f32 %v3929, %v3773
        %v3931 = vadd.f32 %v3930, %v3774
        %v3932 = vadd.f32 %v3931, %v3775
        %v3933 = vadd.f32 %v3932, %v3776
        %v3934 = vadd.f32 %v3933, %v3777
        %v3935 = vadd.f32 %v3934, %v3778
        %v3936 = vadd.f32 %v3935, %v3779
        %v3937 = vadd.f32 %v3936, %v3780
        %v3938 = vadd.f32 %v3937, %v3781
        %v3939 = vadd.f32 %v3938, %v3782
        %v3940 = vadd.f32 %v3939, %v3783
        %v3941 = vadd.f32 %v3940, %v3784
        %v3942 = vadd.f32 %v3941, %v3785
        %v3943 = vrot.slane %v3942, 4
        %v3944 = vadd.f32 %v3942, %v3943
        %v3945 = vrot.slane %v3944, 2
        %v3946 = vadd.f32 %v3944, %v3945
        %v3947 = vrot.slane %v3946, 1
        %v3948 = vadd.f32 %v3946, %v3947
        %v3949 = vadd.f32 %v3786, %v3787
        %v3950 = vadd.f32 %v3949, %v3788
        %v3951 = vadd.f32 %v3950, %v3789
        %v3952 = vadd.f32 %v3951, %v3790
        %v3953 = vadd.f32 %v3952, %v3791
        %v3954 = vadd.f32 %v3953, %v3792
        %v3955 = vadd.f32 %v3954, %v3793
        %v3956 = vadd.f32 %v3955, %v3794
        %v3957 = vadd.f32 %v3956, %v3795
        %v3958 = vadd.f32 %v3957, %v3796
        %v3959 = vadd.f32 %v3958, %v3797
        %v3960 = vadd.f32 %v3959, %v3798
        %v3961 = vadd.f32 %v3960, %v3799
        %v3962 = vadd.f32 %v3961, %v3800
        %v3963 = vadd.f32 %v3962, %v3801
        %v3964 = vrot.slane %v3963, 4
        %v3965 = vadd.f32 %v3963, %v3964
        %v3966 = vrot.slane %v3965, 2
        %v3967 = vadd.f32 %v3965, %v3966
        %v3968 = vrot.slane %v3967, 1
        %v3969 = vadd.f32 %v3967, %v3968
        %v3971 = vrot.slane %v2897, 1
        %v3972 = vrot.slane %v2897, 2
        %v3973 = vrot.slane %v2897, 3
        %v3974 = vrot.slane %v2897, 4
        %v3975 = vrot.slane %v2897, 5
        %v3976 = vrot.slane %v2897, 6
        %v3977 = vrot.slane %v2897, 7
        %v3986 = vrcp.pop %v2897
        %v3987 = vmul.f32 %v2897, %v3986
        %v3988 = vsub.f32 1.0, %v3987
        %v3989 = vmul.f32 %v3986, %v3988
        %v3990 = vadd.f32 %v3986, %v3989
        %vm3991 = vweird.f32 %v2897
        %vm3992 = vweird.f32 %v3986
        %vm3993 = vmor %vm3991, %vm3992
        %v3994 = vsel %vm3993, %v3986, %v3990
        %v3995 = vand.u32 2147483647, %v2897
        %vm3996 = vcmp.eq.f32.partialorder %v3995, 8.507059e+37
        %v3997 = vand.u32 %v2897, 2147483648
        %v3998 = vor.u32 1.1754944e-38, %v3997
        %v3999 = vsel %vm3996, %v3998, %v3994
        %v4000 = vmul.f32 %v3822, %v3999
        %v4001 = vrcp.pop %v3971
        %v4002 = vmul.f32 %v3971, %v4001
        %v4003 = vsub.f32 1.0, %v4002
        %v4004 = vmul.f32 %v4001, %v4003
        %v4005 = vadd.f32 %v4001, %v4004
        %vm4006 = vweird.f32 %v3971
        %vm4007 = vweird.f32 %v4001
        %vm4008 = vmor %vm4006, %vm4007
        %v4009 = vsel %vm4008, %v4001, %v4005
        %v4010 = vand.u32 2147483647, %v3971
        %vm4011 = vcmp.eq.f32.partialorder %v4010, 8.507059e+37
        %v4012 = vand.u32 %v3971, 2147483648
        %v4013 = vor.u32 1.1754944e-38, %v4012
        %v4014 = vsel %vm4011, %v4013, %v4009
        %v4015 = vmul.f32 %v3843, %v4014
        %v4016 = vrcp.pop %v3972
        %v4017 = vmul.f32 %v3972, %v4016
        %v4018 = vsub.f32 1.0, %v4017
        %v4019 = vmul.f32 %v4016, %v4018
        %v4020 = vadd.f32 %v4016, %v4019
        %vm4021 = vweird.f32 %v3972
        %vm4022 = vweird.f32 %v4016
        %vm4023 = vmor %vm4021, %vm4022
        %v4024 = vsel %vm4023, %v4016, %v4020
        %v4025 = vand.u32 2147483647, %v3972
        %vm4026 = vcmp.eq.f32.partialorder %v4025, 8.507059e+37
        %v4027 = vand.u32 %v3972, 2147483648
        %v4028 = vor.u32 1.1754944e-38, %v4027
        %v4029 = vsel %vm4026, %v4028, %v4024
        %v4030 = vmul.f32 %v3864, %v4029
        %v4031 = vrcp.pop %v3973
        %v4032 = vmul.f32 %v3973, %v4031
        %v4033 = vsub.f32 1.0, %v4032
        %v4034 = vmul.f32 %v4031, %v4033
        %v4035 = vadd.f32 %v4031, %v4034
        %vm4036 = vweird.f32 %v3973
        %vm4037 = vweird.f32 %v4031
        %vm4038 = vmor %vm4036, %vm4037
        %v4039 = vsel %vm4038, %v4031, %v4035
        %v4040 = vand.u32 2147483647, %v3973
        %vm4041 = vcmp.eq.f32.partialorder %v4040, 8.507059e+37
        %v4042 = vand.u32 %v3973, 2147483648
        %v4043 = vor.u32 1.1754944e-38, %v4042
        %v4044 = vsel %vm4041, %v4043, %v4039
        %v4045 = vmul.f32 %v3885, %v4044
        %v4046 = vrcp.pop %v3974
        %v4047 = vmul.f32 %v3974, %v4046
        %v4048 = vsub.f32 1.0, %v4047
        %v4049 = vmul.f32 %v4046, %v4048
        %v4050 = vadd.f32 %v4046, %v4049
        %vm4051 = vweird.f32 %v3974
        %vm4052 = vweird.f32 %v4046
        %vm4053 = vmor %vm4051, %vm4052
        %v4054 = vsel %vm4053, %v4046, %v4050
        %v4055 = vand.u32 2147483647, %v3974
        %vm4056 = vcmp.eq.f32.partialorder %v4055, 8.507059e+37
        %v4057 = vand.u32 %v3974, 2147483648
        %v4058 = vor.u32 1.1754944e-38, %v4057
        %v4059 = vsel %vm4056, %v4058, %v4054
        %v4060 = vmul.f32 %v3906, %v4059
        %v4061 = vrcp.pop %v3975
        %v4062 = vmul.f32 %v3975, %v4061
        %v4063 = vsub.f32 1.0, %v4062
        %v4064 = vmul.f32 %v4061, %v4063
        %v4065 = vadd.f32 %v4061, %v4064
        %vm4066 = vweird.f32 %v3975
        %vm4067 = vweird.f32 %v4061
        %vm4068 = vmor %vm4066, %vm4067
        %v4069 = vsel %vm4068, %v4061, %v4065
        %v4070 = vand.u32 2147483647, %v3975
        %vm4071 = vcmp.eq.f32.partialorder %v4070, 8.507059e+37
        %v4072 = vand.u32 %v3975, 2147483648
        %v4073 = vor.u32 1.1754944e-38, %v4072
        %v4074 = vsel %vm4071, %v4073, %v4069
        %v4075 = vmul.f32 %v3927, %v4074
        %v4076 = vrcp.pop %v3976
        %v4077 = vmul.f32 %v3976, %v4076
        %v4078 = vsub.f32 1.0, %v4077
        %v4079 = vmul.f32 %v4076, %v4078
        %v4080 = vadd.f32 %v4076, %v4079
        %vm4081 = vweird.f32 %v3976
        %vm4082 = vweird.f32 %v4076
        %vm4083 = vmor %vm4081, %vm4082
        %v4084 = vsel %vm4083, %v4076, %v4080
        %v4085 = vand.u32 2147483647, %v3976
        %vm4086 = vcmp.eq.f32.partialorder %v4085, 8.507059e+37
        %v4087 = vand.u32 %v3976, 2147483648
        %v4088 = vor.u32 1.1754944e-38, %v4087
        %v4089 = vsel %vm4086, %v4088, %v4084
        %v4090 = vmul.f32 %v3948, %v4089
        %v4091 = vrcp.pop %v3977
        %v4092 = vmul.f32 %v3977, %v4091
        %v4093 = vsub.f32 1.0, %v4092
        %v4094 = vmul.f32 %v4091, %v4093
        %v4095 = vadd.f32 %v4091, %v4094
        %vm4096 = vweird.f32 %v3977
        %vm4097 = vweird.f32 %v4091
        %vm4098 = vmor %vm4096, %vm4097
        %v4099 = vsel %vm4098, %v4091, %v4095
        %v4100 = vand.u32 2147483647, %v3977
        %vm4101 = vcmp.eq.f32.partialorder %v4100, 8.507059e+37
        %v4102 = vand.u32 %v3977, 2147483648
        %v4103 = vor.u32 1.1754944e-38, %v4102
        %v4104 = vsel %vm4101, %v4103, %v4099
        %v4105 = vmul.f32 %v3969, %v4104
        %v4106 = vld [vmem:[%s582] sm:$0xff]
        %v4107 = vperm.slane %v4106, 0
        %v4108 = vlaneseq
        %v4109 = vshrl.u32 %v4108, 7
        %4111 = vset.pattern.permute.xlu0 %v4109
        %4112 = vperm.xlu0 %4111, %v4107
        %v4113 = vpop.permute.xlu0 %4112
        %v4114 = vlaneseq
        %v4115 = vshrl.u32 %v4114, 7
        %v4116 = vadd.s32 %v4115, 8
        %4117 = vset.pattern.permute.xlu0 %v4116
        %4118 = vperm.xlu0 %4117, %v4107
        %v4119 = vpop.permute.xlu0 %4118
        %v4120 = vlaneseq
        %v4121 = vshrl.u32 %v4120, 7
        %v4122 = vadd.s32 %v4121, 16
        %4123 = vset.pattern.permute.xlu0 %v4122
        %4124 = vperm.xlu0 %4123, %v4107
        %v4125 = vpop.permute.xlu0 %4124
        %v4126 = vlaneseq
        %v4127 = vshrl.u32 %v4126, 7
        %v4128 = vadd.s32 %v4127, 24
        %4129 = vset.pattern.permute.xlu0 %v4128
        %4130 = vperm.xlu0 %4129, %v4107
        %v4131 = vpop.permute.xlu0 %4130
        %v4132 = vlaneseq
        %v4133 = vshrl.u32 %v4132, 7
        %v4134 = vadd.s32 %v4133, 32
        %4135 = vset.pattern.permute.xlu0 %v4134
        %4136 = vperm.xlu0 %4135, %v4107
        %v4137 = vpop.permute.xlu0 %4136
        %v4138 = vlaneseq
        %v4139 = vshrl.u32 %v4138, 7
        %v4140 = vadd.s32 %v4139, 40
        %4141 = vset.pattern.permute.xlu0 %v4140
        %4142 = vperm.xlu0 %4141, %v4107
        %v4143 = vpop.permute.xlu0 %4142
        %v4144 = vlaneseq
        %v4145 = vshrl.u32 %v4144, 7
        %v4146 = vadd.s32 %v4145, 48
        %4147 = vset.pattern.permute.xlu0 %v4146
        %4148 = vperm.xlu0 %4147, %v4107
        %v4149 = vpop.permute.xlu0 %4148
        %v4150 = vlaneseq
        %v4151 = vshrl.u32 %v4150, 7
        %v4152 = vadd.s32 %v4151, 56
        %4153 = vset.pattern.permute.xlu0 %v4152
        %4154 = vperm.xlu0 %4153, %v4107
        %v4155 = vpop.permute.xlu0 %4154
        %v4156 = vlaneseq
        %v4157 = vshrl.u32 %v4156, 7
        %v4158 = vadd.s32 %v4157, 64
        %4159 = vset.pattern.permute.xlu0 %v4158
        %4160 = vperm.xlu0 %4159, %v4107
        %v4161 = vpop.permute.xlu0 %4160
        %v4162 = vlaneseq
        %v4163 = vshrl.u32 %v4162, 7
        %v4164 = vadd.s32 %v4163, 72
        %4165 = vset.pattern.permute.xlu0 %v4164
        %4166 = vperm.xlu0 %4165, %v4107
        %v4167 = vpop.permute.xlu0 %4166
        %v4168 = vlaneseq
        %v4169 = vshrl.u32 %v4168, 7
        %v4170 = vadd.s32 %v4169, 80
        %4171 = vset.pattern.permute.xlu0 %v4170
        %4172 = vperm.xlu0 %4171, %v4107
        %v4173 = vpop.permute.xlu0 %4172
        %v4174 = vlaneseq
        %v4175 = vshrl.u32 %v4174, 7
        %v4176 = vadd.s32 %v4175, 88
        %4177 = vset.pattern.permute.xlu0 %v4176
        %4178 = vperm.xlu0 %4177, %v4107
        %v4179 = vpop.permute.xlu0 %4178
        %v4180 = vlaneseq
        %v4181 = vshrl.u32 %v4180, 7
        %v4182 = vadd.s32 %v4181, 96
        %4183 = vset.pattern.permute.xlu0 %v4182
        %4184 = vperm.xlu0 %4183, %v4107
        %v4185 = vpop.permute.xlu0 %4184
        %v4186 = vlaneseq
        %v4187 = vshrl.u32 %v4186, 7
        %v4188 = vadd.s32 %v4187, 104
        %4189 = vset.pattern.permute.xlu0 %v4188
        %4190 = vperm.xlu0 %4189, %v4107
        %v4191 = vpop.permute.xlu0 %4190
        %v4192 = vlaneseq
        %v4193 = vshrl.u32 %v4192, 7
        %v4194 = vadd.s32 %v4193, 112
        %4195 = vset.pattern.permute.xlu0 %v4194
        %4196 = vperm.xlu0 %4195, %v4107
        %v4197 = vpop.permute.xlu0 %4196
        %v4198 = vlaneseq
        %v4199 = vshrl.u32 %v4198, 7
        %v4200 = vadd.s32 %v4199, 120
        %4201 = vset.pattern.permute.xlu0 %v4200
        %4202 = vperm.xlu0 %4201, %v4107
        %v4203 = vpop.permute.xlu0 %4202
        %v4204 = vperm.slane %v4106, 1
        %v4205 = vlaneseq
        %v4206 = vshrl.u32 %v4205, 7
        %4208 = vset.pattern.permute.xlu0 %v4206
        %4209 = vperm.xlu0 %4208, %v4204
        %v4210 = vpop.permute.xlu0 %4209
        %v4211 = vlaneseq
        %v4212 = vshrl.u32 %v4211, 7
        %v4213 = vadd.s32 %v4212, 8
        %4214 = vset.pattern.permute.xlu0 %v4213
        %4215 = vperm.xlu0 %4214, %v4204
        %v4216 = vpop.permute.xlu0 %4215
        %v4217 = vlaneseq
        %v4218 = vshrl.u32 %v4217, 7
        %v4219 = vadd.s32 %v4218, 16
        %4220 = vset.pattern.permute.xlu0 %v4219
        %4221 = vperm.xlu0 %4220, %v4204
        %v4222 = vpop.permute.xlu0 %4221
        %v4223 = vlaneseq
        %v4224 = vshrl.u32 %v4223, 7
        %v4225 = vadd.s32 %v4224, 24
        %4226 = vset.pattern.permute.xlu0 %v4225
        %4227 = vperm.xlu0 %4226, %v4204
        %v4228 = vpop.permute.xlu0 %4227
        %v4229 = vlaneseq
        %v4230 = vshrl.u32 %v4229, 7
        %v4231 = vadd.s32 %v4230, 32
        %4232 = vset.pattern.permute.xlu0 %v4231
        %4233 = vperm.xlu0 %4232, %v4204
        %v4234 = vpop.permute.xlu0 %4233
        %v4235 = vlaneseq
        %v4236 = vshrl.u32 %v4235, 7
        %v4237 = vadd.s32 %v4236, 40
        %4238 = vset.pattern.permute.xlu0 %v4237
        %4239 = vperm.xlu0 %4238, %v4204
        %v4240 = vpop.permute.xlu0 %4239
        %v4241 = vlaneseq
        %v4242 = vshrl.u32 %v4241, 7
        %v4243 = vadd.s32 %v4242, 48
        %4244 = vset.pattern.permute.xlu0 %v4243
        %4245 = vperm.xlu0 %4244, %v4204
        %v4246 = vpop.permute.xlu0 %4245
        %v4247 = vlaneseq
        %v4248 = vshrl.u32 %v4247, 7
        %v4249 = vadd.s32 %v4248, 56
        %4250 = vset.pattern.permute.xlu0 %v4249
        %4251 = vperm.xlu0 %4250, %v4204
        %v4252 = vpop.permute.xlu0 %4251
        %v4253 = vlaneseq
        %v4254 = vshrl.u32 %v4253, 7
        %v4255 = vadd.s32 %v4254, 64
        %4256 = vset.pattern.permute.xlu0 %v4255
        %4257 = vperm.xlu0 %4256, %v4204
        %v4258 = vpop.permute.xlu0 %4257
        %v4259 = vlaneseq
        %v4260 = vshrl.u32 %v4259, 7
        %v4261 = vadd.s32 %v4260, 72
        %4262 = vset.pattern.permute.xlu0 %v4261
        %4263 = vperm.xlu0 %4262, %v4204
        %v4264 = vpop.permute.xlu0 %4263
        %v4265 = vlaneseq
        %v4266 = vshrl.u32 %v4265, 7
        %v4267 = vadd.s32 %v4266, 80
        %4268 = vset.pattern.permute.xlu0 %v4267
        %4269 = vperm.xlu0 %4268, %v4204
        %v4270 = vpop.permute.xlu0 %4269
        %v4271 = vlaneseq
        %v4272 = vshrl.u32 %v4271, 7
        %v4273 = vadd.s32 %v4272, 88
        %4274 = vset.pattern.permute.xlu0 %v4273
        %4275 = vperm.xlu0 %4274, %v4204
        %v4276 = vpop.permute.xlu0 %4275
        %v4277 = vlaneseq
        %v4278 = vshrl.u32 %v4277, 7
        %v4279 = vadd.s32 %v4278, 96
        %4280 = vset.pattern.permute.xlu0 %v4279
        %4281 = vperm.xlu0 %4280, %v4204
        %v4282 = vpop.permute.xlu0 %4281
        %v4283 = vlaneseq
        %v4284 = vshrl.u32 %v4283, 7
        %v4285 = vadd.s32 %v4284, 104
        %4286 = vset.pattern.permute.xlu0 %v4285
        %4287 = vperm.xlu0 %4286, %v4204
        %v4288 = vpop.permute.xlu0 %4287
        %v4289 = vlaneseq
        %v4290 = vshrl.u32 %v4289, 7
        %v4291 = vadd.s32 %v4290, 112
        %4292 = vset.pattern.permute.xlu0 %v4291
        %4293 = vperm.xlu0 %4292, %v4204
        %v4294 = vpop.permute.xlu0 %4293
        %v4295 = vlaneseq
        %v4296 = vshrl.u32 %v4295, 7
        %v4297 = vadd.s32 %v4296, 120
        %4298 = vset.pattern.permute.xlu0 %v4297
        %4299 = vperm.xlu0 %4298, %v4204
        %v4300 = vpop.permute.xlu0 %4299
        %v4301 = vperm.slane %v4106, 2
        %v4302 = vlaneseq
        %v4303 = vshrl.u32 %v4302, 7
        %4305 = vset.pattern.permute.xlu0 %v4303
        %4306 = vperm.xlu0 %4305, %v4301
        %v4307 = vpop.permute.xlu0 %4306
        %v4308 = vlaneseq
        %v4309 = vshrl.u32 %v4308, 7
        %v4310 = vadd.s32 %v4309, 8
        %4311 = vset.pattern.permute.xlu0 %v4310
        %4312 = vperm.xlu0 %4311, %v4301
        %v4313 = vpop.permute.xlu0 %4312
        %v4314 = vlaneseq
        %v4315 = vshrl.u32 %v4314, 7
        %v4316 = vadd.s32 %v4315, 16
        %4317 = vset.pattern.permute.xlu0 %v4316
        %4318 = vperm.xlu0 %4317, %v4301
        %v4319 = vpop.permute.xlu0 %4318
        %v4320 = vlaneseq
        %v4321 = vshrl.u32 %v4320, 7
        %v4322 = vadd.s32 %v4321, 24
        %4323 = vset.pattern.permute.xlu0 %v4322
        %4324 = vperm.xlu0 %4323, %v4301
        %v4325 = vpop.permute.xlu0 %4324
        %v4326 = vlaneseq
        %v4327 = vshrl.u32 %v4326, 7
        %v4328 = vadd.s32 %v4327, 32
        %4329 = vset.pattern.permute.xlu0 %v4328
        %4330 = vperm.xlu0 %4329, %v4301
        %v4331 = vpop.permute.xlu0 %4330
        %v4332 = vlaneseq
        %v4333 = vshrl.u32 %v4332, 7
        %v4334 = vadd.s32 %v4333, 40
        %4335 = vset.pattern.permute.xlu0 %v4334
        %4336 = vperm.xlu0 %4335, %v4301
        %v4337 = vpop.permute.xlu0 %4336
        %v4338 = vlaneseq
        %v4339 = vshrl.u32 %v4338, 7
        %v4340 = vadd.s32 %v4339, 48
        %4341 = vset.pattern.permute.xlu0 %v4340
        %4342 = vperm.xlu0 %4341, %v4301
        %v4343 = vpop.permute.xlu0 %4342
        %v4344 = vlaneseq
        %v4345 = vshrl.u32 %v4344, 7
        %v4346 = vadd.s32 %v4345, 56
        %4347 = vset.pattern.permute.xlu0 %v4346
        %4348 = vperm.xlu0 %4347, %v4301
        %v4349 = vpop.permute.xlu0 %4348
        %v4350 = vlaneseq
        %v4351 = vshrl.u32 %v4350, 7
        %v4352 = vadd.s32 %v4351, 64
        %4353 = vset.pattern.permute.xlu0 %v4352
        %4354 = vperm.xlu0 %4353, %v4301
        %v4355 = vpop.permute.xlu0 %4354
        %v4356 = vlaneseq
        %v4357 = vshrl.u32 %v4356, 7
        %v4358 = vadd.s32 %v4357, 72
        %4359 = vset.pattern.permute.xlu0 %v4358
        %4360 = vperm.xlu0 %4359, %v4301
        %v4361 = vpop.permute.xlu0 %4360
        %v4362 = vlaneseq
        %v4363 = vshrl.u32 %v4362, 7
        %v4364 = vadd.s32 %v4363, 80
        %4365 = vset.pattern.permute.xlu0 %v4364
        %4366 = vperm.xlu0 %4365, %v4301
        %v4367 = vpop.permute.xlu0 %4366
        %v4368 = vlaneseq
        %v4369 = vshrl.u32 %v4368, 7
        %v4370 = vadd.s32 %v4369, 88
        %4371 = vset.pattern.permute.xlu0 %v4370
        %4372 = vperm.xlu0 %4371, %v4301
        %v4373 = vpop.permute.xlu0 %4372
        %v4374 = vlaneseq
        %v4375 = vshrl.u32 %v4374, 7
        %v4376 = vadd.s32 %v4375, 96
        %4377 = vset.pattern.permute.xlu0 %v4376
        %4378 = vperm.xlu0 %4377, %v4301
        %v4379 = vpop.permute.xlu0 %4378
        %v4380 = vlaneseq
        %v4381 = vshrl.u32 %v4380, 7
        %v4382 = vadd.s32 %v4381, 104
        %4383 = vset.pattern.permute.xlu0 %v4382
        %4384 = vperm.xlu0 %4383, %v4301
        %v4385 = vpop.permute.xlu0 %4384
        %v4386 = vlaneseq
        %v4387 = vshrl.u32 %v4386, 7
        %v4388 = vadd.s32 %v4387, 112
        %4389 = vset.pattern.permute.xlu0 %v4388
        %4390 = vperm.xlu0 %4389, %v4301
        %v4391 = vpop.permute.xlu0 %4390
        %v4392 = vlaneseq
        %v4393 = vshrl.u32 %v4392, 7
        %v4394 = vadd.s32 %v4393, 120
        %4395 = vset.pattern.permute.xlu0 %v4394
        %4396 = vperm.xlu0 %4395, %v4301
        %v4397 = vpop.permute.xlu0 %4396
        %v4398 = vperm.slane %v4106, 3
        %v4399 = vlaneseq
        %v4400 = vshrl.u32 %v4399, 7
        %4402 = vset.pattern.permute.xlu0 %v4400
        %4403 = vperm.xlu0 %4402, %v4398
        %v4404 = vpop.permute.xlu0 %4403
        %v4405 = vlaneseq
        %v4406 = vshrl.u32 %v4405, 7
        %v4407 = vadd.s32 %v4406, 8
        %4408 = vset.pattern.permute.xlu0 %v4407
        %4409 = vperm.xlu0 %4408, %v4398
        %v4410 = vpop.permute.xlu0 %4409
        %v4411 = vlaneseq
        %v4412 = vshrl.u32 %v4411, 7
        %v4413 = vadd.s32 %v4412, 16
        %4414 = vset.pattern.permute.xlu0 %v4413
        %4415 = vperm.xlu0 %4414, %v4398
        %v4416 = vpop.permute.xlu0 %4415
        %v4417 = vlaneseq
        %v4418 = vshrl.u32 %v4417, 7
        %v4419 = vadd.s32 %v4418, 24
        %4420 = vset.pattern.permute.xlu0 %v4419
        %4421 = vperm.xlu0 %4420, %v4398
        %v4422 = vpop.permute.xlu0 %4421
        %v4423 = vlaneseq
        %v4424 = vshrl.u32 %v4423, 7
        %v4425 = vadd.s32 %v4424, 32
        %4426 = vset.pattern.permute.xlu0 %v4425
        %4427 = vperm.xlu0 %4426, %v4398
        %v4428 = vpop.permute.xlu0 %4427
        %v4429 = vlaneseq
        %v4430 = vshrl.u32 %v4429, 7
        %v4431 = vadd.s32 %v4430, 40
        %4432 = vset.pattern.permute.xlu0 %v4431
        %4433 = vperm.xlu0 %4432, %v4398
        %v4434 = vpop.permute.xlu0 %4433
        %v4435 = vlaneseq
        %v4436 = vshrl.u32 %v4435, 7
        %v4437 = vadd.s32 %v4436, 48
        %4438 = vset.pattern.permute.xlu0 %v4437
        %4439 = vperm.xlu0 %4438, %v4398
        %v4440 = vpop.permute.xlu0 %4439
        %v4441 = vlaneseq
        %v4442 = vshrl.u32 %v4441, 7
        %v4443 = vadd.s32 %v4442, 56
        %4444 = vset.pattern.permute.xlu0 %v4443
        %4445 = vperm.xlu0 %4444, %v4398
        %v4446 = vpop.permute.xlu0 %4445
        %v4447 = vlaneseq
        %v4448 = vshrl.u32 %v4447, 7
        %v4449 = vadd.s32 %v4448, 64
        %4450 = vset.pattern.permute.xlu0 %v4449
        %4451 = vperm.xlu0 %4450, %v4398
        %v4452 = vpop.permute.xlu0 %4451
        %v4453 = vlaneseq
        %v4454 = vshrl.u32 %v4453, 7
        %v4455 = vadd.s32 %v4454, 72
        %4456 = vset.pattern.permute.xlu0 %v4455
        %4457 = vperm.xlu0 %4456, %v4398
        %v4458 = vpop.permute.xlu0 %4457
        %v4459 = vlaneseq
        %v4460 = vshrl.u32 %v4459, 7
        %v4461 = vadd.s32 %v4460, 80
        %4462 = vset.pattern.permute.xlu0 %v4461
        %4463 = vperm.xlu0 %4462, %v4398
        %v4464 = vpop.permute.xlu0 %4463
        %v4465 = vlaneseq
        %v4466 = vshrl.u32 %v4465, 7
        %v4467 = vadd.s32 %v4466, 88
        %4468 = vset.pattern.permute.xlu0 %v4467
        %4469 = vperm.xlu0 %4468, %v4398
        %v4470 = vpop.permute.xlu0 %4469
        %v4471 = vlaneseq
        %v4472 = vshrl.u32 %v4471, 7
        %v4473 = vadd.s32 %v4472, 96
        %4474 = vset.pattern.permute.xlu0 %v4473
        %4475 = vperm.xlu0 %4474, %v4398
        %v4476 = vpop.permute.xlu0 %4475
        %v4477 = vlaneseq
        %v4478 = vshrl.u32 %v4477, 7
        %v4479 = vadd.s32 %v4478, 104
        %4480 = vset.pattern.permute.xlu0 %v4479
        %4481 = vperm.xlu0 %4480, %v4398
        %v4482 = vpop.permute.xlu0 %4481
        %v4483 = vlaneseq
        %v4484 = vshrl.u32 %v4483, 7
        %v4485 = vadd.s32 %v4484, 112
        %4486 = vset.pattern.permute.xlu0 %v4485
        %4487 = vperm.xlu0 %4486, %v4398
        %v4488 = vpop.permute.xlu0 %4487
        %v4489 = vlaneseq
        %v4490 = vshrl.u32 %v4489, 7
        %v4491 = vadd.s32 %v4490, 120
        %4492 = vset.pattern.permute.xlu0 %v4491
        %4493 = vperm.xlu0 %4492, %v4398
        %v4494 = vpop.permute.xlu0 %4493
        %v4495 = vperm.slane %v4106, 4
        %v4496 = vlaneseq
        %v4497 = vshrl.u32 %v4496, 7
        %4499 = vset.pattern.permute.xlu0 %v4497
        %4500 = vperm.xlu0 %4499, %v4495
        %v4501 = vpop.permute.xlu0 %4500
        %v4502 = vlaneseq
        %v4503 = vshrl.u32 %v4502, 7
        %v4504 = vadd.s32 %v4503, 8
        %4505 = vset.pattern.permute.xlu0 %v4504
        %4506 = vperm.xlu0 %4505, %v4495
        %v4507 = vpop.permute.xlu0 %4506
        %v4508 = vlaneseq
        %v4509 = vshrl.u32 %v4508, 7
        %v4510 = vadd.s32 %v4509, 16
        %4511 = vset.pattern.permute.xlu0 %v4510
        %4512 = vperm.xlu0 %4511, %v4495
        %v4513 = vpop.permute.xlu0 %4512
        %v4514 = vlaneseq
        %v4515 = vshrl.u32 %v4514, 7
        %v4516 = vadd.s32 %v4515, 24
        %4517 = vset.pattern.permute.xlu0 %v4516
        %4518 = vperm.xlu0 %4517, %v4495
        %v4519 = vpop.permute.xlu0 %4518
        %v4520 = vlaneseq
        %v4521 = vshrl.u32 %v4520, 7
        %v4522 = vadd.s32 %v4521, 32
        %4523 = vset.pattern.permute.xlu0 %v4522
        %4524 = vperm.xlu0 %4523, %v4495
        %v4525 = vpop.permute.xlu0 %4524
        %v4526 = vlaneseq
        %v4527 = vshrl.u32 %v4526, 7
        %v4528 = vadd.s32 %v4527, 40
        %4529 = vset.pattern.permute.xlu0 %v4528
        %4530 = vperm.xlu0 %4529, %v4495
        %v4531 = vpop.permute.xlu0 %4530
        %v4532 = vlaneseq
        %v4533 = vshrl.u32 %v4532, 7
        %v4534 = vadd.s32 %v4533, 48
        %4535 = vset.pattern.permute.xlu0 %v4534
        %4536 = vperm.xlu0 %4535, %v4495
        %v4537 = vpop.permute.xlu0 %4536
        %v4538 = vlaneseq
        %v4539 = vshrl.u32 %v4538, 7
        %v4540 = vadd.s32 %v4539, 56
        %4541 = vset.pattern.permute.xlu0 %v4540
        %4542 = vperm.xlu0 %4541, %v4495
        %v4543 = vpop.permute.xlu0 %4542
        %v4544 = vlaneseq
        %v4545 = vshrl.u32 %v4544, 7
        %v4546 = vadd.s32 %v4545, 64
        %4547 = vset.pattern.permute.xlu0 %v4546
        %4548 = vperm.xlu0 %4547, %v4495
        %v4549 = vpop.permute.xlu0 %4548
        %v4550 = vlaneseq
        %v4551 = vshrl.u32 %v4550, 7
        %v4552 = vadd.s32 %v4551, 72
        %4553 = vset.pattern.permute.xlu0 %v4552
        %4554 = vperm.xlu0 %4553, %v4495
        %v4555 = vpop.permute.xlu0 %4554
        %v4556 = vlaneseq
        %v4557 = vshrl.u32 %v4556, 7
        %v4558 = vadd.s32 %v4557, 80
        %4559 = vset.pattern.permute.xlu0 %v4558
        %4560 = vperm.xlu0 %4559, %v4495
        %v4561 = vpop.permute.xlu0 %4560
        %v4562 = vlaneseq
        %v4563 = vshrl.u32 %v4562, 7
        %v4564 = vadd.s32 %v4563, 88
        %4565 = vset.pattern.permute.xlu0 %v4564
        %4566 = vperm.xlu0 %4565, %v4495
        %v4567 = vpop.permute.xlu0 %4566
        %v4568 = vlaneseq
        %v4569 = vshrl.u32 %v4568, 7
        %v4570 = vadd.s32 %v4569, 96
        %4571 = vset.pattern.permute.xlu0 %v4570
        %4572 = vperm.xlu0 %4571, %v4495
        %v4573 = vpop.permute.xlu0 %4572
        %v4574 = vlaneseq
        %v4575 = vshrl.u32 %v4574, 7
        %v4576 = vadd.s32 %v4575, 104
        %4577 = vset.pattern.permute.xlu0 %v4576
        %4578 = vperm.xlu0 %4577, %v4495
        %v4579 = vpop.permute.xlu0 %4578
        %v4580 = vlaneseq
        %v4581 = vshrl.u32 %v4580, 7
        %v4582 = vadd.s32 %v4581, 112
        %4583 = vset.pattern.permute.xlu0 %v4582
        %4584 = vperm.xlu0 %4583, %v4495
        %v4585 = vpop.permute.xlu0 %4584
        %v4586 = vlaneseq
        %v4587 = vshrl.u32 %v4586, 7
        %v4588 = vadd.s32 %v4587, 120
        %4589 = vset.pattern.permute.xlu0 %v4588
        %4590 = vperm.xlu0 %4589, %v4495
        %v4591 = vpop.permute.xlu0 %4590
        %v4592 = vperm.slane %v4106, 5
        %v4593 = vlaneseq
        %v4594 = vshrl.u32 %v4593, 7
        %4596 = vset.pattern.permute.xlu0 %v4594
        %4597 = vperm.xlu0 %4596, %v4592
        %v4598 = vpop.permute.xlu0 %4597
        %v4599 = vlaneseq
        %v4600 = vshrl.u32 %v4599, 7
        %v4601 = vadd.s32 %v4600, 8
        %4602 = vset.pattern.permute.xlu0 %v4601
        %4603 = vperm.xlu0 %4602, %v4592
        %v4604 = vpop.permute.xlu0 %4603
        %v4605 = vlaneseq
        %v4606 = vshrl.u32 %v4605, 7
        %v4607 = vadd.s32 %v4606, 16
        %4608 = vset.pattern.permute.xlu0 %v4607
        %4609 = vperm.xlu0 %4608, %v4592
        %v4610 = vpop.permute.xlu0 %4609
        %v4611 = vlaneseq
        %v4612 = vshrl.u32 %v4611, 7
        %v4613 = vadd.s32 %v4612, 24
        %4614 = vset.pattern.permute.xlu0 %v4613
        %4615 = vperm.xlu0 %4614, %v4592
        %v4616 = vpop.permute.xlu0 %4615
        %v4617 = vlaneseq
        %v4618 = vshrl.u32 %v4617, 7
        %v4619 = vadd.s32 %v4618, 32
        %4620 = vset.pattern.permute.xlu0 %v4619
        %4621 = vperm.xlu0 %4620, %v4592
        %v4622 = vpop.permute.xlu0 %4621
        %v4623 = vlaneseq
        %v4624 = vshrl.u32 %v4623, 7
        %v4625 = vadd.s32 %v4624, 40
        %4626 = vset.pattern.permute.xlu0 %v4625
        %4627 = vperm.xlu0 %4626, %v4592
        %v4628 = vpop.permute.xlu0 %4627
        %v4629 = vlaneseq
        %v4630 = vshrl.u32 %v4629, 7
        %v4631 = vadd.s32 %v4630, 48
        %4632 = vset.pattern.permute.xlu0 %v4631
        %4633 = vperm.xlu0 %4632, %v4592
        %v4634 = vpop.permute.xlu0 %4633
        %v4635 = vlaneseq
        %v4636 = vshrl.u32 %v4635, 7
        %v4637 = vadd.s32 %v4636, 56
        %4638 = vset.pattern.permute.xlu0 %v4637
        %4639 = vperm.xlu0 %4638, %v4592
        %v4640 = vpop.permute.xlu0 %4639
        %v4641 = vlaneseq
        %v4642 = vshrl.u32 %v4641, 7
        %v4643 = vadd.s32 %v4642, 64
        %4644 = vset.pattern.permute.xlu0 %v4643
        %4645 = vperm.xlu0 %4644, %v4592
        %v4646 = vpop.permute.xlu0 %4645
        %v4647 = vlaneseq
        %v4648 = vshrl.u32 %v4647, 7
        %v4649 = vadd.s32 %v4648, 72
        %4650 = vset.pattern.permute.xlu0 %v4649
        %4651 = vperm.xlu0 %4650, %v4592
        %v4652 = vpop.permute.xlu0 %4651
        %v4653 = vlaneseq
        %v4654 = vshrl.u32 %v4653, 7
        %v4655 = vadd.s32 %v4654, 80
        %4656 = vset.pattern.permute.xlu0 %v4655
        %4657 = vperm.xlu0 %4656, %v4592
        %v4658 = vpop.permute.xlu0 %4657
        %v4659 = vlaneseq
        %v4660 = vshrl.u32 %v4659, 7
        %v4661 = vadd.s32 %v4660, 88
        %4662 = vset.pattern.permute.xlu0 %v4661
        %4663 = vperm.xlu0 %4662, %v4592
        %v4664 = vpop.permute.xlu0 %4663
        %v4665 = vlaneseq
        %v4666 = vshrl.u32 %v4665, 7
        %v4667 = vadd.s32 %v4666, 96
        %4668 = vset.pattern.permute.xlu0 %v4667
        %4669 = vperm.xlu0 %4668, %v4592
        %v4670 = vpop.permute.xlu0 %4669
        %v4671 = vlaneseq
        %v4672 = vshrl.u32 %v4671, 7
        %v4673 = vadd.s32 %v4672, 104
        %4674 = vset.pattern.permute.xlu0 %v4673
        %4675 = vperm.xlu0 %4674, %v4592
        %v4676 = vpop.permute.xlu0 %4675
        %v4677 = vlaneseq
        %v4678 = vshrl.u32 %v4677, 7
        %v4679 = vadd.s32 %v4678, 112
        %4680 = vset.pattern.permute.xlu0 %v4679
        %4681 = vperm.xlu0 %4680, %v4592
        %v4682 = vpop.permute.xlu0 %4681
        %v4683 = vlaneseq
        %v4684 = vshrl.u32 %v4683, 7
        %v4685 = vadd.s32 %v4684, 120
        %4686 = vset.pattern.permute.xlu0 %v4685
        %4687 = vperm.xlu0 %4686, %v4592
        %v4688 = vpop.permute.xlu0 %4687
        %v4689 = vperm.slane %v4106, 6
        %v4690 = vlaneseq
        %v4691 = vshrl.u32 %v4690, 7
        %4693 = vset.pattern.permute.xlu0 %v4691
        %4694 = vperm.xlu0 %4693, %v4689
        %v4695 = vpop.permute.xlu0 %4694
        %v4696 = vlaneseq
        %v4697 = vshrl.u32 %v4696, 7
        %v4698 = vadd.s32 %v4697, 8
        %4699 = vset.pattern.permute.xlu0 %v4698
        %4700 = vperm.xlu0 %4699, %v4689
        %v4701 = vpop.permute.xlu0 %4700
        %v4702 = vlaneseq
        %v4703 = vshrl.u32 %v4702, 7
        %v4704 = vadd.s32 %v4703, 16
        %4705 = vset.pattern.permute.xlu0 %v4704
        %4706 = vperm.xlu0 %4705, %v4689
        %v4707 = vpop.permute.xlu0 %4706
        %v4708 = vlaneseq
        %v4709 = vshrl.u32 %v4708, 7
        %v4710 = vadd.s32 %v4709, 24
        %4711 = vset.pattern.permute.xlu0 %v4710
        %4712 = vperm.xlu0 %4711, %v4689
        %v4713 = vpop.permute.xlu0 %4712
        %v4714 = vlaneseq
        %v4715 = vshrl.u32 %v4714, 7
        %v4716 = vadd.s32 %v4715, 32
        %4717 = vset.pattern.permute.xlu0 %v4716
        %4718 = vperm.xlu0 %4717, %v4689
        %v4719 = vpop.permute.xlu0 %4718
        %v4720 = vlaneseq
        %v4721 = vshrl.u32 %v4720, 7
        %v4722 = vadd.s32 %v4721, 40
        %4723 = vset.pattern.permute.xlu0 %v4722
        %4724 = vperm.xlu0 %4723, %v4689
        %v4725 = vpop.permute.xlu0 %4724
        %v4726 = vlaneseq
        %v4727 = vshrl.u32 %v4726, 7
        %v4728 = vadd.s32 %v4727, 48
        %4729 = vset.pattern.permute.xlu0 %v4728
        %4730 = vperm.xlu0 %4729, %v4689
        %v4731 = vpop.permute.xlu0 %4730
        %v4732 = vlaneseq
        %v4733 = vshrl.u32 %v4732, 7
        %v4734 = vadd.s32 %v4733, 56
        %4735 = vset.pattern.permute.xlu0 %v4734
        %4736 = vperm.xlu0 %4735, %v4689
        %v4737 = vpop.permute.xlu0 %4736
        %v4738 = vlaneseq
        %v4739 = vshrl.u32 %v4738, 7
        %v4740 = vadd.s32 %v4739, 64
        %4741 = vset.pattern.permute.xlu0 %v4740
        %4742 = vperm.xlu0 %4741, %v4689
        %v4743 = vpop.permute.xlu0 %4742
        %v4744 = vlaneseq
        %v4745 = vshrl.u32 %v4744, 7
        %v4746 = vadd.s32 %v4745, 72
        %4747 = vset.pattern.permute.xlu0 %v4746
        %4748 = vperm.xlu0 %4747, %v4689
        %v4749 = vpop.permute.xlu0 %4748
        %v4750 = vlaneseq
        %v4751 = vshrl.u32 %v4750, 7
        %v4752 = vadd.s32 %v4751, 80
        %4753 = vset.pattern.permute.xlu0 %v4752
        %4754 = vperm.xlu0 %4753, %v4689
        %v4755 = vpop.permute.xlu0 %4754
        %v4756 = vlaneseq
        %v4757 = vshrl.u32 %v4756, 7
        %v4758 = vadd.s32 %v4757, 88
        %4759 = vset.pattern.permute.xlu0 %v4758
        %4760 = vperm.xlu0 %4759, %v4689
        %v4761 = vpop.permute.xlu0 %4760
        %v4762 = vlaneseq
        %v4763 = vshrl.u32 %v4762, 7
        %v4764 = vadd.s32 %v4763, 96
        %4765 = vset.pattern.permute.xlu0 %v4764
        %4766 = vperm.xlu0 %4765, %v4689
        %v4767 = vpop.permute.xlu0 %4766
        %v4768 = vlaneseq
        %v4769 = vshrl.u32 %v4768, 7
        %v4770 = vadd.s32 %v4769, 104
        %4771 = vset.pattern.permute.xlu0 %v4770
        %4772 = vperm.xlu0 %4771, %v4689
        %v4773 = vpop.permute.xlu0 %4772
        %v4774 = vlaneseq
        %v4775 = vshrl.u32 %v4774, 7
        %v4776 = vadd.s32 %v4775, 112
        %4777 = vset.pattern.permute.xlu0 %v4776
        %4778 = vperm.xlu0 %4777, %v4689
        %v4779 = vpop.permute.xlu0 %4778
        %v4780 = vlaneseq
        %v4781 = vshrl.u32 %v4780, 7
        %v4782 = vadd.s32 %v4781, 120
        %4783 = vset.pattern.permute.xlu0 %v4782
        %4784 = vperm.xlu0 %4783, %v4689
        %v4785 = vpop.permute.xlu0 %4784
        %v4786 = vperm.slane %v4106, 7
        %v4787 = vlaneseq
        %v4788 = vshrl.u32 %v4787, 7
        %4790 = vset.pattern.permute.xlu0 %v4788
        %4791 = vperm.xlu0 %4790, %v4786
        %v4792 = vpop.permute.xlu0 %4791
        %v4793 = vlaneseq
        %v4794 = vshrl.u32 %v4793, 7
        %v4795 = vadd.s32 %v4794, 8
        %4796 = vset.pattern.permute.xlu0 %v4795
        %4797 = vperm.xlu0 %4796, %v4786
        %v4798 = vpop.permute.xlu0 %4797
        %v4799 = vlaneseq
        %v4800 = vshrl.u32 %v4799, 7
        %v4801 = vadd.s32 %v4800, 16
        %4802 = vset.pattern.permute.xlu0 %v4801
        %4803 = vperm.xlu0 %4802, %v4786
        %v4804 = vpop.permute.xlu0 %4803
        %v4805 = vlaneseq
        %v4806 = vshrl.u32 %v4805, 7
        %v4807 = vadd.s32 %v4806, 24
        %4808 = vset.pattern.permute.xlu0 %v4807
        %4809 = vperm.xlu0 %4808, %v4786
        %v4810 = vpop.permute.xlu0 %4809
        %v4811 = vlaneseq
        %v4812 = vshrl.u32 %v4811, 7
        %v4813 = vadd.s32 %v4812, 32
        %4814 = vset.pattern.permute.xlu0 %v4813
        %4815 = vperm.xlu0 %4814, %v4786
        %v4816 = vpop.permute.xlu0 %4815
        %v4817 = vlaneseq
        %v4818 = vshrl.u32 %v4817, 7
        %v4819 = vadd.s32 %v4818, 40
        %4820 = vset.pattern.permute.xlu0 %v4819
        %4821 = vperm.xlu0 %4820, %v4786
        %v4822 = vpop.permute.xlu0 %4821
        %v4823 = vlaneseq
        %v4824 = vshrl.u32 %v4823, 7
        %v4825 = vadd.s32 %v4824, 48
        %4826 = vset.pattern.permute.xlu0 %v4825
        %4827 = vperm.xlu0 %4826, %v4786
        %v4828 = vpop.permute.xlu0 %4827
        %v4829 = vlaneseq
        %v4830 = vshrl.u32 %v4829, 7
        %v4831 = vadd.s32 %v4830, 56
        %4832 = vset.pattern.permute.xlu0 %v4831
        %4833 = vperm.xlu0 %4832, %v4786
        %v4834 = vpop.permute.xlu0 %4833
        %v4835 = vlaneseq
        %v4836 = vshrl.u32 %v4835, 7
        %v4837 = vadd.s32 %v4836, 64
        %4838 = vset.pattern.permute.xlu0 %v4837
        %4839 = vperm.xlu0 %4838, %v4786
        %v4840 = vpop.permute.xlu0 %4839
        %v4841 = vlaneseq
        %v4842 = vshrl.u32 %v4841, 7
        %v4843 = vadd.s32 %v4842, 72
        %4844 = vset.pattern.permute.xlu0 %v4843
        %4845 = vperm.xlu0 %4844, %v4786
        %v4846 = vpop.permute.xlu0 %4845
        %v4847 = vlaneseq
        %v4848 = vshrl.u32 %v4847, 7
        %v4849 = vadd.s32 %v4848, 80
        %4850 = vset.pattern.permute.xlu0 %v4849
        %4851 = vperm.xlu0 %4850, %v4786
        %v4852 = vpop.permute.xlu0 %4851
        %v4853 = vlaneseq
        %v4854 = vshrl.u32 %v4853, 7
        %v4855 = vadd.s32 %v4854, 88
        %4856 = vset.pattern.permute.xlu0 %v4855
        %4857 = vperm.xlu0 %4856, %v4786
        %v4858 = vpop.permute.xlu0 %4857
        %v4859 = vlaneseq
        %v4860 = vshrl.u32 %v4859, 7
        %v4861 = vadd.s32 %v4860, 96
        %4862 = vset.pattern.permute.xlu0 %v4861
        %4863 = vperm.xlu0 %4862, %v4786
        %v4864 = vpop.permute.xlu0 %4863
        %v4865 = vlaneseq
        %v4866 = vshrl.u32 %v4865, 7
        %v4867 = vadd.s32 %v4866, 104
        %4868 = vset.pattern.permute.xlu0 %v4867
        %4869 = vperm.xlu0 %4868, %v4786
        %v4870 = vpop.permute.xlu0 %4869
        %v4871 = vlaneseq
        %v4872 = vshrl.u32 %v4871, 7
        %v4873 = vadd.s32 %v4872, 112
        %4874 = vset.pattern.permute.xlu0 %v4873
        %4875 = vperm.xlu0 %4874, %v4786
        %v4876 = vpop.permute.xlu0 %4875
        %v4877 = vlaneseq
        %v4878 = vshrl.u32 %v4877, 7
        %v4879 = vadd.s32 %v4878, 120
        %4880 = vset.pattern.permute.xlu0 %v4879
        %4881 = vperm.xlu0 %4880, %v4786
        %v4882 = vpop.permute.xlu0 %4881
        %vm4883 = vcmp.eq.s32.totalorder %v4113, %v601
        %vm4884 = vcmp.eq.s32.totalorder %v4119, %v601
        %vm4885 = vcmp.eq.s32.totalorder %v4125, %v601
        %vm4886 = vcmp.eq.s32.totalorder %v4131, %v601
        %vm4887 = vcmp.eq.s32.totalorder %v4137, %v601
        %vm4888 = vcmp.eq.s32.totalorder %v4143, %v601
        %vm4889 = vcmp.eq.s32.totalorder %v4149, %v601
        %vm4890 = vcmp.eq.s32.totalorder %v4155, %v601
        %vm4891 = vcmp.eq.s32.totalorder %v4161, %v601
        %vm4892 = vcmp.eq.s32.totalorder %v4167, %v601
        %vm4893 = vcmp.eq.s32.totalorder %v4173, %v601
        %vm4894 = vcmp.eq.s32.totalorder %v4179, %v601
        %vm4895 = vcmp.eq.s32.totalorder %v4185, %v601
        %vm4896 = vcmp.eq.s32.totalorder %v4191, %v601
        %vm4897 = vcmp.eq.s32.totalorder %v4197, %v601
        %vm4898 = vcmp.eq.s32.totalorder %v4203, %v601
        %vm4899 = vcmp.eq.s32.totalorder %v4210, %v601
        %vm4900 = vcmp.eq.s32.totalorder %v4216, %v601
        %vm4901 = vcmp.eq.s32.totalorder %v4222, %v601
        %vm4902 = vcmp.eq.s32.totalorder %v4228, %v601
        %vm4903 = vcmp.eq.s32.totalorder %v4234, %v601
        %vm4904 = vcmp.eq.s32.totalorder %v4240, %v601
        %vm4905 = vcmp.eq.s32.totalorder %v4246, %v601
        %vm4906 = vcmp.eq.s32.totalorder %v4252, %v601
        %vm4907 = vcmp.eq.s32.totalorder %v4258, %v601
        %vm4908 = vcmp.eq.s32.totalorder %v4264, %v601
        %vm4909 = vcmp.eq.s32.totalorder %v4270, %v601
        %vm4910 = vcmp.eq.s32.totalorder %v4276, %v601
        %vm4911 = vcmp.eq.s32.totalorder %v4282, %v601
        %vm4912 = vcmp.eq.s32.totalorder %v4288, %v601
        %vm4913 = vcmp.eq.s32.totalorder %v4294, %v601
        %vm4914 = vcmp.eq.s32.totalorder %v4300, %v601
        %vm4915 = vcmp.eq.s32.totalorder %v4307, %v601
        %vm4916 = vcmp.eq.s32.totalorder %v4313, %v601
        %vm4917 = vcmp.eq.s32.totalorder %v4319, %v601
        %vm4918 = vcmp.eq.s32.totalorder %v4325, %v601
        %vm4919 = vcmp.eq.s32.totalorder %v4331, %v601
        %vm4920 = vcmp.eq.s32.totalorder %v4337, %v601
        %vm4921 = vcmp.eq.s32.totalorder %v4343, %v601
        %vm4922 = vcmp.eq.s32.totalorder %v4349, %v601
        %vm4923 = vcmp.eq.s32.totalorder %v4355, %v601
        %vm4924 = vcmp.eq.s32.totalorder %v4361, %v601
        %vm4925 = vcmp.eq.s32.totalorder %v4367, %v601
        %vm4926 = vcmp.eq.s32.totalorder %v4373, %v601
        %vm4927 = vcmp.eq.s32.totalorder %v4379, %v601
        %vm4928 = vcmp.eq.s32.totalorder %v4385, %v601
        %vm4929 = vcmp.eq.s32.totalorder %v4391, %v601
        %vm4930 = vcmp.eq.s32.totalorder %v4397, %v601
        %vm4931 = vcmp.eq.s32.totalorder %v4404, %v601
        %vm4932 = vcmp.eq.s32.totalorder %v4410, %v601
        %vm4933 = vcmp.eq.s32.totalorder %v4416, %v601
        %vm4934 = vcmp.eq.s32.totalorder %v4422, %v601
        %vm4935 = vcmp.eq.s32.totalorder %v4428, %v601
        %vm4936 = vcmp.eq.s32.totalorder %v4434, %v601
        %vm4937 = vcmp.eq.s32.totalorder %v4440, %v601
        %vm4938 = vcmp.eq.s32.totalorder %v4446, %v601
        %vm4939 = vcmp.eq.s32.totalorder %v4452, %v601
        %vm4940 = vcmp.eq.s32.totalorder %v4458, %v601
        %vm4941 = vcmp.eq.s32.totalorder %v4464, %v601
        %vm4942 = vcmp.eq.s32.totalorder %v4470, %v601
        %vm4943 = vcmp.eq.s32.totalorder %v4476, %v601
        %vm4944 = vcmp.eq.s32.totalorder %v4482, %v601
        %vm4945 = vcmp.eq.s32.totalorder %v4488, %v601
        %vm4946 = vcmp.eq.s32.totalorder %v4494, %v601
        %vm4947 = vcmp.eq.s32.totalorder %v4501, %v601
        %vm4948 = vcmp.eq.s32.totalorder %v4507, %v601
        %vm4949 = vcmp.eq.s32.totalorder %v4513, %v601
        %vm4950 = vcmp.eq.s32.totalorder %v4519, %v601
        %vm4951 = vcmp.eq.s32.totalorder %v4525, %v601
        %vm4952 = vcmp.eq.s32.totalorder %v4531, %v601
        %vm4953 = vcmp.eq.s32.totalorder %v4537, %v601
        %vm4954 = vcmp.eq.s32.totalorder %v4543, %v601
        %vm4955 = vcmp.eq.s32.totalorder %v4549, %v601
        %vm4956 = vcmp.eq.s32.totalorder %v4555, %v601
        %vm4957 = vcmp.eq.s32.totalorder %v4561, %v601
        %vm4958 = vcmp.eq.s32.totalorder %v4567, %v601
        %vm4959 = vcmp.eq.s32.totalorder %v4573, %v601
        %vm4960 = vcmp.eq.s32.totalorder %v4579, %v601
        %vm4961 = vcmp.eq.s32.totalorder %v4585, %v601
        %vm4962 = vcmp.eq.s32.totalorder %v4591, %v601
        %vm4963 = vcmp.eq.s32.totalorder %v4598, %v601
        %vm4964 = vcmp.eq.s32.totalorder %v4604, %v601
        %vm4965 = vcmp.eq.s32.totalorder %v4610, %v601
        %vm4966 = vcmp.eq.s32.totalorder %v4616, %v601
        %vm4967 = vcmp.eq.s32.totalorder %v4622, %v601
        %vm4968 = vcmp.eq.s32.totalorder %v4628, %v601
        %vm4969 = vcmp.eq.s32.totalorder %v4634, %v601
        %vm4970 = vcmp.eq.s32.totalorder %v4640, %v601
        %vm4971 = vcmp.eq.s32.totalorder %v4646, %v601
        %vm4972 = vcmp.eq.s32.totalorder %v4652, %v601
        %vm4973 = vcmp.eq.s32.totalorder %v4658, %v601
        %vm4974 = vcmp.eq.s32.totalorder %v4664, %v601
        %vm4975 = vcmp.eq.s32.totalorder %v4670, %v601
        %vm4976 = vcmp.eq.s32.totalorder %v4676, %v601
        %vm4977 = vcmp.eq.s32.totalorder %v4682, %v601
        %vm4978 = vcmp.eq.s32.totalorder %v4688, %v601
        %vm4979 = vcmp.eq.s32.totalorder %v4695, %v601
        %vm4980 = vcmp.eq.s32.totalorder %v4701, %v601
        %vm4981 = vcmp.eq.s32.totalorder %v4707, %v601
        %vm4982 = vcmp.eq.s32.totalorder %v4713, %v601
        %vm4983 = vcmp.eq.s32.totalorder %v4719, %v601
        %vm4984 = vcmp.eq.s32.totalorder %v4725, %v601
        %vm4985 = vcmp.eq.s32.totalorder %v4731, %v601
        %vm4986 = vcmp.eq.s32.totalorder %v4737, %v601
        %vm4987 = vcmp.eq.s32.totalorder %v4743, %v601
        %vm4988 = vcmp.eq.s32.totalorder %v4749, %v601
        %vm4989 = vcmp.eq.s32.totalorder %v4755, %v601
        %vm4990 = vcmp.eq.s32.totalorder %v4761, %v601
        %vm4991 = vcmp.eq.s32.totalorder %v4767, %v601
        %vm4992 = vcmp.eq.s32.totalorder %v4773, %v601
        %vm4993 = vcmp.eq.s32.totalorder %v4779, %v601
        %vm4994 = vcmp.eq.s32.totalorder %v4785, %v601
        %vm4995 = vcmp.eq.s32.totalorder %v4792, %v601
        %vm4996 = vcmp.eq.s32.totalorder %v4798, %v601
        %vm4997 = vcmp.eq.s32.totalorder %v4804, %v601
        %vm4998 = vcmp.eq.s32.totalorder %v4810, %v601
        %vm4999 = vcmp.eq.s32.totalorder %v4816, %v601
        %vm5000 = vcmp.eq.s32.totalorder %v4822, %v601
        %vm5001 = vcmp.eq.s32.totalorder %v4828, %v601
        %vm5002 = vcmp.eq.s32.totalorder %v4834, %v601
        %vm5003 = vcmp.eq.s32.totalorder %v4840, %v601
        %vm5004 = vcmp.eq.s32.totalorder %v4846, %v601
        %vm5005 = vcmp.eq.s32.totalorder %v4852, %v601
        %vm5006 = vcmp.eq.s32.totalorder %v4858, %v601
        %vm5007 = vcmp.eq.s32.totalorder %v4864, %v601
        %vm5008 = vcmp.eq.s32.totalorder %v4870, %v601
        %vm5009 = vcmp.eq.s32.totalorder %v4876, %v601
        %vm5010 = vcmp.eq.s32.totalorder %v4882, %v601
        %v5011 = vsel %vm4883, 1, 0
        %v5012 = vsel %vm4884, 1, 0
        %v5013 = vsel %vm4885, 1, 0
        %v5014 = vsel %vm4886, 1, 0
        %v5015 = vsel %vm4887, 1, 0
        %v5016 = vsel %vm4888, 1, 0
        %v5017 = vsel %vm4889, 1, 0
        %v5018 = vsel %vm4890, 1, 0
        %v5019 = vsel %vm4891, 1, 0
        %v5020 = vsel %vm4892, 1, 0
        %v5021 = vsel %vm4893, 1, 0
        %v5022 = vsel %vm4894, 1, 0
        %v5023 = vsel %vm4895, 1, 0
        %v5024 = vsel %vm4896, 1, 0
        %v5025 = vsel %vm4897, 1, 0
        %v5026 = vsel %vm4898, 1, 0
        %v5027 = vsel %vm4899, 1, 0
        %v5028 = vsel %vm4900, 1, 0
        %v5029 = vsel %vm4901, 1, 0
        %v5030 = vsel %vm4902, 1, 0
        %v5031 = vsel %vm4903, 1, 0
        %v5032 = vsel %vm4904, 1, 0
        %v5033 = vsel %vm4905, 1, 0
        %v5034 = vsel %vm4906, 1, 0
        %v5035 = vsel %vm4907, 1, 0
        %v5036 = vsel %vm4908, 1, 0
        %v5037 = vsel %vm4909, 1, 0
        %v5038 = vsel %vm4910, 1, 0
        %v5039 = vsel %vm4911, 1, 0
        %v5040 = vsel %vm4912, 1, 0
        %v5041 = vsel %vm4913, 1, 0
        %v5042 = vsel %vm4914, 1, 0
        %v5043 = vsel %vm4915, 1, 0
        %v5044 = vsel %vm4916, 1, 0
        %v5045 = vsel %vm4917, 1, 0
        %v5046 = vsel %vm4918, 1, 0
        %v5047 = vsel %vm4919, 1, 0
        %v5048 = vsel %vm4920, 1, 0
        %v5049 = vsel %vm4921, 1, 0
        %v5050 = vsel %vm4922, 1, 0
        %v5051 = vsel %vm4923, 1, 0
        %v5052 = vsel %vm4924, 1, 0
        %v5053 = vsel %vm4925, 1, 0
        %v5054 = vsel %vm4926, 1, 0
        %v5055 = vsel %vm4927, 1, 0
        %v5056 = vsel %vm4928, 1, 0
        %v5057 = vsel %vm4929, 1, 0
        %v5058 = vsel %vm4930, 1, 0
        %v5059 = vsel %vm4931, 1, 0
        %v5060 = vsel %vm4932, 1, 0
        %v5061 = vsel %vm4933, 1, 0
        %v5062 = vsel %vm4934, 1, 0
        %v5063 = vsel %vm4935, 1, 0
        %v5064 = vsel %vm4936, 1, 0
        %v5065 = vsel %vm4937, 1, 0
        %v5066 = vsel %vm4938, 1, 0
        %v5067 = vsel %vm4939, 1, 0
        %v5068 = vsel %vm4940, 1, 0
        %v5069 = vsel %vm4941, 1, 0
        %v5070 = vsel %vm4942, 1, 0
        %v5071 = vsel %vm4943, 1, 0
        %v5072 = vsel %vm4944, 1, 0
        %v5073 = vsel %vm4945, 1, 0
        %v5074 = vsel %vm4946, 1, 0
        %v5075 = vsel %vm4947, 1, 0
        %v5076 = vsel %vm4948, 1, 0
        %v5077 = vsel %vm4949, 1, 0
        %v5078 = vsel %vm4950, 1, 0
        %v5079 = vsel %vm4951, 1, 0
        %v5080 = vsel %vm4952, 1, 0
        %v5081 = vsel %vm4953, 1, 0
        %v5082 = vsel %vm4954, 1, 0
        %v5083 = vsel %vm4955, 1, 0
        %v5084 = vsel %vm4956, 1, 0
        %v5085 = vsel %vm4957, 1, 0
        %v5086 = vsel %vm4958, 1, 0
        %v5087 = vsel %vm4959, 1, 0
        %v5088 = vsel %vm4960, 1, 0
        %v5089 = vsel %vm4961, 1, 0
        %v5090 = vsel %vm4962, 1, 0
        %v5091 = vsel %vm4963, 1, 0
        %v5092 = vsel %vm4964, 1, 0
        %v5093 = vsel %vm4965, 1, 0
        %v5094 = vsel %vm4966, 1, 0
        %v5095 = vsel %vm4967, 1, 0
        %v5096 = vsel %vm4968, 1, 0
        %v5097 = vsel %vm4969, 1, 0
        %v5098 = vsel %vm4970, 1, 0
        %v5099 = vsel %vm4971, 1, 0
        %v5100 = vsel %vm4972, 1, 0
        %v5101 = vsel %vm4973, 1, 0
        %v5102 = vsel %vm4974, 1, 0
        %v5103 = vsel %vm4975, 1, 0
        %v5104 = vsel %vm4976, 1, 0
        %v5105 = vsel %vm4977, 1, 0
        %v5106 = vsel %vm4978, 1, 0
        %v5107 = vsel %vm4979, 1, 0
        %v5108 = vsel %vm4980, 1, 0
        %v5109 = vsel %vm4981, 1, 0
        %v5110 = vsel %vm4982, 1, 0
        %v5111 = vsel %vm4983, 1, 0
        %v5112 = vsel %vm4984, 1, 0
        %v5113 = vsel %vm4985, 1, 0
        %v5114 = vsel %vm4986, 1, 0
        %v5115 = vsel %vm4987, 1, 0
        %v5116 = vsel %vm4988, 1, 0
        %v5117 = vsel %vm4989, 1, 0
        %v5118 = vsel %vm4990, 1, 0
        %v5119 = vsel %vm4991, 1, 0
        %v5120 = vsel %vm4992, 1, 0
        %v5121 = vsel %vm4993, 1, 0
        %v5122 = vsel %vm4994, 1, 0
        %v5123 = vsel %vm4995, 1, 0
        %v5124 = vsel %vm4996, 1, 0
        %v5125 = vsel %vm4997, 1, 0
        %v5126 = vsel %vm4998, 1, 0
        %v5127 = vsel %vm4999, 1, 0
        %v5128 = vsel %vm5000, 1, 0
        %v5129 = vsel %vm5001, 1, 0
        %v5130 = vsel %vm5002, 1, 0
        %v5131 = vsel %vm5003, 1, 0
        %v5132 = vsel %vm5004, 1, 0
        %v5133 = vsel %vm5005, 1, 0
        %v5134 = vsel %vm5006, 1, 0
        %v5135 = vsel %vm5007, 1, 0
        %v5136 = vsel %vm5008, 1, 0
        %v5137 = vsel %vm5009, 1, 0
        %v5138 = vsel %vm5010, 1, 0
        %v5139 = vcvt.s32.f32 %v5011
        %v5140 = vcvt.s32.f32 %v5012
        %v5141 = vcvt.s32.f32 %v5013
        %v5142 = vcvt.s32.f32 %v5014
        %v5143 = vcvt.s32.f32 %v5015
        %v5144 = vcvt.s32.f32 %v5016
        %v5145 = vcvt.s32.f32 %v5017
        %v5146 = vcvt.s32.f32 %v5018
        %v5147 = vcvt.s32.f32 %v5019
        %v5148 = vcvt.s32.f32 %v5020
        %v5149 = vcvt.s32.f32 %v5021
        %v5150 = vcvt.s32.f32 %v5022
        %v5151 = vcvt.s32.f32 %v5023
        %v5152 = vcvt.s32.f32 %v5024
        %v5153 = vcvt.s32.f32 %v5025
        %v5154 = vcvt.s32.f32 %v5026
        %v5155 = vcvt.s32.f32 %v5027
        %v5156 = vcvt.s32.f32 %v5028
        %v5157 = vcvt.s32.f32 %v5029
        %v5158 = vcvt.s32.f32 %v5030
        %v5159 = vcvt.s32.f32 %v5031
        %v5160 = vcvt.s32.f32 %v5032
        %v5161 = vcvt.s32.f32 %v5033
        %v5162 = vcvt.s32.f32 %v5034
        %v5163 = vcvt.s32.f32 %v5035
        %v5164 = vcvt.s32.f32 %v5036
        %v5165 = vcvt.s32.f32 %v5037
        %v5166 = vcvt.s32.f32 %v5038
        %v5167 = vcvt.s32.f32 %v5039
        %v5168 = vcvt.s32.f32 %v5040
        %v5169 = vcvt.s32.f32 %v5041
        %v5170 = vcvt.s32.f32 %v5042
        %v5171 = vcvt.s32.f32 %v5043
        %v5172 = vcvt.s32.f32 %v5044
        %v5173 = vcvt.s32.f32 %v5045
        %v5174 = vcvt.s32.f32 %v5046
        %v5175 = vcvt.s32.f32 %v5047
        %v5176 = vcvt.s32.f32 %v5048
        %v5177 = vcvt.s32.f32 %v5049
        %v5178 = vcvt.s32.f32 %v5050
        %v5179 = vcvt.s32.f32 %v5051
        %v5180 = vcvt.s32.f32 %v5052
        %v5181 = vcvt.s32.f32 %v5053
        %v5182 = vcvt.s32.f32 %v5054
        %v5183 = vcvt.s32.f32 %v5055
        %v5184 = vcvt.s32.f32 %v5056
        %v5185 = vcvt.s32.f32 %v5057
        %v5186 = vcvt.s32.f32 %v5058
        %v5187 = vcvt.s32.f32 %v5059
        %v5188 = vcvt.s32.f32 %v5060
        %v5189 = vcvt.s32.f32 %v5061
        %v5190 = vcvt.s32.f32 %v5062
        %v5191 = vcvt.s32.f32 %v5063
        %v5192 = vcvt.s32.f32 %v5064
        %v5193 = vcvt.s32.f32 %v5065
        %v5194 = vcvt.s32.f32 %v5066
        %v5195 = vcvt.s32.f32 %v5067
        %v5196 = vcvt.s32.f32 %v5068
        %v5197 = vcvt.s32.f32 %v5069
        %v5198 = vcvt.s32.f32 %v5070
        %v5199 = vcvt.s32.f32 %v5071
        %v5200 = vcvt.s32.f32 %v5072
        %v5201 = vcvt.s32.f32 %v5073
        %v5202 = vcvt.s32.f32 %v5074
        %v5203 = vcvt.s32.f32 %v5075
        %v5204 = vcvt.s32.f32 %v5076
        %v5205 = vcvt.s32.f32 %v5077
        %v5206 = vcvt.s32.f32 %v5078
        %v5207 = vcvt.s32.f32 %v5079
        %v5208 = vcvt.s32.f32 %v5080
        %v5209 = vcvt.s32.f32 %v5081
        %v5210 = vcvt.s32.f32 %v5082
        %v5211 = vcvt.s32.f32 %v5083
        %v5212 = vcvt.s32.f32 %v5084
        %v5213 = vcvt.s32.f32 %v5085
        %v5214 = vcvt.s32.f32 %v5086
        %v5215 = vcvt.s32.f32 %v5087
        %v5216 = vcvt.s32.f32 %v5088
        %v5217 = vcvt.s32.f32 %v5089
        %v5218 = vcvt.s32.f32 %v5090
        %v5219 = vcvt.s32.f32 %v5091
        %v5220 = vcvt.s32.f32 %v5092
        %v5221 = vcvt.s32.f32 %v5093
        %v5222 = vcvt.s32.f32 %v5094
        %v5223 = vcvt.s32.f32 %v5095
        %v5224 = vcvt.s32.f32 %v5096
        %v5225 = vcvt.s32.f32 %v5097
        %v5226 = vcvt.s32.f32 %v5098
        %v5227 = vcvt.s32.f32 %v5099
        %v5228 = vcvt.s32.f32 %v5100
        %v5229 = vcvt.s32.f32 %v5101
        %v5230 = vcvt.s32.f32 %v5102
        %v5231 = vcvt.s32.f32 %v5103
        %v5232 = vcvt.s32.f32 %v5104
        %v5233 = vcvt.s32.f32 %v5105
        %v5234 = vcvt.s32.f32 %v5106
        %v5235 = vcvt.s32.f32 %v5107
        %v5236 = vcvt.s32.f32 %v5108
        %v5237 = vcvt.s32.f32 %v5109
        %v5238 = vcvt.s32.f32 %v5110
        %v5239 = vcvt.s32.f32 %v5111
        %v5240 = vcvt.s32.f32 %v5112
        %v5241 = vcvt.s32.f32 %v5113
        %v5242 = vcvt.s32.f32 %v5114
        %v5243 = vcvt.s32.f32 %v5115
        %v5244 = vcvt.s32.f32 %v5116
        %v5245 = vcvt.s32.f32 %v5117
        %v5246 = vcvt.s32.f32 %v5118
        %v5247 = vcvt.s32.f32 %v5119
        %v5248 = vcvt.s32.f32 %v5120
        %v5249 = vcvt.s32.f32 %v5121
        %v5250 = vcvt.s32.f32 %v5122
        %v5251 = vcvt.s32.f32 %v5123
        %v5252 = vcvt.s32.f32 %v5124
        %v5253 = vcvt.s32.f32 %v5125
        %v5254 = vcvt.s32.f32 %v5126
        %v5255 = vcvt.s32.f32 %v5127
        %v5256 = vcvt.s32.f32 %v5128
        %v5257 = vcvt.s32.f32 %v5129
        %v5258 = vcvt.s32.f32 %v5130
        %v5259 = vcvt.s32.f32 %v5131
        %v5260 = vcvt.s32.f32 %v5132
        %v5261 = vcvt.s32.f32 %v5133
        %v5262 = vcvt.s32.f32 %v5134
        %v5263 = vcvt.s32.f32 %v5135
        %v5264 = vcvt.s32.f32 %v5136
        %v5265 = vcvt.s32.f32 %v5137
        %v5266 = vcvt.s32.f32 %v5138
        %v5267 = vpack.c.bf16 %v5139, %v5139
        %v5268 = vpack.c.bf16 %v5140, %v5140
        %v5269 = vpack.c.bf16 %v5141, %v5141
        %v5270 = vpack.c.bf16 %v5142, %v5142
        %v5271 = vpack.c.bf16 %v5143, %v5143
        %v5272 = vpack.c.bf16 %v5144, %v5144
        %v5273 = vpack.c.bf16 %v5145, %v5145
        %v5274 = vpack.c.bf16 %v5146, %v5146
        %v5275 = vpack.c.bf16 %v5147, %v5147
        %v5276 = vpack.c.bf16 %v5148, %v5148
        %v5277 = vpack.c.bf16 %v5149, %v5149
        %v5278 = vpack.c.bf16 %v5150, %v5150
        %v5279 = vpack.c.bf16 %v5151, %v5151
        %v5280 = vpack.c.bf16 %v5152, %v5152
        %v5281 = vpack.c.bf16 %v5153, %v5153
        %v5282 = vpack.c.bf16 %v5154, %v5154
        %v5283 = vpack.c.bf16 %v5155, %v5155
        %v5284 = vpack.c.bf16 %v5156, %v5156
        %v5285 = vpack.c.bf16 %v5157, %v5157
        %v5286 = vpack.c.bf16 %v5158, %v5158
        %v5287 = vpack.c.bf16 %v5159, %v5159
        %v5288 = vpack.c.bf16 %v5160, %v5160
        %v5289 = vpack.c.bf16 %v5161, %v5161
        %v5290 = vpack.c.bf16 %v5162, %v5162
        %v5291 = vpack.c.bf16 %v5163, %v5163
        %v5292 = vpack.c.bf16 %v5164, %v5164
        %v5293 = vpack.c.bf16 %v5165, %v5165
        %v5294 = vpack.c.bf16 %v5166, %v5166
        %v5295 = vpack.c.bf16 %v5167, %v5167
        %v5296 = vpack.c.bf16 %v5168, %v5168
        %v5297 = vpack.c.bf16 %v5169, %v5169
        %v5298 = vpack.c.bf16 %v5170, %v5170
        %v5299 = vpack.c.bf16 %v5171, %v5171
        %v5300 = vpack.c.bf16 %v5172, %v5172
        %v5301 = vpack.c.bf16 %v5173, %v5173
        %v5302 = vpack.c.bf16 %v5174, %v5174
        %v5303 = vpack.c.bf16 %v5175, %v5175
        %v5304 = vpack.c.bf16 %v5176, %v5176
        %v5305 = vpack.c.bf16 %v5177, %v5177
        %v5306 = vpack.c.bf16 %v5178, %v5178
        %v5307 = vpack.c.bf16 %v5179, %v5179
        %v5308 = vpack.c.bf16 %v5180, %v5180
        %v5309 = vpack.c.bf16 %v5181, %v5181
        %v5310 = vpack.c.bf16 %v5182, %v5182
        %v5311 = vpack.c.bf16 %v5183, %v5183
        %v5312 = vpack.c.bf16 %v5184, %v5184
        %v5313 = vpack.c.bf16 %v5185, %v5185
        %v5314 = vpack.c.bf16 %v5186, %v5186
        %v5315 = vpack.c.bf16 %v5187, %v5187
        %v5316 = vpack.c.bf16 %v5188, %v5188
        %v5317 = vpack.c.bf16 %v5189, %v5189
        %v5318 = vpack.c.bf16 %v5190, %v5190
        %v5319 = vpack.c.bf16 %v5191, %v5191
        %v5320 = vpack.c.bf16 %v5192, %v5192
        %v5321 = vpack.c.bf16 %v5193, %v5193
        %v5322 = vpack.c.bf16 %v5194, %v5194
        %v5323 = vpack.c.bf16 %v5195, %v5195
        %v5324 = vpack.c.bf16 %v5196, %v5196
        %v5325 = vpack.c.bf16 %v5197, %v5197
        %v5326 = vpack.c.bf16 %v5198, %v5198
        %v5327 = vpack.c.bf16 %v5199, %v5199
        %v5328 = vpack.c.bf16 %v5200, %v5200
        %v5329 = vpack.c.bf16 %v5201, %v5201
        %v5330 = vpack.c.bf16 %v5202, %v5202
        %v5331 = vpack.c.bf16 %v5203, %v5203
        %v5332 = vpack.c.bf16 %v5204, %v5204
        %v5333 = vpack.c.bf16 %v5205, %v5205
        %v5334 = vpack.c.bf16 %v5206, %v5206
        %v5335 = vpack.c.bf16 %v5207, %v5207
        %v5336 = vpack.c.bf16 %v5208, %v5208
        %v5337 = vpack.c.bf16 %v5209, %v5209
        %v5338 = vpack.c.bf16 %v5210, %v5210
        %v5339 = vpack.c.bf16 %v5211, %v5211
        %v5340 = vpack.c.bf16 %v5212, %v5212
        %v5341 = vpack.c.bf16 %v5213, %v5213
        %v5342 = vpack.c.bf16 %v5214, %v5214
        %v5343 = vpack.c.bf16 %v5215, %v5215
        %v5344 = vpack.c.bf16 %v5216, %v5216
        %v5345 = vpack.c.bf16 %v5217, %v5217
        %v5346 = vpack.c.bf16 %v5218, %v5218
        %v5347 = vpack.c.bf16 %v5219, %v5219
        %v5348 = vpack.c.bf16 %v5220, %v5220
        %v5349 = vpack.c.bf16 %v5221, %v5221
        %v5350 = vpack.c.bf16 %v5222, %v5222
        %v5351 = vpack.c.bf16 %v5223, %v5223
        %v5352 = vpack.c.bf16 %v5224, %v5224
        %v5353 = vpack.c.bf16 %v5225, %v5225
        %v5354 = vpack.c.bf16 %v5226, %v5226
        %v5355 = vpack.c.bf16 %v5227, %v5227
        %v5356 = vpack.c.bf16 %v5228, %v5228
        %v5357 = vpack.c.bf16 %v5229, %v5229
        %v5358 = vpack.c.bf16 %v5230, %v5230
        %v5359 = vpack.c.bf16 %v5231, %v5231
        %v5360 = vpack.c.bf16 %v5232, %v5232
        %v5361 = vpack.c.bf16 %v5233, %v5233
        %v5362 = vpack.c.bf16 %v5234, %v5234
        %v5363 = vpack.c.bf16 %v5235, %v5235
        %v5364 = vpack.c.bf16 %v5236, %v5236
        %v5365 = vpack.c.bf16 %v5237, %v5237
        %v5366 = vpack.c.bf16 %v5238, %v5238
        %v5367 = vpack.c.bf16 %v5239, %v5239
        %v5368 = vpack.c.bf16 %v5240, %v5240
        %v5369 = vpack.c.bf16 %v5241, %v5241
        %v5370 = vpack.c.bf16 %v5242, %v5242
        %v5371 = vpack.c.bf16 %v5243, %v5243
        %v5372 = vpack.c.bf16 %v5244, %v5244
        %v5373 = vpack.c.bf16 %v5245, %v5245
        %v5374 = vpack.c.bf16 %v5246, %v5246
        %v5375 = vpack.c.bf16 %v5247, %v5247
        %v5376 = vpack.c.bf16 %v5248, %v5248
        %v5377 = vpack.c.bf16 %v5249, %v5249
        %v5378 = vpack.c.bf16 %v5250, %v5250
        %v5379 = vpack.c.bf16 %v5251, %v5251
        %v5380 = vpack.c.bf16 %v5252, %v5252
        %v5381 = vpack.c.bf16 %v5253, %v5253
        %v5382 = vpack.c.bf16 %v5254, %v5254
        %v5383 = vpack.c.bf16 %v5255, %v5255
        %v5384 = vpack.c.bf16 %v5256, %v5256
        %v5385 = vpack.c.bf16 %v5257, %v5257
        %v5386 = vpack.c.bf16 %v5258, %v5258
        %v5387 = vpack.c.bf16 %v5259, %v5259
        %v5388 = vpack.c.bf16 %v5260, %v5260
        %v5389 = vpack.c.bf16 %v5261, %v5261
        %v5390 = vpack.c.bf16 %v5262, %v5262
        %v5391 = vpack.c.bf16 %v5263, %v5263
        %v5392 = vpack.c.bf16 %v5264, %v5264
        %v5393 = vpack.c.bf16 %v5265, %v5265
        %v5394 = vpack.c.bf16 %v5266, %v5266
        %v5523 = vunpack.c.l.b16 %v5267
        %v5524 = vunpack.c.l.b16 %v5268
        %v5525 = vunpack.c.l.b16 %v5269
        %v5526 = vunpack.c.l.b16 %v5270
        %v5527 = vunpack.c.l.b16 %v5271
        %v5528 = vunpack.c.l.b16 %v5272
        %v5529 = vunpack.c.l.b16 %v5273
        %v5530 = vunpack.c.l.b16 %v5274
        %v5531 = vunpack.c.l.b16 %v5275
        %v5532 = vunpack.c.l.b16 %v5276
        %v5533 = vunpack.c.l.b16 %v5277
        %v5534 = vunpack.c.l.b16 %v5278
        %v5535 = vunpack.c.l.b16 %v5279
        %v5536 = vunpack.c.l.b16 %v5280
        %v5537 = vunpack.c.l.b16 %v5281
        %v5538 = vunpack.c.l.b16 %v5282
        %v5539 = vunpack.c.l.b16 %v5283
        %v5540 = vunpack.c.l.b16 %v5284
        %v5541 = vunpack.c.l.b16 %v5285
        %v5542 = vunpack.c.l.b16 %v5286
        %v5543 = vunpack.c.l.b16 %v5287
        %v5544 = vunpack.c.l.b16 %v5288
        %v5545 = vunpack.c.l.b16 %v5289
        %v5546 = vunpack.c.l.b16 %v5290
        %v5547 = vunpack.c.l.b16 %v5291
        %v5548 = vunpack.c.l.b16 %v5292
        %v5549 = vunpack.c.l.b16 %v5293
        %v5550 = vunpack.c.l.b16 %v5294
        %v5551 = vunpack.c.l.b16 %v5295
        %v5552 = vunpack.c.l.b16 %v5296
        %v5553 = vunpack.c.l.b16 %v5297
        %v5554 = vunpack.c.l.b16 %v5298
        %v5555 = vunpack.c.l.b16 %v5299
        %v5556 = vunpack.c.l.b16 %v5300
        %v5557 = vunpack.c.l.b16 %v5301
        %v5558 = vunpack.c.l.b16 %v5302
        %v5559 = vunpack.c.l.b16 %v5303
        %v5560 = vunpack.c.l.b16 %v5304
        %v5561 = vunpack.c.l.b16 %v5305
        %v5562 = vunpack.c.l.b16 %v5306
        %v5563 = vunpack.c.l.b16 %v5307
        %v5564 = vunpack.c.l.b16 %v5308
        %v5565 = vunpack.c.l.b16 %v5309
        %v5566 = vunpack.c.l.b16 %v5310
        %v5567 = vunpack.c.l.b16 %v5311
        %v5568 = vunpack.c.l.b16 %v5312
        %v5569 = vunpack.c.l.b16 %v5313
        %v5570 = vunpack.c.l.b16 %v5314
        %v5571 = vunpack.c.l.b16 %v5315
        %v5572 = vunpack.c.l.b16 %v5316
        %v5573 = vunpack.c.l.b16 %v5317
        %v5574 = vunpack.c.l.b16 %v5318
        %v5575 = vunpack.c.l.b16 %v5319
        %v5576 = vunpack.c.l.b16 %v5320
        %v5577 = vunpack.c.l.b16 %v5321
        %v5578 = vunpack.c.l.b16 %v5322
        %v5579 = vunpack.c.l.b16 %v5323
        %v5580 = vunpack.c.l.b16 %v5324
        %v5581 = vunpack.c.l.b16 %v5325
        %v5582 = vunpack.c.l.b16 %v5326
        %v5583 = vunpack.c.l.b16 %v5327
        %v5584 = vunpack.c.l.b16 %v5328
        %v5585 = vunpack.c.l.b16 %v5329
        %v5586 = vunpack.c.l.b16 %v5330
        %v5587 = vunpack.c.l.b16 %v5331
        %v5588 = vunpack.c.l.b16 %v5332
        %v5589 = vunpack.c.l.b16 %v5333
        %v5590 = vunpack.c.l.b16 %v5334
        %v5591 = vunpack.c.l.b16 %v5335
        %v5592 = vunpack.c.l.b16 %v5336
        %v5593 = vunpack.c.l.b16 %v5337
        %v5594 = vunpack.c.l.b16 %v5338
        %v5595 = vunpack.c.l.b16 %v5339
        %v5596 = vunpack.c.l.b16 %v5340
        %v5597 = vunpack.c.l.b16 %v5341
        %v5598 = vunpack.c.l.b16 %v5342
        %v5599 = vunpack.c.l.b16 %v5343
        %v5600 = vunpack.c.l.b16 %v5344
        %v5601 = vunpack.c.l.b16 %v5345
        %v5602 = vunpack.c.l.b16 %v5346
        %v5603 = vunpack.c.l.b16 %v5347
        %v5604 = vunpack.c.l.b16 %v5348
        %v5605 = vunpack.c.l.b16 %v5349
        %v5606 = vunpack.c.l.b16 %v5350
        %v5607 = vunpack.c.l.b16 %v5351
        %v5608 = vunpack.c.l.b16 %v5352
        %v5609 = vunpack.c.l.b16 %v5353
        %v5610 = vunpack.c.l.b16 %v5354
        %v5611 = vunpack.c.l.b16 %v5355
        %v5612 = vunpack.c.l.b16 %v5356
        %v5613 = vunpack.c.l.b16 %v5357
        %v5614 = vunpack.c.l.b16 %v5358
        %v5615 = vunpack.c.l.b16 %v5359
        %v5616 = vunpack.c.l.b16 %v5360
        %v5617 = vunpack.c.l.b16 %v5361
        %v5618 = vunpack.c.l.b16 %v5362
        %v5619 = vunpack.c.l.b16 %v5363
        %v5620 = vunpack.c.l.b16 %v5364
        %v5621 = vunpack.c.l.b16 %v5365
        %v5622 = vunpack.c.l.b16 %v5366
        %v5623 = vunpack.c.l.b16 %v5367
        %v5624 = vunpack.c.l.b16 %v5368
        %v5625 = vunpack.c.l.b16 %v5369
        %v5626 = vunpack.c.l.b16 %v5370
        %v5627 = vunpack.c.l.b16 %v5371
        %v5628 = vunpack.c.l.b16 %v5372
        %v5629 = vunpack.c.l.b16 %v5373
        %v5630 = vunpack.c.l.b16 %v5374
        %v5631 = vunpack.c.l.b16 %v5375
        %v5632 = vunpack.c.l.b16 %v5376
        %v5633 = vunpack.c.l.b16 %v5377
        %v5634 = vunpack.c.l.b16 %v5378
        %v5635 = vunpack.c.l.b16 %v5379
        %v5636 = vunpack.c.l.b16 %v5380
        %v5637 = vunpack.c.l.b16 %v5381
        %v5638 = vunpack.c.l.b16 %v5382
        %v5639 = vunpack.c.l.b16 %v5383
        %v5640 = vunpack.c.l.b16 %v5384
        %v5641 = vunpack.c.l.b16 %v5385
        %v5642 = vunpack.c.l.b16 %v5386
        %v5643 = vunpack.c.l.b16 %v5387
        %v5644 = vunpack.c.l.b16 %v5388
        %v5645 = vunpack.c.l.b16 %v5389
        %v5646 = vunpack.c.l.b16 %v5390
        %v5647 = vunpack.c.l.b16 %v5391
        %v5648 = vunpack.c.l.b16 %v5392
        %v5649 = vunpack.c.l.b16 %v5393
        %v5650 = vunpack.c.l.b16 %v5394
        %v5651 = vpack.c.b16 %v5524, %v5523
        %v5652 = vpack.c.b16 %v5526, %v5525
        %v5653 = vpack.c.b16 %v5528, %v5527
        %v5654 = vpack.c.b16 %v5530, %v5529
        %v5655 = vpack.c.b16 %v5532, %v5531
        %v5656 = vpack.c.b16 %v5534, %v5533
        %v5657 = vpack.c.b16 %v5536, %v5535
        %v5658 = vpack.c.b16 %v5538, %v5537
        %v5659 = vpack.c.b16 %v5540, %v5539
        %v5660 = vpack.c.b16 %v5542, %v5541
        %v5661 = vpack.c.b16 %v5544, %v5543
        %v5662 = vpack.c.b16 %v5546, %v5545
        %v5663 = vpack.c.b16 %v5548, %v5547
        %v5664 = vpack.c.b16 %v5550, %v5549
        %v5665 = vpack.c.b16 %v5552, %v5551
        %v5666 = vpack.c.b16 %v5554, %v5553
        %v5667 = vpack.c.b16 %v5556, %v5555
        %v5668 = vpack.c.b16 %v5558, %v5557
        %v5669 = vpack.c.b16 %v5560, %v5559
        %v5670 = vpack.c.b16 %v5562, %v5561
        %v5671 = vpack.c.b16 %v5564, %v5563
        %v5672 = vpack.c.b16 %v5566, %v5565
        %v5673 = vpack.c.b16 %v5568, %v5567
        %v5674 = vpack.c.b16 %v5570, %v5569
        %v5675 = vpack.c.b16 %v5572, %v5571
        %v5676 = vpack.c.b16 %v5574, %v5573
        %v5677 = vpack.c.b16 %v5576, %v5575
        %v5678 = vpack.c.b16 %v5578, %v5577
        %v5679 = vpack.c.b16 %v5580, %v5579
        %v5680 = vpack.c.b16 %v5582, %v5581
        %v5681 = vpack.c.b16 %v5584, %v5583
        %v5682 = vpack.c.b16 %v5586, %v5585
        %v5683 = vpack.c.b16 %v5588, %v5587
        %v5684 = vpack.c.b16 %v5590, %v5589
        %v5685 = vpack.c.b16 %v5592, %v5591
        %v5686 = vpack.c.b16 %v5594, %v5593
        %v5687 = vpack.c.b16 %v5596, %v5595
        %v5688 = vpack.c.b16 %v5598, %v5597
        %v5689 = vpack.c.b16 %v5600, %v5599
        %v5690 = vpack.c.b16 %v5602, %v5601
        %v5691 = vpack.c.b16 %v5604, %v5603
        %v5692 = vpack.c.b16 %v5606, %v5605
        %v5693 = vpack.c.b16 %v5608, %v5607
        %v5694 = vpack.c.b16 %v5610, %v5609
        %v5695 = vpack.c.b16 %v5612, %v5611
        %v5696 = vpack.c.b16 %v5614, %v5613
        %v5697 = vpack.c.b16 %v5616, %v5615
        %v5698 = vpack.c.b16 %v5618, %v5617
        %v5699 = vpack.c.b16 %v5620, %v5619
        %v5700 = vpack.c.b16 %v5622, %v5621
        %v5701 = vpack.c.b16 %v5624, %v5623
        %v5702 = vpack.c.b16 %v5626, %v5625
        %v5703 = vpack.c.b16 %v5628, %v5627
        %v5704 = vpack.c.b16 %v5630, %v5629
        %v5705 = vpack.c.b16 %v5632, %v5631
        %v5706 = vpack.c.b16 %v5634, %v5633
        %v5707 = vpack.c.b16 %v5636, %v5635
        %v5708 = vpack.c.b16 %v5638, %v5637
        %v5709 = vpack.c.b16 %v5640, %v5639
        %v5710 = vpack.c.b16 %v5642, %v5641
        %v5711 = vpack.c.b16 %v5644, %v5643
        %v5712 = vpack.c.b16 %v5646, %v5645
        %v5713 = vpack.c.b16 %v5648, %v5647
        %v5714 = vpack.c.b16 %v5650, %v5649
        %v5716 = vsel %vm2245, %v5651, 0
        %v5719 = vsel %vm2245, %v5652, 0
        %v5722 = vsel %vm2245, %v5653, 0
        %v5725 = vsel %vm2245, %v5654, 0
        %v5728 = vsel %vm2245, %v5655, 0
        %v5731 = vsel %vm2245, %v5656, 0
        %v5734 = vsel %vm2245, %v5657, 0
        %v5737 = vsel %vm2245, %v5658, 0
        %v5740 = vsel %vm2245, %v5659, 0
        %v5743 = vsel %vm2245, %v5660, 0
        %v5746 = vsel %vm2245, %v5661, 0
        %v5749 = vsel %vm2245, %v5662, 0
        %v5752 = vsel %vm2245, %v5663, 0
        %v5755 = vsel %vm2245, %v5664, 0
        %v5758 = vsel %vm2245, %v5665, 0
        %v5761 = vsel %vm2245, %v5666, 0
        %v5764 = vsel %vm2245, %v5667, 0
        %v5767 = vsel %vm2245, %v5668, 0
        %v5770 = vsel %vm2245, %v5669, 0
        %v5773 = vsel %vm2245, %v5670, 0
        %v5776 = vsel %vm2245, %v5671, 0
        %v5779 = vsel %vm2245, %v5672, 0
        %v5782 = vsel %vm2245, %v5673, 0
        %v5785 = vsel %vm2245, %v5674, 0
        %v5788 = vsel %vm2245, %v5675, 0
        %v5791 = vsel %vm2245, %v5676, 0
        %v5794 = vsel %vm2245, %v5677, 0
        %v5797 = vsel %vm2245, %v5678, 0
        %v5800 = vsel %vm2245, %v5679, 0
        %v5803 = vsel %vm2245, %v5680, 0
        %v5806 = vsel %vm2245, %v5681, 0
        %v5809 = vsel %vm2245, %v5682, 0
        %v5812 = vsel %vm2245, %v5683, 0
        %v5815 = vsel %vm2245, %v5684, 0
        %v5818 = vsel %vm2245, %v5685, 0
        %v5821 = vsel %vm2245, %v5686, 0
        %v5824 = vsel %vm2245, %v5687, 0
        %v5827 = vsel %vm2245, %v5688, 0
        %v5830 = vsel %vm2245, %v5689, 0
        %v5833 = vsel %vm2245, %v5690, 0
        %v5836 = vsel %vm2245, %v5691, 0
        %v5839 = vsel %vm2245, %v5692, 0
        %v5842 = vsel %vm2245, %v5693, 0
        %v5845 = vsel %vm2245, %v5694, 0
        %v5848 = vsel %vm2245, %v5695, 0
        %v5851 = vsel %vm2245, %v5696, 0
        %v5854 = vsel %vm2245, %v5697, 0
        %v5857 = vsel %vm2245, %v5698, 0
        %v5860 = vsel %vm2245, %v5699, 0
        %v5863 = vsel %vm2245, %v5700, 0
        %v5866 = vsel %vm2245, %v5701, 0
        %v5869 = vsel %vm2245, %v5702, 0
        %v5872 = vsel %vm2245, %v5703, 0
        %v5875 = vsel %vm2245, %v5704, 0
        %v5878 = vsel %vm2245, %v5705, 0
        %v5881 = vsel %vm2245, %v5706, 0
        %v5884 = vsel %vm2245, %v5707, 0
        %v5887 = vsel %vm2245, %v5708, 0
        %v5890 = vsel %vm2245, %v5709, 0
        %v5893 = vsel %vm2245, %v5710, 0
        %v5896 = vsel %vm2245, %v5711, 0
        %v5899 = vsel %vm2245, %v5712, 0
        %v5902 = vsel %vm2245, %v5713, 0
        %v5905 = vsel %vm2245, %v5714, 0
        %5907 = vmatpush.bf16.msra.mxu0 0
        %5908 = vmatpush.bf16.msra.mxu0 0
        %5909 = vmatpush.bf16.msra.mxu0 0
        %5910 = vmatpush.bf16.msra.mxu0 0
        %5911 = vmatpush.bf16.msra.mxu0 0
        %5912 = vmatpush.bf16.msra.mxu0 0
        %5913 = vmatpush.bf16.msra.mxu0 %v2242
        %5914 = vmatpush.bf16.msra.mxu0 %v2241
        %5915 = vmatmul.bf16.gmra.mxu0 %v5716
        %v5916 = vpop.f32.mrf.mxu0
        %v5917 = vadd.f32 %v1911, %v5916
        %v5918 = vpop.f32.mrf.mxu0
        %v5919 = vadd.f32 %v1911, %v5918
        %5920 = vmatmul.bf16.gmra.mxu0 %v5719
        %v5921 = vpop.f32.mrf.mxu0
        %v5922 = vadd.f32 %v1911, %v5921
        %v5923 = vpop.f32.mrf.mxu0
        %v5924 = vadd.f32 %v1911, %v5923
        %5925 = vmatmul.bf16.gmra.mxu0 %v5722
        %v5926 = vpop.f32.mrf.mxu0
        %v5927 = vadd.f32 %v1911, %v5926
        %v5928 = vpop.f32.mrf.mxu0
        %v5929 = vadd.f32 %v1911, %v5928
        %5930 = vmatmul.bf16.gmra.mxu0 %v5725
        %v5931 = vpop.f32.mrf.mxu0
        %v5932 = vadd.f32 %v1911, %v5931
        %v5933 = vpop.f32.mrf.mxu0
        %v5934 = vadd.f32 %v1911, %v5933
        %5935 = vmatmul.bf16.gmra.mxu0 %v5728
        %v5936 = vpop.f32.mrf.mxu0
        %v5937 = vadd.f32 %v1911, %v5936
        %v5938 = vpop.f32.mrf.mxu0
        %v5939 = vadd.f32 %v1911, %v5938
        %5940 = vmatmul.bf16.gmra.mxu0 %v5731
        %v5941 = vpop.f32.mrf.mxu0
        %v5942 = vadd.f32 %v1911, %v5941
        %v5943 = vpop.f32.mrf.mxu0
        %v5944 = vadd.f32 %v1911, %v5943
        %5945 = vmatmul.bf16.gmra.mxu0 %v5734
        %v5946 = vpop.f32.mrf.mxu0
        %v5947 = vadd.f32 %v1911, %v5946
        %v5948 = vpop.f32.mrf.mxu0
        %v5949 = vadd.f32 %v1911, %v5948
        %5950 = vmatmul.bf16.gmra.mxu0 %v5737
        %v5951 = vpop.f32.mrf.mxu0
        %v5952 = vadd.f32 %v1911, %v5951
        %v5953 = vpop.f32.mrf.mxu0
        %v5954 = vadd.f32 %v1911, %v5953
        %5955 = vmatmul.bf16.gmra.mxu0 %v5740
        %v5956 = vpop.f32.mrf.mxu0
        %v5957 = vadd.f32 %v1911, %v5956
        %v5958 = vpop.f32.mrf.mxu0
        %v5959 = vadd.f32 %v1911, %v5958
        %5960 = vmatmul.bf16.gmra.mxu0 %v5743
        %v5961 = vpop.f32.mrf.mxu0
        %v5962 = vadd.f32 %v1911, %v5961
        %v5963 = vpop.f32.mrf.mxu0
        %v5964 = vadd.f32 %v1911, %v5963
        %5965 = vmatmul.bf16.gmra.mxu0 %v5746
        %v5966 = vpop.f32.mrf.mxu0
        %v5967 = vadd.f32 %v1911, %v5966
        %v5968 = vpop.f32.mrf.mxu0
        %v5969 = vadd.f32 %v1911, %v5968
        %5970 = vmatmul.bf16.gmra.mxu0 %v5749
        %v5971 = vpop.f32.mrf.mxu0
        %v5972 = vadd.f32 %v1911, %v5971
        %v5973 = vpop.f32.mrf.mxu0
        %v5974 = vadd.f32 %v1911, %v5973
        %5975 = vmatmul.bf16.gmra.mxu0 %v5752
        %v5976 = vpop.f32.mrf.mxu0
        %v5977 = vadd.f32 %v1911, %v5976
        %v5978 = vpop.f32.mrf.mxu0
        %v5979 = vadd.f32 %v1911, %v5978
        %5980 = vmatmul.bf16.gmra.mxu0 %v5755
        %v5981 = vpop.f32.mrf.mxu0
        %v5982 = vadd.f32 %v1911, %v5981
        %v5983 = vpop.f32.mrf.mxu0
        %v5984 = vadd.f32 %v1911, %v5983
        %5985 = vmatmul.bf16.gmra.mxu0 %v5758
        %v5986 = vpop.f32.mrf.mxu0
        %v5987 = vadd.f32 %v1911, %v5986
        %v5988 = vpop.f32.mrf.mxu0
        %v5989 = vadd.f32 %v1911, %v5988
        %5990 = vmatmul.bf16.gmra.mxu0 %v5761
        %v5991 = vpop.f32.mrf.mxu0
        %v5992 = vadd.f32 %v1911, %v5991
        %v5993 = vpop.f32.mrf.mxu0
        %v5994 = vadd.f32 %v1911, %v5993
        %5995 = vmatmul.bf16.gmra.mxu0 %v5764
        %v5996 = vpop.f32.mrf.mxu0
        %v5997 = vadd.f32 %v1911, %v5996
        %v5998 = vpop.f32.mrf.mxu0
        %v5999 = vadd.f32 %v1911, %v5998
        %6000 = vmatmul.bf16.gmra.mxu0 %v5767
        %v6001 = vpop.f32.mrf.mxu0
        %v6002 = vadd.f32 %v1911, %v6001
        %v6003 = vpop.f32.mrf.mxu0
        %v6004 = vadd.f32 %v1911, %v6003
        %6005 = vmatmul.bf16.gmra.mxu0 %v5770
        %v6006 = vpop.f32.mrf.mxu0
        %v6007 = vadd.f32 %v1911, %v6006
        %v6008 = vpop.f32.mrf.mxu0
        %v6009 = vadd.f32 %v1911, %v6008
        %6010 = vmatmul.bf16.gmra.mxu0 %v5773
        %v6011 = vpop.f32.mrf.mxu0
        %v6012 = vadd.f32 %v1911, %v6011
        %v6013 = vpop.f32.mrf.mxu0
        %v6014 = vadd.f32 %v1911, %v6013
        %6015 = vmatmul.bf16.gmra.mxu0 %v5776
        %v6016 = vpop.f32.mrf.mxu0
        %v6017 = vadd.f32 %v1911, %v6016
        %v6018 = vpop.f32.mrf.mxu0
        %v6019 = vadd.f32 %v1911, %v6018
        %6020 = vmatmul.bf16.gmra.mxu0 %v5779
        %v6021 = vpop.f32.mrf.mxu0
        %v6022 = vadd.f32 %v1911, %v6021
        %v6023 = vpop.f32.mrf.mxu0
        %v6024 = vadd.f32 %v1911, %v6023
        %6025 = vmatmul.bf16.gmra.mxu0 %v5782
        %v6026 = vpop.f32.mrf.mxu0
        %v6027 = vadd.f32 %v1911, %v6026
        %v6028 = vpop.f32.mrf.mxu0
        %v6029 = vadd.f32 %v1911, %v6028
        %6030 = vmatmul.bf16.gmra.mxu0 %v5785
        %v6031 = vpop.f32.mrf.mxu0
        %v6032 = vadd.f32 %v1911, %v6031
        %v6033 = vpop.f32.mrf.mxu0
        %v6034 = vadd.f32 %v1911, %v6033
        %6035 = vmatmul.bf16.gmra.mxu0 %v5788
        %v6036 = vpop.f32.mrf.mxu0
        %v6037 = vadd.f32 %v1911, %v6036
        %v6038 = vpop.f32.mrf.mxu0
        %v6039 = vadd.f32 %v1911, %v6038
        %6040 = vmatmul.bf16.gmra.mxu0 %v5791
        %v6041 = vpop.f32.mrf.mxu0
        %v6042 = vadd.f32 %v1911, %v6041
        %v6043 = vpop.f32.mrf.mxu0
        %v6044 = vadd.f32 %v1911, %v6043
        %6045 = vmatmul.bf16.gmra.mxu0 %v5794
        %v6046 = vpop.f32.mrf.mxu0
        %v6047 = vadd.f32 %v1911, %v6046
        %v6048 = vpop.f32.mrf.mxu0
        %v6049 = vadd.f32 %v1911, %v6048
        %6050 = vmatmul.bf16.gmra.mxu0 %v5797
        %v6051 = vpop.f32.mrf.mxu0
        %v6052 = vadd.f32 %v1911, %v6051
        %v6053 = vpop.f32.mrf.mxu0
        %v6054 = vadd.f32 %v1911, %v6053
        %6055 = vmatmul.bf16.gmra.mxu0 %v5800
        %v6056 = vpop.f32.mrf.mxu0
        %v6057 = vadd.f32 %v1911, %v6056
        %v6058 = vpop.f32.mrf.mxu0
        %v6059 = vadd.f32 %v1911, %v6058
        %6060 = vmatmul.bf16.gmra.mxu0 %v5803
        %v6061 = vpop.f32.mrf.mxu0
        %v6062 = vadd.f32 %v1911, %v6061
        %v6063 = vpop.f32.mrf.mxu0
        %v6064 = vadd.f32 %v1911, %v6063
        %6065 = vmatmul.bf16.gmra.mxu0 %v5806
        %v6066 = vpop.f32.mrf.mxu0
        %v6067 = vadd.f32 %v1911, %v6066
        %v6068 = vpop.f32.mrf.mxu0
        %v6069 = vadd.f32 %v1911, %v6068
        %6070 = vmatmul.bf16.gmra.mxu0 %v5809
        %v6071 = vpop.f32.mrf.mxu0
        %v6072 = vadd.f32 %v1911, %v6071
        %v6073 = vpop.f32.mrf.mxu0
        %v6074 = vadd.f32 %v1911, %v6073
        %6075 = vmatmul.bf16.gmra.mxu0 %v5812
        %v6076 = vpop.f32.mrf.mxu0
        %v6077 = vadd.f32 %v1911, %v6076
        %v6078 = vpop.f32.mrf.mxu0
        %v6079 = vadd.f32 %v1911, %v6078
        %6080 = vmatmul.bf16.gmra.mxu0 %v5815
        %v6081 = vpop.f32.mrf.mxu0
        %v6082 = vadd.f32 %v1911, %v6081
        %v6083 = vpop.f32.mrf.mxu0
        %v6084 = vadd.f32 %v1911, %v6083
        %6085 = vmatmul.bf16.gmra.mxu0 %v5818
        %v6086 = vpop.f32.mrf.mxu0
        %v6087 = vadd.f32 %v1911, %v6086
        %v6088 = vpop.f32.mrf.mxu0
        %v6089 = vadd.f32 %v1911, %v6088
        %6090 = vmatmul.bf16.gmra.mxu0 %v5821
        %v6091 = vpop.f32.mrf.mxu0
        %v6092 = vadd.f32 %v1911, %v6091
        %v6093 = vpop.f32.mrf.mxu0
        %v6094 = vadd.f32 %v1911, %v6093
        %6095 = vmatmul.bf16.gmra.mxu0 %v5824
        %v6096 = vpop.f32.mrf.mxu0
        %v6097 = vadd.f32 %v1911, %v6096
        %v6098 = vpop.f32.mrf.mxu0
        %v6099 = vadd.f32 %v1911, %v6098
        %6100 = vmatmul.bf16.gmra.mxu0 %v5827
        %v6101 = vpop.f32.mrf.mxu0
        %v6102 = vadd.f32 %v1911, %v6101
        %v6103 = vpop.f32.mrf.mxu0
        %v6104 = vadd.f32 %v1911, %v6103
        %6105 = vmatmul.bf16.gmra.mxu0 %v5830
        %v6106 = vpop.f32.mrf.mxu0
        %v6107 = vadd.f32 %v1911, %v6106
        %v6108 = vpop.f32.mrf.mxu0
        %v6109 = vadd.f32 %v1911, %v6108
        %6110 = vmatmul.bf16.gmra.mxu0 %v5833
        %v6111 = vpop.f32.mrf.mxu0
        %v6112 = vadd.f32 %v1911, %v6111
        %v6113 = vpop.f32.mrf.mxu0
        %v6114 = vadd.f32 %v1911, %v6113
        %6115 = vmatmul.bf16.gmra.mxu0 %v5836
        %v6116 = vpop.f32.mrf.mxu0
        %v6117 = vadd.f32 %v1911, %v6116
        %v6118 = vpop.f32.mrf.mxu0
        %v6119 = vadd.f32 %v1911, %v6118
        %6120 = vmatmul.bf16.gmra.mxu0 %v5839
        %v6121 = vpop.f32.mrf.mxu0
        %v6122 = vadd.f32 %v1911, %v6121
        %v6123 = vpop.f32.mrf.mxu0
        %v6124 = vadd.f32 %v1911, %v6123
        %6125 = vmatmul.bf16.gmra.mxu0 %v5842
        %v6126 = vpop.f32.mrf.mxu0
        %v6127 = vadd.f32 %v1911, %v6126
        %v6128 = vpop.f32.mrf.mxu0
        %v6129 = vadd.f32 %v1911, %v6128
        %6130 = vmatmul.bf16.gmra.mxu0 %v5845
        %v6131 = vpop.f32.mrf.mxu0
        %v6132 = vadd.f32 %v1911, %v6131
        %v6133 = vpop.f32.mrf.mxu0
        %v6134 = vadd.f32 %v1911, %v6133
        %6135 = vmatmul.bf16.gmra.mxu0 %v5848
        %v6136 = vpop.f32.mrf.mxu0
        %v6137 = vadd.f32 %v1911, %v6136
        %v6138 = vpop.f32.mrf.mxu0
        %v6139 = vadd.f32 %v1911, %v6138
        %6140 = vmatmul.bf16.gmra.mxu0 %v5851
        %v6141 = vpop.f32.mrf.mxu0
        %v6142 = vadd.f32 %v1911, %v6141
        %v6143 = vpop.f32.mrf.mxu0
        %v6144 = vadd.f32 %v1911, %v6143
        %6145 = vmatmul.bf16.gmra.mxu0 %v5854
        %v6146 = vpop.f32.mrf.mxu0
        %v6147 = vadd.f32 %v1911, %v6146
        %v6148 = vpop.f32.mrf.mxu0
        %v6149 = vadd.f32 %v1911, %v6148
        %6150 = vmatmul.bf16.gmra.mxu0 %v5857
        %v6151 = vpop.f32.mrf.mxu0
        %v6152 = vadd.f32 %v1911, %v6151
        %v6153 = vpop.f32.mrf.mxu0
        %v6154 = vadd.f32 %v1911, %v6153
        %6155 = vmatmul.bf16.gmra.mxu0 %v5860
        %v6156 = vpop.f32.mrf.mxu0
        %v6157 = vadd.f32 %v1911, %v6156
        %v6158 = vpop.f32.mrf.mxu0
        %v6159 = vadd.f32 %v1911, %v6158
        %6160 = vmatmul.bf16.gmra.mxu0 %v5863
        %v6161 = vpop.f32.mrf.mxu0
        %v6162 = vadd.f32 %v1911, %v6161
        %v6163 = vpop.f32.mrf.mxu0
        %v6164 = vadd.f32 %v1911, %v6163
        %6165 = vmatmul.bf16.gmra.mxu0 %v5866
        %v6166 = vpop.f32.mrf.mxu0
        %v6167 = vadd.f32 %v1911, %v6166
        %v6168 = vpop.f32.mrf.mxu0
        %v6169 = vadd.f32 %v1911, %v6168
        %6170 = vmatmul.bf16.gmra.mxu0 %v5869
        %v6171 = vpop.f32.mrf.mxu0
        %v6172 = vadd.f32 %v1911, %v6171
        %v6173 = vpop.f32.mrf.mxu0
        %v6174 = vadd.f32 %v1911, %v6173
        %6175 = vmatmul.bf16.gmra.mxu0 %v5872
        %v6176 = vpop.f32.mrf.mxu0
        %v6177 = vadd.f32 %v1911, %v6176
        %v6178 = vpop.f32.mrf.mxu0
        %v6179 = vadd.f32 %v1911, %v6178
        %6180 = vmatmul.bf16.gmra.mxu0 %v5875
        %v6181 = vpop.f32.mrf.mxu0
        %v6182 = vadd.f32 %v1911, %v6181
        %v6183 = vpop.f32.mrf.mxu0
        %v6184 = vadd.f32 %v1911, %v6183
        %6185 = vmatmul.bf16.gmra.mxu0 %v5878
        %v6186 = vpop.f32.mrf.mxu0
        %v6187 = vadd.f32 %v1911, %v6186
        %v6188 = vpop.f32.mrf.mxu0
        %v6189 = vadd.f32 %v1911, %v6188
        %6190 = vmatmul.bf16.gmra.mxu0 %v5881
        %v6191 = vpop.f32.mrf.mxu0
        %v6192 = vadd.f32 %v1911, %v6191
        %v6193 = vpop.f32.mrf.mxu0
        %v6194 = vadd.f32 %v1911, %v6193
        %6195 = vmatmul.bf16.gmra.mxu0 %v5884
        %v6196 = vpop.f32.mrf.mxu0
        %v6197 = vadd.f32 %v1911, %v6196
        %v6198 = vpop.f32.mrf.mxu0
        %v6199 = vadd.f32 %v1911, %v6198
        %6200 = vmatmul.bf16.gmra.mxu0 %v5887
        %v6201 = vpop.f32.mrf.mxu0
        %v6202 = vadd.f32 %v1911, %v6201
        %v6203 = vpop.f32.mrf.mxu0
        %v6204 = vadd.f32 %v1911, %v6203
        %6205 = vmatmul.bf16.gmra.mxu0 %v5890
        %v6206 = vpop.f32.mrf.mxu0
        %v6207 = vadd.f32 %v1911, %v6206
        %v6208 = vpop.f32.mrf.mxu0
        %v6209 = vadd.f32 %v1911, %v6208
        %6210 = vmatmul.bf16.gmra.mxu0 %v5893
        %v6211 = vpop.f32.mrf.mxu0
        %v6212 = vadd.f32 %v1911, %v6211
        %v6213 = vpop.f32.mrf.mxu0
        %v6214 = vadd.f32 %v1911, %v6213
        %6215 = vmatmul.bf16.gmra.mxu0 %v5896
        %v6216 = vpop.f32.mrf.mxu0
        %v6217 = vadd.f32 %v1911, %v6216
        %v6218 = vpop.f32.mrf.mxu0
        %v6219 = vadd.f32 %v1911, %v6218
        %6220 = vmatmul.bf16.gmra.mxu0 %v5899
        %v6221 = vpop.f32.mrf.mxu0
        %v6222 = vadd.f32 %v1911, %v6221
        %v6223 = vpop.f32.mrf.mxu0
        %v6224 = vadd.f32 %v1911, %v6223
        %6225 = vmatmul.bf16.gmra.mxu0 %v5902
        %v6226 = vpop.f32.mrf.mxu0
        %v6227 = vadd.f32 %v1911, %v6226
        %v6228 = vpop.f32.mrf.mxu0
        %v6229 = vadd.f32 %v1911, %v6228
        %6230 = vmatmul.bf16.gmra.mxu0 %v5905
        %v6231 = vpop.f32.mrf.mxu0
        %v6232 = vadd.f32 %v1911, %v6231
        %v6233 = vpop.f32.mrf.mxu0
        %v6234 = vadd.f32 %v1911, %v6233
        %6235 = vdwg.mxu0
        %v6236 = vtanh.pop %v5917
        %v6237 = vtanh.pop %v5919
        %v6238 = vtanh.pop %v5922
        %v6239 = vtanh.pop %v5924
        %v6240 = vtanh.pop %v5927
        %v6241 = vtanh.pop %v5929
        %v6242 = vtanh.pop %v5932
        %v6243 = vtanh.pop %v5934
        %v6244 = vtanh.pop %v5937
        %v6245 = vtanh.pop %v5939
        %v6246 = vtanh.pop %v5942
        %v6247 = vtanh.pop %v5944
        %v6248 = vtanh.pop %v5947
        %v6249 = vtanh.pop %v5949
        %v6250 = vtanh.pop %v5952
        %v6251 = vtanh.pop %v5954
        %v6252 = vtanh.pop %v5957
        %v6253 = vtanh.pop %v5959
        %v6254 = vtanh.pop %v5962
        %v6255 = vtanh.pop %v5964
        %v6256 = vtanh.pop %v5967
        %v6257 = vtanh.pop %v5969
        %v6258 = vtanh.pop %v5972
        %v6259 = vtanh.pop %v5974
        %v6260 = vtanh.pop %v5977
        %v6261 = vtanh.pop %v5979
        %v6262 = vtanh.pop %v5982
        %v6263 = vtanh.pop %v5984
        %v6264 = vtanh.pop %v5987
        %v6265 = vtanh.pop %v5989
        %v6266 = vtanh.pop %v5992
        %v6267 = vtanh.pop %v5994
        %v6268 = vtanh.pop %v5997
        %v6269 = vtanh.pop %v5999
        %v6270 = vtanh.pop %v6002
        %v6271 = vtanh.pop %v6004
        %v6272 = vtanh.pop %v6007
        %v6273 = vtanh.pop %v6009
        %v6274 = vtanh.pop %v6012
        %v6275 = vtanh.pop %v6014
        %v6276 = vtanh.pop %v6017
        %v6277 = vtanh.pop %v6019
        %v6278 = vtanh.pop %v6022
        %v6279 = vtanh.pop %v6024
        %v6280 = vtanh.pop %v6027
        %v6281 = vtanh.pop %v6029
        %v6282 = vtanh.pop %v6032
        %v6283 = vtanh.pop %v6034
        %v6284 = vtanh.pop %v6037
        %v6285 = vtanh.pop %v6039
        %v6286 = vtanh.pop %v6042
        %v6287 = vtanh.pop %v6044
        %v6288 = vtanh.pop %v6047
        %v6289 = vtanh.pop %v6049
        %v6290 = vtanh.pop %v6052
        %v6291 = vtanh.pop %v6054
        %v6292 = vtanh.pop %v6057
        %v6293 = vtanh.pop %v6059
        %v6294 = vtanh.pop %v6062
        %v6295 = vtanh.pop %v6064
        %v6296 = vtanh.pop %v6067
        %v6297 = vtanh.pop %v6069
        %v6298 = vtanh.pop %v6072
        %v6299 = vtanh.pop %v6074
        %v6300 = vtanh.pop %v6077
        %v6301 = vtanh.pop %v6079
        %v6302 = vtanh.pop %v6082
        %v6303 = vtanh.pop %v6084
        %v6304 = vtanh.pop %v6087
        %v6305 = vtanh.pop %v6089
        %v6306 = vtanh.pop %v6092
        %v6307 = vtanh.pop %v6094
        %v6308 = vtanh.pop %v6097
        %v6309 = vtanh.pop %v6099
        %v6310 = vtanh.pop %v6102
        %v6311 = vtanh.pop %v6104
        %v6312 = vtanh.pop %v6107
        %v6313 = vtanh.pop %v6109
        %v6314 = vtanh.pop %v6112
        %v6315 = vtanh.pop %v6114
        %v6316 = vtanh.pop %v6117
        %v6317 = vtanh.pop %v6119
        %v6318 = vtanh.pop %v6122
        %v6319 = vtanh.pop %v6124
        %v6320 = vtanh.pop %v6127
        %v6321 = vtanh.pop %v6129
        %v6322 = vtanh.pop %v6132
        %v6323 = vtanh.pop %v6134
        %v6324 = vtanh.pop %v6137
        %v6325 = vtanh.pop %v6139
        %v6326 = vtanh.pop %v6142
        %v6327 = vtanh.pop %v6144
        %v6328 = vtanh.pop %v6147
        %v6329 = vtanh.pop %v6149
        %v6330 = vtanh.pop %v6152
        %v6331 = vtanh.pop %v6154
        %v6332 = vtanh.pop %v6157
        %v6333 = vtanh.pop %v6159
        %v6334 = vtanh.pop %v6162
        %v6335 = vtanh.pop %v6164
        %v6336 = vtanh.pop %v6167
        %v6337 = vtanh.pop %v6169
        %v6338 = vtanh.pop %v6172
        %v6339 = vtanh.pop %v6174
        %v6340 = vtanh.pop %v6177
        %v6341 = vtanh.pop %v6179
        %v6342 = vtanh.pop %v6182
        %v6343 = vtanh.pop %v6184
        %v6344 = vtanh.pop %v6187
        %v6345 = vtanh.pop %v6189
        %v6346 = vtanh.pop %v6192
        %v6347 = vtanh.pop %v6194
        %v6348 = vtanh.pop %v6197
        %v6349 = vtanh.pop %v6199
        %v6350 = vtanh.pop %v6202
        %v6351 = vtanh.pop %v6204
        %v6352 = vtanh.pop %v6207
        %v6353 = vtanh.pop %v6209
        %v6354 = vtanh.pop %v6212
        %v6355 = vtanh.pop %v6214
        %v6356 = vtanh.pop %v6217
        %v6357 = vtanh.pop %v6219
        %v6358 = vtanh.pop %v6222
        %v6359 = vtanh.pop %v6224
        %v6360 = vtanh.pop %v6227
        %v6361 = vtanh.pop %v6229
        %v6362 = vtanh.pop %v6232
        %v6363 = vtanh.pop %v6234
        %6364 = vadd.xlane.f32.xlu0 %v608
        %v6365 = vpop.xlane.xlu0 %6364
        %v6366 = vmax.f32 %v6365, 1.0
        %v6367 = vperm.slane %v608, 0
        %v6368 = vlaneseq
        %v6369 = vshrl.u32 %v6368, 7
        %6371 = vset.pattern.permute.xlu0 %v6369
        %6372 = vperm.xlu0 %6371, %v6367
        %v6373 = vpop.permute.xlu0 %6372
        %v6374 = vlaneseq
        %v6375 = vshrl.u32 %v6374, 7
        %v6376 = vadd.s32 %v6375, 8
        %6377 = vset.pattern.permute.xlu0 %v6376
        %6378 = vperm.xlu0 %6377, %v6367
        %v6379 = vpop.permute.xlu0 %6378
        %v6380 = vlaneseq
        %v6381 = vshrl.u32 %v6380, 7
        %v6382 = vadd.s32 %v6381, 16
        %6383 = vset.pattern.permute.xlu0 %v6382
        %6384 = vperm.xlu0 %6383, %v6367
        %v6385 = vpop.permute.xlu0 %6384
        %v6386 = vlaneseq
        %v6387 = vshrl.u32 %v6386, 7
        %v6388 = vadd.s32 %v6387, 24
        %6389 = vset.pattern.permute.xlu0 %v6388
        %6390 = vperm.xlu0 %6389, %v6367
        %v6391 = vpop.permute.xlu0 %6390
        %v6392 = vlaneseq
        %v6393 = vshrl.u32 %v6392, 7
        %v6394 = vadd.s32 %v6393, 32
        %6395 = vset.pattern.permute.xlu0 %v6394
        %6396 = vperm.xlu0 %6395, %v6367
        %v6397 = vpop.permute.xlu0 %6396
        %v6398 = vlaneseq
        %v6399 = vshrl.u32 %v6398, 7
        %v6400 = vadd.s32 %v6399, 40
        %6401 = vset.pattern.permute.xlu0 %v6400
        %6402 = vperm.xlu0 %6401, %v6367
        %v6403 = vpop.permute.xlu0 %6402
        %v6404 = vlaneseq
        %v6405 = vshrl.u32 %v6404, 7
        %v6406 = vadd.s32 %v6405, 48
        %6407 = vset.pattern.permute.xlu0 %v6406
        %6408 = vperm.xlu0 %6407, %v6367
        %v6409 = vpop.permute.xlu0 %6408
        %v6410 = vlaneseq
        %v6411 = vshrl.u32 %v6410, 7
        %v6412 = vadd.s32 %v6411, 56
        %6413 = vset.pattern.permute.xlu0 %v6412
        %6414 = vperm.xlu0 %6413, %v6367
        %v6415 = vpop.permute.xlu0 %6414
        %v6416 = vlaneseq
        %v6417 = vshrl.u32 %v6416, 7
        %v6418 = vadd.s32 %v6417, 64
        %6419 = vset.pattern.permute.xlu0 %v6418
        %6420 = vperm.xlu0 %6419, %v6367
        %v6421 = vpop.permute.xlu0 %6420
        %v6422 = vlaneseq
        %v6423 = vshrl.u32 %v6422, 7
        %v6424 = vadd.s32 %v6423, 72
        %6425 = vset.pattern.permute.xlu0 %v6424
        %6426 = vperm.xlu0 %6425, %v6367
        %v6427 = vpop.permute.xlu0 %6426
        %v6428 = vlaneseq
        %v6429 = vshrl.u32 %v6428, 7
        %v6430 = vadd.s32 %v6429, 80
        %6431 = vset.pattern.permute.xlu0 %v6430
        %6432 = vperm.xlu0 %6431, %v6367
        %v6433 = vpop.permute.xlu0 %6432
        %v6434 = vlaneseq
        %v6435 = vshrl.u32 %v6434, 7
        %v6436 = vadd.s32 %v6435, 88
        %6437 = vset.pattern.permute.xlu0 %v6436
        %6438 = vperm.xlu0 %6437, %v6367
        %v6439 = vpop.permute.xlu0 %6438
        %v6440 = vlaneseq
        %v6441 = vshrl.u32 %v6440, 7
        %v6442 = vadd.s32 %v6441, 96
        %6443 = vset.pattern.permute.xlu0 %v6442
        %6444 = vperm.xlu0 %6443, %v6367
        %v6445 = vpop.permute.xlu0 %6444
        %v6446 = vlaneseq
        %v6447 = vshrl.u32 %v6446, 7
        %v6448 = vadd.s32 %v6447, 104
        %6449 = vset.pattern.permute.xlu0 %v6448
        %6450 = vperm.xlu0 %6449, %v6367
        %v6451 = vpop.permute.xlu0 %6450
        %v6452 = vlaneseq
        %v6453 = vshrl.u32 %v6452, 7
        %v6454 = vadd.s32 %v6453, 112
        %6455 = vset.pattern.permute.xlu0 %v6454
        %6456 = vperm.xlu0 %6455, %v6367
        %v6457 = vpop.permute.xlu0 %6456
        %v6458 = vlaneseq
        %v6459 = vshrl.u32 %v6458, 7
        %v6460 = vadd.s32 %v6459, 120
        %6461 = vset.pattern.permute.xlu0 %v6460
        %6462 = vperm.xlu0 %6461, %v6367
        %v6463 = vpop.permute.xlu0 %6462
        %v6464 = vperm.slane %v608, 1
        %v6465 = vlaneseq
        %v6466 = vshrl.u32 %v6465, 7
        %6468 = vset.pattern.permute.xlu0 %v6466
        %6469 = vperm.xlu0 %6468, %v6464
        %v6470 = vpop.permute.xlu0 %6469
        %v6471 = vlaneseq
        %v6472 = vshrl.u32 %v6471, 7
        %v6473 = vadd.s32 %v6472, 8
        %6474 = vset.pattern.permute.xlu0 %v6473
        %6475 = vperm.xlu0 %6474, %v6464
        %v6476 = vpop.permute.xlu0 %6475
        %v6477 = vlaneseq
        %v6478 = vshrl.u32 %v6477, 7
        %v6479 = vadd.s32 %v6478, 16
        %6480 = vset.pattern.permute.xlu0 %v6479
        %6481 = vperm.xlu0 %6480, %v6464
        %v6482 = vpop.permute.xlu0 %6481
        %v6483 = vlaneseq
        %v6484 = vshrl.u32 %v6483, 7
        %v6485 = vadd.s32 %v6484, 24
        %6486 = vset.pattern.permute.xlu0 %v6485
        %6487 = vperm.xlu0 %6486, %v6464
        %v6488 = vpop.permute.xlu0 %6487
        %v6489 = vlaneseq
        %v6490 = vshrl.u32 %v6489, 7
        %v6491 = vadd.s32 %v6490, 32
        %6492 = vset.pattern.permute.xlu0 %v6491
        %6493 = vperm.xlu0 %6492, %v6464
        %v6494 = vpop.permute.xlu0 %6493
        %v6495 = vlaneseq
        %v6496 = vshrl.u32 %v6495, 7
        %v6497 = vadd.s32 %v6496, 40
        %6498 = vset.pattern.permute.xlu0 %v6497
        %6499 = vperm.xlu0 %6498, %v6464
        %v6500 = vpop.permute.xlu0 %6499
        %v6501 = vlaneseq
        %v6502 = vshrl.u32 %v6501, 7
        %v6503 = vadd.s32 %v6502, 48
        %6504 = vset.pattern.permute.xlu0 %v6503
        %6505 = vperm.xlu0 %6504, %v6464
        %v6506 = vpop.permute.xlu0 %6505
        %v6507 = vlaneseq
        %v6508 = vshrl.u32 %v6507, 7
        %v6509 = vadd.s32 %v6508, 56
        %6510 = vset.pattern.permute.xlu0 %v6509
        %6511 = vperm.xlu0 %6510, %v6464
        %v6512 = vpop.permute.xlu0 %6511
        %v6513 = vlaneseq
        %v6514 = vshrl.u32 %v6513, 7
        %v6515 = vadd.s32 %v6514, 64
        %6516 = vset.pattern.permute.xlu0 %v6515
        %6517 = vperm.xlu0 %6516, %v6464
        %v6518 = vpop.permute.xlu0 %6517
        %v6519 = vlaneseq
        %v6520 = vshrl.u32 %v6519, 7
        %v6521 = vadd.s32 %v6520, 72
        %6522 = vset.pattern.permute.xlu0 %v6521
        %6523 = vperm.xlu0 %6522, %v6464
        %v6524 = vpop.permute.xlu0 %6523
        %v6525 = vlaneseq
        %v6526 = vshrl.u32 %v6525, 7
        %v6527 = vadd.s32 %v6526, 80
        %6528 = vset.pattern.permute.xlu0 %v6527
        %6529 = vperm.xlu0 %6528, %v6464
        %v6530 = vpop.permute.xlu0 %6529
        %v6531 = vlaneseq
        %v6532 = vshrl.u32 %v6531, 7
        %v6533 = vadd.s32 %v6532, 88
        %6534 = vset.pattern.permute.xlu0 %v6533
        %6535 = vperm.xlu0 %6534, %v6464
        %v6536 = vpop.permute.xlu0 %6535
        %v6537 = vlaneseq
        %v6538 = vshrl.u32 %v6537, 7
        %v6539 = vadd.s32 %v6538, 96
        %6540 = vset.pattern.permute.xlu0 %v6539
        %6541 = vperm.xlu0 %6540, %v6464
        %v6542 = vpop.permute.xlu0 %6541
        %v6543 = vlaneseq
        %v6544 = vshrl.u32 %v6543, 7
        %v6545 = vadd.s32 %v6544, 104
        %6546 = vset.pattern.permute.xlu0 %v6545
        %6547 = vperm.xlu0 %6546, %v6464
        %v6548 = vpop.permute.xlu0 %6547
        %v6549 = vlaneseq
        %v6550 = vshrl.u32 %v6549, 7
        %v6551 = vadd.s32 %v6550, 112
        %6552 = vset.pattern.permute.xlu0 %v6551
        %6553 = vperm.xlu0 %6552, %v6464
        %v6554 = vpop.permute.xlu0 %6553
        %v6555 = vlaneseq
        %v6556 = vshrl.u32 %v6555, 7
        %v6557 = vadd.s32 %v6556, 120
        %6558 = vset.pattern.permute.xlu0 %v6557
        %6559 = vperm.xlu0 %6558, %v6464
        %v6560 = vpop.permute.xlu0 %6559
        %v6561 = vperm.slane %v608, 2
        %v6562 = vlaneseq
        %v6563 = vshrl.u32 %v6562, 7
        %6565 = vset.pattern.permute.xlu0 %v6563
        %6566 = vperm.xlu0 %6565, %v6561
        %v6567 = vpop.permute.xlu0 %6566
        %v6568 = vlaneseq
        %v6569 = vshrl.u32 %v6568, 7
        %v6570 = vadd.s32 %v6569, 8
        %6571 = vset.pattern.permute.xlu0 %v6570
        %6572 = vperm.xlu0 %6571, %v6561
        %v6573 = vpop.permute.xlu0 %6572
        %v6574 = vlaneseq
        %v6575 = vshrl.u32 %v6574, 7
        %v6576 = vadd.s32 %v6575, 16
        %6577 = vset.pattern.permute.xlu0 %v6576
        %6578 = vperm.xlu0 %6577, %v6561
        %v6579 = vpop.permute.xlu0 %6578
        %v6580 = vlaneseq
        %v6581 = vshrl.u32 %v6580, 7
        %v6582 = vadd.s32 %v6581, 24
        %6583 = vset.pattern.permute.xlu0 %v6582
        %6584 = vperm.xlu0 %6583, %v6561
        %v6585 = vpop.permute.xlu0 %6584
        %v6586 = vlaneseq
        %v6587 = vshrl.u32 %v6586, 7
        %v6588 = vadd.s32 %v6587, 32
        %6589 = vset.pattern.permute.xlu0 %v6588
        %6590 = vperm.xlu0 %6589, %v6561
        %v6591 = vpop.permute.xlu0 %6590
        %v6592 = vlaneseq
        %v6593 = vshrl.u32 %v6592, 7
        %v6594 = vadd.s32 %v6593, 40
        %6595 = vset.pattern.permute.xlu0 %v6594
        %6596 = vperm.xlu0 %6595, %v6561
        %v6597 = vpop.permute.xlu0 %6596
        %v6598 = vlaneseq
        %v6599 = vshrl.u32 %v6598, 7
        %v6600 = vadd.s32 %v6599, 48
        %6601 = vset.pattern.permute.xlu0 %v6600
        %6602 = vperm.xlu0 %6601, %v6561
        %v6603 = vpop.permute.xlu0 %6602
        %v6604 = vlaneseq
        %v6605 = vshrl.u32 %v6604, 7
        %v6606 = vadd.s32 %v6605, 56
        %6607 = vset.pattern.permute.xlu0 %v6606
        %6608 = vperm.xlu0 %6607, %v6561
        %v6609 = vpop.permute.xlu0 %6608
        %v6610 = vlaneseq
        %v6611 = vshrl.u32 %v6610, 7
        %v6612 = vadd.s32 %v6611, 64
        %6613 = vset.pattern.permute.xlu0 %v6612
        %6614 = vperm.xlu0 %6613, %v6561
        %v6615 = vpop.permute.xlu0 %6614
        %v6616 = vlaneseq
        %v6617 = vshrl.u32 %v6616, 7
        %v6618 = vadd.s32 %v6617, 72
        %6619 = vset.pattern.permute.xlu0 %v6618
        %6620 = vperm.xlu0 %6619, %v6561
        %v6621 = vpop.permute.xlu0 %6620
        %v6622 = vlaneseq
        %v6623 = vshrl.u32 %v6622, 7
        %v6624 = vadd.s32 %v6623, 80
        %6625 = vset.pattern.permute.xlu0 %v6624
        %6626 = vperm.xlu0 %6625, %v6561
        %v6627 = vpop.permute.xlu0 %6626
        %v6628 = vlaneseq
        %v6629 = vshrl.u32 %v6628, 7
        %v6630 = vadd.s32 %v6629, 88
        %6631 = vset.pattern.permute.xlu0 %v6630
        %6632 = vperm.xlu0 %6631, %v6561
        %v6633 = vpop.permute.xlu0 %6632
        %v6634 = vlaneseq
        %v6635 = vshrl.u32 %v6634, 7
        %v6636 = vadd.s32 %v6635, 96
        %6637 = vset.pattern.permute.xlu0 %v6636
        %6638 = vperm.xlu0 %6637, %v6561
        %v6639 = vpop.permute.xlu0 %6638
        %v6640 = vlaneseq
        %v6641 = vshrl.u32 %v6640, 7
        %v6642 = vadd.s32 %v6641, 104
        %6643 = vset.pattern.permute.xlu0 %v6642
        %6644 = vperm.xlu0 %6643, %v6561
        %v6645 = vpop.permute.xlu0 %6644
        %v6646 = vlaneseq
        %v6647 = vshrl.u32 %v6646, 7
        %v6648 = vadd.s32 %v6647, 112
        %6649 = vset.pattern.permute.xlu0 %v6648
        %6650 = vperm.xlu0 %6649, %v6561
        %v6651 = vpop.permute.xlu0 %6650
        %v6652 = vlaneseq
        %v6653 = vshrl.u32 %v6652, 7
        %v6654 = vadd.s32 %v6653, 120
        %6655 = vset.pattern.permute.xlu0 %v6654
        %6656 = vperm.xlu0 %6655, %v6561
        %v6657 = vpop.permute.xlu0 %6656
        %v6658 = vperm.slane %v608, 3
        %v6659 = vlaneseq
        %v6660 = vshrl.u32 %v6659, 7
        %6662 = vset.pattern.permute.xlu0 %v6660
        %6663 = vperm.xlu0 %6662, %v6658
        %v6664 = vpop.permute.xlu0 %6663
        %v6665 = vlaneseq
        %v6666 = vshrl.u32 %v6665, 7
        %v6667 = vadd.s32 %v6666, 8
        %6668 = vset.pattern.permute.xlu0 %v6667
        %6669 = vperm.xlu0 %6668, %v6658
        %v6670 = vpop.permute.xlu0 %6669
        %v6671 = vlaneseq
        %v6672 = vshrl.u32 %v6671, 7
        %v6673 = vadd.s32 %v6672, 16
        %6674 = vset.pattern.permute.xlu0 %v6673
        %6675 = vperm.xlu0 %6674, %v6658
        %v6676 = vpop.permute.xlu0 %6675
        %v6677 = vlaneseq
        %v6678 = vshrl.u32 %v6677, 7
        %v6679 = vadd.s32 %v6678, 24
        %6680 = vset.pattern.permute.xlu0 %v6679
        %6681 = vperm.xlu0 %6680, %v6658
        %v6682 = vpop.permute.xlu0 %6681
        %v6683 = vlaneseq
        %v6684 = vshrl.u32 %v6683, 7
        %v6685 = vadd.s32 %v6684, 32
        %6686 = vset.pattern.permute.xlu0 %v6685
        %6687 = vperm.xlu0 %6686, %v6658
        %v6688 = vpop.permute.xlu0 %6687
        %v6689 = vlaneseq
        %v6690 = vshrl.u32 %v6689, 7
        %v6691 = vadd.s32 %v6690, 40
        %6692 = vset.pattern.permute.xlu0 %v6691
        %6693 = vperm.xlu0 %6692, %v6658
        %v6694 = vpop.permute.xlu0 %6693
        %v6695 = vlaneseq
        %v6696 = vshrl.u32 %v6695, 7
        %v6697 = vadd.s32 %v6696, 48
        %6698 = vset.pattern.permute.xlu0 %v6697
        %6699 = vperm.xlu0 %6698, %v6658
        %v6700 = vpop.permute.xlu0 %6699
        %v6701 = vlaneseq
        %v6702 = vshrl.u32 %v6701, 7
        %v6703 = vadd.s32 %v6702, 56
        %6704 = vset.pattern.permute.xlu0 %v6703
        %6705 = vperm.xlu0 %6704, %v6658
        %v6706 = vpop.permute.xlu0 %6705
        %v6707 = vlaneseq
        %v6708 = vshrl.u32 %v6707, 7
        %v6709 = vadd.s32 %v6708, 64
        %6710 = vset.pattern.permute.xlu0 %v6709
        %6711 = vperm.xlu0 %6710, %v6658
        %v6712 = vpop.permute.xlu0 %6711
        %v6713 = vlaneseq
        %v6714 = vshrl.u32 %v6713, 7
        %v6715 = vadd.s32 %v6714, 72
        %6716 = vset.pattern.permute.xlu0 %v6715
        %6717 = vperm.xlu0 %6716, %v6658
        %v6718 = vpop.permute.xlu0 %6717
        %v6719 = vlaneseq
        %v6720 = vshrl.u32 %v6719, 7
        %v6721 = vadd.s32 %v6720, 80
        %6722 = vset.pattern.permute.xlu0 %v6721
        %6723 = vperm.xlu0 %6722, %v6658
        %v6724 = vpop.permute.xlu0 %6723
        %v6725 = vlaneseq
        %v6726 = vshrl.u32 %v6725, 7
        %v6727 = vadd.s32 %v6726, 88
        %6728 = vset.pattern.permute.xlu0 %v6727
        %6729 = vperm.xlu0 %6728, %v6658
        %v6730 = vpop.permute.xlu0 %6729
        %v6731 = vlaneseq
        %v6732 = vshrl.u32 %v6731, 7
        %v6733 = vadd.s32 %v6732, 96
        %6734 = vset.pattern.permute.xlu0 %v6733
        %6735 = vperm.xlu0 %6734, %v6658
        %v6736 = vpop.permute.xlu0 %6735
        %v6737 = vlaneseq
        %v6738 = vshrl.u32 %v6737, 7
        %v6739 = vadd.s32 %v6738, 104
        %6740 = vset.pattern.permute.xlu0 %v6739
        %6741 = vperm.xlu0 %6740, %v6658
        %v6742 = vpop.permute.xlu0 %6741
        %v6743 = vlaneseq
        %v6744 = vshrl.u32 %v6743, 7
        %v6745 = vadd.s32 %v6744, 112
        %6746 = vset.pattern.permute.xlu0 %v6745
        %6747 = vperm.xlu0 %6746, %v6658
        %v6748 = vpop.permute.xlu0 %6747
        %v6749 = vlaneseq
        %v6750 = vshrl.u32 %v6749, 7
        %v6751 = vadd.s32 %v6750, 120
        %6752 = vset.pattern.permute.xlu0 %v6751
        %6753 = vperm.xlu0 %6752, %v6658
        %v6754 = vpop.permute.xlu0 %6753
        %v6755 = vperm.slane %v608, 4
        %v6756 = vlaneseq
        %v6757 = vshrl.u32 %v6756, 7
        %6759 = vset.pattern.permute.xlu0 %v6757
        %6760 = vperm.xlu0 %6759, %v6755
        %v6761 = vpop.permute.xlu0 %6760
        %v6762 = vlaneseq
        %v6763 = vshrl.u32 %v6762, 7
        %v6764 = vadd.s32 %v6763, 8
        %6765 = vset.pattern.permute.xlu0 %v6764
        %6766 = vperm.xlu0 %6765, %v6755
        %v6767 = vpop.permute.xlu0 %6766
        %v6768 = vlaneseq
        %v6769 = vshrl.u32 %v6768, 7
        %v6770 = vadd.s32 %v6769, 16
        %6771 = vset.pattern.permute.xlu0 %v6770
        %6772 = vperm.xlu0 %6771, %v6755
        %v6773 = vpop.permute.xlu0 %6772
        %v6774 = vlaneseq
        %v6775 = vshrl.u32 %v6774, 7
        %v6776 = vadd.s32 %v6775, 24
        %6777 = vset.pattern.permute.xlu0 %v6776
        %6778 = vperm.xlu0 %6777, %v6755
        %v6779 = vpop.permute.xlu0 %6778
        %v6780 = vlaneseq
        %v6781 = vshrl.u32 %v6780, 7
        %v6782 = vadd.s32 %v6781, 32
        %6783 = vset.pattern.permute.xlu0 %v6782
        %6784 = vperm.xlu0 %6783, %v6755
        %v6785 = vpop.permute.xlu0 %6784
        %v6786 = vlaneseq
        %v6787 = vshrl.u32 %v6786, 7
        %v6788 = vadd.s32 %v6787, 40
        %6789 = vset.pattern.permute.xlu0 %v6788
        %6790 = vperm.xlu0 %6789, %v6755
        %v6791 = vpop.permute.xlu0 %6790
        %v6792 = vlaneseq
        %v6793 = vshrl.u32 %v6792, 7
        %v6794 = vadd.s32 %v6793, 48
        %6795 = vset.pattern.permute.xlu0 %v6794
        %6796 = vperm.xlu0 %6795, %v6755
        %v6797 = vpop.permute.xlu0 %6796
        %v6798 = vlaneseq
        %v6799 = vshrl.u32 %v6798, 7
        %v6800 = vadd.s32 %v6799, 56
        %6801 = vset.pattern.permute.xlu0 %v6800
        %6802 = vperm.xlu0 %6801, %v6755
        %v6803 = vpop.permute.xlu0 %6802
        %v6804 = vlaneseq
        %v6805 = vshrl.u32 %v6804, 7
        %v6806 = vadd.s32 %v6805, 64
        %6807 = vset.pattern.permute.xlu0 %v6806
        %6808 = vperm.xlu0 %6807, %v6755
        %v6809 = vpop.permute.xlu0 %6808
        %v6810 = vlaneseq
        %v6811 = vshrl.u32 %v6810, 7
        %v6812 = vadd.s32 %v6811, 72
        %6813 = vset.pattern.permute.xlu0 %v6812
        %6814 = vperm.xlu0 %6813, %v6755
        %v6815 = vpop.permute.xlu0 %6814
        %v6816 = vlaneseq
        %v6817 = vshrl.u32 %v6816, 7
        %v6818 = vadd.s32 %v6817, 80
        %6819 = vset.pattern.permute.xlu0 %v6818
        %6820 = vperm.xlu0 %6819, %v6755
        %v6821 = vpop.permute.xlu0 %6820
        %v6822 = vlaneseq
        %v6823 = vshrl.u32 %v6822, 7
        %v6824 = vadd.s32 %v6823, 88
        %6825 = vset.pattern.permute.xlu0 %v6824
        %6826 = vperm.xlu0 %6825, %v6755
        %v6827 = vpop.permute.xlu0 %6826
        %v6828 = vlaneseq
        %v6829 = vshrl.u32 %v6828, 7
        %v6830 = vadd.s32 %v6829, 96
        %6831 = vset.pattern.permute.xlu0 %v6830
        %6832 = vperm.xlu0 %6831, %v6755
        %v6833 = vpop.permute.xlu0 %6832
        %v6834 = vlaneseq
        %v6835 = vshrl.u32 %v6834, 7
        %v6836 = vadd.s32 %v6835, 104
        %6837 = vset.pattern.permute.xlu0 %v6836
        %6838 = vperm.xlu0 %6837, %v6755
        %v6839 = vpop.permute.xlu0 %6838
        %v6840 = vlaneseq
        %v6841 = vshrl.u32 %v6840, 7
        %v6842 = vadd.s32 %v6841, 112
        %6843 = vset.pattern.permute.xlu0 %v6842
        %6844 = vperm.xlu0 %6843, %v6755
        %v6845 = vpop.permute.xlu0 %6844
        %v6846 = vlaneseq
        %v6847 = vshrl.u32 %v6846, 7
        %v6848 = vadd.s32 %v6847, 120
        %6849 = vset.pattern.permute.xlu0 %v6848
        %6850 = vperm.xlu0 %6849, %v6755
        %v6851 = vpop.permute.xlu0 %6850
        %v6852 = vperm.slane %v608, 5
        %v6853 = vlaneseq
        %v6854 = vshrl.u32 %v6853, 7
        %6856 = vset.pattern.permute.xlu0 %v6854
        %6857 = vperm.xlu0 %6856, %v6852
        %v6858 = vpop.permute.xlu0 %6857
        %v6859 = vlaneseq
        %v6860 = vshrl.u32 %v6859, 7
        %v6861 = vadd.s32 %v6860, 8
        %6862 = vset.pattern.permute.xlu0 %v6861
        %6863 = vperm.xlu0 %6862, %v6852
        %v6864 = vpop.permute.xlu0 %6863
        %v6865 = vlaneseq
        %v6866 = vshrl.u32 %v6865, 7
        %v6867 = vadd.s32 %v6866, 16
        %6868 = vset.pattern.permute.xlu0 %v6867
        %6869 = vperm.xlu0 %6868, %v6852
        %v6870 = vpop.permute.xlu0 %6869
        %v6871 = vlaneseq
        %v6872 = vshrl.u32 %v6871, 7
        %v6873 = vadd.s32 %v6872, 24
        %6874 = vset.pattern.permute.xlu0 %v6873
        %6875 = vperm.xlu0 %6874, %v6852
        %v6876 = vpop.permute.xlu0 %6875
        %v6877 = vlaneseq
        %v6878 = vshrl.u32 %v6877, 7
        %v6879 = vadd.s32 %v6878, 32
        %6880 = vset.pattern.permute.xlu0 %v6879
        %6881 = vperm.xlu0 %6880, %v6852
        %v6882 = vpop.permute.xlu0 %6881
        %v6883 = vlaneseq
        %v6884 = vshrl.u32 %v6883, 7
        %v6885 = vadd.s32 %v6884, 40
        %6886 = vset.pattern.permute.xlu0 %v6885
        %6887 = vperm.xlu0 %6886, %v6852
        %v6888 = vpop.permute.xlu0 %6887
        %v6889 = vlaneseq
        %v6890 = vshrl.u32 %v6889, 7
        %v6891 = vadd.s32 %v6890, 48
        %6892 = vset.pattern.permute.xlu0 %v6891
        %6893 = vperm.xlu0 %6892, %v6852
        %v6894 = vpop.permute.xlu0 %6893
        %v6895 = vlaneseq
        %v6896 = vshrl.u32 %v6895, 7
        %v6897 = vadd.s32 %v6896, 56
        %6898 = vset.pattern.permute.xlu0 %v6897
        %6899 = vperm.xlu0 %6898, %v6852
        %v6900 = vpop.permute.xlu0 %6899
        %v6901 = vlaneseq
        %v6902 = vshrl.u32 %v6901, 7
        %v6903 = vadd.s32 %v6902, 64
        %6904 = vset.pattern.permute.xlu0 %v6903
        %6905 = vperm.xlu0 %6904, %v6852
        %v6906 = vpop.permute.xlu0 %6905
        %v6907 = vlaneseq
        %v6908 = vshrl.u32 %v6907, 7
        %v6909 = vadd.s32 %v6908, 72
        %6910 = vset.pattern.permute.xlu0 %v6909
        %6911 = vperm.xlu0 %6910, %v6852
        %v6912 = vpop.permute.xlu0 %6911
        %v6913 = vlaneseq
        %v6914 = vshrl.u32 %v6913, 7
        %v6915 = vadd.s32 %v6914, 80
        %6916 = vset.pattern.permute.xlu0 %v6915
        %6917 = vperm.xlu0 %6916, %v6852
        %v6918 = vpop.permute.xlu0 %6917
        %v6919 = vlaneseq
        %v6920 = vshrl.u32 %v6919, 7
        %v6921 = vadd.s32 %v6920, 88
        %6922 = vset.pattern.permute.xlu0 %v6921
        %6923 = vperm.xlu0 %6922, %v6852
        %v6924 = vpop.permute.xlu0 %6923
        %v6925 = vlaneseq
        %v6926 = vshrl.u32 %v6925, 7
        %v6927 = vadd.s32 %v6926, 96
        %6928 = vset.pattern.permute.xlu0 %v6927
        %6929 = vperm.xlu0 %6928, %v6852
        %v6930 = vpop.permute.xlu0 %6929
        %v6931 = vlaneseq
        %v6932 = vshrl.u32 %v6931, 7
        %v6933 = vadd.s32 %v6932, 104
        %6934 = vset.pattern.permute.xlu0 %v6933
        %6935 = vperm.xlu0 %6934, %v6852
        %v6936 = vpop.permute.xlu0 %6935
        %v6937 = vlaneseq
        %v6938 = vshrl.u32 %v6937, 7
        %v6939 = vadd.s32 %v6938, 112
        %6940 = vset.pattern.permute.xlu0 %v6939
        %6941 = vperm.xlu0 %6940, %v6852
        %v6942 = vpop.permute.xlu0 %6941
        %v6943 = vlaneseq
        %v6944 = vshrl.u32 %v6943, 7
        %v6945 = vadd.s32 %v6944, 120
        %6946 = vset.pattern.permute.xlu0 %v6945
        %6947 = vperm.xlu0 %6946, %v6852
        %v6948 = vpop.permute.xlu0 %6947
        %v6949 = vperm.slane %v608, 6
        %v6950 = vlaneseq
        %v6951 = vshrl.u32 %v6950, 7
        %6953 = vset.pattern.permute.xlu0 %v6951
        %6954 = vperm.xlu0 %6953, %v6949
        %v6955 = vpop.permute.xlu0 %6954
        %v6956 = vlaneseq
        %v6957 = vshrl.u32 %v6956, 7
        %v6958 = vadd.s32 %v6957, 8
        %6959 = vset.pattern.permute.xlu0 %v6958
        %6960 = vperm.xlu0 %6959, %v6949
        %v6961 = vpop.permute.xlu0 %6960
        %v6962 = vlaneseq
        %v6963 = vshrl.u32 %v6962, 7
        %v6964 = vadd.s32 %v6963, 16
        %6965 = vset.pattern.permute.xlu0 %v6964
        %6966 = vperm.xlu0 %6965, %v6949
        %v6967 = vpop.permute.xlu0 %6966
        %v6968 = vlaneseq
        %v6969 = vshrl.u32 %v6968, 7
        %v6970 = vadd.s32 %v6969, 24
        %6971 = vset.pattern.permute.xlu0 %v6970
        %6972 = vperm.xlu0 %6971, %v6949
        %v6973 = vpop.permute.xlu0 %6972
        %v6974 = vlaneseq
        %v6975 = vshrl.u32 %v6974, 7
        %v6976 = vadd.s32 %v6975, 32
        %6977 = vset.pattern.permute.xlu0 %v6976
        %6978 = vperm.xlu0 %6977, %v6949
        %v6979 = vpop.permute.xlu0 %6978
        %v6980 = vlaneseq
        %v6981 = vshrl.u32 %v6980, 7
        %v6982 = vadd.s32 %v6981, 40
        %6983 = vset.pattern.permute.xlu0 %v6982
        %6984 = vperm.xlu0 %6983, %v6949
        %v6985 = vpop.permute.xlu0 %6984
        %v6986 = vlaneseq
        %v6987 = vshrl.u32 %v6986, 7
        %v6988 = vadd.s32 %v6987, 48
        %6989 = vset.pattern.permute.xlu0 %v6988
        %6990 = vperm.xlu0 %6989, %v6949
        %v6991 = vpop.permute.xlu0 %6990
        %v6992 = vlaneseq
        %v6993 = vshrl.u32 %v6992, 7
        %v6994 = vadd.s32 %v6993, 56
        %6995 = vset.pattern.permute.xlu0 %v6994
        %6996 = vperm.xlu0 %6995, %v6949
        %v6997 = vpop.permute.xlu0 %6996
        %v6998 = vlaneseq
        %v6999 = vshrl.u32 %v6998, 7
        %v7000 = vadd.s32 %v6999, 64
        %7001 = vset.pattern.permute.xlu0 %v7000
        %7002 = vperm.xlu0 %7001, %v6949
        %v7003 = vpop.permute.xlu0 %7002
        %v7004 = vlaneseq
        %v7005 = vshrl.u32 %v7004, 7
        %v7006 = vadd.s32 %v7005, 72
        %7007 = vset.pattern.permute.xlu0 %v7006
        %7008 = vperm.xlu0 %7007, %v6949
        %v7009 = vpop.permute.xlu0 %7008
        %v7010 = vlaneseq
        %v7011 = vshrl.u32 %v7010, 7
        %v7012 = vadd.s32 %v7011, 80
        %7013 = vset.pattern.permute.xlu0 %v7012
        %7014 = vperm.xlu0 %7013, %v6949
        %v7015 = vpop.permute.xlu0 %7014
        %v7016 = vlaneseq
        %v7017 = vshrl.u32 %v7016, 7
        %v7018 = vadd.s32 %v7017, 88
        %7019 = vset.pattern.permute.xlu0 %v7018
        %7020 = vperm.xlu0 %7019, %v6949
        %v7021 = vpop.permute.xlu0 %7020
        %v7022 = vlaneseq
        %v7023 = vshrl.u32 %v7022, 7
        %v7024 = vadd.s32 %v7023, 96
        %7025 = vset.pattern.permute.xlu0 %v7024
        %7026 = vperm.xlu0 %7025, %v6949
        %v7027 = vpop.permute.xlu0 %7026
        %v7028 = vlaneseq
        %v7029 = vshrl.u32 %v7028, 7
        %v7030 = vadd.s32 %v7029, 104
        %7031 = vset.pattern.permute.xlu0 %v7030
        %7032 = vperm.xlu0 %7031, %v6949
        %v7033 = vpop.permute.xlu0 %7032
        %v7034 = vlaneseq
        %v7035 = vshrl.u32 %v7034, 7
        %v7036 = vadd.s32 %v7035, 112
        %7037 = vset.pattern.permute.xlu0 %v7036
        %7038 = vperm.xlu0 %7037, %v6949
        %v7039 = vpop.permute.xlu0 %7038
        %v7040 = vlaneseq
        %v7041 = vshrl.u32 %v7040, 7
        %v7042 = vadd.s32 %v7041, 120
        %7043 = vset.pattern.permute.xlu0 %v7042
        %7044 = vperm.xlu0 %7043, %v6949
        %v7045 = vpop.permute.xlu0 %7044
        %v7046 = vperm.slane %v608, 7
        %v7047 = vlaneseq
        %v7048 = vshrl.u32 %v7047, 7
        %7050 = vset.pattern.permute.xlu0 %v7048
        %7051 = vperm.xlu0 %7050, %v7046
        %v7052 = vpop.permute.xlu0 %7051
        %v7053 = vlaneseq
        %v7054 = vshrl.u32 %v7053, 7
        %v7055 = vadd.s32 %v7054, 8
        %7056 = vset.pattern.permute.xlu0 %v7055
        %7057 = vperm.xlu0 %7056, %v7046
        %v7058 = vpop.permute.xlu0 %7057
        %v7059 = vlaneseq
        %v7060 = vshrl.u32 %v7059, 7
        %v7061 = vadd.s32 %v7060, 16
        %7062 = vset.pattern.permute.xlu0 %v7061
        %7063 = vperm.xlu0 %7062, %v7046
        %v7064 = vpop.permute.xlu0 %7063
        %v7065 = vlaneseq
        %v7066 = vshrl.u32 %v7065, 7
        %v7067 = vadd.s32 %v7066, 24
        %7068 = vset.pattern.permute.xlu0 %v7067
        %7069 = vperm.xlu0 %7068, %v7046
        %v7070 = vpop.permute.xlu0 %7069
        %v7071 = vlaneseq
        %v7072 = vshrl.u32 %v7071, 7
        %v7073 = vadd.s32 %v7072, 32
        %7074 = vset.pattern.permute.xlu0 %v7073
        %7075 = vperm.xlu0 %7074, %v7046
        %v7076 = vpop.permute.xlu0 %7075
        %v7077 = vlaneseq
        %v7078 = vshrl.u32 %v7077, 7
        %v7079 = vadd.s32 %v7078, 40
        %7080 = vset.pattern.permute.xlu0 %v7079
        %7081 = vperm.xlu0 %7080, %v7046
        %v7082 = vpop.permute.xlu0 %7081
        %v7083 = vlaneseq
        %v7084 = vshrl.u32 %v7083, 7
        %v7085 = vadd.s32 %v7084, 48
        %7086 = vset.pattern.permute.xlu0 %v7085
        %7087 = vperm.xlu0 %7086, %v7046
        %v7088 = vpop.permute.xlu0 %7087
        %v7089 = vlaneseq
        %v7090 = vshrl.u32 %v7089, 7
        %v7091 = vadd.s32 %v7090, 56
        %7092 = vset.pattern.permute.xlu0 %v7091
        %7093 = vperm.xlu0 %7092, %v7046
        %v7094 = vpop.permute.xlu0 %7093
        %v7095 = vlaneseq
        %v7096 = vshrl.u32 %v7095, 7
        %v7097 = vadd.s32 %v7096, 64
        %7098 = vset.pattern.permute.xlu0 %v7097
        %7099 = vperm.xlu0 %7098, %v7046
        %v7100 = vpop.permute.xlu0 %7099
        %v7101 = vlaneseq
        %v7102 = vshrl.u32 %v7101, 7
        %v7103 = vadd.s32 %v7102, 72
        %7104 = vset.pattern.permute.xlu0 %v7103
        %7105 = vperm.xlu0 %7104, %v7046
        %v7106 = vpop.permute.xlu0 %7105
        %v7107 = vlaneseq
        %v7108 = vshrl.u32 %v7107, 7
        %v7109 = vadd.s32 %v7108, 80
        %7110 = vset.pattern.permute.xlu0 %v7109
        %7111 = vperm.xlu0 %7110, %v7046
        %v7112 = vpop.permute.xlu0 %7111
        %v7113 = vlaneseq
        %v7114 = vshrl.u32 %v7113, 7
        %v7115 = vadd.s32 %v7114, 88
        %7116 = vset.pattern.permute.xlu0 %v7115
        %7117 = vperm.xlu0 %7116, %v7046
        %v7118 = vpop.permute.xlu0 %7117
        %v7119 = vlaneseq
        %v7120 = vshrl.u32 %v7119, 7
        %v7121 = vadd.s32 %v7120, 96
        %7122 = vset.pattern.permute.xlu0 %v7121
        %7123 = vperm.xlu0 %7122, %v7046
        %v7124 = vpop.permute.xlu0 %7123
        %v7125 = vlaneseq
        %v7126 = vshrl.u32 %v7125, 7
        %v7127 = vadd.s32 %v7126, 104
        %7128 = vset.pattern.permute.xlu0 %v7127
        %7129 = vperm.xlu0 %7128, %v7046
        %v7130 = vpop.permute.xlu0 %7129
        %v7131 = vlaneseq
        %v7132 = vshrl.u32 %v7131, 7
        %v7133 = vadd.s32 %v7132, 112
        %7134 = vset.pattern.permute.xlu0 %v7133
        %7135 = vperm.xlu0 %7134, %v7046
        %v7136 = vpop.permute.xlu0 %7135
        %v7137 = vlaneseq
        %v7138 = vshrl.u32 %v7137, 7
        %v7139 = vadd.s32 %v7138, 120
        %7140 = vset.pattern.permute.xlu0 %v7139
        %7141 = vperm.xlu0 %7140, %v7046
        %v7142 = vpop.permute.xlu0 %7141
        %v7143 = vmul.f32 %v6236, %v6373
        %v7144 = vmul.f32 %v6237, %v6379
        %v7145 = vmul.f32 %v6238, %v6385
        %v7146 = vmul.f32 %v6239, %v6391
        %v7147 = vmul.f32 %v6240, %v6397
        %v7148 = vmul.f32 %v6241, %v6403
        %v7149 = vmul.f32 %v6242, %v6409
        %v7150 = vmul.f32 %v6243, %v6415
        %v7151 = vmul.f32 %v6244, %v6421
        %v7152 = vmul.f32 %v6245, %v6427
        %v7153 = vmul.f32 %v6246, %v6433
        %v7154 = vmul.f32 %v6247, %v6439
        %v7155 = vmul.f32 %v6248, %v6445
        %v7156 = vmul.f32 %v6249, %v6451
        %v7157 = vmul.f32 %v6250, %v6457
        %v7158 = vmul.f32 %v6251, %v6463
        %v7159 = vmul.f32 %v6252, %v6470
        %v7160 = vmul.f32 %v6253, %v6476
        %v7161 = vmul.f32 %v6254, %v6482
        %v7162 = vmul.f32 %v6255, %v6488
        %v7163 = vmul.f32 %v6256, %v6494
        %v7164 = vmul.f32 %v6257, %v6500
        %v7165 = vmul.f32 %v6258, %v6506
        %v7166 = vmul.f32 %v6259, %v6512
        %v7167 = vmul.f32 %v6260, %v6518
        %v7168 = vmul.f32 %v6261, %v6524
        %v7169 = vmul.f32 %v6262, %v6530
        %v7170 = vmul.f32 %v6263, %v6536
        %v7171 = vmul.f32 %v6264, %v6542
        %v7172 = vmul.f32 %v6265, %v6548
        %v7173 = vmul.f32 %v6266, %v6554
        %v7174 = vmul.f32 %v6267, %v6560
        %v7175 = vmul.f32 %v6268, %v6567
        %v7176 = vmul.f32 %v6269, %v6573
        %v7177 = vmul.f32 %v6270, %v6579
        %v7178 = vmul.f32 %v6271, %v6585
        %v7179 = vmul.f32 %v6272, %v6591
        %v7180 = vmul.f32 %v6273, %v6597
        %v7181 = vmul.f32 %v6274, %v6603
        %v7182 = vmul.f32 %v6275, %v6609
        %v7183 = vmul.f32 %v6276, %v6615
        %v7184 = vmul.f32 %v6277, %v6621
        %v7185 = vmul.f32 %v6278, %v6627
        %v7186 = vmul.f32 %v6279, %v6633
        %v7187 = vmul.f32 %v6280, %v6639
        %v7188 = vmul.f32 %v6281, %v6645
        %v7189 = vmul.f32 %v6282, %v6651
        %v7190 = vmul.f32 %v6283, %v6657
        %v7191 = vmul.f32 %v6284, %v6664
        %v7192 = vmul.f32 %v6285, %v6670
        %v7193 = vmul.f32 %v6286, %v6676
        %v7194 = vmul.f32 %v6287, %v6682
        %v7195 = vmul.f32 %v6288, %v6688
        %v7196 = vmul.f32 %v6289, %v6694
        %v7197 = vmul.f32 %v6290, %v6700
        %v7198 = vmul.f32 %v6291, %v6706
        %v7199 = vmul.f32 %v6292, %v6712
        %v7200 = vmul.f32 %v6293, %v6718
        %v7201 = vmul.f32 %v6294, %v6724
        %v7202 = vmul.f32 %v6295, %v6730
        %v7203 = vmul.f32 %v6296, %v6736
        %v7204 = vmul.f32 %v6297, %v6742
        %v7205 = vmul.f32 %v6298, %v6748
        %v7206 = vmul.f32 %v6299, %v6754
        %v7207 = vmul.f32 %v6300, %v6761
        %v7208 = vmul.f32 %v6301, %v6767
        %v7209 = vmul.f32 %v6302, %v6773
        %v7210 = vmul.f32 %v6303, %v6779
        %v7211 = vmul.f32 %v6304, %v6785
        %v7212 = vmul.f32 %v6305, %v6791
        %v7213 = vmul.f32 %v6306, %v6797
        %v7214 = vmul.f32 %v6307, %v6803
        %v7215 = vmul.f32 %v6308, %v6809
        %v7216 = vmul.f32 %v6309, %v6815
        %v7217 = vmul.f32 %v6310, %v6821
        %v7218 = vmul.f32 %v6311, %v6827
        %v7219 = vmul.f32 %v6312, %v6833
        %v7220 = vmul.f32 %v6313, %v6839
        %v7221 = vmul.f32 %v6314, %v6845
        %v7222 = vmul.f32 %v6315, %v6851
        %v7223 = vmul.f32 %v6316, %v6858
        %v7224 = vmul.f32 %v6317, %v6864
        %v7225 = vmul.f32 %v6318, %v6870
        %v7226 = vmul.f32 %v6319, %v6876
        %v7227 = vmul.f32 %v6320, %v6882
        %v7228 = vmul.f32 %v6321, %v6888
        %v7229 = vmul.f32 %v6322, %v6894
        %v7230 = vmul.f32 %v6323, %v6900
        %v7231 = vmul.f32 %v6324, %v6906
        %v7232 = vmul.f32 %v6325, %v6912
        %v7233 = vmul.f32 %v6326, %v6918
        %v7234 = vmul.f32 %v6327, %v6924
        %v7235 = vmul.f32 %v6328, %v6930
        %v7236 = vmul.f32 %v6329, %v6936
        %v7237 = vmul.f32 %v6330, %v6942
        %v7238 = vmul.f32 %v6331, %v6948
        %v7239 = vmul.f32 %v6332, %v6955
        %v7240 = vmul.f32 %v6333, %v6961
        %v7241 = vmul.f32 %v6334, %v6967
        %v7242 = vmul.f32 %v6335, %v6973
        %v7243 = vmul.f32 %v6336, %v6979
        %v7244 = vmul.f32 %v6337, %v6985
        %v7245 = vmul.f32 %v6338, %v6991
        %v7246 = vmul.f32 %v6339, %v6997
        %v7247 = vmul.f32 %v6340, %v7003
        %v7248 = vmul.f32 %v6341, %v7009
        %v7249 = vmul.f32 %v6342, %v7015
        %v7250 = vmul.f32 %v6343, %v7021
        %v7251 = vmul.f32 %v6344, %v7027
        %v7252 = vmul.f32 %v6345, %v7033
        %v7253 = vmul.f32 %v6346, %v7039
        %v7254 = vmul.f32 %v6347, %v7045
        %v7255 = vmul.f32 %v6348, %v7052
        %v7256 = vmul.f32 %v6349, %v7058
        %v7257 = vmul.f32 %v6350, %v7064
        %v7258 = vmul.f32 %v6351, %v7070
        %v7259 = vmul.f32 %v6352, %v7076
        %v7260 = vmul.f32 %v6353, %v7082
        %v7261 = vmul.f32 %v6354, %v7088
        %v7262 = vmul.f32 %v6355, %v7094
        %v7263 = vmul.f32 %v6356, %v7100
        %v7264 = vmul.f32 %v6357, %v7106
        %v7265 = vmul.f32 %v6358, %v7112
        %v7266 = vmul.f32 %v6359, %v7118
        %v7267 = vmul.f32 %v6360, %v7124
        %v7268 = vmul.f32 %v6361, %v7130
        %v7269 = vmul.f32 %v6362, %v7136
        %v7270 = vmul.f32 %v6363, %v7142
        %v7271 = vadd.f32 %v7143, %v7144
        %v7272 = vadd.f32 %v7271, %v7145
        %v7273 = vadd.f32 %v7272, %v7146
        %v7274 = vadd.f32 %v7273, %v7147
        %v7275 = vadd.f32 %v7274, %v7148
        %v7276 = vadd.f32 %v7275, %v7149
        %v7277 = vadd.f32 %v7276, %v7150
        %v7278 = vadd.f32 %v7277, %v7151
        %v7279 = vadd.f32 %v7278, %v7152
        %v7280 = vadd.f32 %v7279, %v7153
        %v7281 = vadd.f32 %v7280, %v7154
        %v7282 = vadd.f32 %v7281, %v7155
        %v7283 = vadd.f32 %v7282, %v7156
        %v7284 = vadd.f32 %v7283, %v7157
        %v7285 = vadd.f32 %v7284, %v7158
        %v7286 = vrot.slane %v7285, 4
        %v7287 = vadd.f32 %v7285, %v7286
        %v7288 = vrot.slane %v7287, 2
        %v7289 = vadd.f32 %v7287, %v7288
        %v7290 = vrot.slane %v7289, 1
        %v7291 = vadd.f32 %v7289, %v7290
        %v7292 = vadd.f32 %v7159, %v7160
        %v7293 = vadd.f32 %v7292, %v7161
        %v7294 = vadd.f32 %v7293, %v7162
        %v7295 = vadd.f32 %v7294, %v7163
        %v7296 = vadd.f32 %v7295, %v7164
        %v7297 = vadd.f32 %v7296, %v7165
        %v7298 = vadd.f32 %v7297, %v7166
        %v7299 = vadd.f32 %v7298, %v7167
        %v7300 = vadd.f32 %v7299, %v7168
        %v7301 = vadd.f32 %v7300, %v7169
        %v7302 = vadd.f32 %v7301, %v7170
        %v7303 = vadd.f32 %v7302, %v7171
        %v7304 = vadd.f32 %v7303, %v7172
        %v7305 = vadd.f32 %v7304, %v7173
        %v7306 = vadd.f32 %v7305, %v7174
        %v7307 = vrot.slane %v7306, 4
        %v7308 = vadd.f32 %v7306, %v7307
        %v7309 = vrot.slane %v7308, 2
        %v7310 = vadd.f32 %v7308, %v7309
        %v7311 = vrot.slane %v7310, 1
        %v7312 = vadd.f32 %v7310, %v7311
        %v7313 = vadd.f32 %v7175, %v7176
        %v7314 = vadd.f32 %v7313, %v7177
        %v7315 = vadd.f32 %v7314, %v7178
        %v7316 = vadd.f32 %v7315, %v7179
        %v7317 = vadd.f32 %v7316, %v7180
        %v7318 = vadd.f32 %v7317, %v7181
        %v7319 = vadd.f32 %v7318, %v7182
        %v7320 = vadd.f32 %v7319, %v7183
        %v7321 = vadd.f32 %v7320, %v7184
        %v7322 = vadd.f32 %v7321, %v7185
        %v7323 = vadd.f32 %v7322, %v7186
        %v7324 = vadd.f32 %v7323, %v7187
        %v7325 = vadd.f32 %v7324, %v7188
        %v7326 = vadd.f32 %v7325, %v7189
        %v7327 = vadd.f32 %v7326, %v7190
        %v7328 = vrot.slane %v7327, 4
        %v7329 = vadd.f32 %v7327, %v7328
        %v7330 = vrot.slane %v7329, 2
        %v7331 = vadd.f32 %v7329, %v7330
        %v7332 = vrot.slane %v7331, 1
        %v7333 = vadd.f32 %v7331, %v7332
        %v7334 = vadd.f32 %v7191, %v7192
        %v7335 = vadd.f32 %v7334, %v7193
        %v7336 = vadd.f32 %v7335, %v7194
        %v7337 = vadd.f32 %v7336, %v7195
        %v7338 = vadd.f32 %v7337, %v7196
        %v7339 = vadd.f32 %v7338, %v7197
        %v7340 = vadd.f32 %v7339, %v7198
        %v7341 = vadd.f32 %v7340, %v7199
        %v7342 = vadd.f32 %v7341, %v7200
        %v7343 = vadd.f32 %v7342, %v7201
        %v7344 = vadd.f32 %v7343, %v7202
        %v7345 = vadd.f32 %v7344, %v7203
        %v7346 = vadd.f32 %v7345, %v7204
        %v7347 = vadd.f32 %v7346, %v7205
        %v7348 = vadd.f32 %v7347, %v7206
        %v7349 = vrot.slane %v7348, 4
        %v7350 = vadd.f32 %v7348, %v7349
        %v7351 = vrot.slane %v7350, 2
        %v7352 = vadd.f32 %v7350, %v7351
        %v7353 = vrot.slane %v7352, 1
        %v7354 = vadd.f32 %v7352, %v7353
        %v7355 = vadd.f32 %v7207, %v7208
        %v7356 = vadd.f32 %v7355, %v7209
        %v7357 = vadd.f32 %v7356, %v7210
        %v7358 = vadd.f32 %v7357, %v7211
        %v7359 = vadd.f32 %v7358, %v7212
        %v7360 = vadd.f32 %v7359, %v7213
        %v7361 = vadd.f32 %v7360, %v7214
        %v7362 = vadd.f32 %v7361, %v7215
        %v7363 = vadd.f32 %v7362, %v7216
        %v7364 = vadd.f32 %v7363, %v7217
        %v7365 = vadd.f32 %v7364, %v7218
        %v7366 = vadd.f32 %v7365, %v7219
        %v7367 = vadd.f32 %v7366, %v7220
        %v7368 = vadd.f32 %v7367, %v7221
        %v7369 = vadd.f32 %v7368, %v7222
        %v7370 = vrot.slane %v7369, 4
        %v7371 = vadd.f32 %v7369, %v7370
        %v7372 = vrot.slane %v7371, 2
        %v7373 = vadd.f32 %v7371, %v7372
        %v7374 = vrot.slane %v7373, 1
        %v7375 = vadd.f32 %v7373, %v7374
        %v7376 = vadd.f32 %v7223, %v7224
        %v7377 = vadd.f32 %v7376, %v7225
        %v7378 = vadd.f32 %v7377, %v7226
        %v7379 = vadd.f32 %v7378, %v7227
        %v7380 = vadd.f32 %v7379, %v7228
        %v7381 = vadd.f32 %v7380, %v7229
        %v7382 = vadd.f32 %v7381, %v7230
        %v7383 = vadd.f32 %v7382, %v7231
        %v7384 = vadd.f32 %v7383, %v7232
        %v7385 = vadd.f32 %v7384, %v7233
        %v7386 = vadd.f32 %v7385, %v7234
        %v7387 = vadd.f32 %v7386, %v7235
        %v7388 = vadd.f32 %v7387, %v7236
        %v7389 = vadd.f32 %v7388, %v7237
        %v7390 = vadd.f32 %v7389, %v7238
        %v7391 = vrot.slane %v7390, 4
        %v7392 = vadd.f32 %v7390, %v7391
        %v7393 = vrot.slane %v7392, 2
        %v7394 = vadd.f32 %v7392, %v7393
        %v7395 = vrot.slane %v7394, 1
        %v7396 = vadd.f32 %v7394, %v7395
        %v7397 = vadd.f32 %v7239, %v7240
        %v7398 = vadd.f32 %v7397, %v7241
        %v7399 = vadd.f32 %v7398, %v7242
        %v7400 = vadd.f32 %v7399, %v7243
        %v7401 = vadd.f32 %v7400, %v7244
        %v7402 = vadd.f32 %v7401, %v7245
        %v7403 = vadd.f32 %v7402, %v7246
        %v7404 = vadd.f32 %v7403, %v7247
        %v7405 = vadd.f32 %v7404, %v7248
        %v7406 = vadd.f32 %v7405, %v7249
        %v7407 = vadd.f32 %v7406, %v7250
        %v7408 = vadd.f32 %v7407, %v7251
        %v7409 = vadd.f32 %v7408, %v7252
        %v7410 = vadd.f32 %v7409, %v7253
        %v7411 = vadd.f32 %v7410, %v7254
        %v7412 = vrot.slane %v7411, 4
        %v7413 = vadd.f32 %v7411, %v7412
        %v7414 = vrot.slane %v7413, 2
        %v7415 = vadd.f32 %v7413, %v7414
        %v7416 = vrot.slane %v7415, 1
        %v7417 = vadd.f32 %v7415, %v7416
        %v7418 = vadd.f32 %v7255, %v7256
        %v7419 = vadd.f32 %v7418, %v7257
        %v7420 = vadd.f32 %v7419, %v7258
        %v7421 = vadd.f32 %v7420, %v7259
        %v7422 = vadd.f32 %v7421, %v7260
        %v7423 = vadd.f32 %v7422, %v7261
        %v7424 = vadd.f32 %v7423, %v7262
        %v7425 = vadd.f32 %v7424, %v7263
        %v7426 = vadd.f32 %v7425, %v7264
        %v7427 = vadd.f32 %v7426, %v7265
        %v7428 = vadd.f32 %v7427, %v7266
        %v7429 = vadd.f32 %v7428, %v7267
        %v7430 = vadd.f32 %v7429, %v7268
        %v7431 = vadd.f32 %v7430, %v7269
        %v7432 = vadd.f32 %v7431, %v7270
        %v7433 = vrot.slane %v7432, 4
        %v7434 = vadd.f32 %v7432, %v7433
        %v7435 = vrot.slane %v7434, 2
        %v7436 = vadd.f32 %v7434, %v7435
        %v7437 = vrot.slane %v7436, 1
        %v7438 = vadd.f32 %v7436, %v7437
        %v7440 = vrot.slane %v6366, 1
        %v7441 = vrot.slane %v6366, 2
        %v7442 = vrot.slane %v6366, 3
        %v7443 = vrot.slane %v6366, 4
        %v7444 = vrot.slane %v6366, 5
        %v7445 = vrot.slane %v6366, 6
        %v7446 = vrot.slane %v6366, 7
        %v7455 = vrcp.pop %v6366
        %v7456 = vmul.f32 %v6366, %v7455
        %v7457 = vsub.f32 1.0, %v7456
        %v7458 = vmul.f32 %v7455, %v7457
        %v7459 = vadd.f32 %v7455, %v7458
        %vm7460 = vweird.f32 %v6366
        %vm7461 = vweird.f32 %v7455
        %vm7462 = vmor %vm7460, %vm7461
        %v7463 = vsel %vm7462, %v7455, %v7459
        %v7464 = vand.u32 2147483647, %v6366
        %vm7465 = vcmp.eq.f32.partialorder %v7464, 8.507059e+37
        %v7466 = vand.u32 %v6366, 2147483648
        %v7467 = vor.u32 1.1754944e-38, %v7466
        %v7468 = vsel %vm7465, %v7467, %v7463
        %v7469 = vmul.f32 %v7291, %v7468
        %v7470 = vrcp.pop %v7440
        %v7471 = vmul.f32 %v7440, %v7470
        %v7472 = vsub.f32 1.0, %v7471
        %v7473 = vmul.f32 %v7470, %v7472
        %v7474 = vadd.f32 %v7470, %v7473
        %vm7475 = vweird.f32 %v7440
        %vm7476 = vweird.f32 %v7470
        %vm7477 = vmor %vm7475, %vm7476
        %v7478 = vsel %vm7477, %v7470, %v7474
        %v7479 = vand.u32 2147483647, %v7440
        %vm7480 = vcmp.eq.f32.partialorder %v7479, 8.507059e+37
        %v7481 = vand.u32 %v7440, 2147483648
        %v7482 = vor.u32 1.1754944e-38, %v7481
        %v7483 = vsel %vm7480, %v7482, %v7478
        %v7484 = vmul.f32 %v7312, %v7483
        %v7485 = vrcp.pop %v7441
        %v7486 = vmul.f32 %v7441, %v7485
        %v7487 = vsub.f32 1.0, %v7486
        %v7488 = vmul.f32 %v7485, %v7487
        %v7489 = vadd.f32 %v7485, %v7488
        %vm7490 = vweird.f32 %v7441
        %vm7491 = vweird.f32 %v7485
        %vm7492 = vmor %vm7490, %vm7491
        %v7493 = vsel %vm7492, %v7485, %v7489
        %v7494 = vand.u32 2147483647, %v7441
        %vm7495 = vcmp.eq.f32.partialorder %v7494, 8.507059e+37
        %v7496 = vand.u32 %v7441, 2147483648
        %v7497 = vor.u32 1.1754944e-38, %v7496
        %v7498 = vsel %vm7495, %v7497, %v7493
        %v7499 = vmul.f32 %v7333, %v7498
        %v7500 = vrcp.pop %v7442
        %v7501 = vmul.f32 %v7442, %v7500
        %v7502 = vsub.f32 1.0, %v7501
        %v7503 = vmul.f32 %v7500, %v7502
        %v7504 = vadd.f32 %v7500, %v7503
        %vm7505 = vweird.f32 %v7442
        %vm7506 = vweird.f32 %v7500
        %vm7507 = vmor %vm7505, %vm7506
        %v7508 = vsel %vm7507, %v7500, %v7504
        %v7509 = vand.u32 2147483647, %v7442
        %vm7510 = vcmp.eq.f32.partialorder %v7509, 8.507059e+37
        %v7511 = vand.u32 %v7442, 2147483648
        %v7512 = vor.u32 1.1754944e-38, %v7511
        %v7513 = vsel %vm7510, %v7512, %v7508
        %v7514 = vmul.f32 %v7354, %v7513
        %v7515 = vrcp.pop %v7443
        %v7516 = vmul.f32 %v7443, %v7515
        %v7517 = vsub.f32 1.0, %v7516
        %v7518 = vmul.f32 %v7515, %v7517
        %v7519 = vadd.f32 %v7515, %v7518
        %vm7520 = vweird.f32 %v7443
        %vm7521 = vweird.f32 %v7515
        %vm7522 = vmor %vm7520, %vm7521
        %v7523 = vsel %vm7522, %v7515, %v7519
        %v7524 = vand.u32 2147483647, %v7443
        %vm7525 = vcmp.eq.f32.partialorder %v7524, 8.507059e+37
        %v7526 = vand.u32 %v7443, 2147483648
        %v7527 = vor.u32 1.1754944e-38, %v7526
        %v7528 = vsel %vm7525, %v7527, %v7523
        %v7529 = vmul.f32 %v7375, %v7528
        %v7530 = vrcp.pop %v7444
        %v7531 = vmul.f32 %v7444, %v7530
        %v7532 = vsub.f32 1.0, %v7531
        %v7533 = vmul.f32 %v7530, %v7532
        %v7534 = vadd.f32 %v7530, %v7533
        %vm7535 = vweird.f32 %v7444
        %vm7536 = vweird.f32 %v7530
        %vm7537 = vmor %vm7535, %vm7536
        %v7538 = vsel %vm7537, %v7530, %v7534
        %v7539 = vand.u32 2147483647, %v7444
        %vm7540 = vcmp.eq.f32.partialorder %v7539, 8.507059e+37
        %v7541 = vand.u32 %v7444, 2147483648
        %v7542 = vor.u32 1.1754944e-38, %v7541
        %v7543 = vsel %vm7540, %v7542, %v7538
        %v7544 = vmul.f32 %v7396, %v7543
        %v7545 = vrcp.pop %v7445
        %v7546 = vmul.f32 %v7445, %v7545
        %v7547 = vsub.f32 1.0, %v7546
        %v7548 = vmul.f32 %v7545, %v7547
        %v7549 = vadd.f32 %v7545, %v7548
        %vm7550 = vweird.f32 %v7445
        %vm7551 = vweird.f32 %v7545
        %vm7552 = vmor %vm7550, %vm7551
        %v7553 = vsel %vm7552, %v7545, %v7549
        %v7554 = vand.u32 2147483647, %v7445
        %vm7555 = vcmp.eq.f32.partialorder %v7554, 8.507059e+37
        %v7556 = vand.u32 %v7445, 2147483648
        %v7557 = vor.u32 1.1754944e-38, %v7556
        %v7558 = vsel %vm7555, %v7557, %v7553
        %v7559 = vmul.f32 %v7417, %v7558
        %v7560 = vrcp.pop %v7446
        %v7561 = vmul.f32 %v7446, %v7560
        %v7562 = vsub.f32 1.0, %v7561
        %v7563 = vmul.f32 %v7560, %v7562
        %v7564 = vadd.f32 %v7560, %v7563
        %vm7565 = vweird.f32 %v7446
        %vm7566 = vweird.f32 %v7560
        %vm7567 = vmor %vm7565, %vm7566
        %v7568 = vsel %vm7567, %v7560, %v7564
        %v7569 = vand.u32 2147483647, %v7446
        %vm7570 = vcmp.eq.f32.partialorder %v7569, 8.507059e+37
        %v7571 = vand.u32 %v7446, 2147483648
        %v7572 = vor.u32 1.1754944e-38, %v7571
        %v7573 = vsel %vm7570, %v7572, %v7568
        %v7574 = vmul.f32 %v7438, %v7573
        %v7575 = vadd.f32 %v7469, %v4000
        %v7576 = vadd.f32 %v7484, %v4015
        %v7577 = vadd.f32 %v7499, %v4030
        %v7578 = vadd.f32 %v7514, %v4045
        %v7579 = vadd.f32 %v7529, %v4060
        %v7580 = vadd.f32 %v7544, %v4075
        %v7581 = vadd.f32 %v7559, %v4090
        %v7582 = vadd.f32 %v7574, %v4105
        %v7583 = vmul.f32 %v7575, 0.5
        %v7584 = vmul.f32 %v7576, 0.5
        %v7585 = vmul.f32 %v7577, 0.5
        %v7586 = vmul.f32 %v7578, 0.5
        %v7587 = vmul.f32 %v7579, 0.5
        %v7588 = vmul.f32 %v7580, 0.5
        %v7589 = vmul.f32 %v7581, 0.5
        %v7590 = vmul.f32 %v7582, 0.5
        %v7599 = vrot.slane %v7584, 7
        %vm7600 = vcmask 1041409
        %v7601 = vsel %vm7600, %v7599, %v7583
        %v7602 = vrot.slane %v7585, 6
        %vm7603 = vcmask 1042434
        %v7604 = vsel %vm7603, %v7602, %v7601
        %v7605 = vrot.slane %v7586, 5
        %vm7606 = vcmask 1043459
        %v7607 = vsel %vm7606, %v7605, %v7604
        %v7608 = vrot.slane %v7587, 4
        %vm7609 = vcmask 1044484
        %v7610 = vsel %vm7609, %v7608, %v7607
        %v7611 = vrot.slane %v7588, 3
        %vm7612 = vcmask 1045509
        %v7613 = vsel %vm7612, %v7611, %v7610
        %v7614 = vrot.slane %v7589, 2
        %vm7615 = vcmask 1046534
        %v7616 = vsel %vm7615, %v7614, %v7613
        %v7617 = vrot.slane %v7590, 1
        %vm7618 = vcmask 1047559
        %v7619 = vsel %vm7618, %v7617, %v7616
        %7621 = vst [vmem:[%s578] sm:$0xff] %v7619
        %v7622 = vld [vmem:[%s590] sm:$0xff]
        %v7623 = vld [vmem:[#allocation2] sm:$0xf]
        %v7624 = vld [vmem:[#allocation2 + $0x4] sm:$0xf]
        %v7625 = vld [vmem:[#allocation2 + $0x8] sm:$0xf]
        %v7626 = vld [vmem:[#allocation2 + $0xc] sm:$0xf]
        %v7627 = vld [vmem:[%s8] sm:$0x1]
        %v7628 = vperm.slane %v7622, 0
        %v7629 = vlaneseq
        %v7630 = vshrl.u32 %v7629, 7
        %7632 = vset.pattern.permute.xlu0 %v7630
        %7633 = vperm.xlu0 %7632, %v7628
        %v7634 = vpop.permute.xlu0 %7633
        %v7635 = vperm.slane %v7622, 1
        %v7636 = vlaneseq
        %v7637 = vshrl.u32 %v7636, 7
        %7639 = vset.pattern.permute.xlu0 %v7637
        %7640 = vperm.xlu0 %7639, %v7635
        %v7641 = vpop.permute.xlu0 %7640
        %v7642 = vperm.slane %v7622, 2
        %v7643 = vlaneseq
        %v7644 = vshrl.u32 %v7643, 7
        %7646 = vset.pattern.permute.xlu0 %v7644
        %7647 = vperm.xlu0 %7646, %v7642
        %v7648 = vpop.permute.xlu0 %7647
        %v7649 = vperm.slane %v7622, 3
        %v7650 = vlaneseq
        %v7651 = vshrl.u32 %v7650, 7
        %7653 = vset.pattern.permute.xlu0 %v7651
        %7654 = vperm.xlu0 %7653, %v7649
        %v7655 = vpop.permute.xlu0 %7654
        %v7656 = vperm.slane %v7622, 4
        %v7657 = vlaneseq
        %v7658 = vshrl.u32 %v7657, 7
        %7660 = vset.pattern.permute.xlu0 %v7658
        %7661 = vperm.xlu0 %7660, %v7656
        %v7662 = vpop.permute.xlu0 %7661
        %v7663 = vperm.slane %v7622, 5
        %v7664 = vlaneseq
        %v7665 = vshrl.u32 %v7664, 7
        %7667 = vset.pattern.permute.xlu0 %v7665
        %7668 = vperm.xlu0 %7667, %v7663
        %v7669 = vpop.permute.xlu0 %7668
        %v7670 = vperm.slane %v7622, 6
        %v7671 = vlaneseq
        %v7672 = vshrl.u32 %v7671, 7
        %7674 = vset.pattern.permute.xlu0 %v7672
        %7675 = vperm.xlu0 %7674, %v7670
        %v7676 = vpop.permute.xlu0 %7675
        %v7677 = vperm.slane %v7622, 7
        %v7678 = vlaneseq
        %v7679 = vshrl.u32 %v7678, 7
        %7681 = vset.pattern.permute.xlu0 %v7679
        %7682 = vperm.xlu0 %7681, %v7677
        %v7683 = vpop.permute.xlu0 %7682
        %vm7684 = vcmp.eq.s32.totalorder %v7634, %v601
        %vm7685 = vcmp.eq.s32.totalorder %v7641, %v601
        %vm7686 = vcmp.eq.s32.totalorder %v7648, %v601
        %vm7687 = vcmp.eq.s32.totalorder %v7655, %v601
        %vm7688 = vcmp.eq.s32.totalorder %v7662, %v601
        %vm7689 = vcmp.eq.s32.totalorder %v7669, %v601
        %vm7690 = vcmp.eq.s32.totalorder %v7676, %v601
        %vm7691 = vcmp.eq.s32.totalorder %v7683, %v601
        %v7692 = vsel %vm7684, 1, 0
        %v7693 = vsel %vm7685, 1, 0
        %v7694 = vsel %vm7686, 1, 0
        %v7695 = vsel %vm7687, 1, 0
        %v7696 = vsel %vm7688, 1, 0
        %v7697 = vsel %vm7689, 1, 0
        %v7698 = vsel %vm7690, 1, 0
        %v7699 = vsel %vm7691, 1, 0
        %v7700 = vcvt.s32.f32 %v7692
        %v7701 = vcvt.s32.f32 %v7693
        %v7702 = vcvt.s32.f32 %v7694
        %v7703 = vcvt.s32.f32 %v7695
        %v7704 = vcvt.s32.f32 %v7696
        %v7705 = vcvt.s32.f32 %v7697
        %v7706 = vcvt.s32.f32 %v7698
        %v7707 = vcvt.s32.f32 %v7699
        %v7708 = vpack.c.bf16 %v7700, %v7700
        %v7709 = vpack.c.bf16 %v7701, %v7701
        %v7710 = vpack.c.bf16 %v7702, %v7702
        %v7711 = vpack.c.bf16 %v7703, %v7703
        %v7712 = vpack.c.bf16 %v7704, %v7704
        %v7713 = vpack.c.bf16 %v7705, %v7705
        %v7714 = vpack.c.bf16 %v7706, %v7706
        %v7715 = vpack.c.bf16 %v7707, %v7707
        %v7717 = vperm.slane %v7627, 0
        %v7727 = vunpack.c.l.b16 %v7708
        %v7728 = vunpack.c.l.b16 %v7709
        %v7729 = vunpack.c.l.b16 %v7710
        %v7730 = vunpack.c.l.b16 %v7711
        %v7731 = vunpack.c.l.b16 %v7712
        %v7732 = vunpack.c.l.b16 %v7713
        %v7733 = vunpack.c.l.b16 %v7714
        %v7734 = vunpack.c.l.b16 %v7715
        %v7735 = vpack.c.b16 %v7728, %v7727
        %v7736 = vpack.c.b16 %v7730, %v7729
        %v7737 = vpack.c.b16 %v7732, %v7731
        %v7738 = vpack.c.b16 %v7734, %v7733
        %v7743 = vunpack.c.l.b16 %v7623
        %v7744 = vunpack.c.l.b16 %v7624
        %v7745 = vunpack.c.l.b16 %v7625
        %v7746 = vunpack.c.l.b16 %v7626
        %v7747 = vpack.c.b16 %v7744, %v7743
        %v7748 = vpack.c.b16 %v7746, %v7745
        %v7752 = vsel %vm2245, %v7735, 0
        %v7755 = vsel %vm2245, %v7736, 0
        %v7758 = vsel %vm2245, %v7737, 0
        %v7761 = vsel %vm2245, %v7738, 0
        %7763 = vmatpush.bf16.msra.mxu0 0
        %7764 = vmatpush.bf16.msra.mxu0 0
        %7765 = vmatpush.bf16.msra.mxu0 0
        %7766 = vmatpush.bf16.msra.mxu0 0
        %7767 = vmatpush.bf16.msra.mxu0 0
        %7768 = vmatpush.bf16.msra.mxu0 0
        %7769 = vmatpush.bf16.msra.mxu0 %v7748
        %7770 = vmatpush.bf16.msra.mxu0 %v7747
        %7771 = vmatmul.bf16.gmra.mxu0 %v7752
        %v7772 = vpop.f32.mrf.mxu0
        %v7773 = vadd.f32 %v7717, %v7772
        %v7774 = vpop.f32.mrf.mxu0
        %v7775 = vadd.f32 %v7717, %v7774
        %7776 = vmatmul.bf16.gmra.mxu0 %v7755
        %v7777 = vpop.f32.mrf.mxu0
        %v7778 = vadd.f32 %v7717, %v7777
        %v7779 = vpop.f32.mrf.mxu0
        %v7780 = vadd.f32 %v7717, %v7779
        %7781 = vmatmul.bf16.gmra.mxu0 %v7758
        %v7782 = vpop.f32.mrf.mxu0
        %v7783 = vadd.f32 %v7717, %v7782
        %v7784 = vpop.f32.mrf.mxu0
        %v7785 = vadd.f32 %v7717, %v7784
        %7786 = vmatmul.bf16.gmra.mxu0 %v7761
        %v7787 = vpop.f32.mrf.mxu0
        %v7788 = vadd.f32 %v7717, %v7787
        %v7789 = vpop.f32.mrf.mxu0
        %v7790 = vadd.f32 %v7717, %v7789
        %7791 = vdwg.mxu0
        %v7792 = vtanh.pop %v7773
        %v7793 = vtanh.pop %v7775
        %v7794 = vtanh.pop %v7778
        %v7795 = vtanh.pop %v7780
        %v7796 = vtanh.pop %v7783
        %v7797 = vtanh.pop %v7785
        %v7798 = vtanh.pop %v7788
        %v7799 = vtanh.pop %v7790
        %v7800 = vpack.c.bf16 %v6236, %v6236
        %v7801 = vpack.c.bf16 %v6237, %v6237
        %v7802 = vpack.c.bf16 %v6238, %v6238
        %v7803 = vpack.c.bf16 %v6239, %v6239
        %v7804 = vpack.c.bf16 %v6240, %v6240
        %v7805 = vpack.c.bf16 %v6241, %v6241
        %v7806 = vpack.c.bf16 %v6242, %v6242
        %v7807 = vpack.c.bf16 %v6243, %v6243
        %v7808 = vpack.c.bf16 %v6244, %v6244
        %v7809 = vpack.c.bf16 %v6245, %v6245
        %v7810 = vpack.c.bf16 %v6246, %v6246
        %v7811 = vpack.c.bf16 %v6247, %v6247
        %v7812 = vpack.c.bf16 %v6248, %v6248
        %v7813 = vpack.c.bf16 %v6249, %v6249
        %v7814 = vpack.c.bf16 %v6250, %v6250
        %v7815 = vpack.c.bf16 %v6251, %v6251
        %v7816 = vpack.c.bf16 %v6252, %v6252
        %v7817 = vpack.c.bf16 %v6253, %v6253
        %v7818 = vpack.c.bf16 %v6254, %v6254
        %v7819 = vpack.c.bf16 %v6255, %v6255
        %v7820 = vpack.c.bf16 %v6256, %v6256
        %v7821 = vpack.c.bf16 %v6257, %v6257
        %v7822 = vpack.c.bf16 %v6258, %v6258
        %v7823 = vpack.c.bf16 %v6259, %v6259
        %v7824 = vpack.c.bf16 %v6260, %v6260
        %v7825 = vpack.c.bf16 %v6261, %v6261
        %v7826 = vpack.c.bf16 %v6262, %v6262
        %v7827 = vpack.c.bf16 %v6263, %v6263
        %v7828 = vpack.c.bf16 %v6264, %v6264
        %v7829 = vpack.c.bf16 %v6265, %v6265
        %v7830 = vpack.c.bf16 %v6266, %v6266
        %v7831 = vpack.c.bf16 %v6267, %v6267
        %v7832 = vpack.c.bf16 %v6268, %v6268
        %v7833 = vpack.c.bf16 %v6269, %v6269
        %v7834 = vpack.c.bf16 %v6270, %v6270
        %v7835 = vpack.c.bf16 %v6271, %v6271
        %v7836 = vpack.c.bf16 %v6272, %v6272
        %v7837 = vpack.c.bf16 %v6273, %v6273
        %v7838 = vpack.c.bf16 %v6274, %v6274
        %v7839 = vpack.c.bf16 %v6275, %v6275
        %v7840 = vpack.c.bf16 %v6276, %v6276
        %v7841 = vpack.c.bf16 %v6277, %v6277
        %v7842 = vpack.c.bf16 %v6278, %v6278
        %v7843 = vpack.c.bf16 %v6279, %v6279
        %v7844 = vpack.c.bf16 %v6280, %v6280
        %v7845 = vpack.c.bf16 %v6281, %v6281
        %v7846 = vpack.c.bf16 %v6282, %v6282
        %v7847 = vpack.c.bf16 %v6283, %v6283
        %v7848 = vpack.c.bf16 %v6284, %v6284
        %v7849 = vpack.c.bf16 %v6285, %v6285
        %v7850 = vpack.c.bf16 %v6286, %v6286
        %v7851 = vpack.c.bf16 %v6287, %v6287
        %v7852 = vpack.c.bf16 %v6288, %v6288
        %v7853 = vpack.c.bf16 %v6289, %v6289
        %v7854 = vpack.c.bf16 %v6290, %v6290
        %v7855 = vpack.c.bf16 %v6291, %v6291
        %v7856 = vpack.c.bf16 %v6292, %v6292
        %v7857 = vpack.c.bf16 %v6293, %v6293
        %v7858 = vpack.c.bf16 %v6294, %v6294
        %v7859 = vpack.c.bf16 %v6295, %v6295
        %v7860 = vpack.c.bf16 %v6296, %v6296
        %v7861 = vpack.c.bf16 %v6297, %v6297
        %v7862 = vpack.c.bf16 %v6298, %v6298
        %v7863 = vpack.c.bf16 %v6299, %v6299
        %v7864 = vpack.c.bf16 %v6300, %v6300
        %v7865 = vpack.c.bf16 %v6301, %v6301
        %v7866 = vpack.c.bf16 %v6302, %v6302
        %v7867 = vpack.c.bf16 %v6303, %v6303
        %v7868 = vpack.c.bf16 %v6304, %v6304
        %v7869 = vpack.c.bf16 %v6305, %v6305
        %v7870 = vpack.c.bf16 %v6306, %v6306
        %v7871 = vpack.c.bf16 %v6307, %v6307
        %v7872 = vpack.c.bf16 %v6308, %v6308
        %v7873 = vpack.c.bf16 %v6309, %v6309
        %v7874 = vpack.c.bf16 %v6310, %v6310
        %v7875 = vpack.c.bf16 %v6311, %v6311
        %v7876 = vpack.c.bf16 %v6312, %v6312
        %v7877 = vpack.c.bf16 %v6313, %v6313
        %v7878 = vpack.c.bf16 %v6314, %v6314
        %v7879 = vpack.c.bf16 %v6315, %v6315
        %v7880 = vpack.c.bf16 %v6316, %v6316
        %v7881 = vpack.c.bf16 %v6317, %v6317
        %v7882 = vpack.c.bf16 %v6318, %v6318
        %v7883 = vpack.c.bf16 %v6319, %v6319
        %v7884 = vpack.c.bf16 %v6320, %v6320
        %v7885 = vpack.c.bf16 %v6321, %v6321
        %v7886 = vpack.c.bf16 %v6322, %v6322
        %v7887 = vpack.c.bf16 %v6323, %v6323
        %v7888 = vpack.c.bf16 %v6324, %v6324
        %v7889 = vpack.c.bf16 %v6325, %v6325
        %v7890 = vpack.c.bf16 %v6326, %v6326
        %v7891 = vpack.c.bf16 %v6327, %v6327
        %v7892 = vpack.c.bf16 %v6328, %v6328
        %v7893 = vpack.c.bf16 %v6329, %v6329
        %v7894 = vpack.c.bf16 %v6330, %v6330
        %v7895 = vpack.c.bf16 %v6331, %v6331
        %v7896 = vpack.c.bf16 %v6332, %v6332
        %v7897 = vpack.c.bf16 %v6333, %v6333
        %v7898 = vpack.c.bf16 %v6334, %v6334
        %v7899 = vpack.c.bf16 %v6335, %v6335
        %v7900 = vpack.c.bf16 %v6336, %v6336
        %v7901 = vpack.c.bf16 %v6337, %v6337
        %v7902 = vpack.c.bf16 %v6338, %v6338
        %v7903 = vpack.c.bf16 %v6339, %v6339
        %v7904 = vpack.c.bf16 %v6340, %v6340
        %v7905 = vpack.c.bf16 %v6341, %v6341
        %v7906 = vpack.c.bf16 %v6342, %v6342
        %v7907 = vpack.c.bf16 %v6343, %v6343
        %v7908 = vpack.c.bf16 %v6344, %v6344
        %v7909 = vpack.c.bf16 %v6345, %v6345
        %v7910 = vpack.c.bf16 %v6346, %v6346
        %v7911 = vpack.c.bf16 %v6347, %v6347
        %v7912 = vpack.c.bf16 %v6348, %v6348
        %v7913 = vpack.c.bf16 %v6349, %v6349
        %v7914 = vpack.c.bf16 %v6350, %v6350
        %v7915 = vpack.c.bf16 %v6351, %v6351
        %v7916 = vpack.c.bf16 %v6352, %v6352
        %v7917 = vpack.c.bf16 %v6353, %v6353
        %v7918 = vpack.c.bf16 %v6354, %v6354
        %v7919 = vpack.c.bf16 %v6355, %v6355
        %v7920 = vpack.c.bf16 %v6356, %v6356
        %v7921 = vpack.c.bf16 %v6357, %v6357
        %v7922 = vpack.c.bf16 %v6358, %v6358
        %v7923 = vpack.c.bf16 %v6359, %v6359
        %v7924 = vpack.c.bf16 %v6360, %v6360
        %v7925 = vpack.c.bf16 %v6361, %v6361
        %v7926 = vpack.c.bf16 %v6362, %v6362
        %v7927 = vpack.c.bf16 %v6363, %v6363
        %v7928 = vpack.c.bf16 %v7792, %v7792
        %v7929 = vpack.c.bf16 %v7793, %v7793
        %v7930 = vpack.c.bf16 %v7794, %v7794
        %v7931 = vpack.c.bf16 %v7795, %v7795
        %v7932 = vpack.c.bf16 %v7796, %v7796
        %v7933 = vpack.c.bf16 %v7797, %v7797
        %v7934 = vpack.c.bf16 %v7798, %v7798
        %v7935 = vpack.c.bf16 %v7799, %v7799
        %v7937 = vrot.slane %v608, 1
        %v7938 = vrot.slane %v608, 2
        %v7939 = vrot.slane %v608, 3
        %v7940 = vrot.slane %v608, 4
        %v7941 = vrot.slane %v608, 5
        %v7942 = vrot.slane %v608, 6
        %v7943 = vrot.slane %v608, 7
        %v7951 = vsub.f32 %v608, 1.0
        %v7952 = vsub.f32 %v7937, 1.0
        %v7953 = vsub.f32 %v7938, 1.0
        %v7954 = vsub.f32 %v7939, 1.0
        %v7955 = vsub.f32 %v7940, 1.0
        %v7956 = vsub.f32 %v7941, 1.0
        %v7957 = vsub.f32 %v7942, 1.0
        %v7958 = vsub.f32 %v7943, 1.0
        %v7959 = vmul.f32 %v7951, 1e+09
        %v7960 = vmul.f32 %v7952, 1e+09
        %v7961 = vmul.f32 %v7953, 1e+09
        %v7962 = vmul.f32 %v7954, 1e+09
        %v7963 = vmul.f32 %v7955, 1e+09
        %v7964 = vmul.f32 %v7956, 1e+09
        %v7965 = vmul.f32 %v7957, 1e+09
        %v7966 = vmul.f32 %v7958, 1e+09
        %v7975 = vperm.slane %v7959, 0
        %v7976 = vperm.slane %v7960, 0
        %v7977 = vperm.slane %v7961, 0
        %v7978 = vperm.slane %v7962, 0
        %v7979 = vperm.slane %v7963, 0
        %v7980 = vperm.slane %v7964, 0
        %v7981 = vperm.slane %v7965, 0
        %v7982 = vperm.slane %v7966, 0
        %v8007 = vunpack.c.l.b16 %v7800
        %v8008 = vunpack.c.l.b16 %v7801
        %v8009 = vunpack.c.l.b16 %v7802
        %v8010 = vunpack.c.l.b16 %v7803
        %v8011 = vunpack.c.l.b16 %v7804
        %v8012 = vunpack.c.l.b16 %v7805
        %v8013 = vunpack.c.l.b16 %v7806
        %v8014 = vunpack.c.l.b16 %v7807
        %v8015 = vunpack.c.l.b16 %v7808
        %v8016 = vunpack.c.l.b16 %v7809
        %v8017 = vunpack.c.l.b16 %v7810
        %v8018 = vunpack.c.l.b16 %v7811
        %v8019 = vunpack.c.l.b16 %v7812
        %v8020 = vunpack.c.l.b16 %v7813
        %v8021 = vunpack.c.l.b16 %v7814
        %v8022 = vunpack.c.l.b16 %v7815
        %v8023 = vpack.c.b16 %v8008, %v8007
        %v8024 = vpack.c.b16 %v8010, %v8009
        %v8025 = vpack.c.b16 %v8012, %v8011
        %v8026 = vpack.c.b16 %v8014, %v8013
        %v8027 = vpack.c.b16 %v8016, %v8015
        %v8028 = vpack.c.b16 %v8018, %v8017
        %v8029 = vpack.c.b16 %v8020, %v8019
        %v8030 = vpack.c.b16 %v8022, %v8021
        %8039 = vmatpush.bf16.xpose.msra.mxu0 %v8030
        %8040 = vmatpush.bf16.xpose.msra.mxu0 %v8029
        %8041 = vmatpush.bf16.xpose.msra.mxu0 %v8028
        %8042 = vmatpush.bf16.xpose.msra.mxu0 %v8027
        %8043 = vmatpush.bf16.xpose.msra.mxu0 %v8026
        %8044 = vmatpush.bf16.xpose.msra.mxu0 %v8025
        %8045 = vmatpush.bf16.xpose.msra.mxu0 %v8024
        %8046 = vmatpush.bf16.xpose.msra.mxu0 %v8023
        %8047 = vmatmul.bf16.gmra.mxu0 %v7928
        %v8048 = vpop.f32.mrf.mxu0
        %v8049 = vadd.f32 %v7975, %v8048
        %v8050 = vpop.f32.mrf.mxu0
        %8051 = vdwg.mxu0
        %v8068 = vunpack.c.l.b16 %v7816
        %v8069 = vunpack.c.l.b16 %v7817
        %v8070 = vunpack.c.l.b16 %v7818
        %v8071 = vunpack.c.l.b16 %v7819
        %v8072 = vunpack.c.l.b16 %v7820
        %v8073 = vunpack.c.l.b16 %v7821
        %v8074 = vunpack.c.l.b16 %v7822
        %v8075 = vunpack.c.l.b16 %v7823
        %v8076 = vunpack.c.l.b16 %v7824
        %v8077 = vunpack.c.l.b16 %v7825
        %v8078 = vunpack.c.l.b16 %v7826
        %v8079 = vunpack.c.l.b16 %v7827
        %v8080 = vunpack.c.l.b16 %v7828
        %v8081 = vunpack.c.l.b16 %v7829
        %v8082 = vunpack.c.l.b16 %v7830
        %v8083 = vunpack.c.l.b16 %v7831
        %v8084 = vpack.c.b16 %v8069, %v8068
        %v8085 = vpack.c.b16 %v8071, %v8070
        %v8086 = vpack.c.b16 %v8073, %v8072
        %v8087 = vpack.c.b16 %v8075, %v8074
        %v8088 = vpack.c.b16 %v8077, %v8076
        %v8089 = vpack.c.b16 %v8079, %v8078
        %v8090 = vpack.c.b16 %v8081, %v8080
        %v8091 = vpack.c.b16 %v8083, %v8082
        %8100 = vmatpush.bf16.xpose.msra.mxu0 %v8091
        %8101 = vmatpush.bf16.xpose.msra.mxu0 %v8090
        %8102 = vmatpush.bf16.xpose.msra.mxu0 %v8089
        %8103 = vmatpush.bf16.xpose.msra.mxu0 %v8088
        %8104 = vmatpush.bf16.xpose.msra.mxu0 %v8087
        %8105 = vmatpush.bf16.xpose.msra.mxu0 %v8086
        %8106 = vmatpush.bf16.xpose.msra.mxu0 %v8085
        %8107 = vmatpush.bf16.xpose.msra.mxu0 %v8084
        %8108 = vmatmul.bf16.gmra.mxu0 %v7929
        %v8109 = vpop.f32.mrf.mxu0
        %v8110 = vadd.f32 %v7976, %v8109
        %v8111 = vpop.f32.mrf.mxu0
        %8112 = vdwg.mxu0
        %v8129 = vunpack.c.l.b16 %v7832
        %v8130 = vunpack.c.l.b16 %v7833
        %v8131 = vunpack.c.l.b16 %v7834
        %v8132 = vunpack.c.l.b16 %v7835
        %v8133 = vunpack.c.l.b16 %v7836
        %v8134 = vunpack.c.l.b16 %v7837
        %v8135 = vunpack.c.l.b16 %v7838
        %v8136 = vunpack.c.l.b16 %v7839
        %v8137 = vunpack.c.l.b16 %v7840
        %v8138 = vunpack.c.l.b16 %v7841
        %v8139 = vunpack.c.l.b16 %v7842
        %v8140 = vunpack.c.l.b16 %v7843
        %v8141 = vunpack.c.l.b16 %v7844
        %v8142 = vunpack.c.l.b16 %v7845
        %v8143 = vunpack.c.l.b16 %v7846
        %v8144 = vunpack.c.l.b16 %v7847
        %v8145 = vpack.c.b16 %v8130, %v8129
        %v8146 = vpack.c.b16 %v8132, %v8131
        %v8147 = vpack.c.b16 %v8134, %v8133
        %v8148 = vpack.c.b16 %v8136, %v8135
        %v8149 = vpack.c.b16 %v8138, %v8137
        %v8150 = vpack.c.b16 %v8140, %v8139
        %v8151 = vpack.c.b16 %v8142, %v8141
        %v8152 = vpack.c.b16 %v8144, %v8143
        %8161 = vmatpush.bf16.xpose.msra.mxu0 %v8152
        %8162 = vmatpush.bf16.xpose.msra.mxu0 %v8151
        %8163 = vmatpush.bf16.xpose.msra.mxu0 %v8150
        %8164 = vmatpush.bf16.xpose.msra.mxu0 %v8149
        %8165 = vmatpush.bf16.xpose.msra.mxu0 %v8148
        %8166 = vmatpush.bf16.xpose.msra.mxu0 %v8147
        %8167 = vmatpush.bf16.xpose.msra.mxu0 %v8146
        %8168 = vmatpush.bf16.xpose.msra.mxu0 %v8145
        %8169 = vmatmul.bf16.gmra.mxu0 %v7930
        %v8170 = vpop.f32.mrf.mxu0
        %v8171 = vadd.f32 %v7977, %v8170
        %v8172 = vpop.f32.mrf.mxu0
        %8173 = vdwg.mxu0
        %v8190 = vunpack.c.l.b16 %v7848
        %v8191 = vunpack.c.l.b16 %v7849
        %v8192 = vunpack.c.l.b16 %v7850
        %v8193 = vunpack.c.l.b16 %v7851
        %v8194 = vunpack.c.l.b16 %v7852
        %v8195 = vunpack.c.l.b16 %v7853
        %v8196 = vunpack.c.l.b16 %v7854
        %v8197 = vunpack.c.l.b16 %v7855
        %v8198 = vunpack.c.l.b16 %v7856
        %v8199 = vunpack.c.l.b16 %v7857
        %v8200 = vunpack.c.l.b16 %v7858
        %v8201 = vunpack.c.l.b16 %v7859
        %v8202 = vunpack.c.l.b16 %v7860
        %v8203 = vunpack.c.l.b16 %v7861
        %v8204 = vunpack.c.l.b16 %v7862
        %v8205 = vunpack.c.l.b16 %v7863
        %v8206 = vpack.c.b16 %v8191, %v8190
        %v8207 = vpack.c.b16 %v8193, %v8192
        %v8208 = vpack.c.b16 %v8195, %v8194
        %v8209 = vpack.c.b16 %v8197, %v8196
        %v8210 = vpack.c.b16 %v8199, %v8198
        %v8211 = vpack.c.b16 %v8201, %v8200
        %v8212 = vpack.c.b16 %v8203, %v8202
        %v8213 = vpack.c.b16 %v8205, %v8204
        %8222 = vmatpush.bf16.xpose.msra.mxu0 %v8213
        %8223 = vmatpush.bf16.xpose.msra.mxu0 %v8212
        %8224 = vmatpush.bf16.xpose.msra.mxu0 %v8211
        %8225 = vmatpush.bf16.xpose.msra.mxu0 %v8210
        %8226 = vmatpush.bf16.xpose.msra.mxu0 %v8209
        %8227 = vmatpush.bf16.xpose.msra.mxu0 %v8208
        %8228 = vmatpush.bf16.xpose.msra.mxu0 %v8207
        %8229 = vmatpush.bf16.xpose.msra.mxu0 %v8206
        %8230 = vmatmul.bf16.gmra.mxu0 %v7931
        %v8231 = vpop.f32.mrf.mxu0
        %v8232 = vadd.f32 %v7978, %v8231
        %v8233 = vpop.f32.mrf.mxu0
        %8234 = vdwg.mxu0
        %v8251 = vunpack.c.l.b16 %v7864
        %v8252 = vunpack.c.l.b16 %v7865
        %v8253 = vunpack.c.l.b16 %v7866
        %v8254 = vunpack.c.l.b16 %v7867
        %v8255 = vunpack.c.l.b16 %v7868
        %v8256 = vunpack.c.l.b16 %v7869
        %v8257 = vunpack.c.l.b16 %v7870
        %v8258 = vunpack.c.l.b16 %v7871
        %v8259 = vunpack.c.l.b16 %v7872
        %v8260 = vunpack.c.l.b16 %v7873
        %v8261 = vunpack.c.l.b16 %v7874
        %v8262 = vunpack.c.l.b16 %v7875
        %v8263 = vunpack.c.l.b16 %v7876
        %v8264 = vunpack.c.l.b16 %v7877
        %v8265 = vunpack.c.l.b16 %v7878
        %v8266 = vunpack.c.l.b16 %v7879
        %v8267 = vpack.c.b16 %v8252, %v8251
        %v8268 = vpack.c.b16 %v8254, %v8253
        %v8269 = vpack.c.b16 %v8256, %v8255
        %v8270 = vpack.c.b16 %v8258, %v8257
        %v8271 = vpack.c.b16 %v8260, %v8259
        %v8272 = vpack.c.b16 %v8262, %v8261
        %v8273 = vpack.c.b16 %v8264, %v8263
        %v8274 = vpack.c.b16 %v8266, %v8265
        %8283 = vmatpush.bf16.xpose.msra.mxu0 %v8274
        %8284 = vmatpush.bf16.xpose.msra.mxu0 %v8273
        %8285 = vmatpush.bf16.xpose.msra.mxu0 %v8272
        %8286 = vmatpush.bf16.xpose.msra.mxu0 %v8271
        %8287 = vmatpush.bf16.xpose.msra.mxu0 %v8270
        %8288 = vmatpush.bf16.xpose.msra.mxu0 %v8269
        %8289 = vmatpush.bf16.xpose.msra.mxu0 %v8268
        %8290 = vmatpush.bf16.xpose.msra.mxu0 %v8267
        %8291 = vmatmul.bf16.gmra.mxu0 %v7932
        %v8292 = vpop.f32.mrf.mxu0
        %v8293 = vadd.f32 %v7979, %v8292
        %v8294 = vpop.f32.mrf.mxu0
        %8295 = vdwg.mxu0
        %v8312 = vunpack.c.l.b16 %v7880
        %v8313 = vunpack.c.l.b16 %v7881
        %v8314 = vunpack.c.l.b16 %v7882
        %v8315 = vunpack.c.l.b16 %v7883
        %v8316 = vunpack.c.l.b16 %v7884
        %v8317 = vunpack.c.l.b16 %v7885
        %v8318 = vunpack.c.l.b16 %v7886
        %v8319 = vunpack.c.l.b16 %v7887
        %v8320 = vunpack.c.l.b16 %v7888
        %v8321 = vunpack.c.l.b16 %v7889
        %v8322 = vunpack.c.l.b16 %v7890
        %v8323 = vunpack.c.l.b16 %v7891
        %v8324 = vunpack.c.l.b16 %v7892
        %v8325 = vunpack.c.l.b16 %v7893
        %v8326 = vunpack.c.l.b16 %v7894
        %v8327 = vunpack.c.l.b16 %v7895
        %v8328 = vpack.c.b16 %v8313, %v8312
        %v8329 = vpack.c.b16 %v8315, %v8314
        %v8330 = vpack.c.b16 %v8317, %v8316
        %v8331 = vpack.c.b16 %v8319, %v8318
        %v8332 = vpack.c.b16 %v8321, %v8320
        %v8333 = vpack.c.b16 %v8323, %v8322
        %v8334 = vpack.c.b16 %v8325, %v8324
        %v8335 = vpack.c.b16 %v8327, %v8326
        %8344 = vmatpush.bf16.xpose.msra.mxu0 %v8335
        %8345 = vmatpush.bf16.xpose.msra.mxu0 %v8334
        %8346 = vmatpush.bf16.xpose.msra.mxu0 %v8333
        %8347 = vmatpush.bf16.xpose.msra.mxu0 %v8332
        %8348 = vmatpush.bf16.xpose.msra.mxu0 %v8331
        %8349 = vmatpush.bf16.xpose.msra.mxu0 %v8330
        %8350 = vmatpush.bf16.xpose.msra.mxu0 %v8329
        %8351 = vmatpush.bf16.xpose.msra.mxu0 %v8328
        %8352 = vmatmul.bf16.gmra.mxu0 %v7933
        %v8353 = vpop.f32.mrf.mxu0
        %v8354 = vadd.f32 %v7980, %v8353
        %v8355 = vpop.f32.mrf.mxu0
        %8356 = vdwg.mxu0
        %v8373 = vunpack.c.l.b16 %v7896
        %v8374 = vunpack.c.l.b16 %v7897
        %v8375 = vunpack.c.l.b16 %v7898
        %v8376 = vunpack.c.l.b16 %v7899
        %v8377 = vunpack.c.l.b16 %v7900
        %v8378 = vunpack.c.l.b16 %v7901
        %v8379 = vunpack.c.l.b16 %v7902
        %v8380 = vunpack.c.l.b16 %v7903
        %v8381 = vunpack.c.l.b16 %v7904
        %v8382 = vunpack.c.l.b16 %v7905
        %v8383 = vunpack.c.l.b16 %v7906
        %v8384 = vunpack.c.l.b16 %v7907
        %v8385 = vunpack.c.l.b16 %v7908
        %v8386 = vunpack.c.l.b16 %v7909
        %v8387 = vunpack.c.l.b16 %v7910
        %v8388 = vunpack.c.l.b16 %v7911
        %v8389 = vpack.c.b16 %v8374, %v8373
        %v8390 = vpack.c.b16 %v8376, %v8375
        %v8391 = vpack.c.b16 %v8378, %v8377
        %v8392 = vpack.c.b16 %v8380, %v8379
        %v8393 = vpack.c.b16 %v8382, %v8381
        %v8394 = vpack.c.b16 %v8384, %v8383
        %v8395 = vpack.c.b16 %v8386, %v8385
        %v8396 = vpack.c.b16 %v8388, %v8387
        %8405 = vmatpush.bf16.xpose.msra.mxu0 %v8396
        %8406 = vmatpush.bf16.xpose.msra.mxu0 %v8395
        %8407 = vmatpush.bf16.xpose.msra.mxu0 %v8394
        %8408 = vmatpush.bf16.xpose.msra.mxu0 %v8393
        %8409 = vmatpush.bf16.xpose.msra.mxu0 %v8392
        %8410 = vmatpush.bf16.xpose.msra.mxu0 %v8391
        %8411 = vmatpush.bf16.xpose.msra.mxu0 %v8390
        %8412 = vmatpush.bf16.xpose.msra.mxu0 %v8389
        %8413 = vmatmul.bf16.gmra.mxu0 %v7934
        %v8414 = vpop.f32.mrf.mxu0
        %v8415 = vadd.f32 %v7981, %v8414
        %v8416 = vpop.f32.mrf.mxu0
        %8417 = vdwg.mxu0
        %v8434 = vunpack.c.l.b16 %v7912
        %v8435 = vunpack.c.l.b16 %v7913
        %v8436 = vunpack.c.l.b16 %v7914
        %v8437 = vunpack.c.l.b16 %v7915
        %v8438 = vunpack.c.l.b16 %v7916
        %v8439 = vunpack.c.l.b16 %v7917
        %v8440 = vunpack.c.l.b16 %v7918
        %v8441 = vunpack.c.l.b16 %v7919
        %v8442 = vunpack.c.l.b16 %v7920
        %v8443 = vunpack.c.l.b16 %v7921
        %v8444 = vunpack.c.l.b16 %v7922
        %v8445 = vunpack.c.l.b16 %v7923
        %v8446 = vunpack.c.l.b16 %v7924
        %v8447 = vunpack.c.l.b16 %v7925
        %v8448 = vunpack.c.l.b16 %v7926
        %v8449 = vunpack.c.l.b16 %v7927
        %v8450 = vpack.c.b16 %v8435, %v8434
        %v8451 = vpack.c.b16 %v8437, %v8436
        %v8452 = vpack.c.b16 %v8439, %v8438
        %v8453 = vpack.c.b16 %v8441, %v8440
        %v8454 = vpack.c.b16 %v8443, %v8442
        %v8455 = vpack.c.b16 %v8445, %v8444
        %v8456 = vpack.c.b16 %v8447, %v8446
        %v8457 = vpack.c.b16 %v8449, %v8448
        %8466 = vmatpush.bf16.xpose.msra.mxu0 %v8457
        %8467 = vmatpush.bf16.xpose.msra.mxu0 %v8456
        %8468 = vmatpush.bf16.xpose.msra.mxu0 %v8455
        %8469 = vmatpush.bf16.xpose.msra.mxu0 %v8454
        %8470 = vmatpush.bf16.xpose.msra.mxu0 %v8453
        %8471 = vmatpush.bf16.xpose.msra.mxu0 %v8452
        %8472 = vmatpush.bf16.xpose.msra.mxu0 %v8451
        %8473 = vmatpush.bf16.xpose.msra.mxu0 %v8450
        %8474 = vmatmul.bf16.gmra.mxu0 %v7935
        %v8475 = vpop.f32.mrf.mxu0
        %v8476 = vadd.f32 %v7982, %v8475
        %v8477 = vpop.f32.mrf.mxu0
        %8478 = vdwg.mxu0
        %8479 = vmax.xlane.f32.xlu0 %v8049
        %v8480 = vpop.xlane.xlu0 %8479
        %8481 = vmax.xlane.f32.xlu0 %v8110
        %v8482 = vpop.xlane.xlu0 %8481
        %8483 = vmax.xlane.f32.xlu0 %v8171
        %v8484 = vpop.xlane.xlu0 %8483
        %8485 = vmax.xlane.f32.xlu0 %v8232
        %v8486 = vpop.xlane.xlu0 %8485
        %8487 = vmax.xlane.f32.xlu0 %v8293
        %v8488 = vpop.xlane.xlu0 %8487
        %8489 = vmax.xlane.f32.xlu0 %v8354
        %v8490 = vpop.xlane.xlu0 %8489
        %8491 = vmax.xlane.f32.xlu0 %v8415
        %v8492 = vpop.xlane.xlu0 %8491
        %8493 = vmax.xlane.f32.xlu0 %v8476
        %v8494 = vpop.xlane.xlu0 %8493
        %v8495 = vsub.f32 %v8049, %v8480
        %v8496 = vsub.f32 %v8110, %v8482
        %v8497 = vsub.f32 %v8171, %v8484
        %v8498 = vsub.f32 %v8232, %v8486
        %v8499 = vsub.f32 %v8293, %v8488
        %v8500 = vsub.f32 %v8354, %v8490
        %v8501 = vsub.f32 %v8415, %v8492
        %v8502 = vsub.f32 %v8476, %v8494
        %v8503 = vmul.f32 %v8495, 1.442695
        %v8504 = vpow.pop %v8503
        %v8505 = vmul.f32 %v8496, 1.442695
        %v8506 = vpow.pop %v8505
        %v8507 = vmul.f32 %v8497, 1.442695
        %v8508 = vpow.pop %v8507
        %v8509 = vmul.f32 %v8498, 1.442695
        %v8510 = vpow.pop %v8509
        %v8511 = vmul.f32 %v8499, 1.442695
        %v8512 = vpow.pop %v8511
        %v8513 = vmul.f32 %v8500, 1.442695
        %v8514 = vpow.pop %v8513
        %v8515 = vmul.f32 %v8501, 1.442695
        %v8516 = vpow.pop %v8515
        %v8517 = vmul.f32 %v8502, 1.442695
        %v8518 = vpow.pop %v8517
        %8519 = vadd.xlane.f32.xlu0 %v8504
        %v8520 = vpop.xlane.xlu0 %8519
        %8521 = vadd.xlane.f32.xlu0 %v8506
        %v8522 = vpop.xlane.xlu0 %8521
        %8523 = vadd.xlane.f32.xlu0 %v8508
        %v8524 = vpop.xlane.xlu0 %8523
        %8525 = vadd.xlane.f32.xlu0 %v8510
        %v8526 = vpop.xlane.xlu0 %8525
        %8527 = vadd.xlane.f32.xlu0 %v8512
        %v8528 = vpop.xlane.xlu0 %8527
        %8529 = vadd.xlane.f32.xlu0 %v8514
        %v8530 = vpop.xlane.xlu0 %8529
        %8531 = vadd.xlane.f32.xlu0 %v8516
        %v8532 = vpop.xlane.xlu0 %8531
        %8533 = vadd.xlane.f32.xlu0 %v8518
        %v8534 = vpop.xlane.xlu0 %8533
        %v8535 = vrcp.pop %v8520
        %v8536 = vmul.f32 %v8520, %v8535
        %v8537 = vsub.f32 1.0, %v8536
        %v8538 = vmul.f32 %v8535, %v8537
        %v8539 = vadd.f32 %v8535, %v8538
        %vm8540 = vweird.f32 %v8520
        %vm8541 = vweird.f32 %v8535
        %vm8542 = vmor %vm8540, %vm8541
        %v8543 = vsel %vm8542, %v8535, %v8539
        %v8544 = vand.u32 2147483647, %v8520
        %vm8545 = vcmp.eq.f32.partialorder %v8544, 8.507059e+37
        %v8546 = vand.u32 %v8520, 2147483648
        %v8547 = vor.u32 1.1754944e-38, %v8546
        %v8548 = vsel %vm8545, %v8547, %v8543
        %v8549 = vmul.f32 %v8504, %v8548
        %v8550 = vrcp.pop %v8522
        %v8551 = vmul.f32 %v8522, %v8550
        %v8552 = vsub.f32 1.0, %v8551
        %v8553 = vmul.f32 %v8550, %v8552
        %v8554 = vadd.f32 %v8550, %v8553
        %vm8555 = vweird.f32 %v8522
        %vm8556 = vweird.f32 %v8550
        %vm8557 = vmor %vm8555, %vm8556
        %v8558 = vsel %vm8557, %v8550, %v8554
        %v8559 = vand.u32 2147483647, %v8522
        %vm8560 = vcmp.eq.f32.partialorder %v8559, 8.507059e+37
        %v8561 = vand.u32 %v8522, 2147483648
        %v8562 = vor.u32 1.1754944e-38, %v8561
        %v8563 = vsel %vm8560, %v8562, %v8558
        %v8564 = vmul.f32 %v8506, %v8563
        %v8565 = vrcp.pop %v8524
        %v8566 = vmul.f32 %v8524, %v8565
        %v8567 = vsub.f32 1.0, %v8566
        %v8568 = vmul.f32 %v8565, %v8567
        %v8569 = vadd.f32 %v8565, %v8568
        %vm8570 = vweird.f32 %v8524
        %vm8571 = vweird.f32 %v8565
        %vm8572 = vmor %vm8570, %vm8571
        %v8573 = vsel %vm8572, %v8565, %v8569
        %v8574 = vand.u32 2147483647, %v8524
        %vm8575 = vcmp.eq.f32.partialorder %v8574, 8.507059e+37
        %v8576 = vand.u32 %v8524, 2147483648
        %v8577 = vor.u32 1.1754944e-38, %v8576
        %v8578 = vsel %vm8575, %v8577, %v8573
        %v8579 = vmul.f32 %v8508, %v8578
        %v8580 = vrcp.pop %v8526
        %v8581 = vmul.f32 %v8526, %v8580
        %v8582 = vsub.f32 1.0, %v8581
        %v8583 = vmul.f32 %v8580, %v8582
        %v8584 = vadd.f32 %v8580, %v8583
        %vm8585 = vweird.f32 %v8526
        %vm8586 = vweird.f32 %v8580
        %vm8587 = vmor %vm8585, %vm8586
        %v8588 = vsel %vm8587, %v8580, %v8584
        %v8589 = vand.u32 2147483647, %v8526
        %vm8590 = vcmp.eq.f32.partialorder %v8589, 8.507059e+37
        %v8591 = vand.u32 %v8526, 2147483648
        %v8592 = vor.u32 1.1754944e-38, %v8591
        %v8593 = vsel %vm8590, %v8592, %v8588
        %v8594 = vmul.f32 %v8510, %v8593
        %v8595 = vrcp.pop %v8528
        %v8596 = vmul.f32 %v8528, %v8595
        %v8597 = vsub.f32 1.0, %v8596
        %v8598 = vmul.f32 %v8595, %v8597
        %v8599 = vadd.f32 %v8595, %v8598
        %vm8600 = vweird.f32 %v8528
        %vm8601 = vweird.f32 %v8595
        %vm8602 = vmor %vm8600, %vm8601
        %v8603 = vsel %vm8602, %v8595, %v8599
        %v8604 = vand.u32 2147483647, %v8528
        %vm8605 = vcmp.eq.f32.partialorder %v8604, 8.507059e+37
        %v8606 = vand.u32 %v8528, 2147483648
        %v8607 = vor.u32 1.1754944e-38, %v8606
        %v8608 = vsel %vm8605, %v8607, %v8603
        %v8609 = vmul.f32 %v8512, %v8608
        %v8610 = vrcp.pop %v8530
        %v8611 = vmul.f32 %v8530, %v8610
        %v8612 = vsub.f32 1.0, %v8611
        %v8613 = vmul.f32 %v8610, %v8612
        %v8614 = vadd.f32 %v8610, %v8613
        %vm8615 = vweird.f32 %v8530
        %vm8616 = vweird.f32 %v8610
        %vm8617 = vmor %vm8615, %vm8616
        %v8618 = vsel %vm8617, %v8610, %v8614
        %v8619 = vand.u32 2147483647, %v8530
        %vm8620 = vcmp.eq.f32.partialorder %v8619, 8.507059e+37
        %v8621 = vand.u32 %v8530, 2147483648
        %v8622 = vor.u32 1.1754944e-38, %v8621
        %v8623 = vsel %vm8620, %v8622, %v8618
        %v8624 = vmul.f32 %v8514, %v8623
        %v8625 = vrcp.pop %v8532
        %v8626 = vmul.f32 %v8532, %v8625
        %v8627 = vsub.f32 1.0, %v8626
        %v8628 = vmul.f32 %v8625, %v8627
        %v8629 = vadd.f32 %v8625, %v8628
        %vm8630 = vweird.f32 %v8532
        %vm8631 = vweird.f32 %v8625
        %vm8632 = vmor %vm8630, %vm8631
        %v8633 = vsel %vm8632, %v8625, %v8629
        %v8634 = vand.u32 2147483647, %v8532
        %vm8635 = vcmp.eq.f32.partialorder %v8634, 8.507059e+37
        %v8636 = vand.u32 %v8532, 2147483648
        %v8637 = vor.u32 1.1754944e-38, %v8636
        %v8638 = vsel %vm8635, %v8637, %v8633
        %v8639 = vmul.f32 %v8516, %v8638
        %v8640 = vrcp.pop %v8534
        %v8641 = vmul.f32 %v8534, %v8640
        %v8642 = vsub.f32 1.0, %v8641
        %v8643 = vmul.f32 %v8640, %v8642
        %v8644 = vadd.f32 %v8640, %v8643
        %vm8645 = vweird.f32 %v8534
        %vm8646 = vweird.f32 %v8640
        %vm8647 = vmor %vm8645, %vm8646
        %v8648 = vsel %vm8647, %v8640, %v8644
        %v8649 = vand.u32 2147483647, %v8534
        %vm8650 = vcmp.eq.f32.partialorder %v8649, 8.507059e+37
        %v8651 = vand.u32 %v8534, 2147483648
        %v8652 = vor.u32 1.1754944e-38, %v8651
        %v8653 = vsel %vm8650, %v8652, %v8648
        %v8654 = vmul.f32 %v8518, %v8653
        %v8655 = vrot.slane %v8579, 4
        %vm8656 = vcmask 1047556
        %v8657 = vsel %vm8656, %v8655, %v8549
        %v8658 = vrot.slane %v8549, 4
        %v8659 = vsel %vm8656, %v8579, %v8658
        %v8661 = vunpack.c.l.s4 1983009808
        %v8662 = vunpack.c.0.s8 %v8661
        %v8663 = vperm.slane %v8657, %v8662
        %v8665 = vunpack.c.l.s4 1983009808
        %v8666 = vunpack.c.0.s8 %v8665
        %v8667 = vperm.slane %v8659, %v8666
        %v8668 = vrot.slane %v8594, 4
        %v8669 = vsel %vm8656, %v8668, %v8564
        %v8670 = vrot.slane %v8564, 4
        %v8671 = vsel %vm8656, %v8594, %v8670
        %v8673 = vunpack.c.l.s4 1983009808
        %v8674 = vunpack.c.0.s8 %v8673
        %v8675 = vperm.slane %v8669, %v8674
        %v8677 = vunpack.c.l.s4 1983009808
        %v8678 = vunpack.c.0.s8 %v8677
        %v8679 = vperm.slane %v8671, %v8678
        %v8680 = vrot.slane %v8639, 4
        %v8681 = vsel %vm8656, %v8680, %v8609
        %v8682 = vrot.slane %v8609, 4
        %v8683 = vsel %vm8656, %v8639, %v8682
        %v8685 = vunpack.c.l.s4 1983009808
        %v8686 = vunpack.c.0.s8 %v8685
        %v8687 = vperm.slane %v8681, %v8686
        %v8689 = vunpack.c.l.s4 1983009808
        %v8690 = vunpack.c.0.s8 %v8689
        %v8691 = vperm.slane %v8683, %v8690
        %v8692 = vrot.slane %v8654, 4
        %v8693 = vsel %vm8656, %v8692, %v8624
        %v8694 = vrot.slane %v8624, 4
        %v8695 = vsel %vm8656, %v8654, %v8694
        %v8697 = vunpack.c.l.s4 1983009808
        %v8698 = vunpack.c.0.s8 %v8697
        %v8699 = vperm.slane %v8693, %v8698
        %v8701 = vunpack.c.l.s4 1983009808
        %v8702 = vunpack.c.0.s8 %v8701
        %v8703 = vperm.slane %v8695, %v8702
        %v8704 = vrot.slane %v8675, 4
        %v8705 = vsel %vm8656, %v8704, %v8663
        %v8706 = vrot.slane %v8663, 4
        %v8707 = vsel %vm8656, %v8675, %v8706
        %v8709 = vunpack.c.l.s4 1934713408
        %v8710 = vunpack.c.0.s8 %v8709
        %v8711 = vperm.slane %v8705, %v8710
        %v8713 = vunpack.c.l.s4 1934713408
        %v8714 = vunpack.c.0.s8 %v8713
        %v8715 = vperm.slane %v8707, %v8714
        %v8716 = vrot.slane %v8679, 4
        %v8717 = vsel %vm8656, %v8716, %v8667
        %v8718 = vrot.slane %v8667, 4
        %v8719 = vsel %vm8656, %v8679, %v8718
        %v8721 = vunpack.c.l.s4 1934713408
        %v8722 = vunpack.c.0.s8 %v8721
        %v8723 = vperm.slane %v8717, %v8722
        %v8725 = vunpack.c.l.s4 1934713408
        %v8726 = vunpack.c.0.s8 %v8725
        %v8727 = vperm.slane %v8719, %v8726
        %v8728 = vrot.slane %v8699, 4
        %v8729 = vsel %vm8656, %v8728, %v8687
        %v8730 = vrot.slane %v8687, 4
        %v8731 = vsel %vm8656, %v8699, %v8730
        %v8733 = vunpack.c.l.s4 1934713408
        %v8734 = vunpack.c.0.s8 %v8733
        %v8735 = vperm.slane %v8729, %v8734
        %v8737 = vunpack.c.l.s4 1934713408
        %v8738 = vunpack.c.0.s8 %v8737
        %v8739 = vperm.slane %v8731, %v8738
        %v8740 = vrot.slane %v8703, 4
        %v8741 = vsel %vm8656, %v8740, %v8691
        %v8742 = vrot.slane %v8691, 4
        %v8743 = vsel %vm8656, %v8703, %v8742
        %v8745 = vunpack.c.l.s4 1934713408
        %v8746 = vunpack.c.0.s8 %v8745
        %v8747 = vperm.slane %v8741, %v8746
        %v8749 = vunpack.c.l.s4 1934713408
        %v8750 = vunpack.c.0.s8 %v8749
        %v8751 = vperm.slane %v8743, %v8750
        %v8752 = vrot.slane %v8735, 4
        %v8753 = vsel %vm8656, %v8752, %v8711
        %v8754 = vrot.slane %v8711, 4
        %v8755 = vsel %vm8656, %v8735, %v8754
        %v8756 = vrot.slane %v8739, 4
        %v8757 = vsel %vm8656, %v8756, %v8715
        %v8758 = vrot.slane %v8715, 4
        %v8759 = vsel %vm8656, %v8739, %v8758
        %v8760 = vrot.slane %v8747, 4
        %v8761 = vsel %vm8656, %v8760, %v8723
        %v8762 = vrot.slane %v8723, 4
        %v8763 = vsel %vm8656, %v8747, %v8762
        %v8764 = vrot.slane %v8751, 4
        %v8765 = vsel %vm8656, %v8764, %v8727
        %v8766 = vrot.slane %v8727, 4
        %v8767 = vsel %vm8656, %v8751, %v8766
        %8768 = vst [vmem:[%s571] sm:$0xff] %v8753
        %8769 = vst [vmem:[%s571 + $0x8] sm:$0xff] %v8755
        %8770 = vst [vmem:[%s571 + $0x10] sm:$0xff] %v8757
        %8771 = vst [vmem:[%s571 + $0x18] sm:$0xff] %v8759
        %8772 = vst [vmem:[%s571 + $0x20] sm:$0xff] %v8761
        %8773 = vst [vmem:[%s571 + $0x28] sm:$0xff] %v8763
        %8774 = vst [vmem:[%s571 + $0x30] sm:$0xff] %v8765
        %8775 = vst [vmem:[%s571 + $0x38] sm:$0xff] %v8767
        %v8776 = vpack.c.bf16 %v8549, %v8549
        %v8777 = vpack.c.bf16 %v8564, %v8564
        %v8778 = vpack.c.bf16 %v8579, %v8579
        %v8779 = vpack.c.bf16 %v8594, %v8594
        %v8780 = vpack.c.bf16 %v8609, %v8609
        %v8781 = vpack.c.bf16 %v8624, %v8624
        %v8782 = vpack.c.bf16 %v8639, %v8639
        %v8783 = vpack.c.bf16 %v8654, %v8654
        %8784 = vmatpush.bf16.msra.mxu0 %v8030
        %8785 = vmatpush.bf16.msra.mxu0 %v8029
        %8786 = vmatpush.bf16.msra.mxu0 %v8028
        %8787 = vmatpush.bf16.msra.mxu0 %v8027
        %8788 = vmatpush.bf16.msra.mxu0 %v8026
        %8789 = vmatpush.bf16.msra.mxu0 %v8025
        %8790 = vmatpush.bf16.msra.mxu0 %v8024
        %8791 = vmatpush.bf16.msra.mxu0 %v8023
        %8792 = vmatmul.bf16.gmra.mxu0 %v8776
        %v8793 = vpop.f32.mrf.mxu0
        %v8794 = vadd.f32 0.0, %v8793
        %v8795 = vpop.f32.mrf.mxu0
        %8796 = vdwg.mxu0
        %8797 = vmatpush.bf16.msra.mxu0 %v8091
        %8798 = vmatpush.bf16.msra.mxu0 %v8090
        %8799 = vmatpush.bf16.msra.mxu0 %v8089
        %8800 = vmatpush.bf16.msra.mxu0 %v8088
        %8801 = vmatpush.bf16.msra.mxu0 %v8087
        %8802 = vmatpush.bf16.msra.mxu0 %v8086
        %8803 = vmatpush.bf16.msra.mxu0 %v8085
        %8804 = vmatpush.bf16.msra.mxu0 %v8084
        %8805 = vmatmul.bf16.gmra.mxu0 %v8777
        %v8806 = vpop.f32.mrf.mxu0
        %v8807 = vadd.f32 0.0, %v8806
        %v8808 = vpop.f32.mrf.mxu0
        %8809 = vdwg.mxu0
        %8810 = vmatpush.bf16.msra.mxu0 %v8152
        %8811 = vmatpush.bf16.msra.mxu0 %v8151
        %8812 = vmatpush.bf16.msra.mxu0 %v8150
        %8813 = vmatpush.bf16.msra.mxu0 %v8149
        %8814 = vmatpush.bf16.msra.mxu0 %v8148
        %8815 = vmatpush.bf16.msra.mxu0 %v8147
        %8816 = vmatpush.bf16.msra.mxu0 %v8146
        %8817 = vmatpush.bf16.msra.mxu0 %v8145
        %8818 = vmatmul.bf16.gmra.mxu0 %v8778
        %v8819 = vpop.f32.mrf.mxu0
        %v8820 = vadd.f32 0.0, %v8819
        %v8821 = vpop.f32.mrf.mxu0
        %8822 = vdwg.mxu0
        %8823 = vmatpush.bf16.msra.mxu0 %v8213
        %8824 = vmatpush.bf16.msra.mxu0 %v8212
        %8825 = vmatpush.bf16.msra.mxu0 %v8211
        %8826 = vmatpush.bf16.msra.mxu0 %v8210
        %8827 = vmatpush.bf16.msra.mxu0 %v8209
        %8828 = vmatpush.bf16.msra.mxu0 %v8208
        %8829 = vmatpush.bf16.msra.mxu0 %v8207
        %8830 = vmatpush.bf16.msra.mxu0 %v8206
        %8831 = vmatmul.bf16.gmra.mxu0 %v8779
        %v8832 = vpop.f32.mrf.mxu0
        %v8833 = vadd.f32 0.0, %v8832
        %v8834 = vpop.f32.mrf.mxu0
        %8835 = vdwg.mxu0
        %8836 = vmatpush.bf16.msra.mxu0 %v8274
        %8837 = vmatpush.bf16.msra.mxu0 %v8273
        %8838 = vmatpush.bf16.msra.mxu0 %v8272
        %8839 = vmatpush.bf16.msra.mxu0 %v8271
        %8840 = vmatpush.bf16.msra.mxu0 %v8270
        %8841 = vmatpush.bf16.msra.mxu0 %v8269
        %8842 = vmatpush.bf16.msra.mxu0 %v8268
        %8843 = vmatpush.bf16.msra.mxu0 %v8267
        %8844 = vmatmul.bf16.gmra.mxu0 %v8780
        %v8845 = vpop.f32.mrf.mxu0
        %v8846 = vadd.f32 0.0, %v8845
        %v8847 = vpop.f32.mrf.mxu0
        %8848 = vdwg.mxu0
        %8849 = vmatpush.bf16.msra.mxu0 %v8335
        %8850 = vmatpush.bf16.msra.mxu0 %v8334
        %8851 = vmatpush.bf16.msra.mxu0 %v8333
        %8852 = vmatpush.bf16.msra.mxu0 %v8332
        %8853 = vmatpush.bf16.msra.mxu0 %v8331
        %8854 = vmatpush.bf16.msra.mxu0 %v8330
        %8855 = vmatpush.bf16.msra.mxu0 %v8329
        %8856 = vmatpush.bf16.msra.mxu0 %v8328
        %8857 = vmatmul.bf16.gmra.mxu0 %v8781
        %v8858 = vpop.f32.mrf.mxu0
        %v8859 = vadd.f32 0.0, %v8858
        %v8860 = vpop.f32.mrf.mxu0
        %8861 = vdwg.mxu0
        %8862 = vmatpush.bf16.msra.mxu0 %v8396
        %8863 = vmatpush.bf16.msra.mxu0 %v8395
        %8864 = vmatpush.bf16.msra.mxu0 %v8394
        %8865 = vmatpush.bf16.msra.mxu0 %v8393
        %8866 = vmatpush.bf16.msra.mxu0 %v8392
        %8867 = vmatpush.bf16.msra.mxu0 %v8391
        %8868 = vmatpush.bf16.msra.mxu0 %v8390
        %8869 = vmatpush.bf16.msra.mxu0 %v8389
        %8870 = vmatmul.bf16.gmra.mxu0 %v8782
        %v8871 = vpop.f32.mrf.mxu0
        %v8872 = vadd.f32 0.0, %v8871
        %v8873 = vpop.f32.mrf.mxu0
        %8874 = vdwg.mxu0
        %8875 = vmatpush.bf16.msra.mxu0 %v8457
        %8876 = vmatpush.bf16.msra.mxu0 %v8456
        %8877 = vmatpush.bf16.msra.mxu0 %v8455
        %8878 = vmatpush.bf16.msra.mxu0 %v8454
        %8879 = vmatpush.bf16.msra.mxu0 %v8453
        %8880 = vmatpush.bf16.msra.mxu0 %v8452
        %8881 = vmatpush.bf16.msra.mxu0 %v8451
        %8882 = vmatpush.bf16.msra.mxu0 %v8450
        %8883 = vmatmul.bf16.gmra.mxu0 %v8783
        %v8884 = vpop.f32.mrf.mxu0
        %v8885 = vadd.f32 0.0, %v8884
        %v8886 = vpop.f32.mrf.mxu0
        %8887 = vdwg.mxu0
        %v8888 = vpack.c.bf16 %v8807, %v8794
        %v8889 = vpack.c.bf16 %v8833, %v8820
        %v8890 = vpack.c.bf16 %v8859, %v8846
        %v8891 = vpack.c.bf16 %v8885, %v8872
        %v8892 = vld [vmem:[#allocation5] sm:$0xf]
        %v8893 = vld [vmem:[#allocation5 + $0x4] sm:$0xf]
        %v8894 = vld [vmem:[#allocation5 + $0x8] sm:$0xf]
        %v8895 = vld [vmem:[#allocation5 + $0xc] sm:$0xf]
        %v8896 = vld [vmem:[#allocation5 + $0x10] sm:$0xf]
        %v8897 = vld [vmem:[#allocation5 + $0x14] sm:$0xf]
        %v8898 = vld [vmem:[#allocation5 + $0x18] sm:$0xf]
        %v8899 = vld [vmem:[#allocation5 + $0x1c] sm:$0xf]
        %v8900 = vld [vmem:[#allocation5 + $0x20] sm:$0xf]
        %v8901 = vld [vmem:[#allocation5 + $0x24] sm:$0xf]
        %v8902 = vld [vmem:[#allocation5 + $0x28] sm:$0xf]
        %v8903 = vld [vmem:[#allocation5 + $0x2c] sm:$0xf]
        %v8904 = vld [vmem:[#allocation5 + $0x30] sm:$0xf]
        %v8905 = vld [vmem:[#allocation5 + $0x34] sm:$0xf]
        %v8906 = vld [vmem:[#allocation5 + $0x38] sm:$0xf]
        %v8907 = vld [vmem:[#allocation5 + $0x3c] sm:$0xf]
        %v8908 = vpack.c.bf16 %v7793, %v7792
        %v8909 = vpack.c.bf16 %v7795, %v7794
        %v8910 = vpack.c.bf16 %v7797, %v7796
        %v8911 = vpack.c.bf16 %v7799, %v7798
        %v8912 = vld [vmem:[#allocation7] sm:$0xf]
        %v8913 = vld [vmem:[#allocation7 + $0x4] sm:$0xf]
        %v8914 = vld [vmem:[#allocation7 + $0x8] sm:$0xf]
        %v8915 = vld [vmem:[#allocation7 + $0xc] sm:$0xf]
        %v8916 = vld [vmem:[#allocation7 + $0x10] sm:$0xf]
        %v8917 = vld [vmem:[#allocation7 + $0x14] sm:$0xf]
        %v8918 = vld [vmem:[#allocation7 + $0x18] sm:$0xf]
        %v8919 = vld [vmem:[#allocation7 + $0x1c] sm:$0xf]
        %v8920 = vld [vmem:[#allocation7 + $0x20] sm:$0xf]
        %v8921 = vld [vmem:[#allocation7 + $0x24] sm:$0xf]
        %v8922 = vld [vmem:[#allocation7 + $0x28] sm:$0xf]
        %v8923 = vld [vmem:[#allocation7 + $0x2c] sm:$0xf]
        %v8924 = vld [vmem:[#allocation7 + $0x30] sm:$0xf]
        %v8925 = vld [vmem:[#allocation7 + $0x34] sm:$0xf]
        %v8926 = vld [vmem:[#allocation7 + $0x38] sm:$0xf]
        %v8927 = vld [vmem:[#allocation7 + $0x3c] sm:$0xf]
        %v8944 = vunpack.c.l.b16 %v8912
        %v8945 = vunpack.c.l.b16 %v8913
        %v8946 = vunpack.c.l.b16 %v8914
        %v8947 = vunpack.c.l.b16 %v8915
        %v8948 = vunpack.c.l.b16 %v8916
        %v8949 = vunpack.c.l.b16 %v8917
        %v8950 = vunpack.c.l.b16 %v8918
        %v8951 = vunpack.c.l.b16 %v8919
        %v8952 = vunpack.c.l.b16 %v8920
        %v8953 = vunpack.c.l.b16 %v8921
        %v8954 = vunpack.c.l.b16 %v8922
        %v8955 = vunpack.c.l.b16 %v8923
        %v8956 = vunpack.c.l.b16 %v8924
        %v8957 = vunpack.c.l.b16 %v8925
        %v8958 = vunpack.c.l.b16 %v8926
        %v8959 = vunpack.c.l.b16 %v8927
        %v8960 = vpack.c.b16 %v8945, %v8944
        %v8961 = vpack.c.b16 %v8947, %v8946
        %v8962 = vpack.c.b16 %v8949, %v8948
        %v8963 = vpack.c.b16 %v8951, %v8950
        %v8964 = vpack.c.b16 %v8953, %v8952
        %v8965 = vpack.c.b16 %v8955, %v8954
        %v8966 = vpack.c.b16 %v8957, %v8956
        %v8967 = vpack.c.b16 %v8959, %v8958
        %8976 = vmatpush.bf16.msra.mxu0 %v8967
        %8977 = vmatpush.bf16.msra.mxu0 %v8966
        %8978 = vmatpush.bf16.msra.mxu0 %v8965
        %8979 = vmatpush.bf16.msra.mxu0 %v8964
        %8980 = vmatpush.bf16.msra.mxu0 %v8963
        %8981 = vmatpush.bf16.msra.mxu0 %v8962
        %8982 = vmatpush.bf16.msra.mxu0 %v8961
        %8983 = vmatpush.bf16.msra.mxu0 %v8960
        %8984 = vmatmul.bf16.gmra.mxu0 %v8908
        %v8985 = vpop.f32.mrf.mxu0
        %v8986 = vadd.f32 0.0, %v8985
        %v8987 = vpop.f32.mrf.mxu0
        %v8988 = vadd.f32 0.0, %v8987
        %8989 = vmatmul.bf16.gmra.mxu0 %v8909
        %v8990 = vpop.f32.mrf.mxu0
        %v8991 = vadd.f32 0.0, %v8990
        %v8992 = vpop.f32.mrf.mxu0
        %v8993 = vadd.f32 0.0, %v8992
        %8994 = vmatmul.bf16.gmra.mxu0 %v8910
        %v8995 = vpop.f32.mrf.mxu0
        %v8996 = vadd.f32 0.0, %v8995
        %v8997 = vpop.f32.mrf.mxu0
        %v8998 = vadd.f32 0.0, %v8997
        %8999 = vmatmul.bf16.gmra.mxu0 %v8911
        %v9000 = vpop.f32.mrf.mxu0
        %v9001 = vadd.f32 0.0, %v9000
        %v9002 = vpop.f32.mrf.mxu0
        %v9003 = vadd.f32 0.0, %v9002
        %9004 = vdwg.mxu0
        %v9021 = vunpack.c.l.b16 %v8892
        %v9022 = vunpack.c.l.b16 %v8893
        %v9023 = vunpack.c.l.b16 %v8894
        %v9024 = vunpack.c.l.b16 %v8895
        %v9025 = vunpack.c.l.b16 %v8896
        %v9026 = vunpack.c.l.b16 %v8897
        %v9027 = vunpack.c.l.b16 %v8898
        %v9028 = vunpack.c.l.b16 %v8899
        %v9029 = vunpack.c.l.b16 %v8900
        %v9030 = vunpack.c.l.b16 %v8901
        %v9031 = vunpack.c.l.b16 %v8902
        %v9032 = vunpack.c.l.b16 %v8903
        %v9033 = vunpack.c.l.b16 %v8904
        %v9034 = vunpack.c.l.b16 %v8905
        %v9035 = vunpack.c.l.b16 %v8906
        %v9036 = vunpack.c.l.b16 %v8907
        %v9037 = vpack.c.b16 %v9022, %v9021
        %v9038 = vpack.c.b16 %v9024, %v9023
        %v9039 = vpack.c.b16 %v9026, %v9025
        %v9040 = vpack.c.b16 %v9028, %v9027
        %v9041 = vpack.c.b16 %v9030, %v9029
        %v9042 = vpack.c.b16 %v9032, %v9031
        %v9043 = vpack.c.b16 %v9034, %v9033
        %v9044 = vpack.c.b16 %v9036, %v9035
        %9053 = vmatpush.bf16.msra.mxu0 %v9044
        %9054 = vmatpush.bf16.msra.mxu0 %v9043
        %9055 = vmatpush.bf16.msra.mxu0 %v9042
        %9056 = vmatpush.bf16.msra.mxu0 %v9041
        %9057 = vmatpush.bf16.msra.mxu0 %v9040
        %9058 = vmatpush.bf16.msra.mxu0 %v9039
        %9059 = vmatpush.bf16.msra.mxu0 %v9038
        %9060 = vmatpush.bf16.msra.mxu0 %v9037
        %9061 = vmatmul.bf16.gmra.mxu0 %v8888
        %v9062 = vpop.f32.mrf.mxu0
        %v9063 = vadd.f32 %v8986, %v9062
        %v9064 = vpop.f32.mrf.mxu0
        %v9065 = vadd.f32 %v8988, %v9064
        %9066 = vmatmul.bf16.gmra.mxu0 %v8889
        %v9067 = vpop.f32.mrf.mxu0
        %v9068 = vadd.f32 %v8991, %v9067
        %v9069 = vpop.f32.mrf.mxu0
        %v9070 = vadd.f32 %v8993, %v9069
        %9071 = vmatmul.bf16.gmra.mxu0 %v8890
        %v9072 = vpop.f32.mrf.mxu0
        %v9073 = vadd.f32 %v8996, %v9072
        %v9074 = vpop.f32.mrf.mxu0
        %v9075 = vadd.f32 %v8998, %v9074
        %9076 = vmatmul.bf16.gmra.mxu0 %v8891
        %v9077 = vpop.f32.mrf.mxu0
        %v9078 = vadd.f32 %v9001, %v9077
        %v9079 = vpop.f32.mrf.mxu0
        %v9080 = vadd.f32 %v9003, %v9079
        %9081 = vdwg.mxu0
        %v9082 = vld [vmem:[%s11] sm:$0x1]
        %v9084 = vperm.slane %v9082, 0
        %v9086 = vadd.f32 %v9063, %v9084
        %v9087 = vadd.f32 %v9065, %v9084
        %v9088 = vadd.f32 %v9068, %v9084
        %v9089 = vadd.f32 %v9070, %v9084
        %v9090 = vadd.f32 %v9073, %v9084
        %v9091 = vadd.f32 %v9075, %v9084
        %v9092 = vadd.f32 %v9078, %v9084
        %v9093 = vadd.f32 %v9080, %v9084
        %v9094 = vtanh.pop %v9086
        %v9095 = vtanh.pop %v9087
        %v9096 = vtanh.pop %v9088
        %v9097 = vtanh.pop %v9089
        %v9098 = vtanh.pop %v9090
        %v9099 = vtanh.pop %v9091
        %v9100 = vtanh.pop %v9092
        %v9101 = vtanh.pop %v9093
        %v9102 = vrot.slane %v9096, 4
        %v9103 = vsel %vm8656, %v9102, %v9094
        %v9104 = vrot.slane %v9094, 4
        %v9105 = vsel %vm8656, %v9096, %v9104
        %v9107 = vunpack.c.l.s4 1983009808
        %v9108 = vunpack.c.0.s8 %v9107
        %v9109 = vperm.slane %v9103, %v9108
        %v9111 = vunpack.c.l.s4 1983009808
        %v9112 = vunpack.c.0.s8 %v9111
        %v9113 = vperm.slane %v9105, %v9112
        %v9114 = vrot.slane %v9097, 4
        %v9115 = vsel %vm8656, %v9114, %v9095
        %v9116 = vrot.slane %v9095, 4
        %v9117 = vsel %vm8656, %v9097, %v9116
        %v9119 = vunpack.c.l.s4 1983009808
        %v9120 = vunpack.c.0.s8 %v9119
        %v9121 = vperm.slane %v9115, %v9120
        %v9123 = vunpack.c.l.s4 1983009808
        %v9124 = vunpack.c.0.s8 %v9123
        %v9125 = vperm.slane %v9117, %v9124
        %v9126 = vrot.slane %v9100, 4
        %v9127 = vsel %vm8656, %v9126, %v9098
        %v9128 = vrot.slane %v9098, 4
        %v9129 = vsel %vm8656, %v9100, %v9128
        %v9131 = vunpack.c.l.s4 1983009808
        %v9132 = vunpack.c.0.s8 %v9131
        %v9133 = vperm.slane %v9127, %v9132
        %v9135 = vunpack.c.l.s4 1983009808
        %v9136 = vunpack.c.0.s8 %v9135
        %v9137 = vperm.slane %v9129, %v9136
        %v9138 = vrot.slane %v9101, 4
        %v9139 = vsel %vm8656, %v9138, %v9099
        %v9140 = vrot.slane %v9099, 4
        %v9141 = vsel %vm8656, %v9101, %v9140
        %v9143 = vunpack.c.l.s4 1983009808
        %v9144 = vunpack.c.0.s8 %v9143
        %v9145 = vperm.slane %v9139, %v9144
        %v9147 = vunpack.c.l.s4 1983009808
        %v9148 = vunpack.c.0.s8 %v9147
        %v9149 = vperm.slane %v9141, %v9148
        %v9150 = vrot.slane %v9121, 4
        %v9151 = vsel %vm8656, %v9150, %v9109
        %v9152 = vrot.slane %v9109, 4
        %v9153 = vsel %vm8656, %v9121, %v9152
        %v9155 = vunpack.c.l.s4 1934713408
        %v9156 = vunpack.c.0.s8 %v9155
        %v9157 = vperm.slane %v9151, %v9156
        %v9159 = vunpack.c.l.s4 1934713408
        %v9160 = vunpack.c.0.s8 %v9159
        %v9161 = vperm.slane %v9153, %v9160
        %v9162 = vrot.slane %v9125, 4
        %v9163 = vsel %vm8656, %v9162, %v9113
        %v9164 = vrot.slane %v9113, 4
        %v9165 = vsel %vm8656, %v9125, %v9164
        %v9167 = vunpack.c.l.s4 1934713408
        %v9168 = vunpack.c.0.s8 %v9167
        %v9169 = vperm.slane %v9163, %v9168
        %v9171 = vunpack.c.l.s4 1934713408
        %v9172 = vunpack.c.0.s8 %v9171
        %v9173 = vperm.slane %v9165, %v9172
        %v9174 = vrot.slane %v9145, 4
        %v9175 = vsel %vm8656, %v9174, %v9133
        %v9176 = vrot.slane %v9133, 4
        %v9177 = vsel %vm8656, %v9145, %v9176
        %v9179 = vunpack.c.l.s4 1934713408
        %v9180 = vunpack.c.0.s8 %v9179
        %v9181 = vperm.slane %v9175, %v9180
        %v9183 = vunpack.c.l.s4 1934713408
        %v9184 = vunpack.c.0.s8 %v9183
        %v9185 = vperm.slane %v9177, %v9184
        %v9186 = vrot.slane %v9149, 4
        %v9187 = vsel %vm8656, %v9186, %v9137
        %v9188 = vrot.slane %v9137, 4
        %v9189 = vsel %vm8656, %v9149, %v9188
        %v9191 = vunpack.c.l.s4 1934713408
        %v9192 = vunpack.c.0.s8 %v9191
        %v9193 = vperm.slane %v9187, %v9192
        %v9195 = vunpack.c.l.s4 1934713408
        %v9196 = vunpack.c.0.s8 %v9195
        %v9197 = vperm.slane %v9189, %v9196
        %v9198 = vrot.slane %v9181, 4
        %v9199 = vsel %vm8656, %v9198, %v9157
        %v9200 = vrot.slane %v9157, 4
        %v9201 = vsel %vm8656, %v9181, %v9200
        %v9202 = vrot.slane %v9185, 4
        %v9203 = vsel %vm8656, %v9202, %v9161
        %v9204 = vrot.slane %v9161, 4
        %v9205 = vsel %vm8656, %v9185, %v9204
        %v9206 = vrot.slane %v9193, 4
        %v9207 = vsel %vm8656, %v9206, %v9169
        %v9208 = vrot.slane %v9169, 4
        %v9209 = vsel %vm8656, %v9193, %v9208
        %v9210 = vrot.slane %v9197, 4
        %v9211 = vsel %vm8656, %v9210, %v9173
        %v9212 = vrot.slane %v9173, 4
        %v9213 = vsel %vm8656, %v9197, %v9212
        %9214 = vst [vmem:[%s564] sm:$0xff] %v9199
        %9215 = vst [vmem:[%s564 + $0x8] sm:$0xff] %v9201
        %9216 = vst [vmem:[%s564 + $0x10] sm:$0xff] %v9203
        %9217 = vst [vmem:[%s564 + $0x18] sm:$0xff] %v9205
        %9218 = vst [vmem:[%s564 + $0x20] sm:$0xff] %v9207
        %9219 = vst [vmem:[%s564 + $0x28] sm:$0xff] %v9209
        %9220 = vst [vmem:[%s564 + $0x30] sm:$0xff] %v9211
        %9221 = vst [vmem:[%s564 + $0x38] sm:$0xff] %v9213
        %s9222 = sand.u32 %s319, 1
        %s9223 = scalar_lea.sflag [#allocation4], %s9222
        %s9224 = sand.u32 %s319, 1
        %s9225 = smul.addr %s9224, 64
        %s9226 = scalar_lea.vmem [#allocation8], %s9225
        %s9227 = sand.u32 %s34, 1
        %s9228 = scalar_lea.sflag [#allocation10], %s9227
        %s9229 = sand.u32 %s345, 1
        %s9230 = smul.addr %s9229, 64
        %s9231 = scalar_lea.vmem [#allocation9], %s9230
        %s9232 = sand.u32 %s34, 1
        %s9233 = scalar_lea.sflag [#allocation10], %s9232
        %s9234 = sand.u32 %s371, 1
        %s9235 = smul.addr %s9234, 8
        %s9236 = scalar_lea.vmem [#allocation11], %s9235
        // Predicated region
        $region81: #{tpu_custom_call.1} parent=67 // pred_check
          %p9237 = pneg %p329
        $region82: #{tpu_custom_call.1} parent=67 // pred_check_branch
          %9239 = sbr.rel (%p9237) target = $region84
        $region83: #{tpu_custom_call.1} parent=67 // pred_region
          %9241 = vsyncadd %s9223, 0
          %s9242 = smul.addr %s34, 8
          %s9243 = scalar_lea.hbm %s12, %s9242
          %s9244 = sshll.u32 %s9226, 4
          %s9245 = int_to_ptr.vmem [resolvable:$true] %s9244
          %s9246 = sshll.u32 %s9243, 4
          %s9247 = int_to_ptr.hbm [resolvable:$true] %s9246
          %9252 = dma.vmem_to_hbm [thread:$0]  %s9245, 1024, %s9247, %s9223, 128, 256, 8
        $region84: #{tpu_custom_call.1} parent=67 // pred_fallthru
          _
        // Predicated region
        $region85: #{tpu_custom_call.1} parent=67 // pred_check
          %p9253 = pneg %p355
        $region86: #{tpu_custom_call.1} parent=67 // pred_check_branch
          %9255 = sbr.rel (%p9253) target = $region88
        $region87: #{tpu_custom_call.1} parent=67 // pred_region
          %9257 = vsyncadd %s9228, 0
          %s9258 = smul.addr %s34, 8
          %s9259 = scalar_lea.hbm %s13, %s9258
          %s9260 = sshll.u32 %s9231, 4
          %s9261 = int_to_ptr.vmem [resolvable:$true] %s9260
          %s9262 = sshll.u32 %s9259, 4
          %s9263 = int_to_ptr.hbm [resolvable:$true] %s9262
          %9268 = dma.vmem_to_hbm [thread:$0]  %s9261, 1024, %s9263, %s9228, 128, 256, 8
        $region88: #{tpu_custom_call.1} parent=67 // pred_fallthru
          _
        // Predicated region
        $region89: #{tpu_custom_call.1} parent=67 // pred_check
          %p9269 = pneg %p381
        $region90: #{tpu_custom_call.1} parent=67 // pred_check_branch
          %9271 = sbr.rel (%p9269) target = $region92
        $region91: #{tpu_custom_call.1} parent=67 // pred_region
          %9273 = vsyncadd %s9233, 0
          %s9274 = smul.addr %s34, 8
          %s9275 = scalar_lea.hbm %s14, %s9274
          %s9277 = sshll.u32 %s9236, 4
          %s9278 = int_to_ptr.vmem [resolvable:$true] %s9277
          %s9279 = sshll.u32 %s9275, 4
          %s9280 = int_to_ptr.hbm [resolvable:$true] %s9279
          %9282 = dma.vmem_to_hbm [thread:$0]  %s9278, 128, %s9280, %s9233
        $region92: #{tpu_custom_call.1} parent=67 // pred_fallthru
          _
      $region68: #{tpu_custom_call.1} parent=5 // pred_fallthru
        _
      %p9283 = scmp.le.s32.totalorder 2, %s29
      // Predicated region
      $region93: #{tpu_custom_call.1} parent=5 // pred_check
        %p9284 = pneg %p9283
      $region94: #{tpu_custom_call.1} parent=5 // pred_check_branch
        %9286 = sbr.rel (%p9284) target = $region96
      $region95: #{tpu_custom_call.1} parent=5 // pred_region
        %s9287 = ssub.s32 %s29, 2
        // Predicated region
        $region97: #{tpu_custom_call.1} parent=95 // pred_check
          %p9288 = pneg %p335
        $region98: #{tpu_custom_call.1} parent=95 // pred_check_branch
          %9290 = sbr.rel (%p9288) target = $region100
        $region99: #{tpu_custom_call.1} parent=95 // pred_region
          %s9291 = sand.u32 %s320, 1
          %s9292 = scalar_lea.sflag [#allocation4], %s9291
          %s9293 = sand.u32 %s320, 1
          %s9294 = smul.addr %s9293, 64
          %s9295 = scalar_lea.vmem [#allocation8], %s9294
          %9297 = dma.done %s9292, 1024
        $region100: #{tpu_custom_call.1} parent=95 // pred_fallthru
          _
        // Predicated region
        $region101: #{tpu_custom_call.1} parent=95 // pred_check
          %p9298 = pneg %p361
        $region102: #{tpu_custom_call.1} parent=95 // pred_check_branch
          %9300 = sbr.rel (%p9298) target = $region104
        $region103: #{tpu_custom_call.1} parent=95 // pred_region
          %s9301 = sand.u32 %s35, 1
          %s9302 = scalar_lea.sflag [#allocation10], %s9301
          %s9303 = sand.u32 %s346, 1
          %s9304 = smul.addr %s9303, 64
          %s9305 = scalar_lea.vmem [#allocation9], %s9304
          %9307 = dma.done %s9302, 1024
        $region104: #{tpu_custom_call.1} parent=95 // pred_fallthru
          _
        // Predicated region
        $region105: #{tpu_custom_call.1} parent=95 // pred_check
          %p9308 = pneg %p387
        $region106: #{tpu_custom_call.1} parent=95 // pred_check_branch
          %9310 = sbr.rel (%p9308) target = $region108
        $region107: #{tpu_custom_call.1} parent=95 // pred_region
          %s9311 = sand.u32 %s35, 1
          %s9312 = scalar_lea.sflag [#allocation10], %s9311
          %s9313 = sand.u32 %s372, 1
          %s9314 = smul.addr %s9313, 8
          %s9315 = scalar_lea.vmem [#allocation11], %s9314
          %9317 = dma.done %s9312, 128
        $region108: #{tpu_custom_call.1} parent=95 // pred_fallthru
          _
      $region96: #{tpu_custom_call.1} parent=5 // pred_fallthru
        _
    $region6: #{tpu_custom_call.1} parent=1 // loop_footer
      %s33 = sadd.s32 1, %s29
    $region7: #{tpu_custom_call.1} parent=1 // loop_footer_branch
      %28 = sbr.rel target = $region3
    $region8: #{tpu_custom_call.1} parent=1 // loop_exit
      _
    %9318 = vsyncpa [#allocation3], 1
    %s9319 = scalar_lea.sflag [#allocation3], 1
    %9320 = vsyncpa %s9319, 1
    %9321 = vsyncpa [#allocation6], 1
    %9322 = vsyncpa [#allocation4], 1
    %s9323 = scalar_lea.sflag [#allocation4], 1
    %9324 = vsyncpa %s9323, 1
    %9325 = vsyncpa [#allocation10], 1
    %s9326 = scalar_lea.sflag [#allocation10], 1
    %9327 = vsyncpa %s9326, 1

</llo_original>
